<compile_context>
chip_gen: v7x
topology: tpu7x:2x2x1
jax: 0.10.0
libtpu: 0.0.40
codegen_flags: <defaults>
</compile_context>

<pallas_src>
import functools

import jax
import jax.numpy as jnp
from jax.experimental import pallas as pl
from jax.experimental.pallas import tpu as pltpu

INT_CH = 512  # fixed in the PyTorch module


def bot_mini_conv_kernel(x_ref,
                         w1_ref, w2_ref, w3_ref, w4_ref, w5_ref, w6_ref,
                         wd_ref, b_ref, bd_ref,
                         out_ref, *, tb, seq_len, l_out):
    # x_ref block: (tb*seq_len, c_in) -- `tb` batch samples concatenated along rows.
    bf = jnp.bfloat16
    xb = x_ref[...].astype(bf)                                # (R, c_in) bf16

    def im2col4(h):
        # K=4 "valid" conv -> one big-K matmul: stack the 4 shifted row views
        # along the channel (lane) axis once instead of doing 4 per-tap dots
        # with 3 extra f32 accumulate passes (accumulation stays in the MXU).
        rows = h.shape[0] - 3
        return jnp.concatenate([h[k:k + rows, :] for k in range(4)], axis=1)

    def conv_k4(h, w_ref, bias):                              # w_ref: (4*C_in, C_out)
        return jnp.dot(im2col4(h), w_ref[...],
                       preferred_element_type=jnp.float32) + bias

    def conv_k1(h, w_ref, bias):                              # 1x1 conv == matmul
        return jnp.dot(h, w_ref[...],
                       preferred_element_type=jnp.float32) + bias

    relu = lambda v: jnp.maximum(v, 0.0)

    # Activations stored in bf16 (halves VMEM / load-store bytes); matmuls
    # accumulate in f32; residual adds run in f32 transiently and re-round.
    h1 = relu(conv_k4(xb, w1_ref, b_ref[0])).astype(bf)       # (R-3, 512)
    h2 = relu(conv_k4(h1, w2_ref, b_ref[1])).astype(bf)       # (R-6, 512)
    h3 = relu(conv_k4(h2, w3_ref, b_ref[2])).astype(bf)       # (R-9, 512)

    h4 = (relu(conv_k1(h3, w4_ref, b_ref[3])) + h3.astype(jnp.float32)).astype(bf)
    h5 = (relu(conv_k1(h4, w5_ref, b_ref[4])) + h4.astype(jnp.float32)).astype(bf)
    h6 = (relu(conv_k1(h5, w6_ref, b_ref[5])) + h5.astype(jnp.float32)).astype(bf)

    dist = conv_k4(h6, wd_ref, bd_ref[0])                     # (R-12, out_pad) f32

    # Rows whose 13-row receptive field crosses a sample boundary (or lies in
    # the per-sample alignment padding) are discarded here.  Valid rows for
    # sample j start at j*seq_len, which is sublane-aligned (seq_len % 8 == 0).
    for j in range(tb):
        start = j * seq_len
        out_ref[j] = dist[start:start + l_out, :].astype(out_ref.dtype)


def _tpu_budget():
    """Generation-aware scoped-VMEM limit and row-tile target."""
    try:
        cap = int(pltpu.get_tpu_info().vmem_capacity_bytes)
    except Exception:
        cap = 64 << 20  # conservative guess (v7x per-core VMEM)
    # Use most of VMEM but leave headroom for Mosaic scratch + double-buffered
    # input/output blocks: v5e/v6e (128 MiB) -> ~100 MiB, v7x (64 MiB) -> 48 MiB.
    vmem_limit = max(32 << 20, min(cap - (16 << 20), 100 << 20))
    # Peak live activation set is ~8-10 KiB per concatenated row with bf16
    # activations (dominated by the (rows, 2048) im2col block + f32 accumulator),
    # plus ~7 MiB of VMEM-resident weights.
    target_rows = 3072 if cap >= (96 << 20) else 1536
    return vmem_limit, target_rows


def _pick_tb(B, rows_per_sample, target_rows):
    """Largest batch tile whose concatenated rows fit the row budget, while
    keeping >= 2 grid steps (so v7x's second TensorCore always has work on the
    'parallel' batch axis; the extra step costs ~0.35 us on single-core chips)."""
    max_tb = max(1, B // 2) if B >= 2 else 1
    candidates = [tb for tb in range(1, max_tb + 1) if B % tb == 0]
    fitting = [tb for tb in candidates if tb * rows_per_sample <= target_rows]
    if fitting:
        return max(fitting)
    # TODO(synk): add L-tiling with a 12-row halo (second grid axis over the
    # sequence) so a single sample's activation chain never has to fit in VMEM.
    return min(candidates)


def _call_pallas(x2, weights, *, B, rows, c_in, tb, l_out, out_pad, n_steps,
                 vmem_limit, single_buffer_weights):
    def const_spec(a):
        nd = a.ndim
        kwargs = {}
        if single_buffer_weights:
            # Constant index_map -> one VMEM buffer suffices (no prefetch).
            kwargs["pipeline_mode"] = pl.Buffered(1)
        return pl.BlockSpec(a.shape, lambda i, _nd=nd: (0,) * _nd, **kwargs)

    in_specs = [pl.BlockSpec((rows, c_in), lambda i: (i, 0))]
    in_specs += [const_spec(a) for a in weights]
    out_spec = pl.BlockSpec((tb, l_out, out_pad), lambda i: (i, 0, 0))

    kernel = functools.partial(bot_mini_conv_kernel,
                               tb=tb, seq_len=rows // tb, l_out=l_out)

    return pl.pallas_call(
        kernel,
        out_shape=jax.ShapeDtypeStruct((B, l_out, out_pad), jnp.float32),
        grid=(n_steps,),
        in_specs=in_specs,
        out_specs=out_spec,
        compiler_params=pltpu.CompilerParams(
            dimension_semantics=("parallel",),     # batch tiles are independent
            vmem_limit_bytes=vmem_limit,
        ),
    )(x2, *weights)


def prepare_params(params):
    """One-time weight preprocessing, hoisted out of the per-call forward:
    bf16 casts, dist-channel padding to a lane multiple, im2col tap flattening
    of every K=4 weight, and packing the six 512-wide biases into one array."""
    bf = jnp.bfloat16
    c_in = params["w1"].shape[1]
    bot_out = params["wd"].shape[2]
    out_pad = ((bot_out + 127) // 128) * 128       # lane-dense final matmul/stores

    w1f = params["w1"].astype(bf).reshape(4 * c_in, INT_CH)
    w2f = params["w2"].astype(bf).reshape(4 * INT_CH, INT_CH)
    w3f = params["w3"].astype(bf).reshape(4 * INT_CH, INT_CH)
    w4 = params["w4"].astype(bf)
    w5 = params["w5"].astype(bf)
    w6 = params["w6"].astype(bf)
    wd_p = (jnp.zeros((4, INT_CH, out_pad), bf)
            .at[:, :, :bot_out].set(params["wd"].astype(bf))
            .reshape(4 * INT_CH, out_pad))

    b_pack = jnp.zeros((8, INT_CH), jnp.float32)
    for row, name in enumerate(("b1", "b2", "b3", "b4", "b5", "b6")):
        b_pack = b_pack.at[row].set(params[name][0])
    bd_p = jnp.zeros((1, out_pad), jnp.float32).at[:, :bot_out].set(params["bd"])

    weights = (w1f, w2f, w3f, w4, w5, w6, wd_p, b_pack, bd_p)
    return {"weights": weights, "c_in": c_in, "bot_out": bot_out, "out_pad": out_pad}


def bot_mini_conv(x, prepped, *, bot_ch, ar=True):
    """x: (B, L, top_ch + bot_ch) float32.  Returns (B, bot_out, L-12) like PyTorch."""
    if not ar:
        x = x.at[:, :, -bot_ch:].set(0.0)   # glue: zero masked channels (non-AR mode)

    B, L, c_in = x.shape
    assert c_in == prepped["c_in"], (c_in, prepped["c_in"])
    assert L >= 13, "need at least 13 timesteps for the K=4,4,4,..,4 conv stack"
    l_out = L - 12
    bot_out, out_pad = prepped["bot_out"], prepped["out_pad"]

    # Pad each sample to a multiple of 8 rows so every per-sample slice/store in
    # the kernel starts sublane-aligned; padded rows only feed discarded outputs.
    L_pad = ((L + 7) // 8) * 8
    if L_pad != L:
        x = jnp.pad(x, ((0, 0), (0, L_pad - L), (0, 0)))

    vmem_limit, target_rows = _tpu_budget()
    tb = _pick_tb(B, L_pad, target_rows)
    rows = tb * L_pad
    n_steps = B // tb

    # Concatenate samples along the row axis (free row-major reshape) so the
    # kernel's matmul M dimension is tb*L_pad instead of (L-12).
    x2 = x.reshape(B * L_pad, c_in)

    common = dict(B=B, rows=rows, c_in=c_in, tb=tb, l_out=l_out,
                  out_pad=out_pad, n_steps=n_steps, vmem_limit=vmem_limit)
    try:
        out_nlc = _call_pallas(x2, prepped["weights"], **common,
                               single_buffer_weights=hasattr(pl, "Buffered"))
    except (TypeError, NotImplementedError, ValueError):
        # Only the pipeline_mode=pl.Buffered(1) feature probe is retried here;
        # any genuine lowering/runtime error reproduces in (and propagates
        # from) this fallback call with default double-buffered weights.
        out_nlc = _call_pallas(x2, prepped["weights"], **common,
                               single_buffer_weights=False)

    # (B, l_out, out_pad) -> PyTorch NCL (B, bot_out, l_out): one tiny XLA op.
    return jnp.transpose(out_nlc[:, :, :bot_out], (0, 2, 1))


def init_params(key, top_ch, bot_ch, bot_out):
    """Deterministic synthetic weights matching the nn.Conv1d shapes.
    Stored as (K, C_in, C_out) in f32; biases as (1, C_out)."""
    c_in = top_ch + bot_ch
    specs = {
        "w1": (4, c_in, INT_CH), "b1": (1, INT_CH),
        "w2": (4, INT_CH, INT_CH), "b2": (1, INT_CH),
        "w3": (4, INT_CH, INT_CH), "b3": (1, INT_CH),
        "w4": (INT_CH, INT_CH), "b4": (1, INT_CH),
        "w5": (INT_CH, INT_CH), "b5": (1, INT_CH),
        "w6": (INT_CH, INT_CH), "b6": (1, INT_CH),
        "wd": (4, INT_CH, bot_out), "bd": (1, bot_out),
    }
    params = {}
    keys = jax.random.split(key, len(specs))
    for k, (name, shape) in zip(keys, specs.items()):
        if name.startswith("w"):
            fan_in = shape[0] * shape[1] if len(shape) == 3 else shape[0]
            bound = 1.0 / jnp.sqrt(jnp.float32(fan_in))
            params[name] = jax.random.uniform(k, shape, jnp.float32, -bound, bound)
        else:
            params[name] = jax.random.uniform(k, shape, jnp.float32, -0.05, 0.05)
    return params


def reference_forward(x, params, *, bot_ch, ar=True):
    """Pure-JAX f32 reference mirroring the PyTorch forward (lax.conv, NCL)."""
    if not ar:
        x = x.at[:, :, -bot_ch:].set(0.0)
    h = jnp.transpose(x, (0, 2, 1))  # (B, C, L)

    def conv(h, w_kio, b, relu):
        w_oik = jnp.transpose(w_kio, (2, 1, 0)) if w_kio.ndim == 3 \
            else jnp.transpose(w_kio, (1, 0))[:, :, None]
        y = jax.lax.conv_general_dilated(
            h, w_oik, (1,), "VALID", dimension_numbers=("NCH", "OIH", "NCH"))
        y = y + b.reshape(1, -1, 1)
        return jnp.maximum(y, 0.0) if relu else y

    h1 = conv(h, params["w1"], params["b1"], True)
    h2 = conv(h1, params["w2"], params["b2"], True)
    h3 = conv(h2, params["w3"], params["b3"], True)
    h4 = conv(h3, params["w4"], params["b4"], True) + h3
    h5 = conv(h4, params["w5"], params["b5"], True) + h4
    h6 = conv(h5, params["w6"], params["b6"], True) + h5
    return conv(h6, params["wd"], params["bd"], False)


if __name__ == "__main__":
    B, L = 2, 16
    top_ch, bot_ch, bot_out = 4, 4, 16   # small synthetic sizes; int_ch fixed at 512

    key = jax.random.PRNGKey(0)
    kx, kp = jax.random.split(key)
    x = jax.random.normal(kx, (B, L, top_ch + bot_ch), jnp.float32)
    params = init_params(kp, top_ch, bot_ch, bot_out)

    prepped = prepare_params(params)     # one-time weight prep (hoisted)
    out = jax.block_until_ready(bot_mini_conv(x, prepped, bot_ch=bot_ch, ar=True))
    ref = jax.block_until_ready(reference_forward(x, params, bot_ch=bot_ch, ar=True))

    assert out.shape == (B, bot_out, L - 12), out.shape
    max_err = float(jnp.max(jnp.abs(out - ref)))
    # bf16 MXU operands / bf16-stored activations with f32 accumulation vs. an
    # all-f32 reference.
    assert max_err < 5e-2, max_err

    print("KERNEL_OK")
</pallas_src>

<mosaic_0001>
module attributes {stable_mosaic.version = 11 : i64} {
  func.func @bot_mini_conv_kernel(%arg0: i32, %arg1: memref<16x8xf32, #tpu.memory_space<vmem>>, %arg2: memref<32x512xbf16, #tpu.memory_space<vmem>>, %arg3: memref<2048x512xbf16, #tpu.memory_space<vmem>>, %arg4: memref<2048x512xbf16, #tpu.memory_space<vmem>>, %arg5: memref<512x512xbf16, #tpu.memory_space<vmem>>, %arg6: memref<512x512xbf16, #tpu.memory_space<vmem>>, %arg7: memref<512x512xbf16, #tpu.memory_space<vmem>>, %arg8: memref<2048x128xbf16, #tpu.memory_space<vmem>>, %arg9: memref<8x512xf32, #tpu.memory_space<vmem>>, %arg10: memref<1x128xf32, #tpu.memory_space<vmem>>, %arg11: memref<1x4x128xf32, #tpu.memory_space<vmem>>) attributes {dimension_semantics = [#tpu.dimension_semantics<parallel>], iteration_bounds = array<i64: 2>, scalar_prefetch = 0 : i64, scratch_operands = 0 : i64, tpu.core_type = #tpu.core_type<tc>, window_params = [{transform_indices = @transform_0, window_bounds = array<i64: 16, 8>}, {pipeline_mode = #tpu.pipeline_mode<synchronous>, transform_indices = @transform_1, window_bounds = array<i64: 32, 512>}, {pipeline_mode = #tpu.pipeline_mode<synchronous>, transform_indices = @transform_2, window_bounds = array<i64: 2048, 512>}, {pipeline_mode = #tpu.pipeline_mode<synchronous>, transform_indices = @transform_3, window_bounds = array<i64: 2048, 512>}, {pipeline_mode = #tpu.pipeline_mode<synchronous>, transform_indices = @transform_4, window_bounds = array<i64: 512, 512>}, {pipeline_mode = #tpu.pipeline_mode<synchronous>, transform_indices = @transform_5, window_bounds = array<i64: 512, 512>}, {pipeline_mode = #tpu.pipeline_mode<synchronous>, transform_indices = @transform_6, window_bounds = array<i64: 512, 512>}, {pipeline_mode = #tpu.pipeline_mode<synchronous>, transform_indices = @transform_7, window_bounds = array<i64: 2048, 128>}, {pipeline_mode = #tpu.pipeline_mode<synchronous>, transform_indices = @transform_8, window_bounds = array<i64: 8, 512>}, {pipeline_mode = #tpu.pipeline_mode<synchronous>, transform_indices = @transform_9, window_bounds = array<i64: 1, 128>}, {transform_indices = @transform_10, window_bounds = array<i64: 1, 4, 128>}]} {
    %c0 = arith.constant 0 : index
    %c0_0 = arith.constant 0 : index
    %0 = vector.load %arg1[%c0, %c0_0] : memref<16x8xf32, #tpu.memory_space<vmem>>, vector<16x8xf32>
    %1 = arith.truncf %0 : vector<16x8xf32> to vector<16x8xbf16>
    %c0_1 = arith.constant 0 : index
    %c0_2 = arith.constant 0 : index
    %2 = vector.load %arg9[%c0_1, %c0_2] : memref<8x512xf32, #tpu.memory_space<vmem>>, vector<1x512xf32>
    %3 = vector.shape_cast %2 : vector<1x512xf32> to vector<512xf32>
    %4 = vector.extract_strided_slice %1 {offsets = [0, 0], sizes = [13, 8], strides = [1, 1]} : vector<16x8xbf16> to vector<13x8xbf16>
    %5 = vector.extract_strided_slice %1 {offsets = [1, 0], sizes = [13, 8], strides = [1, 1]} : vector<16x8xbf16> to vector<13x8xbf16>
    %6 = vector.extract_strided_slice %1 {offsets = [2, 0], sizes = [13, 8], strides = [1, 1]} : vector<16x8xbf16> to vector<13x8xbf16>
    %7 = vector.extract_strided_slice %1 {offsets = [3, 0], sizes = [13, 8], strides = [1, 1]} : vector<16x8xbf16> to vector<13x8xbf16>
    %8 = tpu.concatenate %4, %5, %6, %7 in 1 : vector<13x8xbf16>, vector<13x8xbf16>, vector<13x8xbf16>, vector<13x8xbf16> -> vector<13x32xbf16>
    %c0_3 = arith.constant 0 : index
    %c0_4 = arith.constant 0 : index
    %9 = vector.load %arg2[%c0_3, %c0_4] : memref<32x512xbf16, #tpu.memory_space<vmem>>, vector<32x512xbf16>
    %cst = arith.constant dense<0.000000e+00> : vector<13x512xf32>
    %10 = tpu.matmul %8, %9, %cst {dimension_numbers = #tpu.dot_dimension_numbers<[1], [0], [0], [1], [0, 0, 1, 1], [], []>} : vector<13x32xbf16>, vector<32x512xbf16>, vector<13x512xf32> -> vector<13x512xf32>
    %11 = vector.shape_cast %3 : vector<512xf32> to vector<1x512xf32>
    %12 = vector.broadcast %11 : vector<1x512xf32> to vector<13x512xf32>
    %13 = arith.addf %10, %12 : vector<13x512xf32>
    %cst_5 = arith.constant 0.000000e+00 : f32
    %14 = vector.broadcast %cst_5 : f32 to vector<13x512xf32>
    %15 = arith.maximumf %13, %14 : vector<13x512xf32>
    %16 = arith.truncf %15 : vector<13x512xf32> to vector<13x512xbf16>
    %c1 = arith.constant 1 : index
    %c0_6 = arith.constant 0 : index
    %17 = vector.load %arg9[%c1, %c0_6] : memref<8x512xf32, #tpu.memory_space<vmem>>, vector<1x512xf32>
    %18 = vector.shape_cast %17 : vector<1x512xf32> to vector<512xf32>
    %19 = vector.extract_strided_slice %16 {offsets = [0, 0], sizes = [10, 512], strides = [1, 1]} : vector<13x512xbf16> to vector<10x512xbf16>
    %20 = vector.extract_strided_slice %16 {offsets = [1, 0], sizes = [10, 512], strides = [1, 1]} : vector<13x512xbf16> to vector<10x512xbf16>
    %21 = vector.extract_strided_slice %16 {offsets = [2, 0], sizes = [10, 512], strides = [1, 1]} : vector<13x512xbf16> to vector<10x512xbf16>
    %22 = vector.extract_strided_slice %16 {offsets = [3, 0], sizes = [10, 512], strides = [1, 1]} : vector<13x512xbf16> to vector<10x512xbf16>
    %23 = tpu.concatenate %19, %20, %21, %22 in 1 : vector<10x512xbf16>, vector<10x512xbf16>, vector<10x512xbf16>, vector<10x512xbf16> -> vector<10x2048xbf16>
    %c0_7 = arith.constant 0 : index
    %c0_8 = arith.constant 0 : index
    %24 = vector.load %arg3[%c0_7, %c0_8] : memref<2048x512xbf16, #tpu.memory_space<vmem>>, vector<2048x512xbf16>
    %cst_9 = arith.constant dense<0.000000e+00> : vector<10x512xf32>
    %25 = tpu.matmul %23, %24, %cst_9 {dimension_numbers = #tpu.dot_dimension_numbers<[1], [0], [0], [1], [0, 0, 1, 1], [], []>} : vector<10x2048xbf16>, vector<2048x512xbf16>, vector<10x512xf32> -> vector<10x512xf32>
    %26 = vector.shape_cast %18 : vector<512xf32> to vector<1x512xf32>
    %27 = vector.broadcast %26 : vector<1x512xf32> to vector<10x512xf32>
    %28 = arith.addf %25, %27 : vector<10x512xf32>
    %cst_10 = arith.constant 0.000000e+00 : f32
    %29 = vector.broadcast %cst_10 : f32 to vector<10x512xf32>
    %30 = arith.maximumf %28, %29 : vector<10x512xf32>
    %31 = arith.truncf %30 : vector<10x512xf32> to vector<10x512xbf16>
    %c2 = arith.constant 2 : index
    %c0_11 = arith.constant 0 : index
    %32 = vector.load %arg9[%c2, %c0_11] : memref<8x512xf32, #tpu.memory_space<vmem>>, vector<1x512xf32>
    %33 = vector.shape_cast %32 : vector<1x512xf32> to vector<512xf32>
    %34 = vector.extract_strided_slice %31 {offsets = [0, 0], sizes = [7, 512], strides = [1, 1]} : vector<10x512xbf16> to vector<7x512xbf16>
    %35 = vector.extract_strided_slice %31 {offsets = [1, 0], sizes = [7, 512], strides = [1, 1]} : vector<10x512xbf16> to vector<7x512xbf16>
    %36 = vector.extract_strided_slice %31 {offsets = [2, 0], sizes = [7, 512], strides = [1, 1]} : vector<10x512xbf16> to vector<7x512xbf16>
    %37 = vector.extract_strided_slice %31 {offsets = [3, 0], sizes = [7, 512], strides = [1, 1]} : vector<10x512xbf16> to vector<7x512xbf16>
    %38 = tpu.concatenate %34, %35, %36, %37 in 1 : vector<7x512xbf16>, vector<7x512xbf16>, vector<7x512xbf16>, vector<7x512xbf16> -> vector<7x2048xbf16>
    %c0_12 = arith.constant 0 : index
    %c0_13 = arith.constant 0 : index
    %39 = vector.load %arg4[%c0_12, %c0_13] : memref<2048x512xbf16, #tpu.memory_space<vmem>>, vector<2048x512xbf16>
    %cst_14 = arith.constant dense<0.000000e+00> : vector<7x512xf32>
    %40 = tpu.matmul %38, %39, %cst_14 {dimension_numbers = #tpu.dot_dimension_numbers<[1], [0], [0], [1], [0, 0, 1, 1], [], []>} : vector<7x2048xbf16>, vector<2048x512xbf16>, vector<7x512xf32> -> vector<7x512xf32>
    %41 = vector.shape_cast %33 : vector<512xf32> to vector<1x512xf32>
    %42 = vector.broadcast %41 : vector<1x512xf32> to vector<7x512xf32>
    %43 = arith.addf %40, %42 : vector<7x512xf32>
    %cst_15 = arith.constant 0.000000e+00 : f32
    %44 = vector.broadcast %cst_15 : f32 to vector<7x512xf32>
    %45 = arith.maximumf %43, %44 : vector<7x512xf32>
    %46 = arith.truncf %45 : vector<7x512xf32> to vector<7x512xbf16>
    %c3 = arith.constant 3 : index
    %c0_16 = arith.constant 0 : index
    %47 = vector.load %arg9[%c3, %c0_16] : memref<8x512xf32, #tpu.memory_space<vmem>>, vector<1x512xf32>
    %48 = vector.shape_cast %47 : vector<1x512xf32> to vector<512xf32>
    %c0_17 = arith.constant 0 : index
    %c0_18 = arith.constant 0 : index
    %49 = vector.load %arg5[%c0_17, %c0_18] : memref<512x512xbf16, #tpu.memory_space<vmem>>, vector<512x512xbf16>
    %cst_19 = arith.constant dense<0.000000e+00> : vector<7x512xf32>
    %50 = tpu.matmul %46, %49, %cst_19 {dimension_numbers = #tpu.dot_dimension_numbers<[1], [0], [0], [1], [0, 0, 1, 1], [], []>} : vector<7x512xbf16>, vector<512x512xbf16>, vector<7x512xf32> -> vector<7x512xf32>
    %51 = vector.shape_cast %48 : vector<512xf32> to vector<1x512xf32>
    %52 = vector.broadcast %51 : vector<1x512xf32> to vector<7x512xf32>
    %53 = arith.addf %50, %52 : vector<7x512xf32>
    %cst_20 = arith.constant 0.000000e+00 : f32
    %54 = vector.broadcast %cst_20 : f32 to vector<7x512xf32>
    %55 = arith.maximumf %53, %54 : vector<7x512xf32>
    %56 = arith.extf %46 : vector<7x512xbf16> to vector<7x512xf32>
    %57 = arith.addf %55, %56 : vector<7x512xf32>
    %58 = arith.truncf %57 : vector<7x512xf32> to vector<7x512xbf16>
    %c4 = arith.constant 4 : index
    %c0_21 = arith.constant 0 : index
    %59 = vector.load %arg9[%c4, %c0_21] : memref<8x512xf32, #tpu.memory_space<vmem>>, vector<1x512xf32>
    %60 = vector.shape_cast %59 : vector<1x512xf32> to vector<512xf32>
    %c0_22 = arith.constant 0 : index
    %c0_23 = arith.constant 0 : index
    %61 = vector.load %arg6[%c0_22, %c0_23] : memref<512x512xbf16, #tpu.memory_space<vmem>>, vector<512x512xbf16>
    %cst_24 = arith.constant dense<0.000000e+00> : vector<7x512xf32>
    %62 = tpu.matmul %58, %61, %cst_24 {dimension_numbers = #tpu.dot_dimension_numbers<[1], [0], [0], [1], [0, 0, 1, 1], [], []>} : vector<7x512xbf16>, vector<512x512xbf16>, vector<7x512xf32> -> vector<7x512xf32>
    %63 = vector.shape_cast %60 : vector<512xf32> to vector<1x512xf32>
    %64 = vector.broadcast %63 : vector<1x512xf32> to vector<7x512xf32>
    %65 = arith.addf %62, %64 : vector<7x512xf32>
    %cst_25 = arith.constant 0.000000e+00 : f32
    %66 = vector.broadcast %cst_25 : f32 to vector<7x512xf32>
    %67 = arith.maximumf %65, %66 : vector<7x512xf32>
    %68 = arith.extf %58 : vector<7x512xbf16> to vector<7x512xf32>
    %69 = arith.addf %67, %68 : vector<7x512xf32>
    %70 = arith.truncf %69 : vector<7x512xf32> to vector<7x512xbf16>
    %c5 = arith.constant 5 : index
    %c0_26 = arith.constant 0 : index
    %71 = vector.load %arg9[%c5, %c0_26] : memref<8x512xf32, #tpu.memory_space<vmem>>, vector<1x512xf32>
    %72 = vector.shape_cast %71 : vector<1x512xf32> to vector<512xf32>
    %c0_27 = arith.constant 0 : index
    %c0_28 = arith.constant 0 : index
    %73 = vector.load %arg7[%c0_27, %c0_28] : memref<512x512xbf16, #tpu.memory_space<vmem>>, vector<512x512xbf16>
    %cst_29 = arith.constant dense<0.000000e+00> : vector<7x512xf32>
    %74 = tpu.matmul %70, %73, %cst_29 {dimension_numbers = #tpu.dot_dimension_numbers<[1], [0], [0], [1], [0, 0, 1, 1], [], []>} : vector<7x512xbf16>, vector<512x512xbf16>, vector<7x512xf32> -> vector<7x512xf32>
    %75 = vector.shape_cast %72 : vector<512xf32> to vector<1x512xf32>
    %76 = vector.broadcast %75 : vector<1x512xf32> to vector<7x512xf32>
    %77 = arith.addf %74, %76 : vector<7x512xf32>
    %cst_30 = arith.constant 0.000000e+00 : f32
    %78 = vector.broadcast %cst_30 : f32 to vector<7x512xf32>
    %79 = arith.maximumf %77, %78 : vector<7x512xf32>
    %80 = arith.extf %70 : vector<7x512xbf16> to vector<7x512xf32>
    %81 = arith.addf %79, %80 : vector<7x512xf32>
    %82 = arith.truncf %81 : vector<7x512xf32> to vector<7x512xbf16>
    %c0_31 = arith.constant 0 : index
    %c0_32 = arith.constant 0 : index
    %83 = vector.load %arg10[%c0_31, %c0_32] : memref<1x128xf32, #tpu.memory_space<vmem>>, vector<1x128xf32>
    %84 = vector.shape_cast %83 : vector<1x128xf32> to vector<128xf32>
    %85 = vector.extract_strided_slice %82 {offsets = [0, 0], sizes = [4, 512], strides = [1, 1]} : vector<7x512xbf16> to vector<4x512xbf16>
    %86 = vector.extract_strided_slice %82 {offsets = [1, 0], sizes = [4, 512], strides = [1, 1]} : vector<7x512xbf16> to vector<4x512xbf16>
    %87 = vector.extract_strided_slice %82 {offsets = [2, 0], sizes = [4, 512], strides = [1, 1]} : vector<7x512xbf16> to vector<4x512xbf16>
    %88 = vector.extract_strided_slice %82 {offsets = [3, 0], sizes = [4, 512], strides = [1, 1]} : vector<7x512xbf16> to vector<4x512xbf16>
    %89 = tpu.concatenate %85, %86, %87, %88 in 1 : vector<4x512xbf16>, vector<4x512xbf16>, vector<4x512xbf16>, vector<4x512xbf16> -> vector<4x2048xbf16>
    %c0_33 = arith.constant 0 : index
    %c0_34 = arith.constant 0 : index
    %90 = vector.load %arg8[%c0_33, %c0_34] : memref<2048x128xbf16, #tpu.memory_space<vmem>>, vector<2048x128xbf16>
    %cst_35 = arith.constant dense<0.000000e+00> : vector<4x128xf32>
    %91 = tpu.matmul %89, %90, %cst_35 {dimension_numbers = #tpu.dot_dimension_numbers<[1], [0], [0], [1], [0, 0, 1, 1], [], []>} : vector<4x2048xbf16>, vector<2048x128xbf16>, vector<4x128xf32> -> vector<4x128xf32>
    %92 = vector.shape_cast %84 : vector<128xf32> to vector<1x128xf32>
    %93 = vector.broadcast %92 : vector<1x128xf32> to vector<4x128xf32>
    %94 = arith.addf %91, %93 : vector<4x128xf32>
    %c0_36 = arith.constant 0 : index
    %c0_37 = arith.constant 0 : index
    %c0_38 = arith.constant 0 : index
    %95 = vector.load %arg11[%c0_36, %c0_37, %c0_38] : memref<1x4x128xf32, #tpu.memory_space<vmem>>, vector<1x4x128xf32>
    %96 = vector.shape_cast %95 : vector<1x4x128xf32> to vector<4x128xf32>
    %97 = vector.shape_cast %94 : vector<4x128xf32> to vector<1x4x128xf32>
    tpu.vector_store %arg11[%c0_36, %c0_37, %c0_38], %97 {strides = array<i32>} : memref<1x4x128xf32, #tpu.memory_space<vmem>>, vector<1x4x128xf32>,
    return
  }
  func.func @transform_0(%arg0: i32) -> (i32, i32) {
    %c0_i32 = arith.constant 0 : i32
    %c0_i32_0 = arith.constant 0 : i32
    return %arg0, %c0_i32 : i32, i32
  }
  func.func @transform_1(%arg0: i32) -> (i32, i32) {
    %c0_i32 = arith.constant 0 : i32
    %c0_i32_0 = arith.constant 0 : i32
    %c0_i32_1 = arith.constant 0 : i32
    return %c0_i32, %c0_i32_0 : i32, i32
  }
  func.func @transform_2(%arg0: i32) -> (i32, i32) {
    %c0_i32 = arith.constant 0 : i32
    %c0_i32_0 = arith.constant 0 : i32
    %c0_i32_1 = arith.constant 0 : i32
    return %c0_i32, %c0_i32_0 : i32, i32
  }
  func.func @transform_3(%arg0: i32) -> (i32, i32) {
    %c0_i32 = arith.constant 0 : i32
    %c0_i32_0 = arith.constant 0 : i32
    %c0_i32_1 = arith.constant 0 : i32
    return %c0_i32, %c0_i32_0 : i32, i32
  }
  func.func @transform_4(%arg0: i32) -> (i32, i32) {
    %c0_i32 = arith.constant 0 : i32
    %c0_i32_0 = arith.constant 0 : i32
    %c0_i32_1 = arith.constant 0 : i32
    return %c0_i32, %c0_i32_0 : i32, i32
  }
  func.func @transform_5(%arg0: i32) -> (i32, i32) {
    %c0_i32 = arith.constant 0 : i32
    %c0_i32_0 = arith.constant 0 : i32
    %c0_i32_1 = arith.constant 0 : i32
    return %c0_i32, %c0_i32_0 : i32, i32
  }
  func.func @transform_6(%arg0: i32) -> (i32, i32) {
    %c0_i32 = arith.constant 0 : i32
    %c0_i32_0 = arith.constant 0 : i32
    %c0_i32_1 = arith.constant 0 : i32
    return %c0_i32, %c0_i32_0 : i32, i32
  }
  func.func @transform_7(%arg0: i32) -> (i32, i32) {
    %c0_i32 = arith.constant 0 : i32
    %c0_i32_0 = arith.constant 0 : i32
    %c0_i32_1 = arith.constant 0 : i32
    return %c0_i32, %c0_i32_0 : i32, i32
  }
  func.func @transform_8(%arg0: i32) -> (i32, i32) {
    %c0_i32 = arith.constant 0 : i32
    %c0_i32_0 = arith.constant 0 : i32
    %c0_i32_1 = arith.constant 0 : i32
    return %c0_i32, %c0_i32_0 : i32, i32
  }
  func.func @transform_9(%arg0: i32) -> (i32, i32) {
    %c0_i32 = arith.constant 0 : i32
    %c0_i32_0 = arith.constant 0 : i32
    %c0_i32_1 = arith.constant 0 : i32
    return %c0_i32, %c0_i32_0 : i32, i32
  }
  func.func @transform_10(%arg0: i32) -> (i32, i32, i32) {
    %c0_i32 = arith.constant 0 : i32
    %c0_i32_0 = arith.constant 0 : i32
    %c0_i32_1 = arith.constant 0 : i32
    return %arg0, %c0_i32, %c0_i32_0 : i32, i32, i32
  }
}

</mosaic_0001>

<llo_original>
// kernel: tpu_custom_call.1
$region0: #{tpu_custom_call.1}
  #allocation0 [shape = 'u32[]', space=smem, size = 0x4, offset = 0x4, fixed_abs, tag = 'smem constant byte address 0x4 - core index']
  #allocation1 [shape = 'u32[144,128]{1,0:T(1,128)}', space=vmem, size = 0x12000, scoped, tag = 'internal scratch']
  %s0 = inlined_call_operand.vmem [shape: f32[32,8], index: 0, kind: input, shape index: {}]
  %s1 = inlined_call_operand.hbm [shape: bf16[32,512], index: 1, kind: input, shape index: {}]
  %s2 = inlined_call_operand.hbm [shape: bf16[2048,512], index: 2, kind: input, shape index: {}]
  %s3 = inlined_call_operand.hbm [shape: bf16[2048,512], index: 3, kind: input, shape index: {}]
  %s4 = inlined_call_operand.hbm [shape: bf16[512,512], index: 4, kind: input, shape index: {}]
  %s5 = inlined_call_operand.hbm [shape: bf16[512,512], index: 5, kind: input, shape index: {}]
  %s6 = inlined_call_operand.hbm [shape: bf16[512,512], index: 6, kind: input, shape index: {}]
  %s7 = inlined_call_operand.hbm [shape: bf16[2048,128], index: 7, kind: input, shape index: {}]
  %s8 = inlined_call_operand.hbm [shape: f32[8,512], index: 8, kind: input, shape index: {}]
  %s9 = inlined_call_operand.hbm [shape: f32[1,128], index: 9, kind: input, shape index: {}]
  %s10 = inlined_call_operand.hbm [shape: f32[2,4,128], index: 10, kind: output, shape index: {}]
  %s11 = sld [smem:[#allocation0]]
  $region109: #{tpu_custom_call.1} parent=0
    _
  %s13 = ssub.s32 1, %s11
  %s14 = scalar_select 0, %s13, %s11
  $region1: #{tpu_custom_call.1} parent=0
    #allocation2 [shape = 'u8[32768]{0}', space=vmem, size = 0x8000, scoped, tag = 'input window, operand 1, single buffered']
    #allocation3 [shape = 's32[2]{0}', space=sflag, size = 0x8, scoped, tag = 'scoped memory for tpu_custom_call.1']
    #allocation4 [shape = 's32[2]{0}', space=sflag, size = 0x8, scoped, tag = 'scoped memory for tpu_custom_call.1']
    #allocation5 [shape = 'u8[2097152]{0}', space=vmem, size = 0x200000, scoped, tag = 'input window, operand 2, single buffered']
    #allocation6 [shape = 's32[1]{0}', space=sflag, size = 0x4, scoped, tag = 'scoped memory for tpu_custom_call.1']
    #allocation7 [shape = 'u8[2097152]{0}', space=vmem, size = 0x200000, scoped, tag = 'input window, operand 3, single buffered']
    #allocation8 [shape = 'u8[524288]{0}', space=vmem, size = 0x80000, scoped, tag = 'input window, operand 4, single buffered']
    #allocation9 [shape = 's32[1]{0}', space=sflag, size = 0x4, scoped, tag = 'scoped memory for tpu_custom_call.1']
    #allocation10 [shape = 'u8[524288]{0}', space=vmem, size = 0x80000, scoped, tag = 'input window, operand 5, single buffered']
    #allocation11 [shape = 'u8[524288]{0}', space=vmem, size = 0x80000, scoped, tag = 'input window, operand 6, single buffered']
    #allocation12 [shape = 's32[1]{0}', space=sflag, size = 0x4, scoped, tag = 'scoped memory for tpu_custom_call.1']
    #allocation13 [shape = 'u8[524288]{0}', space=vmem, size = 0x80000, scoped, tag = 'input window, operand 7, single buffered']
    #allocation14 [shape = 'u8[16384]{0}', space=vmem, size = 0x4000, scoped, tag = 'input window, operand 8, single buffered']
    #allocation15 [shape = 's32[1]{0}', space=sflag, size = 0x4, scoped, tag = 'scoped memory for tpu_custom_call.1']
    #allocation16 [shape = 'u8[512]{0}', space=vmem, size = 0x400, scoped, tag = 'input window, operand 9, single buffered']
    #allocation17 [shape = 'u8[4096]{0}', space=vmem, size = 0x1000, scoped, tag = 'output window, operand 0']
    %15 = vsyncpa [#allocation3], 0
    %16 = vsyncpa [#allocation6], 0
    %17 = vsyncpa [#allocation9], 0
    %18 = vsyncpa [#allocation12], 0
    %19 = vsyncpa [#allocation15], 0
    %20 = vsyncpa [#allocation4], 0
    %s21 = scalar_lea.sflag [#allocation4], 1
    %22 = vsyncpa %s21, 0
    loop: start=0, step=1, limit=4
    $region2: #{tpu_custom_call.1} parent=1 // loop_pre_header
      _
    $region3: #{tpu_custom_call.1} parent=1 // loop_header
      %s24 = sphi 0, %s28
      %p25 = scmp.ge.s32.totalorder %s24, 4
      %s34 = sphi 0, %s36
      %s37 = sphi 0, %s34
      %s38 = sphi 0, %s37
      %s54 = sphi 0, %s38
      %s58 = sphi 0, %s58
      %s60 = sphi 0, %s58
      %s61 = sphi 0, %s60
      %s75 = sphi 0, %s61
      %s79 = sphi 0, %s79
      %s81 = sphi 0, %s79
      %s82 = sphi 0, %s81
      %s96 = sphi 0, %s82
      %s100 = sphi 0, %s100
      %s102 = sphi 0, %s100
      %s103 = sphi 0, %s102
      %s117 = sphi 0, %s103
      %s121 = sphi 0, %s121
      %s123 = sphi 0, %s121
      %s124 = sphi 0, %s123
      %s138 = sphi 0, %s124
      %s142 = sphi 0, %s142
      %s144 = sphi 0, %s142
      %s145 = sphi 0, %s144
      %s159 = sphi 0, %s145
      %s163 = sphi 0, %s163
      %s165 = sphi 0, %s163
      %s166 = sphi 0, %s165
      %s180 = sphi 0, %s166
      %s184 = sphi 0, %s184
      %s186 = sphi 0, %s184
      %s187 = sphi 0, %s186
      %s201 = sphi 0, %s187
      %s205 = sphi 0, %s205
      %s207 = sphi 0, %s205
      %s208 = sphi 0, %s207
      %s222 = sphi 0, %s208
      %s226 = sphi 0, %s226
      %s228 = sphi 0, %s226
      %s229 = sphi 0, %s228
      %s243 = sphi 0, %s229
      %s249 = sphi 0, %s251
      %s252 = sphi 0, %s249
      %s253 = sphi 0, %s252
      %s269 = sphi 0, %s253
    $region4: #{tpu_custom_call.1} parent=1 // loop_header_branch
      %27 = sbr.rel (%p25) target = $region8
    $region5: #{tpu_custom_call.1} parent=1 // loop_body
      %s29 = ssub.s32 %s24, 1
      %s30 = ssub.s32 %s24, 2
      %s31 = sadd.s32 %s24, 1
      %s32 = ssub.s32 %s24, %s31
      %p33 = scmp.eq.s32.totalorder %s32, 0
      %s35 = sadd.s32 %s34, 1
      %s36 = scalar_select %p33, %s34, %s35
      %p39 = pneg %p33
      %p40 = scmp.eq.s32.totalorder %s24, 1
      %p41 = por %p39, %p40
      %p42 = scmp.ne.s32.totalorder %s34, %s37
      %p43 = scmp.eq.s32.totalorder %s24, 0
      %p44 = por %p42, %p43
      %p45 = scmp.ne.s32.totalorder %s34, %s37
      %p46 = scmp.eq.s32.totalorder %s29, 1
      %p47 = por %p45, %p46
      %p48 = scmp.ne.s32.totalorder %s37, %s38
      %p49 = scmp.eq.s32.totalorder %s29, 0
      %p50 = por %p48, %p49
      %p51 = scmp.ne.s32.totalorder %s37, %s38
      %p52 = scmp.eq.s32.totalorder %s30, 1
      %p53 = por %p51, %p52
      %p55 = scmp.ne.s32.totalorder %s38, %s54
      %p56 = scmp.eq.s32.totalorder %s30, 0
      %p57 = por %p55, %p56
      %s59 = sadd.s32 %s58, 1
      %p62 = scmp.eq.s32.totalorder %s24, 1
      %p63 = scmp.ne.s32.totalorder %s58, %s60
      %p64 = scmp.eq.s32.totalorder %s24, 0
      %p65 = por %p63, %p64
      %p66 = scmp.ne.s32.totalorder %s58, %s60
      %p67 = scmp.eq.s32.totalorder %s29, 1
      %p68 = por %p66, %p67
      %p69 = scmp.ne.s32.totalorder %s60, %s61
      %p70 = scmp.eq.s32.totalorder %s29, 0
      %p71 = por %p69, %p70
      %p72 = scmp.ne.s32.totalorder %s60, %s61
      %p73 = scmp.eq.s32.totalorder %s30, 1
      %p74 = por %p72, %p73
      %p76 = scmp.ne.s32.totalorder %s61, %s75
      %p77 = scmp.eq.s32.totalorder %s30, 0
      %p78 = por %p76, %p77
      %s80 = sadd.s32 %s79, 1
      %p83 = scmp.eq.s32.totalorder %s24, 1
      %p84 = scmp.ne.s32.totalorder %s79, %s81
      %p85 = scmp.eq.s32.totalorder %s24, 0
      %p86 = por %p84, %p85
      %p87 = scmp.ne.s32.totalorder %s79, %s81
      %p88 = scmp.eq.s32.totalorder %s29, 1
      %p89 = por %p87, %p88
      %p90 = scmp.ne.s32.totalorder %s81, %s82
      %p91 = scmp.eq.s32.totalorder %s29, 0
      %p92 = por %p90, %p91
      %p93 = scmp.ne.s32.totalorder %s81, %s82
      %p94 = scmp.eq.s32.totalorder %s30, 1
      %p95 = por %p93, %p94
      %p97 = scmp.ne.s32.totalorder %s82, %s96
      %p98 = scmp.eq.s32.totalorder %s30, 0
      %p99 = por %p97, %p98
      %s101 = sadd.s32 %s100, 1
      %p104 = scmp.eq.s32.totalorder %s24, 1
      %p105 = scmp.ne.s32.totalorder %s100, %s102
      %p106 = scmp.eq.s32.totalorder %s24, 0
      %p107 = por %p105, %p106
      %p108 = scmp.ne.s32.totalorder %s100, %s102
      %p109 = scmp.eq.s32.totalorder %s29, 1
      %p110 = por %p108, %p109
      %p111 = scmp.ne.s32.totalorder %s102, %s103
      %p112 = scmp.eq.s32.totalorder %s29, 0
      %p113 = por %p111, %p112
      %p114 = scmp.ne.s32.totalorder %s102, %s103
      %p115 = scmp.eq.s32.totalorder %s30, 1
      %p116 = por %p114, %p115
      %p118 = scmp.ne.s32.totalorder %s103, %s117
      %p119 = scmp.eq.s32.totalorder %s30, 0
      %p120 = por %p118, %p119
      %s122 = sadd.s32 %s121, 1
      %p125 = scmp.eq.s32.totalorder %s24, 1
      %p126 = scmp.ne.s32.totalorder %s121, %s123
      %p127 = scmp.eq.s32.totalorder %s24, 0
      %p128 = por %p126, %p127
      %p129 = scmp.ne.s32.totalorder %s121, %s123
      %p130 = scmp.eq.s32.totalorder %s29, 1
      %p131 = por %p129, %p130
      %p132 = scmp.ne.s32.totalorder %s123, %s124
      %p133 = scmp.eq.s32.totalorder %s29, 0
      %p134 = por %p132, %p133
      %p135 = scmp.ne.s32.totalorder %s123, %s124
      %p136 = scmp.eq.s32.totalorder %s30, 1
      %p137 = por %p135, %p136
      %p139 = scmp.ne.s32.totalorder %s124, %s138
      %p140 = scmp.eq.s32.totalorder %s30, 0
      %p141 = por %p139, %p140
      %s143 = sadd.s32 %s142, 1
      %p146 = scmp.eq.s32.totalorder %s24, 1
      %p147 = scmp.ne.s32.totalorder %s142, %s144
      %p148 = scmp.eq.s32.totalorder %s24, 0
      %p149 = por %p147, %p148
      %p150 = scmp.ne.s32.totalorder %s142, %s144
      %p151 = scmp.eq.s32.totalorder %s29, 1
      %p152 = por %p150, %p151
      %p153 = scmp.ne.s32.totalorder %s144, %s145
      %p154 = scmp.eq.s32.totalorder %s29, 0
      %p155 = por %p153, %p154
      %p156 = scmp.ne.s32.totalorder %s144, %s145
      %p157 = scmp.eq.s32.totalorder %s30, 1
      %p158 = por %p156, %p157
      %p160 = scmp.ne.s32.totalorder %s145, %s159
      %p161 = scmp.eq.s32.totalorder %s30, 0
      %p162 = por %p160, %p161
      %s164 = sadd.s32 %s163, 1
      %p167 = scmp.eq.s32.totalorder %s24, 1
      %p168 = scmp.ne.s32.totalorder %s163, %s165
      %p169 = scmp.eq.s32.totalorder %s24, 0
      %p170 = por %p168, %p169
      %p171 = scmp.ne.s32.totalorder %s163, %s165
      %p172 = scmp.eq.s32.totalorder %s29, 1
      %p173 = por %p171, %p172
      %p174 = scmp.ne.s32.totalorder %s165, %s166
      %p175 = scmp.eq.s32.totalorder %s29, 0
      %p176 = por %p174, %p175
      %p177 = scmp.ne.s32.totalorder %s165, %s166
      %p178 = scmp.eq.s32.totalorder %s30, 1
      %p179 = por %p177, %p178
      %p181 = scmp.ne.s32.totalorder %s166, %s180
      %p182 = scmp.eq.s32.totalorder %s30, 0
      %p183 = por %p181, %p182
      %s185 = sadd.s32 %s184, 1
      %p188 = scmp.eq.s32.totalorder %s24, 1
      %p189 = scmp.ne.s32.totalorder %s184, %s186
      %p190 = scmp.eq.s32.totalorder %s24, 0
      %p191 = por %p189, %p190
      %p192 = scmp.ne.s32.totalorder %s184, %s186
      %p193 = scmp.eq.s32.totalorder %s29, 1
      %p194 = por %p192, %p193
      %p195 = scmp.ne.s32.totalorder %s186, %s187
      %p196 = scmp.eq.s32.totalorder %s29, 0
      %p197 = por %p195, %p196
      %p198 = scmp.ne.s32.totalorder %s186, %s187
      %p199 = scmp.eq.s32.totalorder %s30, 1
      %p200 = por %p198, %p199
      %p202 = scmp.ne.s32.totalorder %s187, %s201
      %p203 = scmp.eq.s32.totalorder %s30, 0
      %p204 = por %p202, %p203
      %s206 = sadd.s32 %s205, 1
      %p209 = scmp.eq.s32.totalorder %s24, 1
      %p210 = scmp.ne.s32.totalorder %s205, %s207
      %p211 = scmp.eq.s32.totalorder %s24, 0
      %p212 = por %p210, %p211
      %p213 = scmp.ne.s32.totalorder %s205, %s207
      %p214 = scmp.eq.s32.totalorder %s29, 1
      %p215 = por %p213, %p214
      %p216 = scmp.ne.s32.totalorder %s207, %s208
      %p217 = scmp.eq.s32.totalorder %s29, 0
      %p218 = por %p216, %p217
      %p219 = scmp.ne.s32.totalorder %s207, %s208
      %p220 = scmp.eq.s32.totalorder %s30, 1
      %p221 = por %p219, %p220
      %p223 = scmp.ne.s32.totalorder %s208, %s222
      %p224 = scmp.eq.s32.totalorder %s30, 0
      %p225 = por %p223, %p224
      %s227 = sadd.s32 %s226, 1
      %p230 = scmp.eq.s32.totalorder %s24, 1
      %p231 = scmp.ne.s32.totalorder %s226, %s228
      %p232 = scmp.eq.s32.totalorder %s24, 0
      %p233 = por %p231, %p232
      %p234 = scmp.ne.s32.totalorder %s226, %s228
      %p235 = scmp.eq.s32.totalorder %s29, 1
      %p236 = por %p234, %p235
      %p237 = scmp.ne.s32.totalorder %s228, %s229
      %p238 = scmp.eq.s32.totalorder %s29, 0
      %p239 = por %p237, %p238
      %p240 = scmp.ne.s32.totalorder %s228, %s229
      %p241 = scmp.eq.s32.totalorder %s30, 1
      %p242 = por %p240, %p241
      %p244 = scmp.ne.s32.totalorder %s229, %s243
      %p245 = scmp.eq.s32.totalorder %s30, 0
      %p246 = por %p244, %p245
      %s247 = ssub.s32 %s24, %s31
      %p248 = scmp.eq.s32.totalorder %s247, 0
      %s250 = sadd.s32 %s249, 1
      %s251 = scalar_select %p248, %s249, %s250
      %p254 = pneg %p248
      %p255 = scmp.eq.s32.totalorder %s24, 1
      %p256 = por %p254, %p255
      %p257 = scmp.ne.s32.totalorder %s249, %s252
      %p258 = scmp.eq.s32.totalorder %s24, 0
      %p259 = por %p257, %p258
      %p260 = scmp.ne.s32.totalorder %s249, %s252
      %p261 = scmp.eq.s32.totalorder %s29, 1
      %p262 = por %p260, %p261
      %p263 = scmp.ne.s32.totalorder %s252, %s253
      %p264 = scmp.eq.s32.totalorder %s29, 0
      %p265 = por %p263, %p264
      %p266 = scmp.ne.s32.totalorder %s252, %s253
      %p267 = scmp.eq.s32.totalorder %s30, 1
      %p268 = por %p266, %p267
      %p270 = scmp.ne.s32.totalorder %s253, %s269
      %p271 = scmp.eq.s32.totalorder %s30, 0
      %p272 = por %p270, %p271
      %p273 = scmp.le.s32.totalorder 1, %s24
      %p274 = scmp.lt.s32.totalorder %s24, 3
      %p275 = pnand %p273, %p274
      %p276 = pneg %p275
      // Predicated region
      $region9: #{tpu_custom_call.1} parent=5 // pred_check
        _
      $region10: #{tpu_custom_call.1} parent=5 // pred_check_branch
        %278 = sbr.rel (%p275) target = $region12
      $region11: #{tpu_custom_call.1} parent=5 // pred_region
        %s279 = ssub.s32 %s24, 1
        // Predicated region
        $region13: #{tpu_custom_call.1} parent=11 // pred_check
          %p280 = pneg %p71
        $region14: #{tpu_custom_call.1} parent=11 // pred_check_branch
          %282 = sbr.rel (%p280) target = $region16
        $region15: #{tpu_custom_call.1} parent=11 // pred_region
          %s284 = ssub.s32 1024, 1024
          %285 = vsyncadd [#allocation3], %s284
          %s286 = sshll.u32 [#allocation2], 4
          %s287 = int_to_ptr.vmem [resolvable:$true] %s286
          %292 = dma.hbm_to_vmem [thread:$0]  %s1, 1024, %s287, [#allocation3], 256, 256, 16
        $region16: #{tpu_custom_call.1} parent=11 // pred_fallthru
          _
        // Predicated region
        $region17: #{tpu_custom_call.1} parent=11 // pred_check
          %p293 = pneg %p92
        $region18: #{tpu_custom_call.1} parent=11 // pred_check_branch
          %295 = sbr.rel (%p293) target = $region20
        $region19: #{tpu_custom_call.1} parent=11 // pred_region
          %s297 = ssub.s32 65536, 65536
          %298 = vsyncadd [#allocation6], %s297
          %s299 = sshll.u32 [#allocation5], 4
          %s300 = int_to_ptr.vmem [resolvable:$true] %s299
          %305 = dma.hbm_to_vmem [thread:$0]  %s2, 65536, %s300, [#allocation6], 256, 256, 16
        $region20: #{tpu_custom_call.1} parent=11 // pred_fallthru
          _
        // Predicated region
        $region21: #{tpu_custom_call.1} parent=11 // pred_check
          %p306 = pneg %p113
        $region22: #{tpu_custom_call.1} parent=11 // pred_check_branch
          %308 = sbr.rel (%p306) target = $region24
        $region23: #{tpu_custom_call.1} parent=11 // pred_region
          %s310 = ssub.s32 65536, 65536
          %311 = vsyncadd [#allocation6], %s310
          %s312 = sshll.u32 [#allocation7], 4
          %s313 = int_to_ptr.vmem [resolvable:$true] %s312
          %318 = dma.hbm_to_vmem [thread:$0]  %s3, 65536, %s313, [#allocation6], 256, 256, 16
        $region24: #{tpu_custom_call.1} parent=11 // pred_fallthru
          _
        // Predicated region
        $region25: #{tpu_custom_call.1} parent=11 // pred_check
          %p319 = pneg %p134
        $region26: #{tpu_custom_call.1} parent=11 // pred_check_branch
          %321 = sbr.rel (%p319) target = $region28
        $region27: #{tpu_custom_call.1} parent=11 // pred_region
          %s323 = ssub.s32 16384, 16384
          %324 = vsyncadd [#allocation9], %s323
          %s325 = sshll.u32 [#allocation8], 4
          %s326 = int_to_ptr.vmem [resolvable:$true] %s325
          %331 = dma.hbm_to_vmem [thread:$0]  %s4, 16384, %s326, [#allocation9], 256, 256, 16
        $region28: #{tpu_custom_call.1} parent=11 // pred_fallthru
          _
        // Predicated region
        $region29: #{tpu_custom_call.1} parent=11 // pred_check
          %p332 = pneg %p155
        $region30: #{tpu_custom_call.1} parent=11 // pred_check_branch
          %334 = sbr.rel (%p332) target = $region32
        $region31: #{tpu_custom_call.1} parent=11 // pred_region
          %s336 = ssub.s32 16384, 16384
          %337 = vsyncadd [#allocation9], %s336
          %s338 = sshll.u32 [#allocation10], 4
          %s339 = int_to_ptr.vmem [resolvable:$true] %s338
          %344 = dma.hbm_to_vmem [thread:$0]  %s5, 16384, %s339, [#allocation9], 256, 256, 16
        $region32: #{tpu_custom_call.1} parent=11 // pred_fallthru
          _
        // Predicated region
        $region33: #{tpu_custom_call.1} parent=11 // pred_check
          %p345 = pneg %p176
        $region34: #{tpu_custom_call.1} parent=11 // pred_check_branch
          %347 = sbr.rel (%p345) target = $region36
        $region35: #{tpu_custom_call.1} parent=11 // pred_region
          %s349 = ssub.s32 16384, 16384
          %350 = vsyncadd [#allocation12], %s349
          %s351 = sshll.u32 [#allocation11], 4
          %s352 = int_to_ptr.vmem [resolvable:$true] %s351
          %357 = dma.hbm_to_vmem [thread:$0]  %s6, 16384, %s352, [#allocation12], 256, 256, 16
        $region36: #{tpu_custom_call.1} parent=11 // pred_fallthru
          _
        // Predicated region
        $region37: #{tpu_custom_call.1} parent=11 // pred_check
          %p358 = pneg %p197
        $region38: #{tpu_custom_call.1} parent=11 // pred_check_branch
          %360 = sbr.rel (%p358) target = $region40
        $region39: #{tpu_custom_call.1} parent=11 // pred_region
          %s362 = ssub.s32 16384, 16384
          %363 = vsyncadd [#allocation12], %s362
          %s364 = sshll.u32 [#allocation13], 4
          %s365 = int_to_ptr.vmem [resolvable:$true] %s364
          %370 = dma.hbm_to_vmem [thread:$0]  %s7, 16384, %s365, [#allocation12], 64, 64, 4
        $region40: #{tpu_custom_call.1} parent=11 // pred_fallthru
          _
        // Predicated region
        $region41: #{tpu_custom_call.1} parent=11 // pred_check
          %p371 = pneg %p218
        $region42: #{tpu_custom_call.1} parent=11 // pred_check_branch
          %373 = sbr.rel (%p371) target = $region44
        $region43: #{tpu_custom_call.1} parent=11 // pred_region
          %s375 = ssub.s32 512, 512
          %376 = vsyncadd [#allocation15], %s375
          %s378 = sshll.u32 [#allocation14], 4
          %s379 = int_to_ptr.vmem [resolvable:$true] %s378
          %381 = dma.hbm_to_vmem [thread:$0]  %s8, 512, %s379, [#allocation15]
        $region44: #{tpu_custom_call.1} parent=11 // pred_fallthru
          _
        // Predicated region
        $region45: #{tpu_custom_call.1} parent=11 // pred_check
          %p382 = pneg %p239
        $region46: #{tpu_custom_call.1} parent=11 // pred_check_branch
          %384 = sbr.rel (%p382) target = $region48
        $region47: #{tpu_custom_call.1} parent=11 // pred_region
          %s386 = ssub.s32 16, 16
          %387 = vsyncadd [#allocation15], %s386
          %s389 = sshll.u32 [#allocation16], 4
          %s390 = int_to_ptr.vmem [resolvable:$true] %s389
          %392 = dma.hbm_to_vmem [thread:$0]  %s9, 16, %s390, [#allocation15]
        $region48: #{tpu_custom_call.1} parent=11 // pred_fallthru
          _
      $region12: #{tpu_custom_call.1} parent=5 // pred_fallthru
        _
      %p393 = scmp.lt.s32.totalorder %s24, 2
      // Predicated region
      $region49: #{tpu_custom_call.1} parent=5 // pred_check
        %p394 = pneg %p393
      $region50: #{tpu_custom_call.1} parent=5 // pred_check_branch
        %396 = sbr.rel (%p394) target = $region52
      $region51: #{tpu_custom_call.1} parent=5 // pred_region
        // Predicated region
        $region53: #{tpu_custom_call.1} parent=51 // pred_check
          %p397 = pneg %p44
        $region54: #{tpu_custom_call.1} parent=51 // pred_check_branch
          %399 = sbr.rel (%p397) target = $region56
        $region55: #{tpu_custom_call.1} parent=51 // pred_region
          %s400 = smul.u32 2, %s24
          %p401 = scmp.lt.s32.totalorder %s400, 3
          %s402 = scalar_select %p401, %s400, 3
          %s403 = smul.addr %s402, 8
          %s404 = scalar_lea.vmem %s0, %s403
          %s405 = smul.u32 2, %s24
        $region56: #{tpu_custom_call.1} parent=51 // pred_fallthru
          _
      $region52: #{tpu_custom_call.1} parent=5 // pred_fallthru
        _
      %p406 = scmp.le.s32.totalorder 1, %s24
      %p407 = scmp.lt.s32.totalorder %s24, 3
      %p408 = pnand %p406, %p407
      %p409 = pneg %p408
      // Predicated region
      $region57: #{tpu_custom_call.1} parent=5 // pred_check
        _
      $region58: #{tpu_custom_call.1} parent=5 // pred_check_branch
        %411 = sbr.rel (%p408) target = $region60
      $region59: #{tpu_custom_call.1} parent=5 // pred_region
        %s412 = ssub.s32 %s24, 1
        // Predicated region
        $region61: #{tpu_custom_call.1} parent=59 // pred_check
          %p413 = pneg %p71
        $region62: #{tpu_custom_call.1} parent=59 // pred_check_branch
          %415 = sbr.rel (%p413) target = $region64
        $region63: #{tpu_custom_call.1} parent=59 // pred_region
          %416 = dma.done [#allocation3], 1024
        $region64: #{tpu_custom_call.1} parent=59 // pred_fallthru
          _
        // Predicated region
        $region65: #{tpu_custom_call.1} parent=59 // pred_check
          %p417 = pneg %p92
        $region66: #{tpu_custom_call.1} parent=59 // pred_check_branch
          %419 = sbr.rel (%p417) target = $region68
        $region67: #{tpu_custom_call.1} parent=59 // pred_region
          %420 = dma.done [#allocation6], 65536
        $region68: #{tpu_custom_call.1} parent=59 // pred_fallthru
          _
        // Predicated region
        $region69: #{tpu_custom_call.1} parent=59 // pred_check
          %p421 = pneg %p113
        $region70: #{tpu_custom_call.1} parent=59 // pred_check_branch
          %423 = sbr.rel (%p421) target = $region72
        $region71: #{tpu_custom_call.1} parent=59 // pred_region
          %424 = dma.done [#allocation6], 65536
        $region72: #{tpu_custom_call.1} parent=59 // pred_fallthru
          _
        // Predicated region
        $region73: #{tpu_custom_call.1} parent=59 // pred_check
          %p425 = pneg %p134
        $region74: #{tpu_custom_call.1} parent=59 // pred_check_branch
          %427 = sbr.rel (%p425) target = $region76
        $region75: #{tpu_custom_call.1} parent=59 // pred_region
          %428 = dma.done [#allocation9], 16384
        $region76: #{tpu_custom_call.1} parent=59 // pred_fallthru
          _
        // Predicated region
        $region77: #{tpu_custom_call.1} parent=59 // pred_check
          %p429 = pneg %p155
        $region78: #{tpu_custom_call.1} parent=59 // pred_check_branch
          %431 = sbr.rel (%p429) target = $region80
        $region79: #{tpu_custom_call.1} parent=59 // pred_region
          %432 = dma.done [#allocation9], 16384
        $region80: #{tpu_custom_call.1} parent=59 // pred_fallthru
          _
        // Predicated region
        $region81: #{tpu_custom_call.1} parent=59 // pred_check
          %p433 = pneg %p176
        $region82: #{tpu_custom_call.1} parent=59 // pred_check_branch
          %435 = sbr.rel (%p433) target = $region84
        $region83: #{tpu_custom_call.1} parent=59 // pred_region
          %436 = dma.done [#allocation12], 16384
        $region84: #{tpu_custom_call.1} parent=59 // pred_fallthru
          _
        // Predicated region
        $region85: #{tpu_custom_call.1} parent=59 // pred_check
          %p437 = pneg %p197
        $region86: #{tpu_custom_call.1} parent=59 // pred_check_branch
          %439 = sbr.rel (%p437) target = $region88
        $region87: #{tpu_custom_call.1} parent=59 // pred_region
          %440 = dma.done [#allocation12], 16384
        $region88: #{tpu_custom_call.1} parent=59 // pred_fallthru
          _
        // Predicated region
        $region89: #{tpu_custom_call.1} parent=59 // pred_check
          %p441 = pneg %p218
        $region90: #{tpu_custom_call.1} parent=59 // pred_check_branch
          %443 = sbr.rel (%p441) target = $region92
        $region91: #{tpu_custom_call.1} parent=59 // pred_region
          %444 = dma.done [#allocation15], 512
        $region92: #{tpu_custom_call.1} parent=59 // pred_fallthru
          _
        // Predicated region
        $region93: #{tpu_custom_call.1} parent=59 // pred_check
          %p445 = pneg %p239
        $region94: #{tpu_custom_call.1} parent=59 // pred_check_branch
          %447 = sbr.rel (%p445) target = $region96
        $region95: #{tpu_custom_call.1} parent=59 // pred_region
          %448 = dma.done [#allocation15], 16
        $region96: #{tpu_custom_call.1} parent=59 // pred_fallthru
          _
        %s449 = smul.u32 2, %s29
        %p450 = scmp.lt.s32.totalorder %s449, 3
        %s451 = scalar_select %p450, %s449, 3
        %s452 = smul.addr %s451, 8
        %s453 = scalar_lea.vmem %s0, %s452
        %p454 = pneg %p50
        %p455 = pneg %p47
        %p456 = pneg %p71
        %p457 = pneg %p68
        %p458 = pneg %p92
        %p459 = pneg %p89
        %p460 = pneg %p113
        %p461 = pneg %p110
        %p462 = pneg %p134
        %p463 = pneg %p131
        %p464 = pneg %p155
        %p465 = pneg %p152
        %p466 = pneg %p176
        %p467 = pneg %p173
        %p468 = pneg %p197
        %p469 = pneg %p194
        %p470 = pneg %p218
        %p471 = pneg %p215
        %p472 = pneg %p239
        %p473 = pneg %p236
        %p474 = pneg %p265
        %p475 = pneg %p262
        %s476 = sand.u32 %s252, 1
        %s477 = scalar_lea.sflag [#allocation4], %s476
        %s478 = sand.u32 %s252, 1
        %s479 = smul.addr %s478, 4
        %s480 = scalar_lea.vmem [#allocation17], %s479
        %s481 = smul.u32 2, %s29
        %p482 = scmp.lt.s32.totalorder %s481, 3
        %s483 = scalar_select %p482, %s481, 3
        %s484 = smul.addr %s483, 8
        %s485 = scalar_lea.vmem %s0, %s484
        %s486 = smul.u32 2, %s29
        %v488 = vld [vmem:[%s485] sm:$0xff]
        %v489 = vld [vmem:[%s485 + $0x8] sm:$0xff]
        %v490 = vpack.c.bf16 %v489, %v488
        %v491 = vld [vmem:[#allocation14] ss:$8 sm:$0xf]
        %v493 = vshrl.u32 %v490, 16
        %v495 = vshll.u32 %v490, 16
        %v497 = vrot.slane %v495, 1
        %v498 = vor.u32 %v493, %v497
        %499 = vrot.lane.b32.xlu0 %v498, 8
        %v500 = vpop.permute.xlu0 %499
        %v502 = vrot.slane %v490, 1
        %503 = vrot.lane.b32.xlu0 %v502, 16
        %v504 = vpop.permute.xlu0 %503
        %v505 = vrot.slane %v493, 1
        %v506 = vrot.slane %v495, 2
        %v507 = vor.u32 %v505, %v506
        %508 = vrot.lane.b32.xlu0 %v507, 24
        %v509 = vpop.permute.xlu0 %508
        %vm510 = vcmask 64512
        %v512 = vsel %vm510, %v490, %v500
        %vm513 = vcmask 130048
        %v515 = vsel %vm513, %v512, %v504
        %vm516 = vcmask 195584
        %v518 = vsel %vm516, %v515, %v509
        %v519 = vld [vmem:[#allocation2] sm:$0xff]
        %v520 = vld [vmem:[#allocation2 + $0x8] sm:$0xff]
        %v521 = vld [vmem:[#allocation2 + $0x10] sm:$0xff]
        %v522 = vld [vmem:[#allocation2 + $0x18] sm:$0xff]
        %v523 = vld [vmem:[#allocation2 + $0x20] sm:$0xff]
        %v524 = vld [vmem:[#allocation2 + $0x28] sm:$0xff]
        %v525 = vld [vmem:[#allocation2 + $0x30] sm:$0xff]
        %v526 = vld [vmem:[#allocation2 + $0x38] sm:$0xff]
        %v528 = vlaneseq
        %v529 = vshrl.u32 %v528, 7
        %v530 = vsub.s32 0, %v529
        %v531 = vrot.slane %v491, %v530
        %v532 = vlaneseq
        %v533 = vshrl.u32 %v532, 7
        %v534 = vsub.s32 1, %v533
        %v535 = vrot.slane %v491, %v534
        %v536 = vlaneseq
        %v537 = vshrl.u32 %v536, 7
        %v538 = vsub.s32 2, %v537
        %v539 = vrot.slane %v491, %v538
        %v540 = vlaneseq
        %v541 = vshrl.u32 %v540, 7
        %v542 = vsub.s32 3, %v541
        %v543 = vrot.slane %v491, %v542
        %v556 = vunpack.c.l.b16 %v519
        %v557 = vunpack.c.h.b16 %v519
        %v558 = vunpack.c.l.b16 %v520
        %v559 = vunpack.c.h.b16 %v520
        %v560 = vunpack.c.l.b16 %v521
        %v561 = vunpack.c.h.b16 %v521
        %v562 = vunpack.c.l.b16 %v522
        %v563 = vunpack.c.h.b16 %v522
        %v564 = vunpack.c.l.b16 %v523
        %v565 = vunpack.c.h.b16 %v523
        %v566 = vunpack.c.l.b16 %v524
        %v567 = vunpack.c.h.b16 %v524
        %v568 = vunpack.c.l.b16 %v525
        %v569 = vunpack.c.h.b16 %v525
        %v570 = vunpack.c.l.b16 %v526
        %v571 = vunpack.c.h.b16 %v526
        %v572 = vpack.c.b16 %v560, %v556
        %v573 = vpack.c.b16 %v561, %v557
        %v574 = vpack.c.b16 %v562, %v558
        %v575 = vpack.c.b16 %v563, %v559
        %v576 = vpack.c.b16 %v568, %v564
        %v577 = vpack.c.b16 %v569, %v565
        %v578 = vpack.c.b16 %v570, %v566
        %v579 = vpack.c.b16 %v571, %v567
        %vm588 = vcmask 261120
        %v589 = vsel %vm588, %v518, 0
        %591 = vmatprep.subr.bf16.mxu0 %v573
        %592 = vmatpush1.bf16.msra.mxu0 %v572
        %593 = vmatprep.subr.bf16.mxu0 %v577
        %594 = vmatpush1.bf16.msra.mxu0 %v576
        %595 = vmatprep.subr.bf16.mxu0 0
        %596 = vmatpush1.bf16.msra.mxu0 0
        %597 = vmatprep.subr.bf16.mxu0 0
        %598 = vmatpush1.bf16.msra.mxu0 0
        %599 = vmatprep.subr.bf16.mxu0 0
        %600 = vmatpush1.bf16.msra.mxu0 0
        %601 = vmatprep.subr.bf16.mxu0 0
        %602 = vmatpush1.bf16.msra.mxu0 0
        %603 = vmatprep.subr.bf16.mxu0 0
        %604 = vmatpush1.bf16.msra.mxu0 0
        %605 = vmatprep.subr.bf16.mxu0 0
        %606 = vmatpush1.bf16.msra.mxu0 0
        %607 = vmatprep.subr.bf16.mxu0 0
        %608 = vmatpush1.bf16.msra.mxu0 0
        %609 = vmatprep.subr.bf16.mxu0 0
        %610 = vmatpush1.bf16.msra.mxu0 0
        %611 = vmatprep.subr.bf16.mxu0 0
        %612 = vmatpush1.bf16.msra.mxu0 0
        %613 = vmatprep.subr.bf16.mxu0 0
        %614 = vmatpush1.bf16.msra.mxu0 0
        %615 = vmatprep.subr.bf16.mxu0 0
        %616 = vmatpush1.bf16.msra.mxu0 0
        %617 = vmatprep.subr.bf16.mxu0 0
        %618 = vmatpush1.bf16.msra.mxu0 0
        %619 = vmatprep.subr.bf16.mxu0 0
        %620 = vmatpush1.bf16.msra.mxu0 0
        %621 = vmatprep.subr.bf16.mxu0 0
        %622 = vmatpush1.bf16.msra.mxu0 0
        %623 = vmatprep.mubr.bf16.mxu0 0
        %624 = vmatmul.mubr.bf16.gmra.mrb[0].mxu0 %v589
        %v625 = vpop.f32.mrb[0].mxu0
        %v626 = vadd.f32 %v531, %v625
        %v627 = vpop.f32.mrb[0].mxu0
        %v628 = vadd.f32 %v535, %v627
        %v629 = vpop.f32.mrb[0].mxu0
        %v630 = vadd.f32 %v531, %v629
        %v631 = vpop.f32.mrb[0].mxu0
        %v632 = vadd.f32 %v535, %v631
        %633 = vdwg.mxu0
        %634 = vmatprep.subr.bf16.mxu0 %v575
        %635 = vmatpush1.bf16.msra.mxu0 %v574
        %636 = vmatprep.subr.bf16.mxu0 %v579
        %637 = vmatpush1.bf16.msra.mxu0 %v578
        %638 = vmatprep.subr.bf16.mxu0 0
        %639 = vmatpush1.bf16.msra.mxu0 0
        %640 = vmatprep.subr.bf16.mxu0 0
        %641 = vmatpush1.bf16.msra.mxu0 0
        %642 = vmatprep.subr.bf16.mxu0 0
        %643 = vmatpush1.bf16.msra.mxu0 0
        %644 = vmatprep.subr.bf16.mxu0 0
        %645 = vmatpush1.bf16.msra.mxu0 0
        %646 = vmatprep.subr.bf16.mxu0 0
        %647 = vmatpush1.bf16.msra.mxu0 0
        %648 = vmatprep.subr.bf16.mxu0 0
        %649 = vmatpush1.bf16.msra.mxu0 0
        %650 = vmatprep.subr.bf16.mxu0 0
        %651 = vmatpush1.bf16.msra.mxu0 0
        %652 = vmatprep.subr.bf16.mxu0 0
        %653 = vmatpush1.bf16.msra.mxu0 0
        %654 = vmatprep.subr.bf16.mxu0 0
        %655 = vmatpush1.bf16.msra.mxu0 0
        %656 = vmatprep.subr.bf16.mxu0 0
        %657 = vmatpush1.bf16.msra.mxu0 0
        %658 = vmatprep.subr.bf16.mxu0 0
        %659 = vmatpush1.bf16.msra.mxu0 0
        %660 = vmatprep.subr.bf16.mxu0 0
        %661 = vmatpush1.bf16.msra.mxu0 0
        %662 = vmatprep.subr.bf16.mxu0 0
        %663 = vmatpush1.bf16.msra.mxu0 0
        %664 = vmatprep.subr.bf16.mxu0 0
        %665 = vmatpush1.bf16.msra.mxu0 0
        %666 = vmatprep.mubr.bf16.mxu0 0
        %667 = vmatmul.mubr.bf16.gmra.mrb[0].mxu0 %v589
        %v668 = vpop.f32.mrb[0].mxu0
        %v669 = vadd.f32 %v539, %v668
        %v670 = vpop.f32.mrb[0].mxu0
        %v671 = vadd.f32 %v543, %v670
        %v672 = vpop.f32.mrb[0].mxu0
        %v673 = vadd.f32 %v539, %v672
        %v674 = vpop.f32.mrb[0].mxu0
        %v675 = vadd.f32 %v543, %v674
        %676 = vdwg.mxu0
        %v677 = vmax.f32 %v626, 0.0
        %v678 = vmax.f32 %v628, 0.0
        %v679 = vmax.f32 %v669, 0.0
        %v680 = vmax.f32 %v671, 0.0
        %v681 = vmax.f32 %v630, 0.0
        %v682 = vmax.f32 %v632, 0.0
        %v683 = vmax.f32 %v673, 0.0
        %v684 = vmax.f32 %v675, 0.0
        %v685 = vpack.c.bf16 %v681, %v677
        %v686 = vpack.c.bf16 %v682, %v678
        %v687 = vpack.c.bf16 %v683, %v679
        %v688 = vpack.c.bf16 %v684, %v680
        %s689 = scalar_lea.vmem [#allocation14], 1
        %v690 = vld [vmem:[%s689] ss:$8 sm:$0xf]
        %v692 = vshrl.u32 %v685, 16
        %v694 = vshll.u32 %v685, 16
        %v696 = vrot.slane %v694, 1
        %v697 = vor.u32 %v692, %v696
        %v699 = vshrl.u32 %v686, 16
        %v701 = vshll.u32 %v686, 16
        %v703 = vrot.slane %v701, 1
        %v704 = vor.u32 %v699, %v703
        %v706 = vshrl.u32 %v687, 16
        %v708 = vshll.u32 %v687, 16
        %v710 = vrot.slane %v708, 1
        %v711 = vor.u32 %v706, %v710
        %v713 = vshrl.u32 %v688, 16
        %v715 = vshll.u32 %v688, 16
        %v717 = vrot.slane %v715, 1
        %v718 = vor.u32 %v713, %v717
        %v727 = vrot.slane %v685, 1
        %v728 = vrot.slane %v686, 1
        %v729 = vrot.slane %v687, 1
        %v730 = vrot.slane %v688, 1
        %v735 = vrot.slane %v692, 1
        %v736 = vrot.slane %v694, 2
        %v737 = vor.u32 %v735, %v736
        %v738 = vrot.slane %v699, 1
        %v739 = vrot.slane %v701, 2
        %v740 = vor.u32 %v738, %v739
        %v741 = vrot.slane %v706, 1
        %v742 = vrot.slane %v708, 2
        %v743 = vor.u32 %v741, %v742
        %v744 = vrot.slane %v713, 1
        %v745 = vrot.slane %v715, 2
        %v746 = vor.u32 %v744, %v745
        %v751 = vld [vmem:[#allocation5] sm:$0xff]
        %v752 = vld [vmem:[#allocation5 + $0x8] sm:$0xff]
        %v753 = vld [vmem:[#allocation5 + $0x10] sm:$0xff]
        %v754 = vld [vmem:[#allocation5 + $0x18] sm:$0xff]
        %v755 = vld [vmem:[#allocation5 + $0x20] sm:$0xff]
        %v756 = vld [vmem:[#allocation5 + $0x28] sm:$0xff]
        %v757 = vld [vmem:[#allocation5 + $0x30] sm:$0xff]
        %v758 = vld [vmem:[#allocation5 + $0x38] sm:$0xff]
        %v759 = vld [vmem:[#allocation5 + $0x40] sm:$0xff]
        %v760 = vld [vmem:[#allocation5 + $0x48] sm:$0xff]
        %v761 = vld [vmem:[#allocation5 + $0x50] sm:$0xff]
        %v762 = vld [vmem:[#allocation5 + $0x58] sm:$0xff]
        %v763 = vld [vmem:[#allocation5 + $0x60] sm:$0xff]
        %v764 = vld [vmem:[#allocation5 + $0x68] sm:$0xff]
        %v765 = vld [vmem:[#allocation5 + $0x70] sm:$0xff]
        %v766 = vld [vmem:[#allocation5 + $0x78] sm:$0xff]
        %v767 = vld [vmem:[#allocation5 + $0x80] sm:$0xff]
        %v768 = vld [vmem:[#allocation5 + $0x88] sm:$0xff]
        %v769 = vld [vmem:[#allocation5 + $0x90] sm:$0xff]
        %v770 = vld [vmem:[#allocation5 + $0x98] sm:$0xff]
        %v771 = vld [vmem:[#allocation5 + $0xa0] sm:$0xff]
        %v772 = vld [vmem:[#allocation5 + $0xa8] sm:$0xff]
        %v773 = vld [vmem:[#allocation5 + $0xb0] sm:$0xff]
        %v774 = vld [vmem:[#allocation5 + $0xb8] sm:$0xff]
        %v775 = vld [vmem:[#allocation5 + $0xc0] sm:$0xff]
        %v776 = vld [vmem:[#allocation5 + $0xc8] sm:$0xff]
        %v777 = vld [vmem:[#allocation5 + $0xd0] sm:$0xff]
        %v778 = vld [vmem:[#allocation5 + $0xd8] sm:$0xff]
        %v779 = vld [vmem:[#allocation5 + $0xe0] sm:$0xff]
        %v780 = vld [vmem:[#allocation5 + $0xe8] sm:$0xff]
        %v781 = vld [vmem:[#allocation5 + $0xf0] sm:$0xff]
        %v782 = vld [vmem:[#allocation5 + $0xf8] sm:$0xff]
        %v783 = vld [vmem:[#allocation5 + $0x100] sm:$0xff]
        %v784 = vld [vmem:[#allocation5 + $0x108] sm:$0xff]
        %v785 = vld [vmem:[#allocation5 + $0x110] sm:$0xff]
        %v786 = vld [vmem:[#allocation5 + $0x118] sm:$0xff]
        %v787 = vld [vmem:[#allocation5 + $0x120] sm:$0xff]
        %v788 = vld [vmem:[#allocation5 + $0x128] sm:$0xff]
        %v789 = vld [vmem:[#allocation5 + $0x130] sm:$0xff]
        %v790 = vld [vmem:[#allocation5 + $0x138] sm:$0xff]
        %v791 = vld [vmem:[#allocation5 + $0x140] sm:$0xff]
        %v792 = vld [vmem:[#allocation5 + $0x148] sm:$0xff]
        %v793 = vld [vmem:[#allocation5 + $0x150] sm:$0xff]
        %v794 = vld [vmem:[#allocation5 + $0x158] sm:$0xff]
        %v795 = vld [vmem:[#allocation5 + $0x160] sm:$0xff]
        %v796 = vld [vmem:[#allocation5 + $0x168] sm:$0xff]
        %v797 = vld [vmem:[#allocation5 + $0x170] sm:$0xff]
        %v798 = vld [vmem:[#allocation5 + $0x178] sm:$0xff]
        %v799 = vld [vmem:[#allocation5 + $0x180] sm:$0xff]
        %v800 = vld [vmem:[#allocation5 + $0x188] sm:$0xff]
        %v801 = vld [vmem:[#allocation5 + $0x190] sm:$0xff]
        %v802 = vld [vmem:[#allocation5 + $0x198] sm:$0xff]
        %v803 = vld [vmem:[#allocation5 + $0x1a0] sm:$0xff]
        %v804 = vld [vmem:[#allocation5 + $0x1a8] sm:$0xff]
        %v805 = vld [vmem:[#allocation5 + $0x1b0] sm:$0xff]
        %v806 = vld [vmem:[#allocation5 + $0x1b8] sm:$0xff]
        %v807 = vld [vmem:[#allocation5 + $0x1c0] sm:$0xff]
        %v808 = vld [vmem:[#allocation5 + $0x1c8] sm:$0xff]
        %v809 = vld [vmem:[#allocation5 + $0x1d0] sm:$0xff]
        %v810 = vld [vmem:[#allocation5 + $0x1d8] sm:$0xff]
        %v811 = vld [vmem:[#allocation5 + $0x1e0] sm:$0xff]
        %v812 = vld [vmem:[#allocation5 + $0x1e8] sm:$0xff]
        %v813 = vld [vmem:[#allocation5 + $0x1f0] sm:$0xff]
        %v814 = vld [vmem:[#allocation5 + $0x1f8] sm:$0xff]
        %v815 = vld [vmem:[#allocation5 + $0x200] sm:$0xff]
        %v816 = vld [vmem:[#allocation5 + $0x208] sm:$0xff]
        %v817 = vld [vmem:[#allocation5 + $0x210] sm:$0xff]
        %v818 = vld [vmem:[#allocation5 + $0x218] sm:$0xff]
        %v819 = vld [vmem:[#allocation5 + $0x220] sm:$0xff]
        %v820 = vld [vmem:[#allocation5 + $0x228] sm:$0xff]
        %v821 = vld [vmem:[#allocation5 + $0x230] sm:$0xff]
        %v822 = vld [vmem:[#allocation5 + $0x238] sm:$0xff]
        %v823 = vld [vmem:[#allocation5 + $0x240] sm:$0xff]
        %v824 = vld [vmem:[#allocation5 + $0x248] sm:$0xff]
        %v825 = vld [vmem:[#allocation5 + $0x250] sm:$0xff]
        %v826 = vld [vmem:[#allocation5 + $0x258] sm:$0xff]
        %v827 = vld [vmem:[#allocation5 + $0x260] sm:$0xff]
        %v828 = vld [vmem:[#allocation5 + $0x268] sm:$0xff]
        %v829 = vld [vmem:[#allocation5 + $0x270] sm:$0xff]
        %v830 = vld [vmem:[#allocation5 + $0x278] sm:$0xff]
        %v831 = vld [vmem:[#allocation5 + $0x280] sm:$0xff]
        %v832 = vld [vmem:[#allocation5 + $0x288] sm:$0xff]
        %v833 = vld [vmem:[#allocation5 + $0x290] sm:$0xff]
        %v834 = vld [vmem:[#allocation5 + $0x298] sm:$0xff]
        %v835 = vld [vmem:[#allocation5 + $0x2a0] sm:$0xff]
        %v836 = vld [vmem:[#allocation5 + $0x2a8] sm:$0xff]
        %v837 = vld [vmem:[#allocation5 + $0x2b0] sm:$0xff]
        %v838 = vld [vmem:[#allocation5 + $0x2b8] sm:$0xff]
        %v839 = vld [vmem:[#allocation5 + $0x2c0] sm:$0xff]
        %v840 = vld [vmem:[#allocation5 + $0x2c8] sm:$0xff]
        %v841 = vld [vmem:[#allocation5 + $0x2d0] sm:$0xff]
        %v842 = vld [vmem:[#allocation5 + $0x2d8] sm:$0xff]
        %v843 = vld [vmem:[#allocation5 + $0x2e0] sm:$0xff]
        %v844 = vld [vmem:[#allocation5 + $0x2e8] sm:$0xff]
        %v845 = vld [vmem:[#allocation5 + $0x2f0] sm:$0xff]
        %v846 = vld [vmem:[#allocation5 + $0x2f8] sm:$0xff]
        %v847 = vld [vmem:[#allocation5 + $0x300] sm:$0xff]
        %v848 = vld [vmem:[#allocation5 + $0x308] sm:$0xff]
        %v849 = vld [vmem:[#allocation5 + $0x310] sm:$0xff]
        %v850 = vld [vmem:[#allocation5 + $0x318] sm:$0xff]
        %v851 = vld [vmem:[#allocation5 + $0x320] sm:$0xff]
        %v852 = vld [vmem:[#allocation5 + $0x328] sm:$0xff]
        %v853 = vld [vmem:[#allocation5 + $0x330] sm:$0xff]
        %v854 = vld [vmem:[#allocation5 + $0x338] sm:$0xff]
        %v855 = vld [vmem:[#allocation5 + $0x340] sm:$0xff]
        %v856 = vld [vmem:[#allocation5 + $0x348] sm:$0xff]
        %v857 = vld [vmem:[#allocation5 + $0x350] sm:$0xff]
        %v858 = vld [vmem:[#allocation5 + $0x358] sm:$0xff]
        %v859 = vld [vmem:[#allocation5 + $0x360] sm:$0xff]
        %v860 = vld [vmem:[#allocation5 + $0x368] sm:$0xff]
        %v861 = vld [vmem:[#allocation5 + $0x370] sm:$0xff]
        %v862 = vld [vmem:[#allocation5 + $0x378] sm:$0xff]
        %v863 = vld [vmem:[#allocation5 + $0x380] sm:$0xff]
        %v864 = vld [vmem:[#allocation5 + $0x388] sm:$0xff]
        %v865 = vld [vmem:[#allocation5 + $0x390] sm:$0xff]
        %v866 = vld [vmem:[#allocation5 + $0x398] sm:$0xff]
        %v867 = vld [vmem:[#allocation5 + $0x3a0] sm:$0xff]
        %v868 = vld [vmem:[#allocation5 + $0x3a8] sm:$0xff]
        %v869 = vld [vmem:[#allocation5 + $0x3b0] sm:$0xff]
        %v870 = vld [vmem:[#allocation5 + $0x3b8] sm:$0xff]
        %v871 = vld [vmem:[#allocation5 + $0x3c0] sm:$0xff]
        %v872 = vld [vmem:[#allocation5 + $0x3c8] sm:$0xff]
        %v873 = vld [vmem:[#allocation5 + $0x3d0] sm:$0xff]
        %v874 = vld [vmem:[#allocation5 + $0x3d8] sm:$0xff]
        %v875 = vld [vmem:[#allocation5 + $0x3e0] sm:$0xff]
        %v876 = vld [vmem:[#allocation5 + $0x3e8] sm:$0xff]
        %v877 = vld [vmem:[#allocation5 + $0x3f0] sm:$0xff]
        %v878 = vld [vmem:[#allocation5 + $0x3f8] sm:$0xff]
        %v879 = vld [vmem:[#allocation5 + $0x400] sm:$0xff]
        %v880 = vld [vmem:[#allocation5 + $0x408] sm:$0xff]
        %v881 = vld [vmem:[#allocation5 + $0x410] sm:$0xff]
        %v882 = vld [vmem:[#allocation5 + $0x418] sm:$0xff]
        %v883 = vld [vmem:[#allocation5 + $0x420] sm:$0xff]
        %v884 = vld [vmem:[#allocation5 + $0x428] sm:$0xff]
        %v885 = vld [vmem:[#allocation5 + $0x430] sm:$0xff]
        %v886 = vld [vmem:[#allocation5 + $0x438] sm:$0xff]
        %v887 = vld [vmem:[#allocation5 + $0x440] sm:$0xff]
        %v888 = vld [vmem:[#allocation5 + $0x448] sm:$0xff]
        %v889 = vld [vmem:[#allocation5 + $0x450] sm:$0xff]
        %v890 = vld [vmem:[#allocation5 + $0x458] sm:$0xff]
        %v891 = vld [vmem:[#allocation5 + $0x460] sm:$0xff]
        %v892 = vld [vmem:[#allocation5 + $0x468] sm:$0xff]
        %v893 = vld [vmem:[#allocation5 + $0x470] sm:$0xff]
        %v894 = vld [vmem:[#allocation5 + $0x478] sm:$0xff]
        %v895 = vld [vmem:[#allocation5 + $0x480] sm:$0xff]
        %v896 = vld [vmem:[#allocation5 + $0x488] sm:$0xff]
        %v897 = vld [vmem:[#allocation5 + $0x490] sm:$0xff]
        %v898 = vld [vmem:[#allocation5 + $0x498] sm:$0xff]
        %v899 = vld [vmem:[#allocation5 + $0x4a0] sm:$0xff]
        %v900 = vld [vmem:[#allocation5 + $0x4a8] sm:$0xff]
        %v901 = vld [vmem:[#allocation5 + $0x4b0] sm:$0xff]
        %v902 = vld [vmem:[#allocation5 + $0x4b8] sm:$0xff]
        %v903 = vld [vmem:[#allocation5 + $0x4c0] sm:$0xff]
        %v904 = vld [vmem:[#allocation5 + $0x4c8] sm:$0xff]
        %v905 = vld [vmem:[#allocation5 + $0x4d0] sm:$0xff]
        %v906 = vld [vmem:[#allocation5 + $0x4d8] sm:$0xff]
        %v907 = vld [vmem:[#allocation5 + $0x4e0] sm:$0xff]
        %v908 = vld [vmem:[#allocation5 + $0x4e8] sm:$0xff]
        %v909 = vld [vmem:[#allocation5 + $0x4f0] sm:$0xff]
        %v910 = vld [vmem:[#allocation5 + $0x4f8] sm:$0xff]
        %v911 = vld [vmem:[#allocation5 + $0x500] sm:$0xff]
        %v912 = vld [vmem:[#allocation5 + $0x508] sm:$0xff]
        %v913 = vld [vmem:[#allocation5 + $0x510] sm:$0xff]
        %v914 = vld [vmem:[#allocation5 + $0x518] sm:$0xff]
        %v915 = vld [vmem:[#allocation5 + $0x520] sm:$0xff]
        %v916 = vld [vmem:[#allocation5 + $0x528] sm:$0xff]
        %v917 = vld [vmem:[#allocation5 + $0x530] sm:$0xff]
        %v918 = vld [vmem:[#allocation5 + $0x538] sm:$0xff]
        %v919 = vld [vmem:[#allocation5 + $0x540] sm:$0xff]
        %v920 = vld [vmem:[#allocation5 + $0x548] sm:$0xff]
        %v921 = vld [vmem:[#allocation5 + $0x550] sm:$0xff]
        %v922 = vld [vmem:[#allocation5 + $0x558] sm:$0xff]
        %v923 = vld [vmem:[#allocation5 + $0x560] sm:$0xff]
        %v924 = vld [vmem:[#allocation5 + $0x568] sm:$0xff]
        %v925 = vld [vmem:[#allocation5 + $0x570] sm:$0xff]
        %v926 = vld [vmem:[#allocation5 + $0x578] sm:$0xff]
        %v927 = vld [vmem:[#allocation5 + $0x580] sm:$0xff]
        %v928 = vld [vmem:[#allocation5 + $0x588] sm:$0xff]
        %v929 = vld [vmem:[#allocation5 + $0x590] sm:$0xff]
        %v930 = vld [vmem:[#allocation5 + $0x598] sm:$0xff]
        %v931 = vld [vmem:[#allocation5 + $0x5a0] sm:$0xff]
        %v932 = vld [vmem:[#allocation5 + $0x5a8] sm:$0xff]
        %v933 = vld [vmem:[#allocation5 + $0x5b0] sm:$0xff]
        %v934 = vld [vmem:[#allocation5 + $0x5b8] sm:$0xff]
        %v935 = vld [vmem:[#allocation5 + $0x5c0] sm:$0xff]
        %v936 = vld [vmem:[#allocation5 + $0x5c8] sm:$0xff]
        %v937 = vld [vmem:[#allocation5 + $0x5d0] sm:$0xff]
        %v938 = vld [vmem:[#allocation5 + $0x5d8] sm:$0xff]
        %v939 = vld [vmem:[#allocation5 + $0x5e0] sm:$0xff]
        %v940 = vld [vmem:[#allocation5 + $0x5e8] sm:$0xff]
        %v941 = vld [vmem:[#allocation5 + $0x5f0] sm:$0xff]
        %v942 = vld [vmem:[#allocation5 + $0x5f8] sm:$0xff]
        %v943 = vld [vmem:[#allocation5 + $0x600] sm:$0xff]
        %v944 = vld [vmem:[#allocation5 + $0x608] sm:$0xff]
        %v945 = vld [vmem:[#allocation5 + $0x610] sm:$0xff]
        %v946 = vld [vmem:[#allocation5 + $0x618] sm:$0xff]
        %v947 = vld [vmem:[#allocation5 + $0x620] sm:$0xff]
        %v948 = vld [vmem:[#allocation5 + $0x628] sm:$0xff]
        %v949 = vld [vmem:[#allocation5 + $0x630] sm:$0xff]
        %v950 = vld [vmem:[#allocation5 + $0x638] sm:$0xff]
        %v951 = vld [vmem:[#allocation5 + $0x640] sm:$0xff]
        %v952 = vld [vmem:[#allocation5 + $0x648] sm:$0xff]
        %v953 = vld [vmem:[#allocation5 + $0x650] sm:$0xff]
        %v954 = vld [vmem:[#allocation5 + $0x658] sm:$0xff]
        %v955 = vld [vmem:[#allocation5 + $0x660] sm:$0xff]
        %v956 = vld [vmem:[#allocation5 + $0x668] sm:$0xff]
        %v957 = vld [vmem:[#allocation5 + $0x670] sm:$0xff]
        %v958 = vld [vmem:[#allocation5 + $0x678] sm:$0xff]
        %v959 = vld [vmem:[#allocation5 + $0x680] sm:$0xff]
        %v960 = vld [vmem:[#allocation5 + $0x688] sm:$0xff]
        %v961 = vld [vmem:[#allocation5 + $0x690] sm:$0xff]
        %v962 = vld [vmem:[#allocation5 + $0x698] sm:$0xff]
        %v963 = vld [vmem:[#allocation5 + $0x6a0] sm:$0xff]
        %v964 = vld [vmem:[#allocation5 + $0x6a8] sm:$0xff]
        %v965 = vld [vmem:[#allocation5 + $0x6b0] sm:$0xff]
        %v966 = vld [vmem:[#allocation5 + $0x6b8] sm:$0xff]
        %v967 = vld [vmem:[#allocation5 + $0x6c0] sm:$0xff]
        %v968 = vld [vmem:[#allocation5 + $0x6c8] sm:$0xff]
        %v969 = vld [vmem:[#allocation5 + $0x6d0] sm:$0xff]
        %v970 = vld [vmem:[#allocation5 + $0x6d8] sm:$0xff]
        %v971 = vld [vmem:[#allocation5 + $0x6e0] sm:$0xff]
        %v972 = vld [vmem:[#allocation5 + $0x6e8] sm:$0xff]
        %v973 = vld [vmem:[#allocation5 + $0x6f0] sm:$0xff]
        %v974 = vld [vmem:[#allocation5 + $0x6f8] sm:$0xff]
        %v975 = vld [vmem:[#allocation5 + $0x700] sm:$0xff]
        %v976 = vld [vmem:[#allocation5 + $0x708] sm:$0xff]
        %v977 = vld [vmem:[#allocation5 + $0x710] sm:$0xff]
        %v978 = vld [vmem:[#allocation5 + $0x718] sm:$0xff]
        %v979 = vld [vmem:[#allocation5 + $0x720] sm:$0xff]
        %v980 = vld [vmem:[#allocation5 + $0x728] sm:$0xff]
        %v981 = vld [vmem:[#allocation5 + $0x730] sm:$0xff]
        %v982 = vld [vmem:[#allocation5 + $0x738] sm:$0xff]
        %v983 = vld [vmem:[#allocation5 + $0x740] sm:$0xff]
        %v984 = vld [vmem:[#allocation5 + $0x748] sm:$0xff]
        %v985 = vld [vmem:[#allocation5 + $0x750] sm:$0xff]
        %v986 = vld [vmem:[#allocation5 + $0x758] sm:$0xff]
        %v987 = vld [vmem:[#allocation5 + $0x760] sm:$0xff]
        %v988 = vld [vmem:[#allocation5 + $0x768] sm:$0xff]
        %v989 = vld [vmem:[#allocation5 + $0x770] sm:$0xff]
        %v990 = vld [vmem:[#allocation5 + $0x778] sm:$0xff]
        %v991 = vld [vmem:[#allocation5 + $0x780] sm:$0xff]
        %v992 = vld [vmem:[#allocation5 + $0x788] sm:$0xff]
        %v993 = vld [vmem:[#allocation5 + $0x790] sm:$0xff]
        %v994 = vld [vmem:[#allocation5 + $0x798] sm:$0xff]
        %v995 = vld [vmem:[#allocation5 + $0x7a0] sm:$0xff]
        %v996 = vld [vmem:[#allocation5 + $0x7a8] sm:$0xff]
        %v997 = vld [vmem:[#allocation5 + $0x7b0] sm:$0xff]
        %v998 = vld [vmem:[#allocation5 + $0x7b8] sm:$0xff]
        %v999 = vld [vmem:[#allocation5 + $0x7c0] sm:$0xff]
        %v1000 = vld [vmem:[#allocation5 + $0x7c8] sm:$0xff]
        %v1001 = vld [vmem:[#allocation5 + $0x7d0] sm:$0xff]
        %v1002 = vld [vmem:[#allocation5 + $0x7d8] sm:$0xff]
        %v1003 = vld [vmem:[#allocation5 + $0x7e0] sm:$0xff]
        %v1004 = vld [vmem:[#allocation5 + $0x7e8] sm:$0xff]
        %v1005 = vld [vmem:[#allocation5 + $0x7f0] sm:$0xff]
        %v1006 = vld [vmem:[#allocation5 + $0x7f8] sm:$0xff]
        %v1007 = vld [vmem:[#allocation5 + $0x800] sm:$0xff]
        %v1008 = vld [vmem:[#allocation5 + $0x808] sm:$0xff]
        %v1009 = vld [vmem:[#allocation5 + $0x810] sm:$0xff]
        %v1010 = vld [vmem:[#allocation5 + $0x818] sm:$0xff]
        %v1011 = vld [vmem:[#allocation5 + $0x820] sm:$0xff]
        %v1012 = vld [vmem:[#allocation5 + $0x828] sm:$0xff]
        %v1013 = vld [vmem:[#allocation5 + $0x830] sm:$0xff]
        %v1014 = vld [vmem:[#allocation5 + $0x838] sm:$0xff]
        %v1015 = vld [vmem:[#allocation5 + $0x840] sm:$0xff]
        %v1016 = vld [vmem:[#allocation5 + $0x848] sm:$0xff]
        %v1017 = vld [vmem:[#allocation5 + $0x850] sm:$0xff]
        %v1018 = vld [vmem:[#allocation5 + $0x858] sm:$0xff]
        %v1019 = vld [vmem:[#allocation5 + $0x860] sm:$0xff]
        %v1020 = vld [vmem:[#allocation5 + $0x868] sm:$0xff]
        %v1021 = vld [vmem:[#allocation5 + $0x870] sm:$0xff]
        %v1022 = vld [vmem:[#allocation5 + $0x878] sm:$0xff]
        %v1023 = vld [vmem:[#allocation5 + $0x880] sm:$0xff]
        %v1024 = vld [vmem:[#allocation5 + $0x888] sm:$0xff]
        %v1025 = vld [vmem:[#allocation5 + $0x890] sm:$0xff]
        %v1026 = vld [vmem:[#allocation5 + $0x898] sm:$0xff]
        %v1027 = vld [vmem:[#allocation5 + $0x8a0] sm:$0xff]
        %v1028 = vld [vmem:[#allocation5 + $0x8a8] sm:$0xff]
        %v1029 = vld [vmem:[#allocation5 + $0x8b0] sm:$0xff]
        %v1030 = vld [vmem:[#allocation5 + $0x8b8] sm:$0xff]
        %v1031 = vld [vmem:[#allocation5 + $0x8c0] sm:$0xff]
        %v1032 = vld [vmem:[#allocation5 + $0x8c8] sm:$0xff]
        %v1033 = vld [vmem:[#allocation5 + $0x8d0] sm:$0xff]
        %v1034 = vld [vmem:[#allocation5 + $0x8d8] sm:$0xff]
        %v1035 = vld [vmem:[#allocation5 + $0x8e0] sm:$0xff]
        %v1036 = vld [vmem:[#allocation5 + $0x8e8] sm:$0xff]
        %v1037 = vld [vmem:[#allocation5 + $0x8f0] sm:$0xff]
        %v1038 = vld [vmem:[#allocation5 + $0x8f8] sm:$0xff]
        %v1039 = vld [vmem:[#allocation5 + $0x900] sm:$0xff]
        %v1040 = vld [vmem:[#allocation5 + $0x908] sm:$0xff]
        %v1041 = vld [vmem:[#allocation5 + $0x910] sm:$0xff]
        %v1042 = vld [vmem:[#allocation5 + $0x918] sm:$0xff]
        %v1043 = vld [vmem:[#allocation5 + $0x920] sm:$0xff]
        %v1044 = vld [vmem:[#allocation5 + $0x928] sm:$0xff]
        %v1045 = vld [vmem:[#allocation5 + $0x930] sm:$0xff]
        %v1046 = vld [vmem:[#allocation5 + $0x938] sm:$0xff]
        %v1047 = vld [vmem:[#allocation5 + $0x940] sm:$0xff]
        %v1048 = vld [vmem:[#allocation5 + $0x948] sm:$0xff]
        %v1049 = vld [vmem:[#allocation5 + $0x950] sm:$0xff]
        %v1050 = vld [vmem:[#allocation5 + $0x958] sm:$0xff]
        %v1051 = vld [vmem:[#allocation5 + $0x960] sm:$0xff]
        %v1052 = vld [vmem:[#allocation5 + $0x968] sm:$0xff]
        %v1053 = vld [vmem:[#allocation5 + $0x970] sm:$0xff]
        %v1054 = vld [vmem:[#allocation5 + $0x978] sm:$0xff]
        %v1055 = vld [vmem:[#allocation5 + $0x980] sm:$0xff]
        %v1056 = vld [vmem:[#allocation5 + $0x988] sm:$0xff]
        %v1057 = vld [vmem:[#allocation5 + $0x990] sm:$0xff]
        %v1058 = vld [vmem:[#allocation5 + $0x998] sm:$0xff]
        %v1059 = vld [vmem:[#allocation5 + $0x9a0] sm:$0xff]
        %v1060 = vld [vmem:[#allocation5 + $0x9a8] sm:$0xff]
        %v1061 = vld [vmem:[#allocation5 + $0x9b0] sm:$0xff]
        %v1062 = vld [vmem:[#allocation5 + $0x9b8] sm:$0xff]
        %v1063 = vld [vmem:[#allocation5 + $0x9c0] sm:$0xff]
        %v1064 = vld [vmem:[#allocation5 + $0x9c8] sm:$0xff]
        %v1065 = vld [vmem:[#allocation5 + $0x9d0] sm:$0xff]
        %v1066 = vld [vmem:[#allocation5 + $0x9d8] sm:$0xff]
        %v1067 = vld [vmem:[#allocation5 + $0x9e0] sm:$0xff]
        %v1068 = vld [vmem:[#allocation5 + $0x9e8] sm:$0xff]
        %v1069 = vld [vmem:[#allocation5 + $0x9f0] sm:$0xff]
        %v1070 = vld [vmem:[#allocation5 + $0x9f8] sm:$0xff]
        %v1071 = vld [vmem:[#allocation5 + $0xa00] sm:$0xff]
        %v1072 = vld [vmem:[#allocation5 + $0xa08] sm:$0xff]
        %v1073 = vld [vmem:[#allocation5 + $0xa10] sm:$0xff]
        %v1074 = vld [vmem:[#allocation5 + $0xa18] sm:$0xff]
        %v1075 = vld [vmem:[#allocation5 + $0xa20] sm:$0xff]
        %v1076 = vld [vmem:[#allocation5 + $0xa28] sm:$0xff]
        %v1077 = vld [vmem:[#allocation5 + $0xa30] sm:$0xff]
        %v1078 = vld [vmem:[#allocation5 + $0xa38] sm:$0xff]
        %v1079 = vld [vmem:[#allocation5 + $0xa40] sm:$0xff]
        %v1080 = vld [vmem:[#allocation5 + $0xa48] sm:$0xff]
        %v1081 = vld [vmem:[#allocation5 + $0xa50] sm:$0xff]
        %v1082 = vld [vmem:[#allocation5 + $0xa58] sm:$0xff]
        %v1083 = vld [vmem:[#allocation5 + $0xa60] sm:$0xff]
        %v1084 = vld [vmem:[#allocation5 + $0xa68] sm:$0xff]
        %v1085 = vld [vmem:[#allocation5 + $0xa70] sm:$0xff]
        %v1086 = vld [vmem:[#allocation5 + $0xa78] sm:$0xff]
        %v1087 = vld [vmem:[#allocation5 + $0xa80] sm:$0xff]
        %v1088 = vld [vmem:[#allocation5 + $0xa88] sm:$0xff]
        %v1089 = vld [vmem:[#allocation5 + $0xa90] sm:$0xff]
        %v1090 = vld [vmem:[#allocation5 + $0xa98] sm:$0xff]
        %v1091 = vld [vmem:[#allocation5 + $0xaa0] sm:$0xff]
        %v1092 = vld [vmem:[#allocation5 + $0xaa8] sm:$0xff]
        %v1093 = vld [vmem:[#allocation5 + $0xab0] sm:$0xff]
        %v1094 = vld [vmem:[#allocation5 + $0xab8] sm:$0xff]
        %v1095 = vld [vmem:[#allocation5 + $0xac0] sm:$0xff]
        %v1096 = vld [vmem:[#allocation5 + $0xac8] sm:$0xff]
        %v1097 = vld [vmem:[#allocation5 + $0xad0] sm:$0xff]
        %v1098 = vld [vmem:[#allocation5 + $0xad8] sm:$0xff]
        %v1099 = vld [vmem:[#allocation5 + $0xae0] sm:$0xff]
        %v1100 = vld [vmem:[#allocation5 + $0xae8] sm:$0xff]
        %v1101 = vld [vmem:[#allocation5 + $0xaf0] sm:$0xff]
        %v1102 = vld [vmem:[#allocation5 + $0xaf8] sm:$0xff]
        %v1103 = vld [vmem:[#allocation5 + $0xb00] sm:$0xff]
        %v1104 = vld [vmem:[#allocation5 + $0xb08] sm:$0xff]
        %v1105 = vld [vmem:[#allocation5 + $0xb10] sm:$0xff]
        %v1106 = vld [vmem:[#allocation5 + $0xb18] sm:$0xff]
        %v1107 = vld [vmem:[#allocation5 + $0xb20] sm:$0xff]
        %v1108 = vld [vmem:[#allocation5 + $0xb28] sm:$0xff]
        %v1109 = vld [vmem:[#allocation5 + $0xb30] sm:$0xff]
        %v1110 = vld [vmem:[#allocation5 + $0xb38] sm:$0xff]
        %v1111 = vld [vmem:[#allocation5 + $0xb40] sm:$0xff]
        %v1112 = vld [vmem:[#allocation5 + $0xb48] sm:$0xff]
        %v1113 = vld [vmem:[#allocation5 + $0xb50] sm:$0xff]
        %v1114 = vld [vmem:[#allocation5 + $0xb58] sm:$0xff]
        %v1115 = vld [vmem:[#allocation5 + $0xb60] sm:$0xff]
        %v1116 = vld [vmem:[#allocation5 + $0xb68] sm:$0xff]
        %v1117 = vld [vmem:[#allocation5 + $0xb70] sm:$0xff]
        %v1118 = vld [vmem:[#allocation5 + $0xb78] sm:$0xff]
        %v1119 = vld [vmem:[#allocation5 + $0xb80] sm:$0xff]
        %v1120 = vld [vmem:[#allocation5 + $0xb88] sm:$0xff]
        %v1121 = vld [vmem:[#allocation5 + $0xb90] sm:$0xff]
        %v1122 = vld [vmem:[#allocation5 + $0xb98] sm:$0xff]
        %v1123 = vld [vmem:[#allocation5 + $0xba0] sm:$0xff]
        %v1124 = vld [vmem:[#allocation5 + $0xba8] sm:$0xff]
        %v1125 = vld [vmem:[#allocation5 + $0xbb0] sm:$0xff]
        %v1126 = vld [vmem:[#allocation5 + $0xbb8] sm:$0xff]
        %v1127 = vld [vmem:[#allocation5 + $0xbc0] sm:$0xff]
        %v1128 = vld [vmem:[#allocation5 + $0xbc8] sm:$0xff]
        %v1129 = vld [vmem:[#allocation5 + $0xbd0] sm:$0xff]
        %v1130 = vld [vmem:[#allocation5 + $0xbd8] sm:$0xff]
        %v1131 = vld [vmem:[#allocation5 + $0xbe0] sm:$0xff]
        %v1132 = vld [vmem:[#allocation5 + $0xbe8] sm:$0xff]
        %v1133 = vld [vmem:[#allocation5 + $0xbf0] sm:$0xff]
        %v1134 = vld [vmem:[#allocation5 + $0xbf8] sm:$0xff]
        %v1135 = vld [vmem:[#allocation5 + $0xc00] sm:$0xff]
        %v1136 = vld [vmem:[#allocation5 + $0xc08] sm:$0xff]
        %v1137 = vld [vmem:[#allocation5 + $0xc10] sm:$0xff]
        %v1138 = vld [vmem:[#allocation5 + $0xc18] sm:$0xff]
        %v1139 = vld [vmem:[#allocation5 + $0xc20] sm:$0xff]
        %v1140 = vld [vmem:[#allocation5 + $0xc28] sm:$0xff]
        %v1141 = vld [vmem:[#allocation5 + $0xc30] sm:$0xff]
        %v1142 = vld [vmem:[#allocation5 + $0xc38] sm:$0xff]
        %v1143 = vld [vmem:[#allocation5 + $0xc40] sm:$0xff]
        %v1144 = vld [vmem:[#allocation5 + $0xc48] sm:$0xff]
        %v1145 = vld [vmem:[#allocation5 + $0xc50] sm:$0xff]
        %v1146 = vld [vmem:[#allocation5 + $0xc58] sm:$0xff]
        %v1147 = vld [vmem:[#allocation5 + $0xc60] sm:$0xff]
        %v1148 = vld [vmem:[#allocation5 + $0xc68] sm:$0xff]
        %v1149 = vld [vmem:[#allocation5 + $0xc70] sm:$0xff]
        %v1150 = vld [vmem:[#allocation5 + $0xc78] sm:$0xff]
        %v1151 = vld [vmem:[#allocation5 + $0xc80] sm:$0xff]
        %v1152 = vld [vmem:[#allocation5 + $0xc88] sm:$0xff]
        %v1153 = vld [vmem:[#allocation5 + $0xc90] sm:$0xff]
        %v1154 = vld [vmem:[#allocation5 + $0xc98] sm:$0xff]
        %v1155 = vld [vmem:[#allocation5 + $0xca0] sm:$0xff]
        %v1156 = vld [vmem:[#allocation5 + $0xca8] sm:$0xff]
        %v1157 = vld [vmem:[#allocation5 + $0xcb0] sm:$0xff]
        %v1158 = vld [vmem:[#allocation5 + $0xcb8] sm:$0xff]
        %v1159 = vld [vmem:[#allocation5 + $0xcc0] sm:$0xff]
        %v1160 = vld [vmem:[#allocation5 + $0xcc8] sm:$0xff]
        %v1161 = vld [vmem:[#allocation5 + $0xcd0] sm:$0xff]
        %v1162 = vld [vmem:[#allocation5 + $0xcd8] sm:$0xff]
        %v1163 = vld [vmem:[#allocation5 + $0xce0] sm:$0xff]
        %v1164 = vld [vmem:[#allocation5 + $0xce8] sm:$0xff]
        %v1165 = vld [vmem:[#allocation5 + $0xcf0] sm:$0xff]
        %v1166 = vld [vmem:[#allocation5 + $0xcf8] sm:$0xff]
        %v1167 = vld [vmem:[#allocation5 + $0xd00] sm:$0xff]
        %v1168 = vld [vmem:[#allocation5 + $0xd08] sm:$0xff]
        %v1169 = vld [vmem:[#allocation5 + $0xd10] sm:$0xff]
        %v1170 = vld [vmem:[#allocation5 + $0xd18] sm:$0xff]
        %v1171 = vld [vmem:[#allocation5 + $0xd20] sm:$0xff]
        %v1172 = vld [vmem:[#allocation5 + $0xd28] sm:$0xff]
        %v1173 = vld [vmem:[#allocation5 + $0xd30] sm:$0xff]
        %v1174 = vld [vmem:[#allocation5 + $0xd38] sm:$0xff]
        %v1175 = vld [vmem:[#allocation5 + $0xd40] sm:$0xff]
        %v1176 = vld [vmem:[#allocation5 + $0xd48] sm:$0xff]
        %v1177 = vld [vmem:[#allocation5 + $0xd50] sm:$0xff]
        %v1178 = vld [vmem:[#allocation5 + $0xd58] sm:$0xff]
        %v1179 = vld [vmem:[#allocation5 + $0xd60] sm:$0xff]
        %v1180 = vld [vmem:[#allocation5 + $0xd68] sm:$0xff]
        %v1181 = vld [vmem:[#allocation5 + $0xd70] sm:$0xff]
        %v1182 = vld [vmem:[#allocation5 + $0xd78] sm:$0xff]
        %v1183 = vld [vmem:[#allocation5 + $0xd80] sm:$0xff]
        %v1184 = vld [vmem:[#allocation5 + $0xd88] sm:$0xff]
        %v1185 = vld [vmem:[#allocation5 + $0xd90] sm:$0xff]
        %v1186 = vld [vmem:[#allocation5 + $0xd98] sm:$0xff]
        %v1187 = vld [vmem:[#allocation5 + $0xda0] sm:$0xff]
        %v1188 = vld [vmem:[#allocation5 + $0xda8] sm:$0xff]
        %v1189 = vld [vmem:[#allocation5 + $0xdb0] sm:$0xff]
        %v1190 = vld [vmem:[#allocation5 + $0xdb8] sm:$0xff]
        %v1191 = vld [vmem:[#allocation5 + $0xdc0] sm:$0xff]
        %v1192 = vld [vmem:[#allocation5 + $0xdc8] sm:$0xff]
        %v1193 = vld [vmem:[#allocation5 + $0xdd0] sm:$0xff]
        %v1194 = vld [vmem:[#allocation5 + $0xdd8] sm:$0xff]
        %v1195 = vld [vmem:[#allocation5 + $0xde0] sm:$0xff]
        %v1196 = vld [vmem:[#allocation5 + $0xde8] sm:$0xff]
        %v1197 = vld [vmem:[#allocation5 + $0xdf0] sm:$0xff]
        %v1198 = vld [vmem:[#allocation5 + $0xdf8] sm:$0xff]
        %v1199 = vld [vmem:[#allocation5 + $0xe00] sm:$0xff]
        %v1200 = vld [vmem:[#allocation5 + $0xe08] sm:$0xff]
        %v1201 = vld [vmem:[#allocation5 + $0xe10] sm:$0xff]
        %v1202 = vld [vmem:[#allocation5 + $0xe18] sm:$0xff]
        %v1203 = vld [vmem:[#allocation5 + $0xe20] sm:$0xff]
        %v1204 = vld [vmem:[#allocation5 + $0xe28] sm:$0xff]
        %v1205 = vld [vmem:[#allocation5 + $0xe30] sm:$0xff]
        %v1206 = vld [vmem:[#allocation5 + $0xe38] sm:$0xff]
        %v1207 = vld [vmem:[#allocation5 + $0xe40] sm:$0xff]
        %v1208 = vld [vmem:[#allocation5 + $0xe48] sm:$0xff]
        %v1209 = vld [vmem:[#allocation5 + $0xe50] sm:$0xff]
        %v1210 = vld [vmem:[#allocation5 + $0xe58] sm:$0xff]
        %v1211 = vld [vmem:[#allocation5 + $0xe60] sm:$0xff]
        %v1212 = vld [vmem:[#allocation5 + $0xe68] sm:$0xff]
        %v1213 = vld [vmem:[#allocation5 + $0xe70] sm:$0xff]
        %v1214 = vld [vmem:[#allocation5 + $0xe78] sm:$0xff]
        %v1215 = vld [vmem:[#allocation5 + $0xe80] sm:$0xff]
        %v1216 = vld [vmem:[#allocation5 + $0xe88] sm:$0xff]
        %v1217 = vld [vmem:[#allocation5 + $0xe90] sm:$0xff]
        %v1218 = vld [vmem:[#allocation5 + $0xe98] sm:$0xff]
        %v1219 = vld [vmem:[#allocation5 + $0xea0] sm:$0xff]
        %v1220 = vld [vmem:[#allocation5 + $0xea8] sm:$0xff]
        %v1221 = vld [vmem:[#allocation5 + $0xeb0] sm:$0xff]
        %v1222 = vld [vmem:[#allocation5 + $0xeb8] sm:$0xff]
        %v1223 = vld [vmem:[#allocation5 + $0xec0] sm:$0xff]
        %v1224 = vld [vmem:[#allocation5 + $0xec8] sm:$0xff]
        %v1225 = vld [vmem:[#allocation5 + $0xed0] sm:$0xff]
        %v1226 = vld [vmem:[#allocation5 + $0xed8] sm:$0xff]
        %v1227 = vld [vmem:[#allocation5 + $0xee0] sm:$0xff]
        %v1228 = vld [vmem:[#allocation5 + $0xee8] sm:$0xff]
        %v1229 = vld [vmem:[#allocation5 + $0xef0] sm:$0xff]
        %v1230 = vld [vmem:[#allocation5 + $0xef8] sm:$0xff]
        %v1231 = vld [vmem:[#allocation5 + $0xf00] sm:$0xff]
        %v1232 = vld [vmem:[#allocation5 + $0xf08] sm:$0xff]
        %v1233 = vld [vmem:[#allocation5 + $0xf10] sm:$0xff]
        %v1234 = vld [vmem:[#allocation5 + $0xf18] sm:$0xff]
        %v1235 = vld [vmem:[#allocation5 + $0xf20] sm:$0xff]
        %v1236 = vld [vmem:[#allocation5 + $0xf28] sm:$0xff]
        %v1237 = vld [vmem:[#allocation5 + $0xf30] sm:$0xff]
        %v1238 = vld [vmem:[#allocation5 + $0xf38] sm:$0xff]
        %v1239 = vld [vmem:[#allocation5 + $0xf40] sm:$0xff]
        %v1240 = vld [vmem:[#allocation5 + $0xf48] sm:$0xff]
        %v1241 = vld [vmem:[#allocation5 + $0xf50] sm:$0xff]
        %v1242 = vld [vmem:[#allocation5 + $0xf58] sm:$0xff]
        %v1243 = vld [vmem:[#allocation5 + $0xf60] sm:$0xff]
        %v1244 = vld [vmem:[#allocation5 + $0xf68] sm:$0xff]
        %v1245 = vld [vmem:[#allocation5 + $0xf70] sm:$0xff]
        %v1246 = vld [vmem:[#allocation5 + $0xf78] sm:$0xff]
        %v1247 = vld [vmem:[#allocation5 + $0xf80] sm:$0xff]
        %v1248 = vld [vmem:[#allocation5 + $0xf88] sm:$0xff]
        %v1249 = vld [vmem:[#allocation5 + $0xf90] sm:$0xff]
        %v1250 = vld [vmem:[#allocation5 + $0xf98] sm:$0xff]
        %v1251 = vld [vmem:[#allocation5 + $0xfa0] sm:$0xff]
        %v1252 = vld [vmem:[#allocation5 + $0xfa8] sm:$0xff]
        %v1253 = vld [vmem:[#allocation5 + $0xfb0] sm:$0xff]
        %v1254 = vld [vmem:[#allocation5 + $0xfb8] sm:$0xff]
        %v1255 = vld [vmem:[#allocation5 + $0xfc0] sm:$0xff]
        %v1256 = vld [vmem:[#allocation5 + $0xfc8] sm:$0xff]
        %v1257 = vld [vmem:[#allocation5 + $0xfd0] sm:$0xff]
        %v1258 = vld [vmem:[#allocation5 + $0xfd8] sm:$0xff]
        %v1259 = vld [vmem:[#allocation5 + $0xfe0] sm:$0xff]
        %v1260 = vld [vmem:[#allocation5 + $0xfe8] sm:$0xff]
        %v1261 = vld [vmem:[#allocation5 + $0xff0] sm:$0xff]
        %v1262 = vld [vmem:[#allocation5 + $0xff8] sm:$0xff]
        %v1264 = vlaneseq
        %v1265 = vshrl.u32 %v1264, 7
        %v1266 = vsub.s32 0, %v1265
        %v1267 = vrot.slane %v690, %v1266
        %v1268 = vlaneseq
        %v1269 = vshrl.u32 %v1268, 7
        %v1270 = vsub.s32 1, %v1269
        %v1271 = vrot.slane %v690, %v1270
        %v1272 = vlaneseq
        %v1273 = vshrl.u32 %v1272, 7
        %v1274 = vsub.s32 2, %v1273
        %v1275 = vrot.slane %v690, %v1274
        %v1276 = vlaneseq
        %v1277 = vshrl.u32 %v1276, 7
        %v1278 = vsub.s32 3, %v1277
        %v1279 = vrot.slane %v690, %v1278
        %v1796 = vunpack.c.l.b16 %v751
        %v1797 = vunpack.c.h.b16 %v751
        %v1798 = vunpack.c.l.b16 %v752
        %v1799 = vunpack.c.h.b16 %v752
        %v1800 = vunpack.c.l.b16 %v753
        %v1801 = vunpack.c.h.b16 %v753
        %v1802 = vunpack.c.l.b16 %v754
        %v1803 = vunpack.c.h.b16 %v754
        %v1804 = vunpack.c.l.b16 %v755
        %v1805 = vunpack.c.h.b16 %v755
        %v1806 = vunpack.c.l.b16 %v756
        %v1807 = vunpack.c.h.b16 %v756
        %v1808 = vunpack.c.l.b16 %v757
        %v1809 = vunpack.c.h.b16 %v757
        %v1810 = vunpack.c.l.b16 %v758
        %v1811 = vunpack.c.h.b16 %v758
        %v1812 = vunpack.c.l.b16 %v759
        %v1813 = vunpack.c.h.b16 %v759
        %v1814 = vunpack.c.l.b16 %v760
        %v1815 = vunpack.c.h.b16 %v760
        %v1816 = vunpack.c.l.b16 %v761
        %v1817 = vunpack.c.h.b16 %v761
        %v1818 = vunpack.c.l.b16 %v762
        %v1819 = vunpack.c.h.b16 %v762
        %v1820 = vunpack.c.l.b16 %v763
        %v1821 = vunpack.c.h.b16 %v763
        %v1822 = vunpack.c.l.b16 %v764
        %v1823 = vunpack.c.h.b16 %v764
        %v1824 = vunpack.c.l.b16 %v765
        %v1825 = vunpack.c.h.b16 %v765
        %v1826 = vunpack.c.l.b16 %v766
        %v1827 = vunpack.c.h.b16 %v766
        %v1828 = vunpack.c.l.b16 %v767
        %v1829 = vunpack.c.h.b16 %v767
        %v1830 = vunpack.c.l.b16 %v768
        %v1831 = vunpack.c.h.b16 %v768
        %v1832 = vunpack.c.l.b16 %v769
        %v1833 = vunpack.c.h.b16 %v769
        %v1834 = vunpack.c.l.b16 %v770
        %v1835 = vunpack.c.h.b16 %v770
        %v1836 = vunpack.c.l.b16 %v771
        %v1837 = vunpack.c.h.b16 %v771
        %v1838 = vunpack.c.l.b16 %v772
        %v1839 = vunpack.c.h.b16 %v772
        %v1840 = vunpack.c.l.b16 %v773
        %v1841 = vunpack.c.h.b16 %v773
        %v1842 = vunpack.c.l.b16 %v774
        %v1843 = vunpack.c.h.b16 %v774
        %v1844 = vunpack.c.l.b16 %v775
        %v1845 = vunpack.c.h.b16 %v775
        %v1846 = vunpack.c.l.b16 %v776
        %v1847 = vunpack.c.h.b16 %v776
        %v1848 = vunpack.c.l.b16 %v777
        %v1849 = vunpack.c.h.b16 %v777
        %v1850 = vunpack.c.l.b16 %v778
        %v1851 = vunpack.c.h.b16 %v778
        %v1852 = vunpack.c.l.b16 %v779
        %v1853 = vunpack.c.h.b16 %v779
        %v1854 = vunpack.c.l.b16 %v780
        %v1855 = vunpack.c.h.b16 %v780
        %v1856 = vunpack.c.l.b16 %v781
        %v1857 = vunpack.c.h.b16 %v781
        %v1858 = vunpack.c.l.b16 %v782
        %v1859 = vunpack.c.h.b16 %v782
        %v1860 = vunpack.c.l.b16 %v783
        %v1861 = vunpack.c.h.b16 %v783
        %v1862 = vunpack.c.l.b16 %v784
        %v1863 = vunpack.c.h.b16 %v784
        %v1864 = vunpack.c.l.b16 %v785
        %v1865 = vunpack.c.h.b16 %v785
        %v1866 = vunpack.c.l.b16 %v786
        %v1867 = vunpack.c.h.b16 %v786
        %v1868 = vunpack.c.l.b16 %v787
        %v1869 = vunpack.c.h.b16 %v787
        %v1870 = vunpack.c.l.b16 %v788
        %v1871 = vunpack.c.h.b16 %v788
        %v1872 = vunpack.c.l.b16 %v789
        %v1873 = vunpack.c.h.b16 %v789
        %v1874 = vunpack.c.l.b16 %v790
        %v1875 = vunpack.c.h.b16 %v790
        %v1876 = vunpack.c.l.b16 %v791
        %v1877 = vunpack.c.h.b16 %v791
        %v1878 = vunpack.c.l.b16 %v792
        %v1879 = vunpack.c.h.b16 %v792
        %v1880 = vunpack.c.l.b16 %v793
        %v1881 = vunpack.c.h.b16 %v793
        %v1882 = vunpack.c.l.b16 %v794
        %v1883 = vunpack.c.h.b16 %v794
        %v1884 = vunpack.c.l.b16 %v795
        %v1885 = vunpack.c.h.b16 %v795
        %v1886 = vunpack.c.l.b16 %v796
        %v1887 = vunpack.c.h.b16 %v796
        %v1888 = vunpack.c.l.b16 %v797
        %v1889 = vunpack.c.h.b16 %v797
        %v1890 = vunpack.c.l.b16 %v798
        %v1891 = vunpack.c.h.b16 %v798
        %v1892 = vunpack.c.l.b16 %v799
        %v1893 = vunpack.c.h.b16 %v799
        %v1894 = vunpack.c.l.b16 %v800
        %v1895 = vunpack.c.h.b16 %v800
        %v1896 = vunpack.c.l.b16 %v801
        %v1897 = vunpack.c.h.b16 %v801
        %v1898 = vunpack.c.l.b16 %v802
        %v1899 = vunpack.c.h.b16 %v802
        %v1900 = vunpack.c.l.b16 %v803
        %v1901 = vunpack.c.h.b16 %v803
        %v1902 = vunpack.c.l.b16 %v804
        %v1903 = vunpack.c.h.b16 %v804
        %v1904 = vunpack.c.l.b16 %v805
        %v1905 = vunpack.c.h.b16 %v805
        %v1906 = vunpack.c.l.b16 %v806
        %v1907 = vunpack.c.h.b16 %v806
        %v1908 = vunpack.c.l.b16 %v807
        %v1909 = vunpack.c.h.b16 %v807
        %v1910 = vunpack.c.l.b16 %v808
        %v1911 = vunpack.c.h.b16 %v808
        %v1912 = vunpack.c.l.b16 %v809
        %v1913 = vunpack.c.h.b16 %v809
        %v1914 = vunpack.c.l.b16 %v810
        %v1915 = vunpack.c.h.b16 %v810
        %v1916 = vunpack.c.l.b16 %v811
        %v1917 = vunpack.c.h.b16 %v811
        %v1918 = vunpack.c.l.b16 %v812
        %v1919 = vunpack.c.h.b16 %v812
        %v1920 = vunpack.c.l.b16 %v813
        %v1921 = vunpack.c.h.b16 %v813
        %v1922 = vunpack.c.l.b16 %v814
        %v1923 = vunpack.c.h.b16 %v814
        %v1924 = vunpack.c.l.b16 %v815
        %v1925 = vunpack.c.h.b16 %v815
        %v1926 = vunpack.c.l.b16 %v816
        %v1927 = vunpack.c.h.b16 %v816
        %v1928 = vunpack.c.l.b16 %v817
        %v1929 = vunpack.c.h.b16 %v817
        %v1930 = vunpack.c.l.b16 %v818
        %v1931 = vunpack.c.h.b16 %v818
        %v1932 = vunpack.c.l.b16 %v819
        %v1933 = vunpack.c.h.b16 %v819
        %v1934 = vunpack.c.l.b16 %v820
        %v1935 = vunpack.c.h.b16 %v820
        %v1936 = vunpack.c.l.b16 %v821
        %v1937 = vunpack.c.h.b16 %v821
        %v1938 = vunpack.c.l.b16 %v822
        %v1939 = vunpack.c.h.b16 %v822
        %v1940 = vunpack.c.l.b16 %v823
        %v1941 = vunpack.c.h.b16 %v823
        %v1942 = vunpack.c.l.b16 %v824
        %v1943 = vunpack.c.h.b16 %v824
        %v1944 = vunpack.c.l.b16 %v825
        %v1945 = vunpack.c.h.b16 %v825
        %v1946 = vunpack.c.l.b16 %v826
        %v1947 = vunpack.c.h.b16 %v826
        %v1948 = vunpack.c.l.b16 %v827
        %v1949 = vunpack.c.h.b16 %v827
        %v1950 = vunpack.c.l.b16 %v828
        %v1951 = vunpack.c.h.b16 %v828
        %v1952 = vunpack.c.l.b16 %v829
        %v1953 = vunpack.c.h.b16 %v829
        %v1954 = vunpack.c.l.b16 %v830
        %v1955 = vunpack.c.h.b16 %v830
        %v1956 = vunpack.c.l.b16 %v831
        %v1957 = vunpack.c.h.b16 %v831
        %v1958 = vunpack.c.l.b16 %v832
        %v1959 = vunpack.c.h.b16 %v832
        %v1960 = vunpack.c.l.b16 %v833
        %v1961 = vunpack.c.h.b16 %v833
        %v1962 = vunpack.c.l.b16 %v834
        %v1963 = vunpack.c.h.b16 %v834
        %v1964 = vunpack.c.l.b16 %v835
        %v1965 = vunpack.c.h.b16 %v835
        %v1966 = vunpack.c.l.b16 %v836
        %v1967 = vunpack.c.h.b16 %v836
        %v1968 = vunpack.c.l.b16 %v837
        %v1969 = vunpack.c.h.b16 %v837
        %v1970 = vunpack.c.l.b16 %v838
        %v1971 = vunpack.c.h.b16 %v838
        %v1972 = vunpack.c.l.b16 %v839
        %v1973 = vunpack.c.h.b16 %v839
        %v1974 = vunpack.c.l.b16 %v840
        %v1975 = vunpack.c.h.b16 %v840
        %v1976 = vunpack.c.l.b16 %v841
        %v1977 = vunpack.c.h.b16 %v841
        %v1978 = vunpack.c.l.b16 %v842
        %v1979 = vunpack.c.h.b16 %v842
        %v1980 = vunpack.c.l.b16 %v843
        %v1981 = vunpack.c.h.b16 %v843
        %v1982 = vunpack.c.l.b16 %v844
        %v1983 = vunpack.c.h.b16 %v844
        %v1984 = vunpack.c.l.b16 %v845
        %v1985 = vunpack.c.h.b16 %v845
        %v1986 = vunpack.c.l.b16 %v846
        %v1987 = vunpack.c.h.b16 %v846
        %v1988 = vunpack.c.l.b16 %v847
        %v1989 = vunpack.c.h.b16 %v847
        %v1990 = vunpack.c.l.b16 %v848
        %v1991 = vunpack.c.h.b16 %v848
        %v1992 = vunpack.c.l.b16 %v849
        %v1993 = vunpack.c.h.b16 %v849
        %v1994 = vunpack.c.l.b16 %v850
        %v1995 = vunpack.c.h.b16 %v850
        %v1996 = vunpack.c.l.b16 %v851
        %v1997 = vunpack.c.h.b16 %v851
        %v1998 = vunpack.c.l.b16 %v852
        %v1999 = vunpack.c.h.b16 %v852
        %v2000 = vunpack.c.l.b16 %v853
        %v2001 = vunpack.c.h.b16 %v853
        %v2002 = vunpack.c.l.b16 %v854
        %v2003 = vunpack.c.h.b16 %v854
        %v2004 = vunpack.c.l.b16 %v855
        %v2005 = vunpack.c.h.b16 %v855
        %v2006 = vunpack.c.l.b16 %v856
        %v2007 = vunpack.c.h.b16 %v856
        %v2008 = vunpack.c.l.b16 %v857
        %v2009 = vunpack.c.h.b16 %v857
        %v2010 = vunpack.c.l.b16 %v858
        %v2011 = vunpack.c.h.b16 %v858
        %v2012 = vunpack.c.l.b16 %v859
        %v2013 = vunpack.c.h.b16 %v859
        %v2014 = vunpack.c.l.b16 %v860
        %v2015 = vunpack.c.h.b16 %v860
        %v2016 = vunpack.c.l.b16 %v861
        %v2017 = vunpack.c.h.b16 %v861
        %v2018 = vunpack.c.l.b16 %v862
        %v2019 = vunpack.c.h.b16 %v862
        %v2020 = vunpack.c.l.b16 %v863
        %v2021 = vunpack.c.h.b16 %v863
        %v2022 = vunpack.c.l.b16 %v864
        %v2023 = vunpack.c.h.b16 %v864
        %v2024 = vunpack.c.l.b16 %v865
        %v2025 = vunpack.c.h.b16 %v865
        %v2026 = vunpack.c.l.b16 %v866
        %v2027 = vunpack.c.h.b16 %v866
        %v2028 = vunpack.c.l.b16 %v867
        %v2029 = vunpack.c.h.b16 %v867
        %v2030 = vunpack.c.l.b16 %v868
        %v2031 = vunpack.c.h.b16 %v868
        %v2032 = vunpack.c.l.b16 %v869
        %v2033 = vunpack.c.h.b16 %v869
        %v2034 = vunpack.c.l.b16 %v870
        %v2035 = vunpack.c.h.b16 %v870
        %v2036 = vunpack.c.l.b16 %v871
        %v2037 = vunpack.c.h.b16 %v871
        %v2038 = vunpack.c.l.b16 %v872
        %v2039 = vunpack.c.h.b16 %v872
        %v2040 = vunpack.c.l.b16 %v873
        %v2041 = vunpack.c.h.b16 %v873
        %v2042 = vunpack.c.l.b16 %v874
        %v2043 = vunpack.c.h.b16 %v874
        %v2044 = vunpack.c.l.b16 %v875
        %v2045 = vunpack.c.h.b16 %v875
        %v2046 = vunpack.c.l.b16 %v876
        %v2047 = vunpack.c.h.b16 %v876
        %v2048 = vunpack.c.l.b16 %v877
        %v2049 = vunpack.c.h.b16 %v877
        %v2050 = vunpack.c.l.b16 %v878
        %v2051 = vunpack.c.h.b16 %v878
        %v2052 = vunpack.c.l.b16 %v879
        %v2053 = vunpack.c.h.b16 %v879
        %v2054 = vunpack.c.l.b16 %v880
        %v2055 = vunpack.c.h.b16 %v880
        %v2056 = vunpack.c.l.b16 %v881
        %v2057 = vunpack.c.h.b16 %v881
        %v2058 = vunpack.c.l.b16 %v882
        %v2059 = vunpack.c.h.b16 %v882
        %v2060 = vunpack.c.l.b16 %v883
        %v2061 = vunpack.c.h.b16 %v883
        %v2062 = vunpack.c.l.b16 %v884
        %v2063 = vunpack.c.h.b16 %v884
        %v2064 = vunpack.c.l.b16 %v885
        %v2065 = vunpack.c.h.b16 %v885
        %v2066 = vunpack.c.l.b16 %v886
        %v2067 = vunpack.c.h.b16 %v886
        %v2068 = vunpack.c.l.b16 %v887
        %v2069 = vunpack.c.h.b16 %v887
        %v2070 = vunpack.c.l.b16 %v888
        %v2071 = vunpack.c.h.b16 %v888
        %v2072 = vunpack.c.l.b16 %v889
        %v2073 = vunpack.c.h.b16 %v889
        %v2074 = vunpack.c.l.b16 %v890
        %v2075 = vunpack.c.h.b16 %v890
        %v2076 = vunpack.c.l.b16 %v891
        %v2077 = vunpack.c.h.b16 %v891
        %v2078 = vunpack.c.l.b16 %v892
        %v2079 = vunpack.c.h.b16 %v892
        %v2080 = vunpack.c.l.b16 %v893
        %v2081 = vunpack.c.h.b16 %v893
        %v2082 = vunpack.c.l.b16 %v894
        %v2083 = vunpack.c.h.b16 %v894
        %v2084 = vunpack.c.l.b16 %v895
        %v2085 = vunpack.c.h.b16 %v895
        %v2086 = vunpack.c.l.b16 %v896
        %v2087 = vunpack.c.h.b16 %v896
        %v2088 = vunpack.c.l.b16 %v897
        %v2089 = vunpack.c.h.b16 %v897
        %v2090 = vunpack.c.l.b16 %v898
        %v2091 = vunpack.c.h.b16 %v898
        %v2092 = vunpack.c.l.b16 %v899
        %v2093 = vunpack.c.h.b16 %v899
        %v2094 = vunpack.c.l.b16 %v900
        %v2095 = vunpack.c.h.b16 %v900
        %v2096 = vunpack.c.l.b16 %v901
        %v2097 = vunpack.c.h.b16 %v901
        %v2098 = vunpack.c.l.b16 %v902
        %v2099 = vunpack.c.h.b16 %v902
        %v2100 = vunpack.c.l.b16 %v903
        %v2101 = vunpack.c.h.b16 %v903
        %v2102 = vunpack.c.l.b16 %v904
        %v2103 = vunpack.c.h.b16 %v904
        %v2104 = vunpack.c.l.b16 %v905
        %v2105 = vunpack.c.h.b16 %v905
        %v2106 = vunpack.c.l.b16 %v906
        %v2107 = vunpack.c.h.b16 %v906
        %v2108 = vunpack.c.l.b16 %v907
        %v2109 = vunpack.c.h.b16 %v907
        %v2110 = vunpack.c.l.b16 %v908
        %v2111 = vunpack.c.h.b16 %v908
        %v2112 = vunpack.c.l.b16 %v909
        %v2113 = vunpack.c.h.b16 %v909
        %v2114 = vunpack.c.l.b16 %v910
        %v2115 = vunpack.c.h.b16 %v910
        %v2116 = vunpack.c.l.b16 %v911
        %v2117 = vunpack.c.h.b16 %v911
        %v2118 = vunpack.c.l.b16 %v912
        %v2119 = vunpack.c.h.b16 %v912
        %v2120 = vunpack.c.l.b16 %v913
        %v2121 = vunpack.c.h.b16 %v913
        %v2122 = vunpack.c.l.b16 %v914
        %v2123 = vunpack.c.h.b16 %v914
        %v2124 = vunpack.c.l.b16 %v915
        %v2125 = vunpack.c.h.b16 %v915
        %v2126 = vunpack.c.l.b16 %v916
        %v2127 = vunpack.c.h.b16 %v916
        %v2128 = vunpack.c.l.b16 %v917
        %v2129 = vunpack.c.h.b16 %v917
        %v2130 = vunpack.c.l.b16 %v918
        %v2131 = vunpack.c.h.b16 %v918
        %v2132 = vunpack.c.l.b16 %v919
        %v2133 = vunpack.c.h.b16 %v919
        %v2134 = vunpack.c.l.b16 %v920
        %v2135 = vunpack.c.h.b16 %v920
        %v2136 = vunpack.c.l.b16 %v921
        %v2137 = vunpack.c.h.b16 %v921
        %v2138 = vunpack.c.l.b16 %v922
        %v2139 = vunpack.c.h.b16 %v922
        %v2140 = vunpack.c.l.b16 %v923
        %v2141 = vunpack.c.h.b16 %v923
        %v2142 = vunpack.c.l.b16 %v924
        %v2143 = vunpack.c.h.b16 %v924
        %v2144 = vunpack.c.l.b16 %v925
        %v2145 = vunpack.c.h.b16 %v925
        %v2146 = vunpack.c.l.b16 %v926
        %v2147 = vunpack.c.h.b16 %v926
        %v2148 = vunpack.c.l.b16 %v927
        %v2149 = vunpack.c.h.b16 %v927
        %v2150 = vunpack.c.l.b16 %v928
        %v2151 = vunpack.c.h.b16 %v928
        %v2152 = vunpack.c.l.b16 %v929
        %v2153 = vunpack.c.h.b16 %v929
        %v2154 = vunpack.c.l.b16 %v930
        %v2155 = vunpack.c.h.b16 %v930
        %v2156 = vunpack.c.l.b16 %v931
        %v2157 = vunpack.c.h.b16 %v931
        %v2158 = vunpack.c.l.b16 %v932
        %v2159 = vunpack.c.h.b16 %v932
        %v2160 = vunpack.c.l.b16 %v933
        %v2161 = vunpack.c.h.b16 %v933
        %v2162 = vunpack.c.l.b16 %v934
        %v2163 = vunpack.c.h.b16 %v934
        %v2164 = vunpack.c.l.b16 %v935
        %v2165 = vunpack.c.h.b16 %v935
        %v2166 = vunpack.c.l.b16 %v936
        %v2167 = vunpack.c.h.b16 %v936
        %v2168 = vunpack.c.l.b16 %v937
        %v2169 = vunpack.c.h.b16 %v937
        %v2170 = vunpack.c.l.b16 %v938
        %v2171 = vunpack.c.h.b16 %v938
        %v2172 = vunpack.c.l.b16 %v939
        %v2173 = vunpack.c.h.b16 %v939
        %v2174 = vunpack.c.l.b16 %v940
        %v2175 = vunpack.c.h.b16 %v940
        %v2176 = vunpack.c.l.b16 %v941
        %v2177 = vunpack.c.h.b16 %v941
        %v2178 = vunpack.c.l.b16 %v942
        %v2179 = vunpack.c.h.b16 %v942
        %v2180 = vunpack.c.l.b16 %v943
        %v2181 = vunpack.c.h.b16 %v943
        %v2182 = vunpack.c.l.b16 %v944
        %v2183 = vunpack.c.h.b16 %v944
        %v2184 = vunpack.c.l.b16 %v945
        %v2185 = vunpack.c.h.b16 %v945
        %v2186 = vunpack.c.l.b16 %v946
        %v2187 = vunpack.c.h.b16 %v946
        %v2188 = vunpack.c.l.b16 %v947
        %v2189 = vunpack.c.h.b16 %v947
        %v2190 = vunpack.c.l.b16 %v948
        %v2191 = vunpack.c.h.b16 %v948
        %v2192 = vunpack.c.l.b16 %v949
        %v2193 = vunpack.c.h.b16 %v949
        %v2194 = vunpack.c.l.b16 %v950
        %v2195 = vunpack.c.h.b16 %v950
        %v2196 = vunpack.c.l.b16 %v951
        %v2197 = vunpack.c.h.b16 %v951
        %v2198 = vunpack.c.l.b16 %v952
        %v2199 = vunpack.c.h.b16 %v952
        %v2200 = vunpack.c.l.b16 %v953
        %v2201 = vunpack.c.h.b16 %v953
        %v2202 = vunpack.c.l.b16 %v954
        %v2203 = vunpack.c.h.b16 %v954
        %v2204 = vunpack.c.l.b16 %v955
        %v2205 = vunpack.c.h.b16 %v955
        %v2206 = vunpack.c.l.b16 %v956
        %v2207 = vunpack.c.h.b16 %v956
        %v2208 = vunpack.c.l.b16 %v957
        %v2209 = vunpack.c.h.b16 %v957
        %v2210 = vunpack.c.l.b16 %v958
        %v2211 = vunpack.c.h.b16 %v958
        %v2212 = vunpack.c.l.b16 %v959
        %v2213 = vunpack.c.h.b16 %v959
        %v2214 = vunpack.c.l.b16 %v960
        %v2215 = vunpack.c.h.b16 %v960
        %v2216 = vunpack.c.l.b16 %v961
        %v2217 = vunpack.c.h.b16 %v961
        %v2218 = vunpack.c.l.b16 %v962
        %v2219 = vunpack.c.h.b16 %v962
        %v2220 = vunpack.c.l.b16 %v963
        %v2221 = vunpack.c.h.b16 %v963
        %v2222 = vunpack.c.l.b16 %v964
        %v2223 = vunpack.c.h.b16 %v964
        %v2224 = vunpack.c.l.b16 %v965
        %v2225 = vunpack.c.h.b16 %v965
        %v2226 = vunpack.c.l.b16 %v966
        %v2227 = vunpack.c.h.b16 %v966
        %v2228 = vunpack.c.l.b16 %v967
        %v2229 = vunpack.c.h.b16 %v967
        %v2230 = vunpack.c.l.b16 %v968
        %v2231 = vunpack.c.h.b16 %v968
        %v2232 = vunpack.c.l.b16 %v969
        %v2233 = vunpack.c.h.b16 %v969
        %v2234 = vunpack.c.l.b16 %v970
        %v2235 = vunpack.c.h.b16 %v970
        %v2236 = vunpack.c.l.b16 %v971
        %v2237 = vunpack.c.h.b16 %v971
        %v2238 = vunpack.c.l.b16 %v972
        %v2239 = vunpack.c.h.b16 %v972
        %v2240 = vunpack.c.l.b16 %v973
        %v2241 = vunpack.c.h.b16 %v973
        %v2242 = vunpack.c.l.b16 %v974
        %v2243 = vunpack.c.h.b16 %v974
        %v2244 = vunpack.c.l.b16 %v975
        %v2245 = vunpack.c.h.b16 %v975
        %v2246 = vunpack.c.l.b16 %v976
        %v2247 = vunpack.c.h.b16 %v976
        %v2248 = vunpack.c.l.b16 %v977
        %v2249 = vunpack.c.h.b16 %v977
        %v2250 = vunpack.c.l.b16 %v978
        %v2251 = vunpack.c.h.b16 %v978
        %v2252 = vunpack.c.l.b16 %v979
        %v2253 = vunpack.c.h.b16 %v979
        %v2254 = vunpack.c.l.b16 %v980
        %v2255 = vunpack.c.h.b16 %v980
        %v2256 = vunpack.c.l.b16 %v981
        %v2257 = vunpack.c.h.b16 %v981
        %v2258 = vunpack.c.l.b16 %v982
        %v2259 = vunpack.c.h.b16 %v982
        %v2260 = vunpack.c.l.b16 %v983
        %v2261 = vunpack.c.h.b16 %v983
        %v2262 = vunpack.c.l.b16 %v984
        %v2263 = vunpack.c.h.b16 %v984
        %v2264 = vunpack.c.l.b16 %v985
        %v2265 = vunpack.c.h.b16 %v985
        %v2266 = vunpack.c.l.b16 %v986
        %v2267 = vunpack.c.h.b16 %v986
        %v2268 = vunpack.c.l.b16 %v987
        %v2269 = vunpack.c.h.b16 %v987
        %v2270 = vunpack.c.l.b16 %v988
        %v2271 = vunpack.c.h.b16 %v988
        %v2272 = vunpack.c.l.b16 %v989
        %v2273 = vunpack.c.h.b16 %v989
        %v2274 = vunpack.c.l.b16 %v990
        %v2275 = vunpack.c.h.b16 %v990
        %v2276 = vunpack.c.l.b16 %v991
        %v2277 = vunpack.c.h.b16 %v991
        %v2278 = vunpack.c.l.b16 %v992
        %v2279 = vunpack.c.h.b16 %v992
        %v2280 = vunpack.c.l.b16 %v993
        %v2281 = vunpack.c.h.b16 %v993
        %v2282 = vunpack.c.l.b16 %v994
        %v2283 = vunpack.c.h.b16 %v994
        %v2284 = vunpack.c.l.b16 %v995
        %v2285 = vunpack.c.h.b16 %v995
        %v2286 = vunpack.c.l.b16 %v996
        %v2287 = vunpack.c.h.b16 %v996
        %v2288 = vunpack.c.l.b16 %v997
        %v2289 = vunpack.c.h.b16 %v997
        %v2290 = vunpack.c.l.b16 %v998
        %v2291 = vunpack.c.h.b16 %v998
        %v2292 = vunpack.c.l.b16 %v999
        %v2293 = vunpack.c.h.b16 %v999
        %v2294 = vunpack.c.l.b16 %v1000
        %v2295 = vunpack.c.h.b16 %v1000
        %v2296 = vunpack.c.l.b16 %v1001
        %v2297 = vunpack.c.h.b16 %v1001
        %v2298 = vunpack.c.l.b16 %v1002
        %v2299 = vunpack.c.h.b16 %v1002
        %v2300 = vunpack.c.l.b16 %v1003
        %v2301 = vunpack.c.h.b16 %v1003
        %v2302 = vunpack.c.l.b16 %v1004
        %v2303 = vunpack.c.h.b16 %v1004
        %v2304 = vunpack.c.l.b16 %v1005
        %v2305 = vunpack.c.h.b16 %v1005
        %v2306 = vunpack.c.l.b16 %v1006
        %v2307 = vunpack.c.h.b16 %v1006
        %v2308 = vunpack.c.l.b16 %v1007
        %v2309 = vunpack.c.h.b16 %v1007
        %v2310 = vunpack.c.l.b16 %v1008
        %v2311 = vunpack.c.h.b16 %v1008
        %v2312 = vunpack.c.l.b16 %v1009
        %v2313 = vunpack.c.h.b16 %v1009
        %v2314 = vunpack.c.l.b16 %v1010
        %v2315 = vunpack.c.h.b16 %v1010
        %v2316 = vunpack.c.l.b16 %v1011
        %v2317 = vunpack.c.h.b16 %v1011
        %v2318 = vunpack.c.l.b16 %v1012
        %v2319 = vunpack.c.h.b16 %v1012
        %v2320 = vunpack.c.l.b16 %v1013
        %v2321 = vunpack.c.h.b16 %v1013
        %v2322 = vunpack.c.l.b16 %v1014
        %v2323 = vunpack.c.h.b16 %v1014
        %v2324 = vunpack.c.l.b16 %v1015
        %v2325 = vunpack.c.h.b16 %v1015
        %v2326 = vunpack.c.l.b16 %v1016
        %v2327 = vunpack.c.h.b16 %v1016
        %v2328 = vunpack.c.l.b16 %v1017
        %v2329 = vunpack.c.h.b16 %v1017
        %v2330 = vunpack.c.l.b16 %v1018
        %v2331 = vunpack.c.h.b16 %v1018
        %v2332 = vunpack.c.l.b16 %v1019
        %v2333 = vunpack.c.h.b16 %v1019
        %v2334 = vunpack.c.l.b16 %v1020
        %v2335 = vunpack.c.h.b16 %v1020
        %v2336 = vunpack.c.l.b16 %v1021
        %v2337 = vunpack.c.h.b16 %v1021
        %v2338 = vunpack.c.l.b16 %v1022
        %v2339 = vunpack.c.h.b16 %v1022
        %v2340 = vunpack.c.l.b16 %v1023
        %v2341 = vunpack.c.h.b16 %v1023
        %v2342 = vunpack.c.l.b16 %v1024
        %v2343 = vunpack.c.h.b16 %v1024
        %v2344 = vunpack.c.l.b16 %v1025
        %v2345 = vunpack.c.h.b16 %v1025
        %v2346 = vunpack.c.l.b16 %v1026
        %v2347 = vunpack.c.h.b16 %v1026
        %v2348 = vunpack.c.l.b16 %v1027
        %v2349 = vunpack.c.h.b16 %v1027
        %v2350 = vunpack.c.l.b16 %v1028
        %v2351 = vunpack.c.h.b16 %v1028
        %v2352 = vunpack.c.l.b16 %v1029
        %v2353 = vunpack.c.h.b16 %v1029
        %v2354 = vunpack.c.l.b16 %v1030
        %v2355 = vunpack.c.h.b16 %v1030
        %v2356 = vunpack.c.l.b16 %v1031
        %v2357 = vunpack.c.h.b16 %v1031
        %v2358 = vunpack.c.l.b16 %v1032
        %v2359 = vunpack.c.h.b16 %v1032
        %v2360 = vunpack.c.l.b16 %v1033
        %v2361 = vunpack.c.h.b16 %v1033
        %v2362 = vunpack.c.l.b16 %v1034
        %v2363 = vunpack.c.h.b16 %v1034
        %v2364 = vunpack.c.l.b16 %v1035
        %v2365 = vunpack.c.h.b16 %v1035
        %v2366 = vunpack.c.l.b16 %v1036
        %v2367 = vunpack.c.h.b16 %v1036
        %v2368 = vunpack.c.l.b16 %v1037
        %v2369 = vunpack.c.h.b16 %v1037
        %v2370 = vunpack.c.l.b16 %v1038
        %v2371 = vunpack.c.h.b16 %v1038
        %v2372 = vunpack.c.l.b16 %v1039
        %v2373 = vunpack.c.h.b16 %v1039
        %v2374 = vunpack.c.l.b16 %v1040
        %v2375 = vunpack.c.h.b16 %v1040
        %v2376 = vunpack.c.l.b16 %v1041
        %v2377 = vunpack.c.h.b16 %v1041
        %v2378 = vunpack.c.l.b16 %v1042
        %v2379 = vunpack.c.h.b16 %v1042
        %v2380 = vunpack.c.l.b16 %v1043
        %v2381 = vunpack.c.h.b16 %v1043
        %v2382 = vunpack.c.l.b16 %v1044
        %v2383 = vunpack.c.h.b16 %v1044
        %v2384 = vunpack.c.l.b16 %v1045
        %v2385 = vunpack.c.h.b16 %v1045
        %v2386 = vunpack.c.l.b16 %v1046
        %v2387 = vunpack.c.h.b16 %v1046
        %v2388 = vunpack.c.l.b16 %v1047
        %v2389 = vunpack.c.h.b16 %v1047
        %v2390 = vunpack.c.l.b16 %v1048
        %v2391 = vunpack.c.h.b16 %v1048
        %v2392 = vunpack.c.l.b16 %v1049
        %v2393 = vunpack.c.h.b16 %v1049
        %v2394 = vunpack.c.l.b16 %v1050
        %v2395 = vunpack.c.h.b16 %v1050
        %v2396 = vunpack.c.l.b16 %v1051
        %v2397 = vunpack.c.h.b16 %v1051
        %v2398 = vunpack.c.l.b16 %v1052
        %v2399 = vunpack.c.h.b16 %v1052
        %v2400 = vunpack.c.l.b16 %v1053
        %v2401 = vunpack.c.h.b16 %v1053
        %v2402 = vunpack.c.l.b16 %v1054
        %v2403 = vunpack.c.h.b16 %v1054
        %v2404 = vunpack.c.l.b16 %v1055
        %v2405 = vunpack.c.h.b16 %v1055
        %v2406 = vunpack.c.l.b16 %v1056
        %v2407 = vunpack.c.h.b16 %v1056
        %v2408 = vunpack.c.l.b16 %v1057
        %v2409 = vunpack.c.h.b16 %v1057
        %v2410 = vunpack.c.l.b16 %v1058
        %v2411 = vunpack.c.h.b16 %v1058
        %v2412 = vunpack.c.l.b16 %v1059
        %v2413 = vunpack.c.h.b16 %v1059
        %v2414 = vunpack.c.l.b16 %v1060
        %v2415 = vunpack.c.h.b16 %v1060
        %v2416 = vunpack.c.l.b16 %v1061
        %v2417 = vunpack.c.h.b16 %v1061
        %v2418 = vunpack.c.l.b16 %v1062
        %v2419 = vunpack.c.h.b16 %v1062
        %v2420 = vunpack.c.l.b16 %v1063
        %v2421 = vunpack.c.h.b16 %v1063
        %v2422 = vunpack.c.l.b16 %v1064
        %v2423 = vunpack.c.h.b16 %v1064
        %v2424 = vunpack.c.l.b16 %v1065
        %v2425 = vunpack.c.h.b16 %v1065
        %v2426 = vunpack.c.l.b16 %v1066
        %v2427 = vunpack.c.h.b16 %v1066
        %v2428 = vunpack.c.l.b16 %v1067
        %v2429 = vunpack.c.h.b16 %v1067
        %v2430 = vunpack.c.l.b16 %v1068
        %v2431 = vunpack.c.h.b16 %v1068
        %v2432 = vunpack.c.l.b16 %v1069
        %v2433 = vunpack.c.h.b16 %v1069
        %v2434 = vunpack.c.l.b16 %v1070
        %v2435 = vunpack.c.h.b16 %v1070
        %v2436 = vunpack.c.l.b16 %v1071
        %v2437 = vunpack.c.h.b16 %v1071
        %v2438 = vunpack.c.l.b16 %v1072
        %v2439 = vunpack.c.h.b16 %v1072
        %v2440 = vunpack.c.l.b16 %v1073
        %v2441 = vunpack.c.h.b16 %v1073
        %v2442 = vunpack.c.l.b16 %v1074
        %v2443 = vunpack.c.h.b16 %v1074
        %v2444 = vunpack.c.l.b16 %v1075
        %v2445 = vunpack.c.h.b16 %v1075
        %v2446 = vunpack.c.l.b16 %v1076
        %v2447 = vunpack.c.h.b16 %v1076
        %v2448 = vunpack.c.l.b16 %v1077
        %v2449 = vunpack.c.h.b16 %v1077
        %v2450 = vunpack.c.l.b16 %v1078
        %v2451 = vunpack.c.h.b16 %v1078
        %v2452 = vunpack.c.l.b16 %v1079
        %v2453 = vunpack.c.h.b16 %v1079
        %v2454 = vunpack.c.l.b16 %v1080
        %v2455 = vunpack.c.h.b16 %v1080
        %v2456 = vunpack.c.l.b16 %v1081
        %v2457 = vunpack.c.h.b16 %v1081
        %v2458 = vunpack.c.l.b16 %v1082
        %v2459 = vunpack.c.h.b16 %v1082
        %v2460 = vunpack.c.l.b16 %v1083
        %v2461 = vunpack.c.h.b16 %v1083
        %v2462 = vunpack.c.l.b16 %v1084
        %v2463 = vunpack.c.h.b16 %v1084
        %v2464 = vunpack.c.l.b16 %v1085
        %v2465 = vunpack.c.h.b16 %v1085
        %v2466 = vunpack.c.l.b16 %v1086
        %v2467 = vunpack.c.h.b16 %v1086
        %v2468 = vunpack.c.l.b16 %v1087
        %v2469 = vunpack.c.h.b16 %v1087
        %v2470 = vunpack.c.l.b16 %v1088
        %v2471 = vunpack.c.h.b16 %v1088
        %v2472 = vunpack.c.l.b16 %v1089
        %v2473 = vunpack.c.h.b16 %v1089
        %v2474 = vunpack.c.l.b16 %v1090
        %v2475 = vunpack.c.h.b16 %v1090
        %v2476 = vunpack.c.l.b16 %v1091
        %v2477 = vunpack.c.h.b16 %v1091
        %v2478 = vunpack.c.l.b16 %v1092
        %v2479 = vunpack.c.h.b16 %v1092
        %v2480 = vunpack.c.l.b16 %v1093
        %v2481 = vunpack.c.h.b16 %v1093
        %v2482 = vunpack.c.l.b16 %v1094
        %v2483 = vunpack.c.h.b16 %v1094
        %v2484 = vunpack.c.l.b16 %v1095
        %v2485 = vunpack.c.h.b16 %v1095
        %v2486 = vunpack.c.l.b16 %v1096
        %v2487 = vunpack.c.h.b16 %v1096
        %v2488 = vunpack.c.l.b16 %v1097
        %v2489 = vunpack.c.h.b16 %v1097
        %v2490 = vunpack.c.l.b16 %v1098
        %v2491 = vunpack.c.h.b16 %v1098
        %v2492 = vunpack.c.l.b16 %v1099
        %v2493 = vunpack.c.h.b16 %v1099
        %v2494 = vunpack.c.l.b16 %v1100
        %v2495 = vunpack.c.h.b16 %v1100
        %v2496 = vunpack.c.l.b16 %v1101
        %v2497 = vunpack.c.h.b16 %v1101
        %v2498 = vunpack.c.l.b16 %v1102
        %v2499 = vunpack.c.h.b16 %v1102
        %v2500 = vunpack.c.l.b16 %v1103
        %v2501 = vunpack.c.h.b16 %v1103
        %v2502 = vunpack.c.l.b16 %v1104
        %v2503 = vunpack.c.h.b16 %v1104
        %v2504 = vunpack.c.l.b16 %v1105
        %v2505 = vunpack.c.h.b16 %v1105
        %v2506 = vunpack.c.l.b16 %v1106
        %v2507 = vunpack.c.h.b16 %v1106
        %v2508 = vunpack.c.l.b16 %v1107
        %v2509 = vunpack.c.h.b16 %v1107
        %v2510 = vunpack.c.l.b16 %v1108
        %v2511 = vunpack.c.h.b16 %v1108
        %v2512 = vunpack.c.l.b16 %v1109
        %v2513 = vunpack.c.h.b16 %v1109
        %v2514 = vunpack.c.l.b16 %v1110
        %v2515 = vunpack.c.h.b16 %v1110
        %v2516 = vunpack.c.l.b16 %v1111
        %v2517 = vunpack.c.h.b16 %v1111
        %v2518 = vunpack.c.l.b16 %v1112
        %v2519 = vunpack.c.h.b16 %v1112
        %v2520 = vunpack.c.l.b16 %v1113
        %v2521 = vunpack.c.h.b16 %v1113
        %v2522 = vunpack.c.l.b16 %v1114
        %v2523 = vunpack.c.h.b16 %v1114
        %v2524 = vunpack.c.l.b16 %v1115
        %v2525 = vunpack.c.h.b16 %v1115
        %v2526 = vunpack.c.l.b16 %v1116
        %v2527 = vunpack.c.h.b16 %v1116
        %v2528 = vunpack.c.l.b16 %v1117
        %v2529 = vunpack.c.h.b16 %v1117
        %v2530 = vunpack.c.l.b16 %v1118
        %v2531 = vunpack.c.h.b16 %v1118
        %v2532 = vunpack.c.l.b16 %v1119
        %v2533 = vunpack.c.h.b16 %v1119
        %v2534 = vunpack.c.l.b16 %v1120
        %v2535 = vunpack.c.h.b16 %v1120
        %v2536 = vunpack.c.l.b16 %v1121
        %v2537 = vunpack.c.h.b16 %v1121
        %v2538 = vunpack.c.l.b16 %v1122
        %v2539 = vunpack.c.h.b16 %v1122
        %v2540 = vunpack.c.l.b16 %v1123
        %v2541 = vunpack.c.h.b16 %v1123
        %v2542 = vunpack.c.l.b16 %v1124
        %v2543 = vunpack.c.h.b16 %v1124
        %v2544 = vunpack.c.l.b16 %v1125
        %v2545 = vunpack.c.h.b16 %v1125
        %v2546 = vunpack.c.l.b16 %v1126
        %v2547 = vunpack.c.h.b16 %v1126
        %v2548 = vunpack.c.l.b16 %v1127
        %v2549 = vunpack.c.h.b16 %v1127
        %v2550 = vunpack.c.l.b16 %v1128
        %v2551 = vunpack.c.h.b16 %v1128
        %v2552 = vunpack.c.l.b16 %v1129
        %v2553 = vunpack.c.h.b16 %v1129
        %v2554 = vunpack.c.l.b16 %v1130
        %v2555 = vunpack.c.h.b16 %v1130
        %v2556 = vunpack.c.l.b16 %v1131
        %v2557 = vunpack.c.h.b16 %v1131
        %v2558 = vunpack.c.l.b16 %v1132
        %v2559 = vunpack.c.h.b16 %v1132
        %v2560 = vunpack.c.l.b16 %v1133
        %v2561 = vunpack.c.h.b16 %v1133
        %v2562 = vunpack.c.l.b16 %v1134
        %v2563 = vunpack.c.h.b16 %v1134
        %v2564 = vunpack.c.l.b16 %v1135
        %v2565 = vunpack.c.h.b16 %v1135
        %v2566 = vunpack.c.l.b16 %v1136
        %v2567 = vunpack.c.h.b16 %v1136
        %v2568 = vunpack.c.l.b16 %v1137
        %v2569 = vunpack.c.h.b16 %v1137
        %v2570 = vunpack.c.l.b16 %v1138
        %v2571 = vunpack.c.h.b16 %v1138
        %v2572 = vunpack.c.l.b16 %v1139
        %v2573 = vunpack.c.h.b16 %v1139
        %v2574 = vunpack.c.l.b16 %v1140
        %v2575 = vunpack.c.h.b16 %v1140
        %v2576 = vunpack.c.l.b16 %v1141
        %v2577 = vunpack.c.h.b16 %v1141
        %v2578 = vunpack.c.l.b16 %v1142
        %v2579 = vunpack.c.h.b16 %v1142
        %v2580 = vunpack.c.l.b16 %v1143
        %v2581 = vunpack.c.h.b16 %v1143
        %v2582 = vunpack.c.l.b16 %v1144
        %v2583 = vunpack.c.h.b16 %v1144
        %v2584 = vunpack.c.l.b16 %v1145
        %v2585 = vunpack.c.h.b16 %v1145
        %v2586 = vunpack.c.l.b16 %v1146
        %v2587 = vunpack.c.h.b16 %v1146
        %v2588 = vunpack.c.l.b16 %v1147
        %v2589 = vunpack.c.h.b16 %v1147
        %v2590 = vunpack.c.l.b16 %v1148
        %v2591 = vunpack.c.h.b16 %v1148
        %v2592 = vunpack.c.l.b16 %v1149
        %v2593 = vunpack.c.h.b16 %v1149
        %v2594 = vunpack.c.l.b16 %v1150
        %v2595 = vunpack.c.h.b16 %v1150
        %v2596 = vunpack.c.l.b16 %v1151
        %v2597 = vunpack.c.h.b16 %v1151
        %v2598 = vunpack.c.l.b16 %v1152
        %v2599 = vunpack.c.h.b16 %v1152
        %v2600 = vunpack.c.l.b16 %v1153
        %v2601 = vunpack.c.h.b16 %v1153
        %v2602 = vunpack.c.l.b16 %v1154
        %v2603 = vunpack.c.h.b16 %v1154
        %v2604 = vunpack.c.l.b16 %v1155
        %v2605 = vunpack.c.h.b16 %v1155
        %v2606 = vunpack.c.l.b16 %v1156
        %v2607 = vunpack.c.h.b16 %v1156
        %v2608 = vunpack.c.l.b16 %v1157
        %v2609 = vunpack.c.h.b16 %v1157
        %v2610 = vunpack.c.l.b16 %v1158
        %v2611 = vunpack.c.h.b16 %v1158
        %v2612 = vunpack.c.l.b16 %v1159
        %v2613 = vunpack.c.h.b16 %v1159
        %v2614 = vunpack.c.l.b16 %v1160
        %v2615 = vunpack.c.h.b16 %v1160
        %v2616 = vunpack.c.l.b16 %v1161
        %v2617 = vunpack.c.h.b16 %v1161
        %v2618 = vunpack.c.l.b16 %v1162
        %v2619 = vunpack.c.h.b16 %v1162
        %v2620 = vunpack.c.l.b16 %v1163
        %v2621 = vunpack.c.h.b16 %v1163
        %v2622 = vunpack.c.l.b16 %v1164
        %v2623 = vunpack.c.h.b16 %v1164
        %v2624 = vunpack.c.l.b16 %v1165
        %v2625 = vunpack.c.h.b16 %v1165
        %v2626 = vunpack.c.l.b16 %v1166
        %v2627 = vunpack.c.h.b16 %v1166
        %v2628 = vunpack.c.l.b16 %v1167
        %v2629 = vunpack.c.h.b16 %v1167
        %v2630 = vunpack.c.l.b16 %v1168
        %v2631 = vunpack.c.h.b16 %v1168
        %v2632 = vunpack.c.l.b16 %v1169
        %v2633 = vunpack.c.h.b16 %v1169
        %v2634 = vunpack.c.l.b16 %v1170
        %v2635 = vunpack.c.h.b16 %v1170
        %v2636 = vunpack.c.l.b16 %v1171
        %v2637 = vunpack.c.h.b16 %v1171
        %v2638 = vunpack.c.l.b16 %v1172
        %v2639 = vunpack.c.h.b16 %v1172
        %v2640 = vunpack.c.l.b16 %v1173
        %v2641 = vunpack.c.h.b16 %v1173
        %v2642 = vunpack.c.l.b16 %v1174
        %v2643 = vunpack.c.h.b16 %v1174
        %v2644 = vunpack.c.l.b16 %v1175
        %v2645 = vunpack.c.h.b16 %v1175
        %v2646 = vunpack.c.l.b16 %v1176
        %v2647 = vunpack.c.h.b16 %v1176
        %v2648 = vunpack.c.l.b16 %v1177
        %v2649 = vunpack.c.h.b16 %v1177
        %v2650 = vunpack.c.l.b16 %v1178
        %v2651 = vunpack.c.h.b16 %v1178
        %v2652 = vunpack.c.l.b16 %v1179
        %v2653 = vunpack.c.h.b16 %v1179
        %v2654 = vunpack.c.l.b16 %v1180
        %v2655 = vunpack.c.h.b16 %v1180
        %v2656 = vunpack.c.l.b16 %v1181
        %v2657 = vunpack.c.h.b16 %v1181
        %v2658 = vunpack.c.l.b16 %v1182
        %v2659 = vunpack.c.h.b16 %v1182
        %v2660 = vunpack.c.l.b16 %v1183
        %v2661 = vunpack.c.h.b16 %v1183
        %v2662 = vunpack.c.l.b16 %v1184
        %v2663 = vunpack.c.h.b16 %v1184
        %v2664 = vunpack.c.l.b16 %v1185
        %v2665 = vunpack.c.h.b16 %v1185
        %v2666 = vunpack.c.l.b16 %v1186
        %v2667 = vunpack.c.h.b16 %v1186
        %v2668 = vunpack.c.l.b16 %v1187
        %v2669 = vunpack.c.h.b16 %v1187
        %v2670 = vunpack.c.l.b16 %v1188
        %v2671 = vunpack.c.h.b16 %v1188
        %v2672 = vunpack.c.l.b16 %v1189
        %v2673 = vunpack.c.h.b16 %v1189
        %v2674 = vunpack.c.l.b16 %v1190
        %v2675 = vunpack.c.h.b16 %v1190
        %v2676 = vunpack.c.l.b16 %v1191
        %v2677 = vunpack.c.h.b16 %v1191
        %v2678 = vunpack.c.l.b16 %v1192
        %v2679 = vunpack.c.h.b16 %v1192
        %v2680 = vunpack.c.l.b16 %v1193
        %v2681 = vunpack.c.h.b16 %v1193
        %v2682 = vunpack.c.l.b16 %v1194
        %v2683 = vunpack.c.h.b16 %v1194
        %v2684 = vunpack.c.l.b16 %v1195
        %v2685 = vunpack.c.h.b16 %v1195
        %v2686 = vunpack.c.l.b16 %v1196
        %v2687 = vunpack.c.h.b16 %v1196
        %v2688 = vunpack.c.l.b16 %v1197
        %v2689 = vunpack.c.h.b16 %v1197
        %v2690 = vunpack.c.l.b16 %v1198
        %v2691 = vunpack.c.h.b16 %v1198
        %v2692 = vunpack.c.l.b16 %v1199
        %v2693 = vunpack.c.h.b16 %v1199
        %v2694 = vunpack.c.l.b16 %v1200
        %v2695 = vunpack.c.h.b16 %v1200
        %v2696 = vunpack.c.l.b16 %v1201
        %v2697 = vunpack.c.h.b16 %v1201
        %v2698 = vunpack.c.l.b16 %v1202
        %v2699 = vunpack.c.h.b16 %v1202
        %v2700 = vunpack.c.l.b16 %v1203
        %v2701 = vunpack.c.h.b16 %v1203
        %v2702 = vunpack.c.l.b16 %v1204
        %v2703 = vunpack.c.h.b16 %v1204
        %v2704 = vunpack.c.l.b16 %v1205
        %v2705 = vunpack.c.h.b16 %v1205
        %v2706 = vunpack.c.l.b16 %v1206
        %v2707 = vunpack.c.h.b16 %v1206
        %v2708 = vunpack.c.l.b16 %v1207
        %v2709 = vunpack.c.h.b16 %v1207
        %v2710 = vunpack.c.l.b16 %v1208
        %v2711 = vunpack.c.h.b16 %v1208
        %v2712 = vunpack.c.l.b16 %v1209
        %v2713 = vunpack.c.h.b16 %v1209
        %v2714 = vunpack.c.l.b16 %v1210
        %v2715 = vunpack.c.h.b16 %v1210
        %v2716 = vunpack.c.l.b16 %v1211
        %v2717 = vunpack.c.h.b16 %v1211
        %v2718 = vunpack.c.l.b16 %v1212
        %v2719 = vunpack.c.h.b16 %v1212
        %v2720 = vunpack.c.l.b16 %v1213
        %v2721 = vunpack.c.h.b16 %v1213
        %v2722 = vunpack.c.l.b16 %v1214
        %v2723 = vunpack.c.h.b16 %v1214
        %v2724 = vunpack.c.l.b16 %v1215
        %v2725 = vunpack.c.h.b16 %v1215
        %v2726 = vunpack.c.l.b16 %v1216
        %v2727 = vunpack.c.h.b16 %v1216
        %v2728 = vunpack.c.l.b16 %v1217
        %v2729 = vunpack.c.h.b16 %v1217
        %v2730 = vunpack.c.l.b16 %v1218
        %v2731 = vunpack.c.h.b16 %v1218
        %v2732 = vunpack.c.l.b16 %v1219
        %v2733 = vunpack.c.h.b16 %v1219
        %v2734 = vunpack.c.l.b16 %v1220
        %v2735 = vunpack.c.h.b16 %v1220
        %v2736 = vunpack.c.l.b16 %v1221
        %v2737 = vunpack.c.h.b16 %v1221
        %v2738 = vunpack.c.l.b16 %v1222
        %v2739 = vunpack.c.h.b16 %v1222
        %v2740 = vunpack.c.l.b16 %v1223
        %v2741 = vunpack.c.h.b16 %v1223
        %v2742 = vunpack.c.l.b16 %v1224
        %v2743 = vunpack.c.h.b16 %v1224
        %v2744 = vunpack.c.l.b16 %v1225
        %v2745 = vunpack.c.h.b16 %v1225
        %v2746 = vunpack.c.l.b16 %v1226
        %v2747 = vunpack.c.h.b16 %v1226
        %v2748 = vunpack.c.l.b16 %v1227
        %v2749 = vunpack.c.h.b16 %v1227
        %v2750 = vunpack.c.l.b16 %v1228
        %v2751 = vunpack.c.h.b16 %v1228
        %v2752 = vunpack.c.l.b16 %v1229
        %v2753 = vunpack.c.h.b16 %v1229
        %v2754 = vunpack.c.l.b16 %v1230
        %v2755 = vunpack.c.h.b16 %v1230
        %v2756 = vunpack.c.l.b16 %v1231
        %v2757 = vunpack.c.h.b16 %v1231
        %v2758 = vunpack.c.l.b16 %v1232
        %v2759 = vunpack.c.h.b16 %v1232
        %v2760 = vunpack.c.l.b16 %v1233
        %v2761 = vunpack.c.h.b16 %v1233
        %v2762 = vunpack.c.l.b16 %v1234
        %v2763 = vunpack.c.h.b16 %v1234
        %v2764 = vunpack.c.l.b16 %v1235
        %v2765 = vunpack.c.h.b16 %v1235
        %v2766 = vunpack.c.l.b16 %v1236
        %v2767 = vunpack.c.h.b16 %v1236
        %v2768 = vunpack.c.l.b16 %v1237
        %v2769 = vunpack.c.h.b16 %v1237
        %v2770 = vunpack.c.l.b16 %v1238
        %v2771 = vunpack.c.h.b16 %v1238
        %v2772 = vunpack.c.l.b16 %v1239
        %v2773 = vunpack.c.h.b16 %v1239
        %v2774 = vunpack.c.l.b16 %v1240
        %v2775 = vunpack.c.h.b16 %v1240
        %v2776 = vunpack.c.l.b16 %v1241
        %v2777 = vunpack.c.h.b16 %v1241
        %v2778 = vunpack.c.l.b16 %v1242
        %v2779 = vunpack.c.h.b16 %v1242
        %v2780 = vunpack.c.l.b16 %v1243
        %v2781 = vunpack.c.h.b16 %v1243
        %v2782 = vunpack.c.l.b16 %v1244
        %v2783 = vunpack.c.h.b16 %v1244
        %v2784 = vunpack.c.l.b16 %v1245
        %v2785 = vunpack.c.h.b16 %v1245
        %v2786 = vunpack.c.l.b16 %v1246
        %v2787 = vunpack.c.h.b16 %v1246
        %v2788 = vunpack.c.l.b16 %v1247
        %v2789 = vunpack.c.h.b16 %v1247
        %v2790 = vunpack.c.l.b16 %v1248
        %v2791 = vunpack.c.h.b16 %v1248
        %v2792 = vunpack.c.l.b16 %v1249
        %v2793 = vunpack.c.h.b16 %v1249
        %v2794 = vunpack.c.l.b16 %v1250
        %v2795 = vunpack.c.h.b16 %v1250
        %v2796 = vunpack.c.l.b16 %v1251
        %v2797 = vunpack.c.h.b16 %v1251
        %v2798 = vunpack.c.l.b16 %v1252
        %v2799 = vunpack.c.h.b16 %v1252
        %v2800 = vunpack.c.l.b16 %v1253
        %v2801 = vunpack.c.h.b16 %v1253
        %v2802 = vunpack.c.l.b16 %v1254
        %v2803 = vunpack.c.h.b16 %v1254
        %v2804 = vunpack.c.l.b16 %v1255
        %v2805 = vunpack.c.h.b16 %v1255
        %v2806 = vunpack.c.l.b16 %v1256
        %v2807 = vunpack.c.h.b16 %v1256
        %v2808 = vunpack.c.l.b16 %v1257
        %v2809 = vunpack.c.h.b16 %v1257
        %v2810 = vunpack.c.l.b16 %v1258
        %v2811 = vunpack.c.h.b16 %v1258
        %v2812 = vunpack.c.l.b16 %v1259
        %v2813 = vunpack.c.h.b16 %v1259
        %v2814 = vunpack.c.l.b16 %v1260
        %v2815 = vunpack.c.h.b16 %v1260
        %v2816 = vunpack.c.l.b16 %v1261
        %v2817 = vunpack.c.h.b16 %v1261
        %v2818 = vunpack.c.l.b16 %v1262
        %v2819 = vunpack.c.h.b16 %v1262
        %v2820 = vpack.c.b16 %v1800, %v1796
        %v2821 = vpack.c.b16 %v1801, %v1797
        %v2822 = vpack.c.b16 %v1802, %v1798
        %v2823 = vpack.c.b16 %v1803, %v1799
        %v2824 = vpack.c.b16 %v1808, %v1804
        %v2825 = vpack.c.b16 %v1809, %v1805
        %v2826 = vpack.c.b16 %v1810, %v1806
        %v2827 = vpack.c.b16 %v1811, %v1807
        %v2828 = vpack.c.b16 %v1816, %v1812
        %v2829 = vpack.c.b16 %v1817, %v1813
        %v2830 = vpack.c.b16 %v1818, %v1814
        %v2831 = vpack.c.b16 %v1819, %v1815
        %v2832 = vpack.c.b16 %v1824, %v1820
        %v2833 = vpack.c.b16 %v1825, %v1821
        %v2834 = vpack.c.b16 %v1826, %v1822
        %v2835 = vpack.c.b16 %v1827, %v1823
        %v2836 = vpack.c.b16 %v1832, %v1828
        %v2837 = vpack.c.b16 %v1833, %v1829
        %v2838 = vpack.c.b16 %v1834, %v1830
        %v2839 = vpack.c.b16 %v1835, %v1831
        %v2840 = vpack.c.b16 %v1840, %v1836
        %v2841 = vpack.c.b16 %v1841, %v1837
        %v2842 = vpack.c.b16 %v1842, %v1838
        %v2843 = vpack.c.b16 %v1843, %v1839
        %v2844 = vpack.c.b16 %v1848, %v1844
        %v2845 = vpack.c.b16 %v1849, %v1845
        %v2846 = vpack.c.b16 %v1850, %v1846
        %v2847 = vpack.c.b16 %v1851, %v1847
        %v2848 = vpack.c.b16 %v1856, %v1852
        %v2849 = vpack.c.b16 %v1857, %v1853
        %v2850 = vpack.c.b16 %v1858, %v1854
        %v2851 = vpack.c.b16 %v1859, %v1855
        %v2852 = vpack.c.b16 %v1864, %v1860
        %v2853 = vpack.c.b16 %v1865, %v1861
        %v2854 = vpack.c.b16 %v1866, %v1862
        %v2855 = vpack.c.b16 %v1867, %v1863
        %v2856 = vpack.c.b16 %v1872, %v1868
        %v2857 = vpack.c.b16 %v1873, %v1869
        %v2858 = vpack.c.b16 %v1874, %v1870
        %v2859 = vpack.c.b16 %v1875, %v1871
        %v2860 = vpack.c.b16 %v1880, %v1876
        %v2861 = vpack.c.b16 %v1881, %v1877
        %v2862 = vpack.c.b16 %v1882, %v1878
        %v2863 = vpack.c.b16 %v1883, %v1879
        %v2864 = vpack.c.b16 %v1888, %v1884
        %v2865 = vpack.c.b16 %v1889, %v1885
        %v2866 = vpack.c.b16 %v1890, %v1886
        %v2867 = vpack.c.b16 %v1891, %v1887
        %v2868 = vpack.c.b16 %v1896, %v1892
        %v2869 = vpack.c.b16 %v1897, %v1893
        %v2870 = vpack.c.b16 %v1898, %v1894
        %v2871 = vpack.c.b16 %v1899, %v1895
        %v2872 = vpack.c.b16 %v1904, %v1900
        %v2873 = vpack.c.b16 %v1905, %v1901
        %v2874 = vpack.c.b16 %v1906, %v1902
        %v2875 = vpack.c.b16 %v1907, %v1903
        %v2876 = vpack.c.b16 %v1912, %v1908
        %v2877 = vpack.c.b16 %v1913, %v1909
        %v2878 = vpack.c.b16 %v1914, %v1910
        %v2879 = vpack.c.b16 %v1915, %v1911
        %v2880 = vpack.c.b16 %v1920, %v1916
        %v2881 = vpack.c.b16 %v1921, %v1917
        %v2882 = vpack.c.b16 %v1922, %v1918
        %v2883 = vpack.c.b16 %v1923, %v1919
        %v2884 = vpack.c.b16 %v1928, %v1924
        %v2885 = vpack.c.b16 %v1929, %v1925
        %v2886 = vpack.c.b16 %v1930, %v1926
        %v2887 = vpack.c.b16 %v1931, %v1927
        %v2888 = vpack.c.b16 %v1936, %v1932
        %v2889 = vpack.c.b16 %v1937, %v1933
        %v2890 = vpack.c.b16 %v1938, %v1934
        %v2891 = vpack.c.b16 %v1939, %v1935
        %v2892 = vpack.c.b16 %v1944, %v1940
        %v2893 = vpack.c.b16 %v1945, %v1941
        %v2894 = vpack.c.b16 %v1946, %v1942
        %v2895 = vpack.c.b16 %v1947, %v1943
        %v2896 = vpack.c.b16 %v1952, %v1948
        %v2897 = vpack.c.b16 %v1953, %v1949
        %v2898 = vpack.c.b16 %v1954, %v1950
        %v2899 = vpack.c.b16 %v1955, %v1951
        %v2900 = vpack.c.b16 %v1960, %v1956
        %v2901 = vpack.c.b16 %v1961, %v1957
        %v2902 = vpack.c.b16 %v1962, %v1958
        %v2903 = vpack.c.b16 %v1963, %v1959
        %v2904 = vpack.c.b16 %v1968, %v1964
        %v2905 = vpack.c.b16 %v1969, %v1965
        %v2906 = vpack.c.b16 %v1970, %v1966
        %v2907 = vpack.c.b16 %v1971, %v1967
        %v2908 = vpack.c.b16 %v1976, %v1972
        %v2909 = vpack.c.b16 %v1977, %v1973
        %v2910 = vpack.c.b16 %v1978, %v1974
        %v2911 = vpack.c.b16 %v1979, %v1975
        %v2912 = vpack.c.b16 %v1984, %v1980
        %v2913 = vpack.c.b16 %v1985, %v1981
        %v2914 = vpack.c.b16 %v1986, %v1982
        %v2915 = vpack.c.b16 %v1987, %v1983
        %v2916 = vpack.c.b16 %v1992, %v1988
        %v2917 = vpack.c.b16 %v1993, %v1989
        %v2918 = vpack.c.b16 %v1994, %v1990
        %v2919 = vpack.c.b16 %v1995, %v1991
        %v2920 = vpack.c.b16 %v2000, %v1996
        %v2921 = vpack.c.b16 %v2001, %v1997
        %v2922 = vpack.c.b16 %v2002, %v1998
        %v2923 = vpack.c.b16 %v2003, %v1999
        %v2924 = vpack.c.b16 %v2008, %v2004
        %v2925 = vpack.c.b16 %v2009, %v2005
        %v2926 = vpack.c.b16 %v2010, %v2006
        %v2927 = vpack.c.b16 %v2011, %v2007
        %v2928 = vpack.c.b16 %v2016, %v2012
        %v2929 = vpack.c.b16 %v2017, %v2013
        %v2930 = vpack.c.b16 %v2018, %v2014
        %v2931 = vpack.c.b16 %v2019, %v2015
        %v2932 = vpack.c.b16 %v2024, %v2020
        %v2933 = vpack.c.b16 %v2025, %v2021
        %v2934 = vpack.c.b16 %v2026, %v2022
        %v2935 = vpack.c.b16 %v2027, %v2023
        %v2936 = vpack.c.b16 %v2032, %v2028
        %v2937 = vpack.c.b16 %v2033, %v2029
        %v2938 = vpack.c.b16 %v2034, %v2030
        %v2939 = vpack.c.b16 %v2035, %v2031
        %v2940 = vpack.c.b16 %v2040, %v2036
        %v2941 = vpack.c.b16 %v2041, %v2037
        %v2942 = vpack.c.b16 %v2042, %v2038
        %v2943 = vpack.c.b16 %v2043, %v2039
        %v2944 = vpack.c.b16 %v2048, %v2044
        %v2945 = vpack.c.b16 %v2049, %v2045
        %v2946 = vpack.c.b16 %v2050, %v2046
        %v2947 = vpack.c.b16 %v2051, %v2047
        %v2948 = vpack.c.b16 %v2056, %v2052
        %v2949 = vpack.c.b16 %v2057, %v2053
        %v2950 = vpack.c.b16 %v2058, %v2054
        %v2951 = vpack.c.b16 %v2059, %v2055
        %v2952 = vpack.c.b16 %v2064, %v2060
        %v2953 = vpack.c.b16 %v2065, %v2061
        %v2954 = vpack.c.b16 %v2066, %v2062
        %v2955 = vpack.c.b16 %v2067, %v2063
        %v2956 = vpack.c.b16 %v2072, %v2068
        %v2957 = vpack.c.b16 %v2073, %v2069
        %v2958 = vpack.c.b16 %v2074, %v2070
        %v2959 = vpack.c.b16 %v2075, %v2071
        %v2960 = vpack.c.b16 %v2080, %v2076
        %v2961 = vpack.c.b16 %v2081, %v2077
        %v2962 = vpack.c.b16 %v2082, %v2078
        %v2963 = vpack.c.b16 %v2083, %v2079
        %v2964 = vpack.c.b16 %v2088, %v2084
        %v2965 = vpack.c.b16 %v2089, %v2085
        %v2966 = vpack.c.b16 %v2090, %v2086
        %v2967 = vpack.c.b16 %v2091, %v2087
        %v2968 = vpack.c.b16 %v2096, %v2092
        %v2969 = vpack.c.b16 %v2097, %v2093
        %v2970 = vpack.c.b16 %v2098, %v2094
        %v2971 = vpack.c.b16 %v2099, %v2095
        %v2972 = vpack.c.b16 %v2104, %v2100
        %v2973 = vpack.c.b16 %v2105, %v2101
        %v2974 = vpack.c.b16 %v2106, %v2102
        %v2975 = vpack.c.b16 %v2107, %v2103
        %v2976 = vpack.c.b16 %v2112, %v2108
        %v2977 = vpack.c.b16 %v2113, %v2109
        %v2978 = vpack.c.b16 %v2114, %v2110
        %v2979 = vpack.c.b16 %v2115, %v2111
        %v2980 = vpack.c.b16 %v2120, %v2116
        %v2981 = vpack.c.b16 %v2121, %v2117
        %v2982 = vpack.c.b16 %v2122, %v2118
        %v2983 = vpack.c.b16 %v2123, %v2119
        %v2984 = vpack.c.b16 %v2128, %v2124
        %v2985 = vpack.c.b16 %v2129, %v2125
        %v2986 = vpack.c.b16 %v2130, %v2126
        %v2987 = vpack.c.b16 %v2131, %v2127
        %v2988 = vpack.c.b16 %v2136, %v2132
        %v2989 = vpack.c.b16 %v2137, %v2133
        %v2990 = vpack.c.b16 %v2138, %v2134
        %v2991 = vpack.c.b16 %v2139, %v2135
        %v2992 = vpack.c.b16 %v2144, %v2140
        %v2993 = vpack.c.b16 %v2145, %v2141
        %v2994 = vpack.c.b16 %v2146, %v2142
        %v2995 = vpack.c.b16 %v2147, %v2143
        %v2996 = vpack.c.b16 %v2152, %v2148
        %v2997 = vpack.c.b16 %v2153, %v2149
        %v2998 = vpack.c.b16 %v2154, %v2150
        %v2999 = vpack.c.b16 %v2155, %v2151
        %v3000 = vpack.c.b16 %v2160, %v2156
        %v3001 = vpack.c.b16 %v2161, %v2157
        %v3002 = vpack.c.b16 %v2162, %v2158
        %v3003 = vpack.c.b16 %v2163, %v2159
        %v3004 = vpack.c.b16 %v2168, %v2164
        %v3005 = vpack.c.b16 %v2169, %v2165
        %v3006 = vpack.c.b16 %v2170, %v2166
        %v3007 = vpack.c.b16 %v2171, %v2167
        %v3008 = vpack.c.b16 %v2176, %v2172
        %v3009 = vpack.c.b16 %v2177, %v2173
        %v3010 = vpack.c.b16 %v2178, %v2174
        %v3011 = vpack.c.b16 %v2179, %v2175
        %v3012 = vpack.c.b16 %v2184, %v2180
        %v3013 = vpack.c.b16 %v2185, %v2181
        %v3014 = vpack.c.b16 %v2186, %v2182
        %v3015 = vpack.c.b16 %v2187, %v2183
        %v3016 = vpack.c.b16 %v2192, %v2188
        %v3017 = vpack.c.b16 %v2193, %v2189
        %v3018 = vpack.c.b16 %v2194, %v2190
        %v3019 = vpack.c.b16 %v2195, %v2191
        %v3020 = vpack.c.b16 %v2200, %v2196
        %v3021 = vpack.c.b16 %v2201, %v2197
        %v3022 = vpack.c.b16 %v2202, %v2198
        %v3023 = vpack.c.b16 %v2203, %v2199
        %v3024 = vpack.c.b16 %v2208, %v2204
        %v3025 = vpack.c.b16 %v2209, %v2205
        %v3026 = vpack.c.b16 %v2210, %v2206
        %v3027 = vpack.c.b16 %v2211, %v2207
        %v3028 = vpack.c.b16 %v2216, %v2212
        %v3029 = vpack.c.b16 %v2217, %v2213
        %v3030 = vpack.c.b16 %v2218, %v2214
        %v3031 = vpack.c.b16 %v2219, %v2215
        %v3032 = vpack.c.b16 %v2224, %v2220
        %v3033 = vpack.c.b16 %v2225, %v2221
        %v3034 = vpack.c.b16 %v2226, %v2222
        %v3035 = vpack.c.b16 %v2227, %v2223
        %v3036 = vpack.c.b16 %v2232, %v2228
        %v3037 = vpack.c.b16 %v2233, %v2229
        %v3038 = vpack.c.b16 %v2234, %v2230
        %v3039 = vpack.c.b16 %v2235, %v2231
        %v3040 = vpack.c.b16 %v2240, %v2236
        %v3041 = vpack.c.b16 %v2241, %v2237
        %v3042 = vpack.c.b16 %v2242, %v2238
        %v3043 = vpack.c.b16 %v2243, %v2239
        %v3044 = vpack.c.b16 %v2248, %v2244
        %v3045 = vpack.c.b16 %v2249, %v2245
        %v3046 = vpack.c.b16 %v2250, %v2246
        %v3047 = vpack.c.b16 %v2251, %v2247
        %v3048 = vpack.c.b16 %v2256, %v2252
        %v3049 = vpack.c.b16 %v2257, %v2253
        %v3050 = vpack.c.b16 %v2258, %v2254
        %v3051 = vpack.c.b16 %v2259, %v2255
        %v3052 = vpack.c.b16 %v2264, %v2260
        %v3053 = vpack.c.b16 %v2265, %v2261
        %v3054 = vpack.c.b16 %v2266, %v2262
        %v3055 = vpack.c.b16 %v2267, %v2263
        %v3056 = vpack.c.b16 %v2272, %v2268
        %v3057 = vpack.c.b16 %v2273, %v2269
        %v3058 = vpack.c.b16 %v2274, %v2270
        %v3059 = vpack.c.b16 %v2275, %v2271
        %v3060 = vpack.c.b16 %v2280, %v2276
        %v3061 = vpack.c.b16 %v2281, %v2277
        %v3062 = vpack.c.b16 %v2282, %v2278
        %v3063 = vpack.c.b16 %v2283, %v2279
        %v3064 = vpack.c.b16 %v2288, %v2284
        %v3065 = vpack.c.b16 %v2289, %v2285
        %v3066 = vpack.c.b16 %v2290, %v2286
        %v3067 = vpack.c.b16 %v2291, %v2287
        %v3068 = vpack.c.b16 %v2296, %v2292
        %v3069 = vpack.c.b16 %v2297, %v2293
        %v3070 = vpack.c.b16 %v2298, %v2294
        %v3071 = vpack.c.b16 %v2299, %v2295
        %v3072 = vpack.c.b16 %v2304, %v2300
        %v3073 = vpack.c.b16 %v2305, %v2301
        %v3074 = vpack.c.b16 %v2306, %v2302
        %v3075 = vpack.c.b16 %v2307, %v2303
        %v3076 = vpack.c.b16 %v2312, %v2308
        %v3077 = vpack.c.b16 %v2313, %v2309
        %v3078 = vpack.c.b16 %v2314, %v2310
        %v3079 = vpack.c.b16 %v2315, %v2311
        %v3080 = vpack.c.b16 %v2320, %v2316
        %v3081 = vpack.c.b16 %v2321, %v2317
        %v3082 = vpack.c.b16 %v2322, %v2318
        %v3083 = vpack.c.b16 %v2323, %v2319
        %v3084 = vpack.c.b16 %v2328, %v2324
        %v3085 = vpack.c.b16 %v2329, %v2325
        %v3086 = vpack.c.b16 %v2330, %v2326
        %v3087 = vpack.c.b16 %v2331, %v2327
        %v3088 = vpack.c.b16 %v2336, %v2332
        %v3089 = vpack.c.b16 %v2337, %v2333
        %v3090 = vpack.c.b16 %v2338, %v2334
        %v3091 = vpack.c.b16 %v2339, %v2335
        %v3092 = vpack.c.b16 %v2344, %v2340
        %v3093 = vpack.c.b16 %v2345, %v2341
        %v3094 = vpack.c.b16 %v2346, %v2342
        %v3095 = vpack.c.b16 %v2347, %v2343
        %v3096 = vpack.c.b16 %v2352, %v2348
        %v3097 = vpack.c.b16 %v2353, %v2349
        %v3098 = vpack.c.b16 %v2354, %v2350
        %v3099 = vpack.c.b16 %v2355, %v2351
        %v3100 = vpack.c.b16 %v2360, %v2356
        %v3101 = vpack.c.b16 %v2361, %v2357
        %v3102 = vpack.c.b16 %v2362, %v2358
        %v3103 = vpack.c.b16 %v2363, %v2359
        %v3104 = vpack.c.b16 %v2368, %v2364
        %v3105 = vpack.c.b16 %v2369, %v2365
        %v3106 = vpack.c.b16 %v2370, %v2366
        %v3107 = vpack.c.b16 %v2371, %v2367
        %v3108 = vpack.c.b16 %v2376, %v2372
        %v3109 = vpack.c.b16 %v2377, %v2373
        %v3110 = vpack.c.b16 %v2378, %v2374
        %v3111 = vpack.c.b16 %v2379, %v2375
        %v3112 = vpack.c.b16 %v2384, %v2380
        %v3113 = vpack.c.b16 %v2385, %v2381
        %v3114 = vpack.c.b16 %v2386, %v2382
        %v3115 = vpack.c.b16 %v2387, %v2383
        %v3116 = vpack.c.b16 %v2392, %v2388
        %v3117 = vpack.c.b16 %v2393, %v2389
        %v3118 = vpack.c.b16 %v2394, %v2390
        %v3119 = vpack.c.b16 %v2395, %v2391
        %v3120 = vpack.c.b16 %v2400, %v2396
        %v3121 = vpack.c.b16 %v2401, %v2397
        %v3122 = vpack.c.b16 %v2402, %v2398
        %v3123 = vpack.c.b16 %v2403, %v2399
        %v3124 = vpack.c.b16 %v2408, %v2404
        %v3125 = vpack.c.b16 %v2409, %v2405
        %v3126 = vpack.c.b16 %v2410, %v2406
        %v3127 = vpack.c.b16 %v2411, %v2407
        %v3128 = vpack.c.b16 %v2416, %v2412
        %v3129 = vpack.c.b16 %v2417, %v2413
        %v3130 = vpack.c.b16 %v2418, %v2414
        %v3131 = vpack.c.b16 %v2419, %v2415
        %v3132 = vpack.c.b16 %v2424, %v2420
        %v3133 = vpack.c.b16 %v2425, %v2421
        %v3134 = vpack.c.b16 %v2426, %v2422
        %v3135 = vpack.c.b16 %v2427, %v2423
        %v3136 = vpack.c.b16 %v2432, %v2428
        %v3137 = vpack.c.b16 %v2433, %v2429
        %v3138 = vpack.c.b16 %v2434, %v2430
        %v3139 = vpack.c.b16 %v2435, %v2431
        %v3140 = vpack.c.b16 %v2440, %v2436
        %v3141 = vpack.c.b16 %v2441, %v2437
        %v3142 = vpack.c.b16 %v2442, %v2438
        %v3143 = vpack.c.b16 %v2443, %v2439
        %v3144 = vpack.c.b16 %v2448, %v2444
        %v3145 = vpack.c.b16 %v2449, %v2445
        %v3146 = vpack.c.b16 %v2450, %v2446
        %v3147 = vpack.c.b16 %v2451, %v2447
        %v3148 = vpack.c.b16 %v2456, %v2452
        %v3149 = vpack.c.b16 %v2457, %v2453
        %v3150 = vpack.c.b16 %v2458, %v2454
        %v3151 = vpack.c.b16 %v2459, %v2455
        %v3152 = vpack.c.b16 %v2464, %v2460
        %v3153 = vpack.c.b16 %v2465, %v2461
        %v3154 = vpack.c.b16 %v2466, %v2462
        %v3155 = vpack.c.b16 %v2467, %v2463
        %v3156 = vpack.c.b16 %v2472, %v2468
        %v3157 = vpack.c.b16 %v2473, %v2469
        %v3158 = vpack.c.b16 %v2474, %v2470
        %v3159 = vpack.c.b16 %v2475, %v2471
        %v3160 = vpack.c.b16 %v2480, %v2476
        %v3161 = vpack.c.b16 %v2481, %v2477
        %v3162 = vpack.c.b16 %v2482, %v2478
        %v3163 = vpack.c.b16 %v2483, %v2479
        %v3164 = vpack.c.b16 %v2488, %v2484
        %v3165 = vpack.c.b16 %v2489, %v2485
        %v3166 = vpack.c.b16 %v2490, %v2486
        %v3167 = vpack.c.b16 %v2491, %v2487
        %v3168 = vpack.c.b16 %v2496, %v2492
        %v3169 = vpack.c.b16 %v2497, %v2493
        %v3170 = vpack.c.b16 %v2498, %v2494
        %v3171 = vpack.c.b16 %v2499, %v2495
        %v3172 = vpack.c.b16 %v2504, %v2500
        %v3173 = vpack.c.b16 %v2505, %v2501
        %v3174 = vpack.c.b16 %v2506, %v2502
        %v3175 = vpack.c.b16 %v2507, %v2503
        %v3176 = vpack.c.b16 %v2512, %v2508
        %v3177 = vpack.c.b16 %v2513, %v2509
        %v3178 = vpack.c.b16 %v2514, %v2510
        %v3179 = vpack.c.b16 %v2515, %v2511
        %v3180 = vpack.c.b16 %v2520, %v2516
        %v3181 = vpack.c.b16 %v2521, %v2517
        %v3182 = vpack.c.b16 %v2522, %v2518
        %v3183 = vpack.c.b16 %v2523, %v2519
        %v3184 = vpack.c.b16 %v2528, %v2524
        %v3185 = vpack.c.b16 %v2529, %v2525
        %v3186 = vpack.c.b16 %v2530, %v2526
        %v3187 = vpack.c.b16 %v2531, %v2527
        %v3188 = vpack.c.b16 %v2536, %v2532
        %v3189 = vpack.c.b16 %v2537, %v2533
        %v3190 = vpack.c.b16 %v2538, %v2534
        %v3191 = vpack.c.b16 %v2539, %v2535
        %v3192 = vpack.c.b16 %v2544, %v2540
        %v3193 = vpack.c.b16 %v2545, %v2541
        %v3194 = vpack.c.b16 %v2546, %v2542
        %v3195 = vpack.c.b16 %v2547, %v2543
        %v3196 = vpack.c.b16 %v2552, %v2548
        %v3197 = vpack.c.b16 %v2553, %v2549
        %v3198 = vpack.c.b16 %v2554, %v2550
        %v3199 = vpack.c.b16 %v2555, %v2551
        %v3200 = vpack.c.b16 %v2560, %v2556
        %v3201 = vpack.c.b16 %v2561, %v2557
        %v3202 = vpack.c.b16 %v2562, %v2558
        %v3203 = vpack.c.b16 %v2563, %v2559
        %v3204 = vpack.c.b16 %v2568, %v2564
        %v3205 = vpack.c.b16 %v2569, %v2565
        %v3206 = vpack.c.b16 %v2570, %v2566
        %v3207 = vpack.c.b16 %v2571, %v2567
        %v3208 = vpack.c.b16 %v2576, %v2572
        %v3209 = vpack.c.b16 %v2577, %v2573
        %v3210 = vpack.c.b16 %v2578, %v2574
        %v3211 = vpack.c.b16 %v2579, %v2575
        %v3212 = vpack.c.b16 %v2584, %v2580
        %v3213 = vpack.c.b16 %v2585, %v2581
        %v3214 = vpack.c.b16 %v2586, %v2582
        %v3215 = vpack.c.b16 %v2587, %v2583
        %v3216 = vpack.c.b16 %v2592, %v2588
        %v3217 = vpack.c.b16 %v2593, %v2589
        %v3218 = vpack.c.b16 %v2594, %v2590
        %v3219 = vpack.c.b16 %v2595, %v2591
        %v3220 = vpack.c.b16 %v2600, %v2596
        %v3221 = vpack.c.b16 %v2601, %v2597
        %v3222 = vpack.c.b16 %v2602, %v2598
        %v3223 = vpack.c.b16 %v2603, %v2599
        %v3224 = vpack.c.b16 %v2608, %v2604
        %v3225 = vpack.c.b16 %v2609, %v2605
        %v3226 = vpack.c.b16 %v2610, %v2606
        %v3227 = vpack.c.b16 %v2611, %v2607
        %v3228 = vpack.c.b16 %v2616, %v2612
        %v3229 = vpack.c.b16 %v2617, %v2613
        %v3230 = vpack.c.b16 %v2618, %v2614
        %v3231 = vpack.c.b16 %v2619, %v2615
        %v3232 = vpack.c.b16 %v2624, %v2620
        %v3233 = vpack.c.b16 %v2625, %v2621
        %v3234 = vpack.c.b16 %v2626, %v2622
        %v3235 = vpack.c.b16 %v2627, %v2623
        %v3236 = vpack.c.b16 %v2632, %v2628
        %v3237 = vpack.c.b16 %v2633, %v2629
        %v3238 = vpack.c.b16 %v2634, %v2630
        %v3239 = vpack.c.b16 %v2635, %v2631
        %v3240 = vpack.c.b16 %v2640, %v2636
        %v3241 = vpack.c.b16 %v2641, %v2637
        %v3242 = vpack.c.b16 %v2642, %v2638
        %v3243 = vpack.c.b16 %v2643, %v2639
        %v3244 = vpack.c.b16 %v2648, %v2644
        %v3245 = vpack.c.b16 %v2649, %v2645
        %v3246 = vpack.c.b16 %v2650, %v2646
        %v3247 = vpack.c.b16 %v2651, %v2647
        %v3248 = vpack.c.b16 %v2656, %v2652
        %v3249 = vpack.c.b16 %v2657, %v2653
        %v3250 = vpack.c.b16 %v2658, %v2654
        %v3251 = vpack.c.b16 %v2659, %v2655
        %v3252 = vpack.c.b16 %v2664, %v2660
        %v3253 = vpack.c.b16 %v2665, %v2661
        %v3254 = vpack.c.b16 %v2666, %v2662
        %v3255 = vpack.c.b16 %v2667, %v2663
        %v3256 = vpack.c.b16 %v2672, %v2668
        %v3257 = vpack.c.b16 %v2673, %v2669
        %v3258 = vpack.c.b16 %v2674, %v2670
        %v3259 = vpack.c.b16 %v2675, %v2671
        %v3260 = vpack.c.b16 %v2680, %v2676
        %v3261 = vpack.c.b16 %v2681, %v2677
        %v3262 = vpack.c.b16 %v2682, %v2678
        %v3263 = vpack.c.b16 %v2683, %v2679
        %v3264 = vpack.c.b16 %v2688, %v2684
        %v3265 = vpack.c.b16 %v2689, %v2685
        %v3266 = vpack.c.b16 %v2690, %v2686
        %v3267 = vpack.c.b16 %v2691, %v2687
        %v3268 = vpack.c.b16 %v2696, %v2692
        %v3269 = vpack.c.b16 %v2697, %v2693
        %v3270 = vpack.c.b16 %v2698, %v2694
        %v3271 = vpack.c.b16 %v2699, %v2695
        %v3272 = vpack.c.b16 %v2704, %v2700
        %v3273 = vpack.c.b16 %v2705, %v2701
        %v3274 = vpack.c.b16 %v2706, %v2702
        %v3275 = vpack.c.b16 %v2707, %v2703
        %v3276 = vpack.c.b16 %v2712, %v2708
        %v3277 = vpack.c.b16 %v2713, %v2709
        %v3278 = vpack.c.b16 %v2714, %v2710
        %v3279 = vpack.c.b16 %v2715, %v2711
        %v3280 = vpack.c.b16 %v2720, %v2716
        %v3281 = vpack.c.b16 %v2721, %v2717
        %v3282 = vpack.c.b16 %v2722, %v2718
        %v3283 = vpack.c.b16 %v2723, %v2719
        %v3284 = vpack.c.b16 %v2728, %v2724
        %v3285 = vpack.c.b16 %v2729, %v2725
        %v3286 = vpack.c.b16 %v2730, %v2726
        %v3287 = vpack.c.b16 %v2731, %v2727
        %v3288 = vpack.c.b16 %v2736, %v2732
        %v3289 = vpack.c.b16 %v2737, %v2733
        %v3290 = vpack.c.b16 %v2738, %v2734
        %v3291 = vpack.c.b16 %v2739, %v2735
        %v3292 = vpack.c.b16 %v2744, %v2740
        %v3293 = vpack.c.b16 %v2745, %v2741
        %v3294 = vpack.c.b16 %v2746, %v2742
        %v3295 = vpack.c.b16 %v2747, %v2743
        %v3296 = vpack.c.b16 %v2752, %v2748
        %v3297 = vpack.c.b16 %v2753, %v2749
        %v3298 = vpack.c.b16 %v2754, %v2750
        %v3299 = vpack.c.b16 %v2755, %v2751
        %v3300 = vpack.c.b16 %v2760, %v2756
        %v3301 = vpack.c.b16 %v2761, %v2757
        %v3302 = vpack.c.b16 %v2762, %v2758
        %v3303 = vpack.c.b16 %v2763, %v2759
        %v3304 = vpack.c.b16 %v2768, %v2764
        %v3305 = vpack.c.b16 %v2769, %v2765
        %v3306 = vpack.c.b16 %v2770, %v2766
        %v3307 = vpack.c.b16 %v2771, %v2767
        %v3308 = vpack.c.b16 %v2776, %v2772
        %v3309 = vpack.c.b16 %v2777, %v2773
        %v3310 = vpack.c.b16 %v2778, %v2774
        %v3311 = vpack.c.b16 %v2779, %v2775
        %v3312 = vpack.c.b16 %v2784, %v2780
        %v3313 = vpack.c.b16 %v2785, %v2781
        %v3314 = vpack.c.b16 %v2786, %v2782
        %v3315 = vpack.c.b16 %v2787, %v2783
        %v3316 = vpack.c.b16 %v2792, %v2788
        %v3317 = vpack.c.b16 %v2793, %v2789
        %v3318 = vpack.c.b16 %v2794, %v2790
        %v3319 = vpack.c.b16 %v2795, %v2791
        %v3320 = vpack.c.b16 %v2800, %v2796
        %v3321 = vpack.c.b16 %v2801, %v2797
        %v3322 = vpack.c.b16 %v2802, %v2798
        %v3323 = vpack.c.b16 %v2803, %v2799
        %v3324 = vpack.c.b16 %v2808, %v2804
        %v3325 = vpack.c.b16 %v2809, %v2805
        %v3326 = vpack.c.b16 %v2810, %v2806
        %v3327 = vpack.c.b16 %v2811, %v2807
        %v3328 = vpack.c.b16 %v2816, %v2812
        %v3329 = vpack.c.b16 %v2817, %v2813
        %v3330 = vpack.c.b16 %v2818, %v2814
        %v3331 = vpack.c.b16 %v2819, %v2815
        %3844 = vmatprep.subr.bf16.mxu0 %v2821
        %3845 = vmatpush1.bf16.msra.mxu0 %v2820
        %3846 = vmatprep.subr.bf16.mxu0 %v2825
        %3847 = vmatpush1.bf16.msra.mxu0 %v2824
        %3848 = vmatprep.subr.bf16.mxu0 %v2829
        %3849 = vmatpush1.bf16.msra.mxu0 %v2828
        %3850 = vmatprep.subr.bf16.mxu0 %v2833
        %3851 = vmatpush1.bf16.msra.mxu0 %v2832
        %3852 = vmatprep.subr.bf16.mxu0 %v2837
        %3853 = vmatpush1.bf16.msra.mxu0 %v2836
        %3854 = vmatprep.subr.bf16.mxu0 %v2841
        %3855 = vmatpush1.bf16.msra.mxu0 %v2840
        %3856 = vmatprep.subr.bf16.mxu0 %v2845
        %3857 = vmatpush1.bf16.msra.mxu0 %v2844
        %3858 = vmatprep.subr.bf16.mxu0 %v2849
        %3859 = vmatpush1.bf16.msra.mxu0 %v2848
        %3860 = vmatprep.subr.bf16.mxu0 %v2853
        %3861 = vmatpush1.bf16.msra.mxu0 %v2852
        %3862 = vmatprep.subr.bf16.mxu0 %v2857
        %3863 = vmatpush1.bf16.msra.mxu0 %v2856
        %3864 = vmatprep.subr.bf16.mxu0 %v2861
        %3865 = vmatpush1.bf16.msra.mxu0 %v2860
        %3866 = vmatprep.subr.bf16.mxu0 %v2865
        %3867 = vmatpush1.bf16.msra.mxu0 %v2864
        %3868 = vmatprep.subr.bf16.mxu0 %v2869
        %3869 = vmatpush1.bf16.msra.mxu0 %v2868
        %3870 = vmatprep.subr.bf16.mxu0 %v2873
        %3871 = vmatpush1.bf16.msra.mxu0 %v2872
        %3872 = vmatprep.subr.bf16.mxu0 %v2877
        %3873 = vmatpush1.bf16.msra.mxu0 %v2876
        %3874 = vmatprep.subr.bf16.mxu0 %v2881
        %3875 = vmatpush1.bf16.msra.mxu0 %v2880
        %3876 = vmatprep.mubr.bf16.mxu0 %v686
        %3877 = vmatmul.mubr.bf16.gmra.mrb[0].mxu0 %v685
        %v3878 = vpop.f32.mrb[0].mxu0
        %v3879 = vadd.f32 %v1267, %v3878
        %v3880 = vpop.f32.mrb[0].mxu0
        %v3881 = vadd.f32 %v1271, %v3880
        %v3882 = vpop.f32.mrb[0].mxu0
        %v3883 = vadd.f32 %v1267, %v3882
        %v3884 = vpop.f32.mrb[0].mxu0
        %v3885 = vadd.f32 %v1271, %v3884
        %3886 = vdwg.mxu0
        %3887 = vmatprep.subr.bf16.mxu0 %v2885
        %3888 = vmatpush1.bf16.msra.mxu0 %v2884
        %3889 = vmatprep.subr.bf16.mxu0 %v2889
        %3890 = vmatpush1.bf16.msra.mxu0 %v2888
        %3891 = vmatprep.subr.bf16.mxu0 %v2893
        %3892 = vmatpush1.bf16.msra.mxu0 %v2892
        %3893 = vmatprep.subr.bf16.mxu0 %v2897
        %3894 = vmatpush1.bf16.msra.mxu0 %v2896
        %3895 = vmatprep.subr.bf16.mxu0 %v2901
        %3896 = vmatpush1.bf16.msra.mxu0 %v2900
        %3897 = vmatprep.subr.bf16.mxu0 %v2905
        %3898 = vmatpush1.bf16.msra.mxu0 %v2904
        %3899 = vmatprep.subr.bf16.mxu0 %v2909
        %3900 = vmatpush1.bf16.msra.mxu0 %v2908
        %3901 = vmatprep.subr.bf16.mxu0 %v2913
        %3902 = vmatpush1.bf16.msra.mxu0 %v2912
        %3903 = vmatprep.subr.bf16.mxu0 %v2917
        %3904 = vmatpush1.bf16.msra.mxu0 %v2916
        %3905 = vmatprep.subr.bf16.mxu0 %v2921
        %3906 = vmatpush1.bf16.msra.mxu0 %v2920
        %3907 = vmatprep.subr.bf16.mxu0 %v2925
        %3908 = vmatpush1.bf16.msra.mxu0 %v2924
        %3909 = vmatprep.subr.bf16.mxu0 %v2929
        %3910 = vmatpush1.bf16.msra.mxu0 %v2928
        %3911 = vmatprep.subr.bf16.mxu0 %v2933
        %3912 = vmatpush1.bf16.msra.mxu0 %v2932
        %3913 = vmatprep.subr.bf16.mxu0 %v2937
        %3914 = vmatpush1.bf16.msra.mxu0 %v2936
        %3915 = vmatprep.subr.bf16.mxu0 %v2941
        %3916 = vmatpush1.bf16.msra.mxu0 %v2940
        %3917 = vmatprep.subr.bf16.mxu0 %v2945
        %3918 = vmatpush1.bf16.msra.mxu0 %v2944
        %3919 = vmatprep.mubr.bf16.mxu0 %v688
        %3920 = vmatmul.mubr.bf16.gmra.mrb[0].mxu0 %v687
        %v3921 = vpop.f32.mrb[0].mxu0
        %v3922 = vadd.f32 %v3879, %v3921
        %v3923 = vpop.f32.mrb[0].mxu0
        %v3924 = vadd.f32 %v3881, %v3923
        %v3925 = vpop.f32.mrb[0].mxu0
        %v3926 = vadd.f32 %v3883, %v3925
        %v3927 = vpop.f32.mrb[0].mxu0
        %v3928 = vadd.f32 %v3885, %v3927
        %3929 = vdwg.mxu0
        %3930 = vmatprep.subr.bf16.mxu0 %v2949
        %3931 = vmatpush1.bf16.msra.mxu0 %v2948
        %3932 = vmatprep.subr.bf16.mxu0 %v2953
        %3933 = vmatpush1.bf16.msra.mxu0 %v2952
        %3934 = vmatprep.subr.bf16.mxu0 %v2957
        %3935 = vmatpush1.bf16.msra.mxu0 %v2956
        %3936 = vmatprep.subr.bf16.mxu0 %v2961
        %3937 = vmatpush1.bf16.msra.mxu0 %v2960
        %3938 = vmatprep.subr.bf16.mxu0 %v2965
        %3939 = vmatpush1.bf16.msra.mxu0 %v2964
        %3940 = vmatprep.subr.bf16.mxu0 %v2969
        %3941 = vmatpush1.bf16.msra.mxu0 %v2968
        %3942 = vmatprep.subr.bf16.mxu0 %v2973
        %3943 = vmatpush1.bf16.msra.mxu0 %v2972
        %3944 = vmatprep.subr.bf16.mxu0 %v2977
        %3945 = vmatpush1.bf16.msra.mxu0 %v2976
        %3946 = vmatprep.subr.bf16.mxu0 %v2981
        %3947 = vmatpush1.bf16.msra.mxu0 %v2980
        %3948 = vmatprep.subr.bf16.mxu0 %v2985
        %3949 = vmatpush1.bf16.msra.mxu0 %v2984
        %3950 = vmatprep.subr.bf16.mxu0 %v2989
        %3951 = vmatpush1.bf16.msra.mxu0 %v2988
        %3952 = vmatprep.subr.bf16.mxu0 %v2993
        %3953 = vmatpush1.bf16.msra.mxu0 %v2992
        %3954 = vmatprep.subr.bf16.mxu0 %v2997
        %3955 = vmatpush1.bf16.msra.mxu0 %v2996
        %3956 = vmatprep.subr.bf16.mxu0 %v3001
        %3957 = vmatpush1.bf16.msra.mxu0 %v3000
        %3958 = vmatprep.subr.bf16.mxu0 %v3005
        %3959 = vmatpush1.bf16.msra.mxu0 %v3004
        %3960 = vmatprep.subr.bf16.mxu0 %v3009
        %3961 = vmatpush1.bf16.msra.mxu0 %v3008
        %3962 = vmatprep.mubr.bf16.mxu0 %v704
        %3963 = vmatmul.mubr.bf16.gmra.mrb[0].mxu0 %v697
        %v3964 = vpop.f32.mrb[0].mxu0
        %v3965 = vadd.f32 %v3922, %v3964
        %v3966 = vpop.f32.mrb[0].mxu0
        %v3967 = vadd.f32 %v3924, %v3966
        %v3968 = vpop.f32.mrb[0].mxu0
        %v3969 = vadd.f32 %v3926, %v3968
        %v3970 = vpop.f32.mrb[0].mxu0
        %v3971 = vadd.f32 %v3928, %v3970
        %3972 = vdwg.mxu0
        %3973 = vmatprep.subr.bf16.mxu0 %v3013
        %3974 = vmatpush1.bf16.msra.mxu0 %v3012
        %3975 = vmatprep.subr.bf16.mxu0 %v3017
        %3976 = vmatpush1.bf16.msra.mxu0 %v3016
        %3977 = vmatprep.subr.bf16.mxu0 %v3021
        %3978 = vmatpush1.bf16.msra.mxu0 %v3020
        %3979 = vmatprep.subr.bf16.mxu0 %v3025
        %3980 = vmatpush1.bf16.msra.mxu0 %v3024
        %3981 = vmatprep.subr.bf16.mxu0 %v3029
        %3982 = vmatpush1.bf16.msra.mxu0 %v3028
        %3983 = vmatprep.subr.bf16.mxu0 %v3033
        %3984 = vmatpush1.bf16.msra.mxu0 %v3032
        %3985 = vmatprep.subr.bf16.mxu0 %v3037
        %3986 = vmatpush1.bf16.msra.mxu0 %v3036
        %3987 = vmatprep.subr.bf16.mxu0 %v3041
        %3988 = vmatpush1.bf16.msra.mxu0 %v3040
        %3989 = vmatprep.subr.bf16.mxu0 %v3045
        %3990 = vmatpush1.bf16.msra.mxu0 %v3044
        %3991 = vmatprep.subr.bf16.mxu0 %v3049
        %3992 = vmatpush1.bf16.msra.mxu0 %v3048
        %3993 = vmatprep.subr.bf16.mxu0 %v3053
        %3994 = vmatpush1.bf16.msra.mxu0 %v3052
        %3995 = vmatprep.subr.bf16.mxu0 %v3057
        %3996 = vmatpush1.bf16.msra.mxu0 %v3056
        %3997 = vmatprep.subr.bf16.mxu0 %v3061
        %3998 = vmatpush1.bf16.msra.mxu0 %v3060
        %3999 = vmatprep.subr.bf16.mxu0 %v3065
        %4000 = vmatpush1.bf16.msra.mxu0 %v3064
        %4001 = vmatprep.subr.bf16.mxu0 %v3069
        %4002 = vmatpush1.bf16.msra.mxu0 %v3068
        %4003 = vmatprep.subr.bf16.mxu0 %v3073
        %4004 = vmatpush1.bf16.msra.mxu0 %v3072
        %4005 = vmatprep.mubr.bf16.mxu0 %v718
        %4006 = vmatmul.mubr.bf16.gmra.mrb[0].mxu0 %v711
        %v4007 = vpop.f32.mrb[0].mxu0
        %v4008 = vadd.f32 %v3965, %v4007
        %v4009 = vpop.f32.mrb[0].mxu0
        %v4010 = vadd.f32 %v3967, %v4009
        %v4011 = vpop.f32.mrb[0].mxu0
        %v4012 = vadd.f32 %v3969, %v4011
        %v4013 = vpop.f32.mrb[0].mxu0
        %v4014 = vadd.f32 %v3971, %v4013
        %4015 = vdwg.mxu0
        %4016 = vmatprep.subr.bf16.mxu0 %v3077
        %4017 = vmatpush1.bf16.msra.mxu0 %v3076
        %4018 = vmatprep.subr.bf16.mxu0 %v3081
        %4019 = vmatpush1.bf16.msra.mxu0 %v3080
        %4020 = vmatprep.subr.bf16.mxu0 %v3085
        %4021 = vmatpush1.bf16.msra.mxu0 %v3084
        %4022 = vmatprep.subr.bf16.mxu0 %v3089
        %4023 = vmatpush1.bf16.msra.mxu0 %v3088
        %4024 = vmatprep.subr.bf16.mxu0 %v3093
        %4025 = vmatpush1.bf16.msra.mxu0 %v3092
        %4026 = vmatprep.subr.bf16.mxu0 %v3097
        %4027 = vmatpush1.bf16.msra.mxu0 %v3096
        %4028 = vmatprep.subr.bf16.mxu0 %v3101
        %4029 = vmatpush1.bf16.msra.mxu0 %v3100
        %4030 = vmatprep.subr.bf16.mxu0 %v3105
        %4031 = vmatpush1.bf16.msra.mxu0 %v3104
        %4032 = vmatprep.subr.bf16.mxu0 %v3109
        %4033 = vmatpush1.bf16.msra.mxu0 %v3108
        %4034 = vmatprep.subr.bf16.mxu0 %v3113
        %4035 = vmatpush1.bf16.msra.mxu0 %v3112
        %4036 = vmatprep.subr.bf16.mxu0 %v3117
        %4037 = vmatpush1.bf16.msra.mxu0 %v3116
        %4038 = vmatprep.subr.bf16.mxu0 %v3121
        %4039 = vmatpush1.bf16.msra.mxu0 %v3120
        %4040 = vmatprep.subr.bf16.mxu0 %v3125
        %4041 = vmatpush1.bf16.msra.mxu0 %v3124
        %4042 = vmatprep.subr.bf16.mxu0 %v3129
        %4043 = vmatpush1.bf16.msra.mxu0 %v3128
        %4044 = vmatprep.subr.bf16.mxu0 %v3133
        %4045 = vmatpush1.bf16.msra.mxu0 %v3132
        %4046 = vmatprep.subr.bf16.mxu0 %v3137
        %4047 = vmatpush1.bf16.msra.mxu0 %v3136
        %4048 = vmatprep.mubr.bf16.mxu0 %v728
        %4049 = vmatmul.mubr.bf16.gmra.mrb[0].mxu0 %v727
        %v4050 = vpop.f32.mrb[0].mxu0
        %v4051 = vadd.f32 %v4008, %v4050
        %v4052 = vpop.f32.mrb[0].mxu0
        %v4053 = vadd.f32 %v4010, %v4052
        %v4054 = vpop.f32.mrb[0].mxu0
        %v4055 = vadd.f32 %v4012, %v4054
        %v4056 = vpop.f32.mrb[0].mxu0
        %v4057 = vadd.f32 %v4014, %v4056
        %4058 = vdwg.mxu0
        %4059 = vmatprep.subr.bf16.mxu0 %v3141
        %4060 = vmatpush1.bf16.msra.mxu0 %v3140
        %4061 = vmatprep.subr.bf16.mxu0 %v3145
        %4062 = vmatpush1.bf16.msra.mxu0 %v3144
        %4063 = vmatprep.subr.bf16.mxu0 %v3149
        %4064 = vmatpush1.bf16.msra.mxu0 %v3148
        %4065 = vmatprep.subr.bf16.mxu0 %v3153
        %4066 = vmatpush1.bf16.msra.mxu0 %v3152
        %4067 = vmatprep.subr.bf16.mxu0 %v3157
        %4068 = vmatpush1.bf16.msra.mxu0 %v3156
        %4069 = vmatprep.subr.bf16.mxu0 %v3161
        %4070 = vmatpush1.bf16.msra.mxu0 %v3160
        %4071 = vmatprep.subr.bf16.mxu0 %v3165
        %4072 = vmatpush1.bf16.msra.mxu0 %v3164
        %4073 = vmatprep.subr.bf16.mxu0 %v3169
        %4074 = vmatpush1.bf16.msra.mxu0 %v3168
        %4075 = vmatprep.subr.bf16.mxu0 %v3173
        %4076 = vmatpush1.bf16.msra.mxu0 %v3172
        %4077 = vmatprep.subr.bf16.mxu0 %v3177
        %4078 = vmatpush1.bf16.msra.mxu0 %v3176
        %4079 = vmatprep.subr.bf16.mxu0 %v3181
        %4080 = vmatpush1.bf16.msra.mxu0 %v3180
        %4081 = vmatprep.subr.bf16.mxu0 %v3185
        %4082 = vmatpush1.bf16.msra.mxu0 %v3184
        %4083 = vmatprep.subr.bf16.mxu0 %v3189
        %4084 = vmatpush1.bf16.msra.mxu0 %v3188
        %4085 = vmatprep.subr.bf16.mxu0 %v3193
        %4086 = vmatpush1.bf16.msra.mxu0 %v3192
        %4087 = vmatprep.subr.bf16.mxu0 %v3197
        %4088 = vmatpush1.bf16.msra.mxu0 %v3196
        %4089 = vmatprep.subr.bf16.mxu0 %v3201
        %4090 = vmatpush1.bf16.msra.mxu0 %v3200
        %4091 = vmatprep.mubr.bf16.mxu0 %v730
        %4092 = vmatmul.mubr.bf16.gmra.mrb[0].mxu0 %v729
        %v4093 = vpop.f32.mrb[0].mxu0
        %v4094 = vadd.f32 %v4051, %v4093
        %v4095 = vpop.f32.mrb[0].mxu0
        %v4096 = vadd.f32 %v4053, %v4095
        %v4097 = vpop.f32.mrb[0].mxu0
        %v4098 = vadd.f32 %v4055, %v4097
        %v4099 = vpop.f32.mrb[0].mxu0
        %v4100 = vadd.f32 %v4057, %v4099
        %4101 = vdwg.mxu0
        %4102 = vmatprep.subr.bf16.mxu0 %v3205
        %4103 = vmatpush1.bf16.msra.mxu0 %v3204
        %4104 = vmatprep.subr.bf16.mxu0 %v3209
        %4105 = vmatpush1.bf16.msra.mxu0 %v3208
        %4106 = vmatprep.subr.bf16.mxu0 %v3213
        %4107 = vmatpush1.bf16.msra.mxu0 %v3212
        %4108 = vmatprep.subr.bf16.mxu0 %v3217
        %4109 = vmatpush1.bf16.msra.mxu0 %v3216
        %4110 = vmatprep.subr.bf16.mxu0 %v3221
        %4111 = vmatpush1.bf16.msra.mxu0 %v3220
        %4112 = vmatprep.subr.bf16.mxu0 %v3225
        %4113 = vmatpush1.bf16.msra.mxu0 %v3224
        %4114 = vmatprep.subr.bf16.mxu0 %v3229
        %4115 = vmatpush1.bf16.msra.mxu0 %v3228
        %4116 = vmatprep.subr.bf16.mxu0 %v3233
        %4117 = vmatpush1.bf16.msra.mxu0 %v3232
        %4118 = vmatprep.subr.bf16.mxu0 %v3237
        %4119 = vmatpush1.bf16.msra.mxu0 %v3236
        %4120 = vmatprep.subr.bf16.mxu0 %v3241
        %4121 = vmatpush1.bf16.msra.mxu0 %v3240
        %4122 = vmatprep.subr.bf16.mxu0 %v3245
        %4123 = vmatpush1.bf16.msra.mxu0 %v3244
        %4124 = vmatprep.subr.bf16.mxu0 %v3249
        %4125 = vmatpush1.bf16.msra.mxu0 %v3248
        %4126 = vmatprep.subr.bf16.mxu0 %v3253
        %4127 = vmatpush1.bf16.msra.mxu0 %v3252
        %4128 = vmatprep.subr.bf16.mxu0 %v3257
        %4129 = vmatpush1.bf16.msra.mxu0 %v3256
        %4130 = vmatprep.subr.bf16.mxu0 %v3261
        %4131 = vmatpush1.bf16.msra.mxu0 %v3260
        %4132 = vmatprep.subr.bf16.mxu0 %v3265
        %4133 = vmatpush1.bf16.msra.mxu0 %v3264
        %4134 = vmatprep.mubr.bf16.mxu0 %v740
        %4135 = vmatmul.mubr.bf16.gmra.mrb[0].mxu0 %v737
        %v4136 = vpop.f32.mrb[0].mxu0
        %v4137 = vadd.f32 %v4094, %v4136
        %v4138 = vpop.f32.mrb[0].mxu0
        %v4139 = vadd.f32 %v4096, %v4138
        %v4140 = vpop.f32.mrb[0].mxu0
        %v4141 = vadd.f32 %v4098, %v4140
        %v4142 = vpop.f32.mrb[0].mxu0
        %v4143 = vadd.f32 %v4100, %v4142
        %4144 = vdwg.mxu0
        %4145 = vmatprep.subr.bf16.mxu0 %v3269
        %4146 = vmatpush1.bf16.msra.mxu0 %v3268
        %4147 = vmatprep.subr.bf16.mxu0 %v3273
        %4148 = vmatpush1.bf16.msra.mxu0 %v3272
        %4149 = vmatprep.subr.bf16.mxu0 %v3277
        %4150 = vmatpush1.bf16.msra.mxu0 %v3276
        %4151 = vmatprep.subr.bf16.mxu0 %v3281
        %4152 = vmatpush1.bf16.msra.mxu0 %v3280
        %4153 = vmatprep.subr.bf16.mxu0 %v3285
        %4154 = vmatpush1.bf16.msra.mxu0 %v3284
        %4155 = vmatprep.subr.bf16.mxu0 %v3289
        %4156 = vmatpush1.bf16.msra.mxu0 %v3288
        %4157 = vmatprep.subr.bf16.mxu0 %v3293
        %4158 = vmatpush1.bf16.msra.mxu0 %v3292
        %4159 = vmatprep.subr.bf16.mxu0 %v3297
        %4160 = vmatpush1.bf16.msra.mxu0 %v3296
        %4161 = vmatprep.subr.bf16.mxu0 %v3301
        %4162 = vmatpush1.bf16.msra.mxu0 %v3300
        %4163 = vmatprep.subr.bf16.mxu0 %v3305
        %4164 = vmatpush1.bf16.msra.mxu0 %v3304
        %4165 = vmatprep.subr.bf16.mxu0 %v3309
        %4166 = vmatpush1.bf16.msra.mxu0 %v3308
        %4167 = vmatprep.subr.bf16.mxu0 %v3313
        %4168 = vmatpush1.bf16.msra.mxu0 %v3312
        %4169 = vmatprep.subr.bf16.mxu0 %v3317
        %4170 = vmatpush1.bf16.msra.mxu0 %v3316
        %4171 = vmatprep.subr.bf16.mxu0 %v3321
        %4172 = vmatpush1.bf16.msra.mxu0 %v3320
        %4173 = vmatprep.subr.bf16.mxu0 %v3325
        %4174 = vmatpush1.bf16.msra.mxu0 %v3324
        %4175 = vmatprep.subr.bf16.mxu0 %v3329
        %4176 = vmatpush1.bf16.msra.mxu0 %v3328
        %4177 = vmatprep.mubr.bf16.mxu0 %v746
        %4178 = vmatmul.mubr.bf16.gmra.mrb[0].mxu0 %v743
        %v4179 = vpop.f32.mrb[0].mxu0
        %v4180 = vadd.f32 %v4137, %v4179
        %v4181 = vpop.f32.mrb[0].mxu0
        %v4182 = vadd.f32 %v4139, %v4181
        %v4183 = vpop.f32.mrb[0].mxu0
        %v4184 = vadd.f32 %v4141, %v4183
        %v4185 = vpop.f32.mrb[0].mxu0
        %v4186 = vadd.f32 %v4143, %v4185
        %4187 = vdwg.mxu0
        %4188 = vmatprep.subr.bf16.mxu0 %v2823
        %4189 = vmatpush1.bf16.msra.mxu0 %v2822
        %4190 = vmatprep.subr.bf16.mxu0 %v2827
        %4191 = vmatpush1.bf16.msra.mxu0 %v2826
        %4192 = vmatprep.subr.bf16.mxu0 %v2831
        %4193 = vmatpush1.bf16.msra.mxu0 %v2830
        %4194 = vmatprep.subr.bf16.mxu0 %v2835
        %4195 = vmatpush1.bf16.msra.mxu0 %v2834
        %4196 = vmatprep.subr.bf16.mxu0 %v2839
        %4197 = vmatpush1.bf16.msra.mxu0 %v2838
        %4198 = vmatprep.subr.bf16.mxu0 %v2843
        %4199 = vmatpush1.bf16.msra.mxu0 %v2842
        %4200 = vmatprep.subr.bf16.mxu0 %v2847
        %4201 = vmatpush1.bf16.msra.mxu0 %v2846
        %4202 = vmatprep.subr.bf16.mxu0 %v2851
        %4203 = vmatpush1.bf16.msra.mxu0 %v2850
        %4204 = vmatprep.subr.bf16.mxu0 %v2855
        %4205 = vmatpush1.bf16.msra.mxu0 %v2854
        %4206 = vmatprep.subr.bf16.mxu0 %v2859
        %4207 = vmatpush1.bf16.msra.mxu0 %v2858
        %4208 = vmatprep.subr.bf16.mxu0 %v2863
        %4209 = vmatpush1.bf16.msra.mxu0 %v2862
        %4210 = vmatprep.subr.bf16.mxu0 %v2867
        %4211 = vmatpush1.bf16.msra.mxu0 %v2866
        %4212 = vmatprep.subr.bf16.mxu0 %v2871
        %4213 = vmatpush1.bf16.msra.mxu0 %v2870
        %4214 = vmatprep.subr.bf16.mxu0 %v2875
        %4215 = vmatpush1.bf16.msra.mxu0 %v2874
        %4216 = vmatprep.subr.bf16.mxu0 %v2879
        %4217 = vmatpush1.bf16.msra.mxu0 %v2878
        %4218 = vmatprep.subr.bf16.mxu0 %v2883
        %4219 = vmatpush1.bf16.msra.mxu0 %v2882
        %4220 = vmatprep.mubr.bf16.mxu0 %v686
        %4221 = vmatmul.mubr.bf16.gmra.mrb[0].mxu0 %v685
        %v4222 = vpop.f32.mrb[0].mxu0
        %v4223 = vadd.f32 %v1275, %v4222
        %v4224 = vpop.f32.mrb[0].mxu0
        %v4225 = vadd.f32 %v1279, %v4224
        %v4226 = vpop.f32.mrb[0].mxu0
        %v4227 = vadd.f32 %v1275, %v4226
        %v4228 = vpop.f32.mrb[0].mxu0
        %v4229 = vadd.f32 %v1279, %v4228
        %4230 = vdwg.mxu0
        %4231 = vmatprep.subr.bf16.mxu0 %v2887
        %4232 = vmatpush1.bf16.msra.mxu0 %v2886
        %4233 = vmatprep.subr.bf16.mxu0 %v2891
        %4234 = vmatpush1.bf16.msra.mxu0 %v2890
        %4235 = vmatprep.subr.bf16.mxu0 %v2895
        %4236 = vmatpush1.bf16.msra.mxu0 %v2894
        %4237 = vmatprep.subr.bf16.mxu0 %v2899
        %4238 = vmatpush1.bf16.msra.mxu0 %v2898
        %4239 = vmatprep.subr.bf16.mxu0 %v2903
        %4240 = vmatpush1.bf16.msra.mxu0 %v2902
        %4241 = vmatprep.subr.bf16.mxu0 %v2907
        %4242 = vmatpush1.bf16.msra.mxu0 %v2906
        %4243 = vmatprep.subr.bf16.mxu0 %v2911
        %4244 = vmatpush1.bf16.msra.mxu0 %v2910
        %4245 = vmatprep.subr.bf16.mxu0 %v2915
        %4246 = vmatpush1.bf16.msra.mxu0 %v2914
        %4247 = vmatprep.subr.bf16.mxu0 %v2919
        %4248 = vmatpush1.bf16.msra.mxu0 %v2918
        %4249 = vmatprep.subr.bf16.mxu0 %v2923
        %4250 = vmatpush1.bf16.msra.mxu0 %v2922
        %4251 = vmatprep.subr.bf16.mxu0 %v2927
        %4252 = vmatpush1.bf16.msra.mxu0 %v2926
        %4253 = vmatprep.subr.bf16.mxu0 %v2931
        %4254 = vmatpush1.bf16.msra.mxu0 %v2930
        %4255 = vmatprep.subr.bf16.mxu0 %v2935
        %4256 = vmatpush1.bf16.msra.mxu0 %v2934
        %4257 = vmatprep.subr.bf16.mxu0 %v2939
        %4258 = vmatpush1.bf16.msra.mxu0 %v2938
        %4259 = vmatprep.subr.bf16.mxu0 %v2943
        %4260 = vmatpush1.bf16.msra.mxu0 %v2942
        %4261 = vmatprep.subr.bf16.mxu0 %v2947
        %4262 = vmatpush1.bf16.msra.mxu0 %v2946
        %4263 = vmatprep.mubr.bf16.mxu0 %v688
        %4264 = vmatmul.mubr.bf16.gmra.mrb[0].mxu0 %v687
        %v4265 = vpop.f32.mrb[0].mxu0
        %v4266 = vadd.f32 %v4223, %v4265
        %v4267 = vpop.f32.mrb[0].mxu0
        %v4268 = vadd.f32 %v4225, %v4267
        %v4269 = vpop.f32.mrb[0].mxu0
        %v4270 = vadd.f32 %v4227, %v4269
        %v4271 = vpop.f32.mrb[0].mxu0
        %v4272 = vadd.f32 %v4229, %v4271
        %4273 = vdwg.mxu0
        %4274 = vmatprep.subr.bf16.mxu0 %v2951
        %4275 = vmatpush1.bf16.msra.mxu0 %v2950
        %4276 = vmatprep.subr.bf16.mxu0 %v2955
        %4277 = vmatpush1.bf16.msra.mxu0 %v2954
        %4278 = vmatprep.subr.bf16.mxu0 %v2959
        %4279 = vmatpush1.bf16.msra.mxu0 %v2958
        %4280 = vmatprep.subr.bf16.mxu0 %v2963
        %4281 = vmatpush1.bf16.msra.mxu0 %v2962
        %4282 = vmatprep.subr.bf16.mxu0 %v2967
        %4283 = vmatpush1.bf16.msra.mxu0 %v2966
        %4284 = vmatprep.subr.bf16.mxu0 %v2971
        %4285 = vmatpush1.bf16.msra.mxu0 %v2970
        %4286 = vmatprep.subr.bf16.mxu0 %v2975
        %4287 = vmatpush1.bf16.msra.mxu0 %v2974
        %4288 = vmatprep.subr.bf16.mxu0 %v2979
        %4289 = vmatpush1.bf16.msra.mxu0 %v2978
        %4290 = vmatprep.subr.bf16.mxu0 %v2983
        %4291 = vmatpush1.bf16.msra.mxu0 %v2982
        %4292 = vmatprep.subr.bf16.mxu0 %v2987
        %4293 = vmatpush1.bf16.msra.mxu0 %v2986
        %4294 = vmatprep.subr.bf16.mxu0 %v2991
        %4295 = vmatpush1.bf16.msra.mxu0 %v2990
        %4296 = vmatprep.subr.bf16.mxu0 %v2995
        %4297 = vmatpush1.bf16.msra.mxu0 %v2994
        %4298 = vmatprep.subr.bf16.mxu0 %v2999
        %4299 = vmatpush1.bf16.msra.mxu0 %v2998
        %4300 = vmatprep.subr.bf16.mxu0 %v3003
        %4301 = vmatpush1.bf16.msra.mxu0 %v3002
        %4302 = vmatprep.subr.bf16.mxu0 %v3007
        %4303 = vmatpush1.bf16.msra.mxu0 %v3006
        %4304 = vmatprep.subr.bf16.mxu0 %v3011
        %4305 = vmatpush1.bf16.msra.mxu0 %v3010
        %4306 = vmatprep.mubr.bf16.mxu0 %v704
        %4307 = vmatmul.mubr.bf16.gmra.mrb[0].mxu0 %v697
        %v4308 = vpop.f32.mrb[0].mxu0
        %v4309 = vadd.f32 %v4266, %v4308
        %v4310 = vpop.f32.mrb[0].mxu0
        %v4311 = vadd.f32 %v4268, %v4310
        %v4312 = vpop.f32.mrb[0].mxu0
        %v4313 = vadd.f32 %v4270, %v4312
        %v4314 = vpop.f32.mrb[0].mxu0
        %v4315 = vadd.f32 %v4272, %v4314
        %4316 = vdwg.mxu0
        %4317 = vmatprep.subr.bf16.mxu0 %v3015
        %4318 = vmatpush1.bf16.msra.mxu0 %v3014
        %4319 = vmatprep.subr.bf16.mxu0 %v3019
        %4320 = vmatpush1.bf16.msra.mxu0 %v3018
        %4321 = vmatprep.subr.bf16.mxu0 %v3023
        %4322 = vmatpush1.bf16.msra.mxu0 %v3022
        %4323 = vmatprep.subr.bf16.mxu0 %v3027
        %4324 = vmatpush1.bf16.msra.mxu0 %v3026
        %4325 = vmatprep.subr.bf16.mxu0 %v3031
        %4326 = vmatpush1.bf16.msra.mxu0 %v3030
        %4327 = vmatprep.subr.bf16.mxu0 %v3035
        %4328 = vmatpush1.bf16.msra.mxu0 %v3034
        %4329 = vmatprep.subr.bf16.mxu0 %v3039
        %4330 = vmatpush1.bf16.msra.mxu0 %v3038
        %4331 = vmatprep.subr.bf16.mxu0 %v3043
        %4332 = vmatpush1.bf16.msra.mxu0 %v3042
        %4333 = vmatprep.subr.bf16.mxu0 %v3047
        %4334 = vmatpush1.bf16.msra.mxu0 %v3046
        %4335 = vmatprep.subr.bf16.mxu0 %v3051
        %4336 = vmatpush1.bf16.msra.mxu0 %v3050
        %4337 = vmatprep.subr.bf16.mxu0 %v3055
        %4338 = vmatpush1.bf16.msra.mxu0 %v3054
        %4339 = vmatprep.subr.bf16.mxu0 %v3059
        %4340 = vmatpush1.bf16.msra.mxu0 %v3058
        %4341 = vmatprep.subr.bf16.mxu0 %v3063
        %4342 = vmatpush1.bf16.msra.mxu0 %v3062
        %4343 = vmatprep.subr.bf16.mxu0 %v3067
        %4344 = vmatpush1.bf16.msra.mxu0 %v3066
        %4345 = vmatprep.subr.bf16.mxu0 %v3071
        %4346 = vmatpush1.bf16.msra.mxu0 %v3070
        %4347 = vmatprep.subr.bf16.mxu0 %v3075
        %4348 = vmatpush1.bf16.msra.mxu0 %v3074
        %4349 = vmatprep.mubr.bf16.mxu0 %v718
        %4350 = vmatmul.mubr.bf16.gmra.mrb[0].mxu0 %v711
        %v4351 = vpop.f32.mrb[0].mxu0
        %v4352 = vadd.f32 %v4309, %v4351
        %v4353 = vpop.f32.mrb[0].mxu0
        %v4354 = vadd.f32 %v4311, %v4353
        %v4355 = vpop.f32.mrb[0].mxu0
        %v4356 = vadd.f32 %v4313, %v4355
        %v4357 = vpop.f32.mrb[0].mxu0
        %v4358 = vadd.f32 %v4315, %v4357
        %4359 = vdwg.mxu0
        %4360 = vmatprep.subr.bf16.mxu0 %v3079
        %4361 = vmatpush1.bf16.msra.mxu0 %v3078
        %4362 = vmatprep.subr.bf16.mxu0 %v3083
        %4363 = vmatpush1.bf16.msra.mxu0 %v3082
        %4364 = vmatprep.subr.bf16.mxu0 %v3087
        %4365 = vmatpush1.bf16.msra.mxu0 %v3086
        %4366 = vmatprep.subr.bf16.mxu0 %v3091
        %4367 = vmatpush1.bf16.msra.mxu0 %v3090
        %4368 = vmatprep.subr.bf16.mxu0 %v3095
        %4369 = vmatpush1.bf16.msra.mxu0 %v3094
        %4370 = vmatprep.subr.bf16.mxu0 %v3099
        %4371 = vmatpush1.bf16.msra.mxu0 %v3098
        %4372 = vmatprep.subr.bf16.mxu0 %v3103
        %4373 = vmatpush1.bf16.msra.mxu0 %v3102
        %4374 = vmatprep.subr.bf16.mxu0 %v3107
        %4375 = vmatpush1.bf16.msra.mxu0 %v3106
        %4376 = vmatprep.subr.bf16.mxu0 %v3111
        %4377 = vmatpush1.bf16.msra.mxu0 %v3110
        %4378 = vmatprep.subr.bf16.mxu0 %v3115
        %4379 = vmatpush1.bf16.msra.mxu0 %v3114
        %4380 = vmatprep.subr.bf16.mxu0 %v3119
        %4381 = vmatpush1.bf16.msra.mxu0 %v3118
        %4382 = vmatprep.subr.bf16.mxu0 %v3123
        %4383 = vmatpush1.bf16.msra.mxu0 %v3122
        %4384 = vmatprep.subr.bf16.mxu0 %v3127
        %4385 = vmatpush1.bf16.msra.mxu0 %v3126
        %4386 = vmatprep.subr.bf16.mxu0 %v3131
        %4387 = vmatpush1.bf16.msra.mxu0 %v3130
        %4388 = vmatprep.subr.bf16.mxu0 %v3135
        %4389 = vmatpush1.bf16.msra.mxu0 %v3134
        %4390 = vmatprep.subr.bf16.mxu0 %v3139
        %4391 = vmatpush1.bf16.msra.mxu0 %v3138
        %4392 = vmatprep.mubr.bf16.mxu0 %v728
        %4393 = vmatmul.mubr.bf16.gmra.mrb[0].mxu0 %v727
        %v4394 = vpop.f32.mrb[0].mxu0
        %v4395 = vadd.f32 %v4352, %v4394
        %v4396 = vpop.f32.mrb[0].mxu0
        %v4397 = vadd.f32 %v4354, %v4396
        %v4398 = vpop.f32.mrb[0].mxu0
        %v4399 = vadd.f32 %v4356, %v4398
        %v4400 = vpop.f32.mrb[0].mxu0
        %v4401 = vadd.f32 %v4358, %v4400
        %4402 = vdwg.mxu0
        %4403 = vmatprep.subr.bf16.mxu0 %v3143
        %4404 = vmatpush1.bf16.msra.mxu0 %v3142
        %4405 = vmatprep.subr.bf16.mxu0 %v3147
        %4406 = vmatpush1.bf16.msra.mxu0 %v3146
        %4407 = vmatprep.subr.bf16.mxu0 %v3151
        %4408 = vmatpush1.bf16.msra.mxu0 %v3150
        %4409 = vmatprep.subr.bf16.mxu0 %v3155
        %4410 = vmatpush1.bf16.msra.mxu0 %v3154
        %4411 = vmatprep.subr.bf16.mxu0 %v3159
        %4412 = vmatpush1.bf16.msra.mxu0 %v3158
        %4413 = vmatprep.subr.bf16.mxu0 %v3163
        %4414 = vmatpush1.bf16.msra.mxu0 %v3162
        %4415 = vmatprep.subr.bf16.mxu0 %v3167
        %4416 = vmatpush1.bf16.msra.mxu0 %v3166
        %4417 = vmatprep.subr.bf16.mxu0 %v3171
        %4418 = vmatpush1.bf16.msra.mxu0 %v3170
        %4419 = vmatprep.subr.bf16.mxu0 %v3175
        %4420 = vmatpush1.bf16.msra.mxu0 %v3174
        %4421 = vmatprep.subr.bf16.mxu0 %v3179
        %4422 = vmatpush1.bf16.msra.mxu0 %v3178
        %4423 = vmatprep.subr.bf16.mxu0 %v3183
        %4424 = vmatpush1.bf16.msra.mxu0 %v3182
        %4425 = vmatprep.subr.bf16.mxu0 %v3187
        %4426 = vmatpush1.bf16.msra.mxu0 %v3186
        %4427 = vmatprep.subr.bf16.mxu0 %v3191
        %4428 = vmatpush1.bf16.msra.mxu0 %v3190
        %4429 = vmatprep.subr.bf16.mxu0 %v3195
        %4430 = vmatpush1.bf16.msra.mxu0 %v3194
        %4431 = vmatprep.subr.bf16.mxu0 %v3199
        %4432 = vmatpush1.bf16.msra.mxu0 %v3198
        %4433 = vmatprep.subr.bf16.mxu0 %v3203
        %4434 = vmatpush1.bf16.msra.mxu0 %v3202
        %4435 = vmatprep.mubr.bf16.mxu0 %v730
        %4436 = vmatmul.mubr.bf16.gmra.mrb[0].mxu0 %v729
        %v4437 = vpop.f32.mrb[0].mxu0
        %v4438 = vadd.f32 %v4395, %v4437
        %v4439 = vpop.f32.mrb[0].mxu0
        %v4440 = vadd.f32 %v4397, %v4439
        %v4441 = vpop.f32.mrb[0].mxu0
        %v4442 = vadd.f32 %v4399, %v4441
        %v4443 = vpop.f32.mrb[0].mxu0
        %v4444 = vadd.f32 %v4401, %v4443
        %4445 = vdwg.mxu0
        %4446 = vmatprep.subr.bf16.mxu0 %v3207
        %4447 = vmatpush1.bf16.msra.mxu0 %v3206
        %4448 = vmatprep.subr.bf16.mxu0 %v3211
        %4449 = vmatpush1.bf16.msra.mxu0 %v3210
        %4450 = vmatprep.subr.bf16.mxu0 %v3215
        %4451 = vmatpush1.bf16.msra.mxu0 %v3214
        %4452 = vmatprep.subr.bf16.mxu0 %v3219
        %4453 = vmatpush1.bf16.msra.mxu0 %v3218
        %4454 = vmatprep.subr.bf16.mxu0 %v3223
        %4455 = vmatpush1.bf16.msra.mxu0 %v3222
        %4456 = vmatprep.subr.bf16.mxu0 %v3227
        %4457 = vmatpush1.bf16.msra.mxu0 %v3226
        %4458 = vmatprep.subr.bf16.mxu0 %v3231
        %4459 = vmatpush1.bf16.msra.mxu0 %v3230
        %4460 = vmatprep.subr.bf16.mxu0 %v3235
        %4461 = vmatpush1.bf16.msra.mxu0 %v3234
        %4462 = vmatprep.subr.bf16.mxu0 %v3239
        %4463 = vmatpush1.bf16.msra.mxu0 %v3238
        %4464 = vmatprep.subr.bf16.mxu0 %v3243
        %4465 = vmatpush1.bf16.msra.mxu0 %v3242
        %4466 = vmatprep.subr.bf16.mxu0 %v3247
        %4467 = vmatpush1.bf16.msra.mxu0 %v3246
        %4468 = vmatprep.subr.bf16.mxu0 %v3251
        %4469 = vmatpush1.bf16.msra.mxu0 %v3250
        %4470 = vmatprep.subr.bf16.mxu0 %v3255
        %4471 = vmatpush1.bf16.msra.mxu0 %v3254
        %4472 = vmatprep.subr.bf16.mxu0 %v3259
        %4473 = vmatpush1.bf16.msra.mxu0 %v3258
        %4474 = vmatprep.subr.bf16.mxu0 %v3263
        %4475 = vmatpush1.bf16.msra.mxu0 %v3262
        %4476 = vmatprep.subr.bf16.mxu0 %v3267
        %4477 = vmatpush1.bf16.msra.mxu0 %v3266
        %4478 = vmatprep.mubr.bf16.mxu0 %v740
        %4479 = vmatmul.mubr.bf16.gmra.mrb[0].mxu0 %v737
        %v4480 = vpop.f32.mrb[0].mxu0
        %v4481 = vadd.f32 %v4438, %v4480
        %v4482 = vpop.f32.mrb[0].mxu0
        %v4483 = vadd.f32 %v4440, %v4482
        %v4484 = vpop.f32.mrb[0].mxu0
        %v4485 = vadd.f32 %v4442, %v4484
        %v4486 = vpop.f32.mrb[0].mxu0
        %v4487 = vadd.f32 %v4444, %v4486
        %4488 = vdwg.mxu0
        %4489 = vmatprep.subr.bf16.mxu0 %v3271
        %4490 = vmatpush1.bf16.msra.mxu0 %v3270
        %4491 = vmatprep.subr.bf16.mxu0 %v3275
        %4492 = vmatpush1.bf16.msra.mxu0 %v3274
        %4493 = vmatprep.subr.bf16.mxu0 %v3279
        %4494 = vmatpush1.bf16.msra.mxu0 %v3278
        %4495 = vmatprep.subr.bf16.mxu0 %v3283
        %4496 = vmatpush1.bf16.msra.mxu0 %v3282
        %4497 = vmatprep.subr.bf16.mxu0 %v3287
        %4498 = vmatpush1.bf16.msra.mxu0 %v3286
        %4499 = vmatprep.subr.bf16.mxu0 %v3291
        %4500 = vmatpush1.bf16.msra.mxu0 %v3290
        %4501 = vmatprep.subr.bf16.mxu0 %v3295
        %4502 = vmatpush1.bf16.msra.mxu0 %v3294
        %4503 = vmatprep.subr.bf16.mxu0 %v3299
        %4504 = vmatpush1.bf16.msra.mxu0 %v3298
        %4505 = vmatprep.subr.bf16.mxu0 %v3303
        %4506 = vmatpush1.bf16.msra.mxu0 %v3302
        %4507 = vmatprep.subr.bf16.mxu0 %v3307
        %4508 = vmatpush1.bf16.msra.mxu0 %v3306
        %4509 = vmatprep.subr.bf16.mxu0 %v3311
        %4510 = vmatpush1.bf16.msra.mxu0 %v3310
        %4511 = vmatprep.subr.bf16.mxu0 %v3315
        %4512 = vmatpush1.bf16.msra.mxu0 %v3314
        %4513 = vmatprep.subr.bf16.mxu0 %v3319
        %4514 = vmatpush1.bf16.msra.mxu0 %v3318
        %4515 = vmatprep.subr.bf16.mxu0 %v3323
        %4516 = vmatpush1.bf16.msra.mxu0 %v3322
        %4517 = vmatprep.subr.bf16.mxu0 %v3327
        %4518 = vmatpush1.bf16.msra.mxu0 %v3326
        %4519 = vmatprep.subr.bf16.mxu0 %v3331
        %4520 = vmatpush1.bf16.msra.mxu0 %v3330
        %4521 = vmatprep.mubr.bf16.mxu0 %v746
        %4522 = vmatmul.mubr.bf16.gmra.mrb[0].mxu0 %v743
        %v4523 = vpop.f32.mrb[0].mxu0
        %v4524 = vadd.f32 %v4481, %v4523
        %v4525 = vpop.f32.mrb[0].mxu0
        %v4526 = vadd.f32 %v4483, %v4525
        %v4527 = vpop.f32.mrb[0].mxu0
        %v4528 = vadd.f32 %v4485, %v4527
        %v4529 = vpop.f32.mrb[0].mxu0
        %v4530 = vadd.f32 %v4487, %v4529
        %4531 = vdwg.mxu0
        %v4532 = vmax.f32 %v4180, 0.0
        %v4533 = vmax.f32 %v4182, 0.0
        %v4534 = vmax.f32 %v4524, 0.0
        %v4535 = vmax.f32 %v4526, 0.0
        %v4536 = vmax.f32 %v4184, 0.0
        %v4537 = vmax.f32 %v4186, 0.0
        %v4538 = vmax.f32 %v4528, 0.0
        %v4539 = vmax.f32 %v4530, 0.0
        %v4540 = vpack.c.bf16 %v4536, %v4532
        %v4541 = vpack.c.bf16 %v4537, %v4533
        %v4542 = vpack.c.bf16 %v4538, %v4534
        %v4543 = vpack.c.bf16 %v4539, %v4535
        %s4544 = scalar_lea.vmem [#allocation14], 2
        %v4545 = vld [vmem:[%s4544] ss:$8 sm:$0xf]
        %v4547 = vshrl.u32 %v4540, 16
        %v4549 = vshll.u32 %v4540, 16
        %v4551 = vrot.slane %v4549, 1
        %v4552 = vor.u32 %v4547, %v4551
        %v4554 = vshrl.u32 %v4541, 16
        %v4556 = vshll.u32 %v4541, 16
        %v4558 = vrot.slane %v4556, 1
        %v4559 = vor.u32 %v4554, %v4558
        %v4561 = vshrl.u32 %v4542, 16
        %v4563 = vshll.u32 %v4542, 16
        %v4565 = vrot.slane %v4563, 1
        %v4566 = vor.u32 %v4561, %v4565
        %v4568 = vshrl.u32 %v4543, 16
        %v4570 = vshll.u32 %v4543, 16
        %v4572 = vrot.slane %v4570, 1
        %v4573 = vor.u32 %v4568, %v4572
        %v4582 = vrot.slane %v4540, 1
        %v4583 = vrot.slane %v4541, 1
        %v4584 = vrot.slane %v4542, 1
        %v4585 = vrot.slane %v4543, 1
        %v4590 = vrot.slane %v4547, 1
        %v4591 = vrot.slane %v4549, 2
        %v4592 = vor.u32 %v4590, %v4591
        %v4593 = vrot.slane %v4554, 1
        %v4594 = vrot.slane %v4556, 2
        %v4595 = vor.u32 %v4593, %v4594
        %v4596 = vrot.slane %v4561, 1
        %v4597 = vrot.slane %v4563, 2
        %v4598 = vor.u32 %v4596, %v4597
        %v4599 = vrot.slane %v4568, 1
        %v4600 = vrot.slane %v4570, 2
        %v4601 = vor.u32 %v4599, %v4600
        %v4606 = vld [vmem:[#allocation7] sm:$0xff]
        %v4607 = vld [vmem:[#allocation7 + $0x8] sm:$0xff]
        %v4608 = vld [vmem:[#allocation7 + $0x10] sm:$0xff]
        %v4609 = vld [vmem:[#allocation7 + $0x18] sm:$0xff]
        %v4610 = vld [vmem:[#allocation7 + $0x20] sm:$0xff]
        %v4611 = vld [vmem:[#allocation7 + $0x28] sm:$0xff]
        %v4612 = vld [vmem:[#allocation7 + $0x30] sm:$0xff]
        %v4613 = vld [vmem:[#allocation7 + $0x38] sm:$0xff]
        %v4614 = vld [vmem:[#allocation7 + $0x40] sm:$0xff]
        %v4615 = vld [vmem:[#allocation7 + $0x48] sm:$0xff]
        %v4616 = vld [vmem:[#allocation7 + $0x50] sm:$0xff]
        %v4617 = vld [vmem:[#allocation7 + $0x58] sm:$0xff]
        %v4618 = vld [vmem:[#allocation7 + $0x60] sm:$0xff]
        %v4619 = vld [vmem:[#allocation7 + $0x68] sm:$0xff]
        %v4620 = vld [vmem:[#allocation7 + $0x70] sm:$0xff]
        %v4621 = vld [vmem:[#allocation7 + $0x78] sm:$0xff]
        %v4622 = vld [vmem:[#allocation7 + $0x80] sm:$0xff]
        %v4623 = vld [vmem:[#allocation7 + $0x88] sm:$0xff]
        %v4624 = vld [vmem:[#allocation7 + $0x90] sm:$0xff]
        %v4625 = vld [vmem:[#allocation7 + $0x98] sm:$0xff]
        %v4626 = vld [vmem:[#allocation7 + $0xa0] sm:$0xff]
        %v4627 = vld [vmem:[#allocation7 + $0xa8] sm:$0xff]
        %v4628 = vld [vmem:[#allocation7 + $0xb0] sm:$0xff]
        %v4629 = vld [vmem:[#allocation7 + $0xb8] sm:$0xff]
        %v4630 = vld [vmem:[#allocation7 + $0xc0] sm:$0xff]
        %v4631 = vld [vmem:[#allocation7 + $0xc8] sm:$0xff]
        %v4632 = vld [vmem:[#allocation7 + $0xd0] sm:$0xff]
        %v4633 = vld [vmem:[#allocation7 + $0xd8] sm:$0xff]
        %v4634 = vld [vmem:[#allocation7 + $0xe0] sm:$0xff]
        %v4635 = vld [vmem:[#allocation7 + $0xe8] sm:$0xff]
        %v4636 = vld [vmem:[#allocation7 + $0xf0] sm:$0xff]
        %v4637 = vld [vmem:[#allocation7 + $0xf8] sm:$0xff]
        %v4638 = vld [vmem:[#allocation7 + $0x100] sm:$0xff]
        %v4639 = vld [vmem:[#allocation7 + $0x108] sm:$0xff]
        %v4640 = vld [vmem:[#allocation7 + $0x110] sm:$0xff]
        %v4641 = vld [vmem:[#allocation7 + $0x118] sm:$0xff]
        %v4642 = vld [vmem:[#allocation7 + $0x120] sm:$0xff]
        %v4643 = vld [vmem:[#allocation7 + $0x128] sm:$0xff]
        %v4644 = vld [vmem:[#allocation7 + $0x130] sm:$0xff]
        %v4645 = vld [vmem:[#allocation7 + $0x138] sm:$0xff]
        %v4646 = vld [vmem:[#allocation7 + $0x140] sm:$0xff]
        %v4647 = vld [vmem:[#allocation7 + $0x148] sm:$0xff]
        %v4648 = vld [vmem:[#allocation7 + $0x150] sm:$0xff]
        %v4649 = vld [vmem:[#allocation7 + $0x158] sm:$0xff]
        %v4650 = vld [vmem:[#allocation7 + $0x160] sm:$0xff]
        %v4651 = vld [vmem:[#allocation7 + $0x168] sm:$0xff]
        %v4652 = vld [vmem:[#allocation7 + $0x170] sm:$0xff]
        %v4653 = vld [vmem:[#allocation7 + $0x178] sm:$0xff]
        %v4654 = vld [vmem:[#allocation7 + $0x180] sm:$0xff]
        %v4655 = vld [vmem:[#allocation7 + $0x188] sm:$0xff]
        %v4656 = vld [vmem:[#allocation7 + $0x190] sm:$0xff]
        %v4657 = vld [vmem:[#allocation7 + $0x198] sm:$0xff]
        %v4658 = vld [vmem:[#allocation7 + $0x1a0] sm:$0xff]
        %v4659 = vld [vmem:[#allocation7 + $0x1a8] sm:$0xff]
        %v4660 = vld [vmem:[#allocation7 + $0x1b0] sm:$0xff]
        %v4661 = vld [vmem:[#allocation7 + $0x1b8] sm:$0xff]
        %v4662 = vld [vmem:[#allocation7 + $0x1c0] sm:$0xff]
        %v4663 = vld [vmem:[#allocation7 + $0x1c8] sm:$0xff]
        %v4664 = vld [vmem:[#allocation7 + $0x1d0] sm:$0xff]
        %v4665 = vld [vmem:[#allocation7 + $0x1d8] sm:$0xff]
        %v4666 = vld [vmem:[#allocation7 + $0x1e0] sm:$0xff]
        %v4667 = vld [vmem:[#allocation7 + $0x1e8] sm:$0xff]
        %v4668 = vld [vmem:[#allocation7 + $0x1f0] sm:$0xff]
        %v4669 = vld [vmem:[#allocation7 + $0x1f8] sm:$0xff]
        %v4670 = vld [vmem:[#allocation7 + $0x200] sm:$0xff]
        %v4671 = vld [vmem:[#allocation7 + $0x208] sm:$0xff]
        %v4672 = vld [vmem:[#allocation7 + $0x210] sm:$0xff]
        %v4673 = vld [vmem:[#allocation7 + $0x218] sm:$0xff]
        %v4674 = vld [vmem:[#allocation7 + $0x220] sm:$0xff]
        %v4675 = vld [vmem:[#allocation7 + $0x228] sm:$0xff]
        %v4676 = vld [vmem:[#allocation7 + $0x230] sm:$0xff]
        %v4677 = vld [vmem:[#allocation7 + $0x238] sm:$0xff]
        %v4678 = vld [vmem:[#allocation7 + $0x240] sm:$0xff]
        %v4679 = vld [vmem:[#allocation7 + $0x248] sm:$0xff]
        %v4680 = vld [vmem:[#allocation7 + $0x250] sm:$0xff]
        %v4681 = vld [vmem:[#allocation7 + $0x258] sm:$0xff]
        %v4682 = vld [vmem:[#allocation7 + $0x260] sm:$0xff]
        %v4683 = vld [vmem:[#allocation7 + $0x268] sm:$0xff]
        %v4684 = vld [vmem:[#allocation7 + $0x270] sm:$0xff]
        %v4685 = vld [vmem:[#allocation7 + $0x278] sm:$0xff]
        %v4686 = vld [vmem:[#allocation7 + $0x280] sm:$0xff]
        %v4687 = vld [vmem:[#allocation7 + $0x288] sm:$0xff]
        %v4688 = vld [vmem:[#allocation7 + $0x290] sm:$0xff]
        %v4689 = vld [vmem:[#allocation7 + $0x298] sm:$0xff]
        %v4690 = vld [vmem:[#allocation7 + $0x2a0] sm:$0xff]
        %v4691 = vld [vmem:[#allocation7 + $0x2a8] sm:$0xff]
        %v4692 = vld [vmem:[#allocation7 + $0x2b0] sm:$0xff]
        %v4693 = vld [vmem:[#allocation7 + $0x2b8] sm:$0xff]
        %v4694 = vld [vmem:[#allocation7 + $0x2c0] sm:$0xff]
        %v4695 = vld [vmem:[#allocation7 + $0x2c8] sm:$0xff]
        %v4696 = vld [vmem:[#allocation7 + $0x2d0] sm:$0xff]
        %v4697 = vld [vmem:[#allocation7 + $0x2d8] sm:$0xff]
        %v4698 = vld [vmem:[#allocation7 + $0x2e0] sm:$0xff]
        %v4699 = vld [vmem:[#allocation7 + $0x2e8] sm:$0xff]
        %v4700 = vld [vmem:[#allocation7 + $0x2f0] sm:$0xff]
        %v4701 = vld [vmem:[#allocation7 + $0x2f8] sm:$0xff]
        %v4702 = vld [vmem:[#allocation7 + $0x300] sm:$0xff]
        %v4703 = vld [vmem:[#allocation7 + $0x308] sm:$0xff]
        %v4704 = vld [vmem:[#allocation7 + $0x310] sm:$0xff]
        %v4705 = vld [vmem:[#allocation7 + $0x318] sm:$0xff]
        %v4706 = vld [vmem:[#allocation7 + $0x320] sm:$0xff]
        %v4707 = vld [vmem:[#allocation7 + $0x328] sm:$0xff]
        %v4708 = vld [vmem:[#allocation7 + $0x330] sm:$0xff]
        %v4709 = vld [vmem:[#allocation7 + $0x338] sm:$0xff]
        %v4710 = vld [vmem:[#allocation7 + $0x340] sm:$0xff]
        %v4711 = vld [vmem:[#allocation7 + $0x348] sm:$0xff]
        %v4712 = vld [vmem:[#allocation7 + $0x350] sm:$0xff]
        %v4713 = vld [vmem:[#allocation7 + $0x358] sm:$0xff]
        %v4714 = vld [vmem:[#allocation7 + $0x360] sm:$0xff]
        %v4715 = vld [vmem:[#allocation7 + $0x368] sm:$0xff]
        %v4716 = vld [vmem:[#allocation7 + $0x370] sm:$0xff]
        %v4717 = vld [vmem:[#allocation7 + $0x378] sm:$0xff]
        %v4718 = vld [vmem:[#allocation7 + $0x380] sm:$0xff]
        %v4719 = vld [vmem:[#allocation7 + $0x388] sm:$0xff]
        %v4720 = vld [vmem:[#allocation7 + $0x390] sm:$0xff]
        %v4721 = vld [vmem:[#allocation7 + $0x398] sm:$0xff]
        %v4722 = vld [vmem:[#allocation7 + $0x3a0] sm:$0xff]
        %v4723 = vld [vmem:[#allocation7 + $0x3a8] sm:$0xff]
        %v4724 = vld [vmem:[#allocation7 + $0x3b0] sm:$0xff]
        %v4725 = vld [vmem:[#allocation7 + $0x3b8] sm:$0xff]
        %v4726 = vld [vmem:[#allocation7 + $0x3c0] sm:$0xff]
        %v4727 = vld [vmem:[#allocation7 + $0x3c8] sm:$0xff]
        %v4728 = vld [vmem:[#allocation7 + $0x3d0] sm:$0xff]
        %v4729 = vld [vmem:[#allocation7 + $0x3d8] sm:$0xff]
        %v4730 = vld [vmem:[#allocation7 + $0x3e0] sm:$0xff]
        %v4731 = vld [vmem:[#allocation7 + $0x3e8] sm:$0xff]
        %v4732 = vld [vmem:[#allocation7 + $0x3f0] sm:$0xff]
        %v4733 = vld [vmem:[#allocation7 + $0x3f8] sm:$0xff]
        %v4734 = vld [vmem:[#allocation7 + $0x400] sm:$0xff]
        %v4735 = vld [vmem:[#allocation7 + $0x408] sm:$0xff]
        %v4736 = vld [vmem:[#allocation7 + $0x410] sm:$0xff]
        %v4737 = vld [vmem:[#allocation7 + $0x418] sm:$0xff]
        %v4738 = vld [vmem:[#allocation7 + $0x420] sm:$0xff]
        %v4739 = vld [vmem:[#allocation7 + $0x428] sm:$0xff]
        %v4740 = vld [vmem:[#allocation7 + $0x430] sm:$0xff]
        %v4741 = vld [vmem:[#allocation7 + $0x438] sm:$0xff]
        %v4742 = vld [vmem:[#allocation7 + $0x440] sm:$0xff]
        %v4743 = vld [vmem:[#allocation7 + $0x448] sm:$0xff]
        %v4744 = vld [vmem:[#allocation7 + $0x450] sm:$0xff]
        %v4745 = vld [vmem:[#allocation7 + $0x458] sm:$0xff]
        %v4746 = vld [vmem:[#allocation7 + $0x460] sm:$0xff]
        %v4747 = vld [vmem:[#allocation7 + $0x468] sm:$0xff]
        %v4748 = vld [vmem:[#allocation7 + $0x470] sm:$0xff]
        %v4749 = vld [vmem:[#allocation7 + $0x478] sm:$0xff]
        %v4750 = vld [vmem:[#allocation7 + $0x480] sm:$0xff]
        %v4751 = vld [vmem:[#allocation7 + $0x488] sm:$0xff]
        %v4752 = vld [vmem:[#allocation7 + $0x490] sm:$0xff]
        %v4753 = vld [vmem:[#allocation7 + $0x498] sm:$0xff]
        %v4754 = vld [vmem:[#allocation7 + $0x4a0] sm:$0xff]
        %v4755 = vld [vmem:[#allocation7 + $0x4a8] sm:$0xff]
        %v4756 = vld [vmem:[#allocation7 + $0x4b0] sm:$0xff]
        %v4757 = vld [vmem:[#allocation7 + $0x4b8] sm:$0xff]
        %v4758 = vld [vmem:[#allocation7 + $0x4c0] sm:$0xff]
        %v4759 = vld [vmem:[#allocation7 + $0x4c8] sm:$0xff]
        %v4760 = vld [vmem:[#allocation7 + $0x4d0] sm:$0xff]
        %v4761 = vld [vmem:[#allocation7 + $0x4d8] sm:$0xff]
        %v4762 = vld [vmem:[#allocation7 + $0x4e0] sm:$0xff]
        %v4763 = vld [vmem:[#allocation7 + $0x4e8] sm:$0xff]
        %v4764 = vld [vmem:[#allocation7 + $0x4f0] sm:$0xff]
        %v4765 = vld [vmem:[#allocation7 + $0x4f8] sm:$0xff]
        %v4766 = vld [vmem:[#allocation7 + $0x500] sm:$0xff]
        %v4767 = vld [vmem:[#allocation7 + $0x508] sm:$0xff]
        %v4768 = vld [vmem:[#allocation7 + $0x510] sm:$0xff]
        %v4769 = vld [vmem:[#allocation7 + $0x518] sm:$0xff]
        %v4770 = vld [vmem:[#allocation7 + $0x520] sm:$0xff]
        %v4771 = vld [vmem:[#allocation7 + $0x528] sm:$0xff]
        %v4772 = vld [vmem:[#allocation7 + $0x530] sm:$0xff]
        %v4773 = vld [vmem:[#allocation7 + $0x538] sm:$0xff]
        %v4774 = vld [vmem:[#allocation7 + $0x540] sm:$0xff]
        %v4775 = vld [vmem:[#allocation7 + $0x548] sm:$0xff]
        %v4776 = vld [vmem:[#allocation7 + $0x550] sm:$0xff]
        %v4777 = vld [vmem:[#allocation7 + $0x558] sm:$0xff]
        %v4778 = vld [vmem:[#allocation7 + $0x560] sm:$0xff]
        %v4779 = vld [vmem:[#allocation7 + $0x568] sm:$0xff]
        %v4780 = vld [vmem:[#allocation7 + $0x570] sm:$0xff]
        %v4781 = vld [vmem:[#allocation7 + $0x578] sm:$0xff]
        %v4782 = vld [vmem:[#allocation7 + $0x580] sm:$0xff]
        %v4783 = vld [vmem:[#allocation7 + $0x588] sm:$0xff]
        %v4784 = vld [vmem:[#allocation7 + $0x590] sm:$0xff]
        %v4785 = vld [vmem:[#allocation7 + $0x598] sm:$0xff]
        %v4786 = vld [vmem:[#allocation7 + $0x5a0] sm:$0xff]
        %v4787 = vld [vmem:[#allocation7 + $0x5a8] sm:$0xff]
        %v4788 = vld [vmem:[#allocation7 + $0x5b0] sm:$0xff]
        %v4789 = vld [vmem:[#allocation7 + $0x5b8] sm:$0xff]
        %v4790 = vld [vmem:[#allocation7 + $0x5c0] sm:$0xff]
        %v4791 = vld [vmem:[#allocation7 + $0x5c8] sm:$0xff]
        %v4792 = vld [vmem:[#allocation7 + $0x5d0] sm:$0xff]
        %v4793 = vld [vmem:[#allocation7 + $0x5d8] sm:$0xff]
        %v4794 = vld [vmem:[#allocation7 + $0x5e0] sm:$0xff]
        %v4795 = vld [vmem:[#allocation7 + $0x5e8] sm:$0xff]
        %v4796 = vld [vmem:[#allocation7 + $0x5f0] sm:$0xff]
        %v4797 = vld [vmem:[#allocation7 + $0x5f8] sm:$0xff]
        %v4798 = vld [vmem:[#allocation7 + $0x600] sm:$0xff]
        %v4799 = vld [vmem:[#allocation7 + $0x608] sm:$0xff]
        %v4800 = vld [vmem:[#allocation7 + $0x610] sm:$0xff]
        %v4801 = vld [vmem:[#allocation7 + $0x618] sm:$0xff]
        %v4802 = vld [vmem:[#allocation7 + $0x620] sm:$0xff]
        %v4803 = vld [vmem:[#allocation7 + $0x628] sm:$0xff]
        %v4804 = vld [vmem:[#allocation7 + $0x630] sm:$0xff]
        %v4805 = vld [vmem:[#allocation7 + $0x638] sm:$0xff]
        %v4806 = vld [vmem:[#allocation7 + $0x640] sm:$0xff]
        %v4807 = vld [vmem:[#allocation7 + $0x648] sm:$0xff]
        %v4808 = vld [vmem:[#allocation7 + $0x650] sm:$0xff]
        %v4809 = vld [vmem:[#allocation7 + $0x658] sm:$0xff]
        %v4810 = vld [vmem:[#allocation7 + $0x660] sm:$0xff]
        %v4811 = vld [vmem:[#allocation7 + $0x668] sm:$0xff]
        %v4812 = vld [vmem:[#allocation7 + $0x670] sm:$0xff]
        %v4813 = vld [vmem:[#allocation7 + $0x678] sm:$0xff]
        %v4814 = vld [vmem:[#allocation7 + $0x680] sm:$0xff]
        %v4815 = vld [vmem:[#allocation7 + $0x688] sm:$0xff]
        %v4816 = vld [vmem:[#allocation7 + $0x690] sm:$0xff]
        %v4817 = vld [vmem:[#allocation7 + $0x698] sm:$0xff]
        %v4818 = vld [vmem:[#allocation7 + $0x6a0] sm:$0xff]
        %v4819 = vld [vmem:[#allocation7 + $0x6a8] sm:$0xff]
        %v4820 = vld [vmem:[#allocation7 + $0x6b0] sm:$0xff]
        %v4821 = vld [vmem:[#allocation7 + $0x6b8] sm:$0xff]
        %v4822 = vld [vmem:[#allocation7 + $0x6c0] sm:$0xff]
        %v4823 = vld [vmem:[#allocation7 + $0x6c8] sm:$0xff]
        %v4824 = vld [vmem:[#allocation7 + $0x6d0] sm:$0xff]
        %v4825 = vld [vmem:[#allocation7 + $0x6d8] sm:$0xff]
        %v4826 = vld [vmem:[#allocation7 + $0x6e0] sm:$0xff]
        %v4827 = vld [vmem:[#allocation7 + $0x6e8] sm:$0xff]
        %v4828 = vld [vmem:[#allocation7 + $0x6f0] sm:$0xff]
        %v4829 = vld [vmem:[#allocation7 + $0x6f8] sm:$0xff]
        %v4830 = vld [vmem:[#allocation7 + $0x700] sm:$0xff]
        %v4831 = vld [vmem:[#allocation7 + $0x708] sm:$0xff]
        %v4832 = vld [vmem:[#allocation7 + $0x710] sm:$0xff]
        %v4833 = vld [vmem:[#allocation7 + $0x718] sm:$0xff]
        %v4834 = vld [vmem:[#allocation7 + $0x720] sm:$0xff]
        %v4835 = vld [vmem:[#allocation7 + $0x728] sm:$0xff]
        %v4836 = vld [vmem:[#allocation7 + $0x730] sm:$0xff]
        %v4837 = vld [vmem:[#allocation7 + $0x738] sm:$0xff]
        %v4838 = vld [vmem:[#allocation7 + $0x740] sm:$0xff]
        %v4839 = vld [vmem:[#allocation7 + $0x748] sm:$0xff]
        %v4840 = vld [vmem:[#allocation7 + $0x750] sm:$0xff]
        %v4841 = vld [vmem:[#allocation7 + $0x758] sm:$0xff]
        %v4842 = vld [vmem:[#allocation7 + $0x760] sm:$0xff]
        %v4843 = vld [vmem:[#allocation7 + $0x768] sm:$0xff]
        %v4844 = vld [vmem:[#allocation7 + $0x770] sm:$0xff]
        %v4845 = vld [vmem:[#allocation7 + $0x778] sm:$0xff]
        %v4846 = vld [vmem:[#allocation7 + $0x780] sm:$0xff]
        %v4847 = vld [vmem:[#allocation7 + $0x788] sm:$0xff]
        %v4848 = vld [vmem:[#allocation7 + $0x790] sm:$0xff]
        %v4849 = vld [vmem:[#allocation7 + $0x798] sm:$0xff]
        %v4850 = vld [vmem:[#allocation7 + $0x7a0] sm:$0xff]
        %v4851 = vld [vmem:[#allocation7 + $0x7a8] sm:$0xff]
        %v4852 = vld [vmem:[#allocation7 + $0x7b0] sm:$0xff]
        %v4853 = vld [vmem:[#allocation7 + $0x7b8] sm:$0xff]
        %v4854 = vld [vmem:[#allocation7 + $0x7c0] sm:$0xff]
        %v4855 = vld [vmem:[#allocation7 + $0x7c8] sm:$0xff]
        %v4856 = vld [vmem:[#allocation7 + $0x7d0] sm:$0xff]
        %v4857 = vld [vmem:[#allocation7 + $0x7d8] sm:$0xff]
        %v4858 = vld [vmem:[#allocation7 + $0x7e0] sm:$0xff]
        %v4859 = vld [vmem:[#allocation7 + $0x7e8] sm:$0xff]
        %v4860 = vld [vmem:[#allocation7 + $0x7f0] sm:$0xff]
        %v4861 = vld [vmem:[#allocation7 + $0x7f8] sm:$0xff]
        %v4862 = vld [vmem:[#allocation7 + $0x800] sm:$0xff]
        %v4863 = vld [vmem:[#allocation7 + $0x808] sm:$0xff]
        %v4864 = vld [vmem:[#allocation7 + $0x810] sm:$0xff]
        %v4865 = vld [vmem:[#allocation7 + $0x818] sm:$0xff]
        %v4866 = vld [vmem:[#allocation7 + $0x820] sm:$0xff]
        %v4867 = vld [vmem:[#allocation7 + $0x828] sm:$0xff]
        %v4868 = vld [vmem:[#allocation7 + $0x830] sm:$0xff]
        %v4869 = vld [vmem:[#allocation7 + $0x838] sm:$0xff]
        %v4870 = vld [vmem:[#allocation7 + $0x840] sm:$0xff]
        %v4871 = vld [vmem:[#allocation7 + $0x848] sm:$0xff]
        %v4872 = vld [vmem:[#allocation7 + $0x850] sm:$0xff]
        %v4873 = vld [vmem:[#allocation7 + $0x858] sm:$0xff]
        %v4874 = vld [vmem:[#allocation7 + $0x860] sm:$0xff]
        %v4875 = vld [vmem:[#allocation7 + $0x868] sm:$0xff]
        %v4876 = vld [vmem:[#allocation7 + $0x870] sm:$0xff]
        %v4877 = vld [vmem:[#allocation7 + $0x878] sm:$0xff]
        %v4878 = vld [vmem:[#allocation7 + $0x880] sm:$0xff]
        %v4879 = vld [vmem:[#allocation7 + $0x888] sm:$0xff]
        %v4880 = vld [vmem:[#allocation7 + $0x890] sm:$0xff]
        %v4881 = vld [vmem:[#allocation7 + $0x898] sm:$0xff]
        %v4882 = vld [vmem:[#allocation7 + $0x8a0] sm:$0xff]
        %v4883 = vld [vmem:[#allocation7 + $0x8a8] sm:$0xff]
        %v4884 = vld [vmem:[#allocation7 + $0x8b0] sm:$0xff]
        %v4885 = vld [vmem:[#allocation7 + $0x8b8] sm:$0xff]
        %v4886 = vld [vmem:[#allocation7 + $0x8c0] sm:$0xff]
        %v4887 = vld [vmem:[#allocation7 + $0x8c8] sm:$0xff]
        %v4888 = vld [vmem:[#allocation7 + $0x8d0] sm:$0xff]
        %v4889 = vld [vmem:[#allocation7 + $0x8d8] sm:$0xff]
        %v4890 = vld [vmem:[#allocation7 + $0x8e0] sm:$0xff]
        %v4891 = vld [vmem:[#allocation7 + $0x8e8] sm:$0xff]
        %v4892 = vld [vmem:[#allocation7 + $0x8f0] sm:$0xff]
        %v4893 = vld [vmem:[#allocation7 + $0x8f8] sm:$0xff]
        %v4894 = vld [vmem:[#allocation7 + $0x900] sm:$0xff]
        %v4895 = vld [vmem:[#allocation7 + $0x908] sm:$0xff]
        %v4896 = vld [vmem:[#allocation7 + $0x910] sm:$0xff]
        %v4897 = vld [vmem:[#allocation7 + $0x918] sm:$0xff]
        %v4898 = vld [vmem:[#allocation7 + $0x920] sm:$0xff]
        %v4899 = vld [vmem:[#allocation7 + $0x928] sm:$0xff]
        %v4900 = vld [vmem:[#allocation7 + $0x930] sm:$0xff]
        %v4901 = vld [vmem:[#allocation7 + $0x938] sm:$0xff]
        %v4902 = vld [vmem:[#allocation7 + $0x940] sm:$0xff]
        %v4903 = vld [vmem:[#allocation7 + $0x948] sm:$0xff]
        %v4904 = vld [vmem:[#allocation7 + $0x950] sm:$0xff]
        %v4905 = vld [vmem:[#allocation7 + $0x958] sm:$0xff]
        %v4906 = vld [vmem:[#allocation7 + $0x960] sm:$0xff]
        %v4907 = vld [vmem:[#allocation7 + $0x968] sm:$0xff]
        %v4908 = vld [vmem:[#allocation7 + $0x970] sm:$0xff]
        %v4909 = vld [vmem:[#allocation7 + $0x978] sm:$0xff]
        %v4910 = vld [vmem:[#allocation7 + $0x980] sm:$0xff]
        %v4911 = vld [vmem:[#allocation7 + $0x988] sm:$0xff]
        %v4912 = vld [vmem:[#allocation7 + $0x990] sm:$0xff]
        %v4913 = vld [vmem:[#allocation7 + $0x998] sm:$0xff]
        %v4914 = vld [vmem:[#allocation7 + $0x9a0] sm:$0xff]
        %v4915 = vld [vmem:[#allocation7 + $0x9a8] sm:$0xff]
        %v4916 = vld [vmem:[#allocation7 + $0x9b0] sm:$0xff]
        %v4917 = vld [vmem:[#allocation7 + $0x9b8] sm:$0xff]
        %v4918 = vld [vmem:[#allocation7 + $0x9c0] sm:$0xff]
        %v4919 = vld [vmem:[#allocation7 + $0x9c8] sm:$0xff]
        %v4920 = vld [vmem:[#allocation7 + $0x9d0] sm:$0xff]
        %v4921 = vld [vmem:[#allocation7 + $0x9d8] sm:$0xff]
        %v4922 = vld [vmem:[#allocation7 + $0x9e0] sm:$0xff]
        %v4923 = vld [vmem:[#allocation7 + $0x9e8] sm:$0xff]
        %v4924 = vld [vmem:[#allocation7 + $0x9f0] sm:$0xff]
        %v4925 = vld [vmem:[#allocation7 + $0x9f8] sm:$0xff]
        %v4926 = vld [vmem:[#allocation7 + $0xa00] sm:$0xff]
        %v4927 = vld [vmem:[#allocation7 + $0xa08] sm:$0xff]
        %v4928 = vld [vmem:[#allocation7 + $0xa10] sm:$0xff]
        %v4929 = vld [vmem:[#allocation7 + $0xa18] sm:$0xff]
        %v4930 = vld [vmem:[#allocation7 + $0xa20] sm:$0xff]
        %v4931 = vld [vmem:[#allocation7 + $0xa28] sm:$0xff]
        %v4932 = vld [vmem:[#allocation7 + $0xa30] sm:$0xff]
        %v4933 = vld [vmem:[#allocation7 + $0xa38] sm:$0xff]
        %v4934 = vld [vmem:[#allocation7 + $0xa40] sm:$0xff]
        %v4935 = vld [vmem:[#allocation7 + $0xa48] sm:$0xff]
        %v4936 = vld [vmem:[#allocation7 + $0xa50] sm:$0xff]
        %v4937 = vld [vmem:[#allocation7 + $0xa58] sm:$0xff]
        %v4938 = vld [vmem:[#allocation7 + $0xa60] sm:$0xff]
        %v4939 = vld [vmem:[#allocation7 + $0xa68] sm:$0xff]
        %v4940 = vld [vmem:[#allocation7 + $0xa70] sm:$0xff]
        %v4941 = vld [vmem:[#allocation7 + $0xa78] sm:$0xff]
        %v4942 = vld [vmem:[#allocation7 + $0xa80] sm:$0xff]
        %v4943 = vld [vmem:[#allocation7 + $0xa88] sm:$0xff]
        %v4944 = vld [vmem:[#allocation7 + $0xa90] sm:$0xff]
        %v4945 = vld [vmem:[#allocation7 + $0xa98] sm:$0xff]
        %v4946 = vld [vmem:[#allocation7 + $0xaa0] sm:$0xff]
        %v4947 = vld [vmem:[#allocation7 + $0xaa8] sm:$0xff]
        %v4948 = vld [vmem:[#allocation7 + $0xab0] sm:$0xff]
        %v4949 = vld [vmem:[#allocation7 + $0xab8] sm:$0xff]
        %v4950 = vld [vmem:[#allocation7 + $0xac0] sm:$0xff]
        %v4951 = vld [vmem:[#allocation7 + $0xac8] sm:$0xff]
        %v4952 = vld [vmem:[#allocation7 + $0xad0] sm:$0xff]
        %v4953 = vld [vmem:[#allocation7 + $0xad8] sm:$0xff]
        %v4954 = vld [vmem:[#allocation7 + $0xae0] sm:$0xff]
        %v4955 = vld [vmem:[#allocation7 + $0xae8] sm:$0xff]
        %v4956 = vld [vmem:[#allocation7 + $0xaf0] sm:$0xff]
        %v4957 = vld [vmem:[#allocation7 + $0xaf8] sm:$0xff]
        %v4958 = vld [vmem:[#allocation7 + $0xb00] sm:$0xff]
        %v4959 = vld [vmem:[#allocation7 + $0xb08] sm:$0xff]
        %v4960 = vld [vmem:[#allocation7 + $0xb10] sm:$0xff]
        %v4961 = vld [vmem:[#allocation7 + $0xb18] sm:$0xff]
        %v4962 = vld [vmem:[#allocation7 + $0xb20] sm:$0xff]
        %v4963 = vld [vmem:[#allocation7 + $0xb28] sm:$0xff]
        %v4964 = vld [vmem:[#allocation7 + $0xb30] sm:$0xff]
        %v4965 = vld [vmem:[#allocation7 + $0xb38] sm:$0xff]
        %v4966 = vld [vmem:[#allocation7 + $0xb40] sm:$0xff]
        %v4967 = vld [vmem:[#allocation7 + $0xb48] sm:$0xff]
        %v4968 = vld [vmem:[#allocation7 + $0xb50] sm:$0xff]
        %v4969 = vld [vmem:[#allocation7 + $0xb58] sm:$0xff]
        %v4970 = vld [vmem:[#allocation7 + $0xb60] sm:$0xff]
        %v4971 = vld [vmem:[#allocation7 + $0xb68] sm:$0xff]
        %v4972 = vld [vmem:[#allocation7 + $0xb70] sm:$0xff]
        %v4973 = vld [vmem:[#allocation7 + $0xb78] sm:$0xff]
        %v4974 = vld [vmem:[#allocation7 + $0xb80] sm:$0xff]
        %v4975 = vld [vmem:[#allocation7 + $0xb88] sm:$0xff]
        %v4976 = vld [vmem:[#allocation7 + $0xb90] sm:$0xff]
        %v4977 = vld [vmem:[#allocation7 + $0xb98] sm:$0xff]
        %v4978 = vld [vmem:[#allocation7 + $0xba0] sm:$0xff]
        %v4979 = vld [vmem:[#allocation7 + $0xba8] sm:$0xff]
        %v4980 = vld [vmem:[#allocation7 + $0xbb0] sm:$0xff]
        %v4981 = vld [vmem:[#allocation7 + $0xbb8] sm:$0xff]
        %v4982 = vld [vmem:[#allocation7 + $0xbc0] sm:$0xff]
        %v4983 = vld [vmem:[#allocation7 + $0xbc8] sm:$0xff]
        %v4984 = vld [vmem:[#allocation7 + $0xbd0] sm:$0xff]
        %v4985 = vld [vmem:[#allocation7 + $0xbd8] sm:$0xff]
        %v4986 = vld [vmem:[#allocation7 + $0xbe0] sm:$0xff]
        %v4987 = vld [vmem:[#allocation7 + $0xbe8] sm:$0xff]
        %v4988 = vld [vmem:[#allocation7 + $0xbf0] sm:$0xff]
        %v4989 = vld [vmem:[#allocation7 + $0xbf8] sm:$0xff]
        %v4990 = vld [vmem:[#allocation7 + $0xc00] sm:$0xff]
        %v4991 = vld [vmem:[#allocation7 + $0xc08] sm:$0xff]
        %v4992 = vld [vmem:[#allocation7 + $0xc10] sm:$0xff]
        %v4993 = vld [vmem:[#allocation7 + $0xc18] sm:$0xff]
        %v4994 = vld [vmem:[#allocation7 + $0xc20] sm:$0xff]
        %v4995 = vld [vmem:[#allocation7 + $0xc28] sm:$0xff]
        %v4996 = vld [vmem:[#allocation7 + $0xc30] sm:$0xff]
        %v4997 = vld [vmem:[#allocation7 + $0xc38] sm:$0xff]
        %v4998 = vld [vmem:[#allocation7 + $0xc40] sm:$0xff]
        %v4999 = vld [vmem:[#allocation7 + $0xc48] sm:$0xff]
        %v5000 = vld [vmem:[#allocation7 + $0xc50] sm:$0xff]
        %v5001 = vld [vmem:[#allocation7 + $0xc58] sm:$0xff]
        %v5002 = vld [vmem:[#allocation7 + $0xc60] sm:$0xff]
        %v5003 = vld [vmem:[#allocation7 + $0xc68] sm:$0xff]
        %v5004 = vld [vmem:[#allocation7 + $0xc70] sm:$0xff]
        %v5005 = vld [vmem:[#allocation7 + $0xc78] sm:$0xff]
        %v5006 = vld [vmem:[#allocation7 + $0xc80] sm:$0xff]
        %v5007 = vld [vmem:[#allocation7 + $0xc88] sm:$0xff]
        %v5008 = vld [vmem:[#allocation7 + $0xc90] sm:$0xff]
        %v5009 = vld [vmem:[#allocation7 + $0xc98] sm:$0xff]
        %v5010 = vld [vmem:[#allocation7 + $0xca0] sm:$0xff]
        %v5011 = vld [vmem:[#allocation7 + $0xca8] sm:$0xff]
        %v5012 = vld [vmem:[#allocation7 + $0xcb0] sm:$0xff]
        %v5013 = vld [vmem:[#allocation7 + $0xcb8] sm:$0xff]
        %v5014 = vld [vmem:[#allocation7 + $0xcc0] sm:$0xff]
        %v5015 = vld [vmem:[#allocation7 + $0xcc8] sm:$0xff]
        %v5016 = vld [vmem:[#allocation7 + $0xcd0] sm:$0xff]
        %v5017 = vld [vmem:[#allocation7 + $0xcd8] sm:$0xff]
        %v5018 = vld [vmem:[#allocation7 + $0xce0] sm:$0xff]
        %v5019 = vld [vmem:[#allocation7 + $0xce8] sm:$0xff]
        %v5020 = vld [vmem:[#allocation7 + $0xcf0] sm:$0xff]
        %v5021 = vld [vmem:[#allocation7 + $0xcf8] sm:$0xff]
        %v5022 = vld [vmem:[#allocation7 + $0xd00] sm:$0xff]
        %v5023 = vld [vmem:[#allocation7 + $0xd08] sm:$0xff]
        %v5024 = vld [vmem:[#allocation7 + $0xd10] sm:$0xff]
        %v5025 = vld [vmem:[#allocation7 + $0xd18] sm:$0xff]
        %v5026 = vld [vmem:[#allocation7 + $0xd20] sm:$0xff]
        %v5027 = vld [vmem:[#allocation7 + $0xd28] sm:$0xff]
        %v5028 = vld [vmem:[#allocation7 + $0xd30] sm:$0xff]
        %v5029 = vld [vmem:[#allocation7 + $0xd38] sm:$0xff]
        %v5030 = vld [vmem:[#allocation7 + $0xd40] sm:$0xff]
        %v5031 = vld [vmem:[#allocation7 + $0xd48] sm:$0xff]
        %v5032 = vld [vmem:[#allocation7 + $0xd50] sm:$0xff]
        %v5033 = vld [vmem:[#allocation7 + $0xd58] sm:$0xff]
        %v5034 = vld [vmem:[#allocation7 + $0xd60] sm:$0xff]
        %v5035 = vld [vmem:[#allocation7 + $0xd68] sm:$0xff]
        %v5036 = vld [vmem:[#allocation7 + $0xd70] sm:$0xff]
        %v5037 = vld [vmem:[#allocation7 + $0xd78] sm:$0xff]
        %v5038 = vld [vmem:[#allocation7 + $0xd80] sm:$0xff]
        %v5039 = vld [vmem:[#allocation7 + $0xd88] sm:$0xff]
        %v5040 = vld [vmem:[#allocation7 + $0xd90] sm:$0xff]
        %v5041 = vld [vmem:[#allocation7 + $0xd98] sm:$0xff]
        %v5042 = vld [vmem:[#allocation7 + $0xda0] sm:$0xff]
        %v5043 = vld [vmem:[#allocation7 + $0xda8] sm:$0xff]
        %v5044 = vld [vmem:[#allocation7 + $0xdb0] sm:$0xff]
        %v5045 = vld [vmem:[#allocation7 + $0xdb8] sm:$0xff]
        %v5046 = vld [vmem:[#allocation7 + $0xdc0] sm:$0xff]
        %v5047 = vld [vmem:[#allocation7 + $0xdc8] sm:$0xff]
        %v5048 = vld [vmem:[#allocation7 + $0xdd0] sm:$0xff]
        %v5049 = vld [vmem:[#allocation7 + $0xdd8] sm:$0xff]
        %v5050 = vld [vmem:[#allocation7 + $0xde0] sm:$0xff]
        %v5051 = vld [vmem:[#allocation7 + $0xde8] sm:$0xff]
        %v5052 = vld [vmem:[#allocation7 + $0xdf0] sm:$0xff]
        %v5053 = vld [vmem:[#allocation7 + $0xdf8] sm:$0xff]
        %v5054 = vld [vmem:[#allocation7 + $0xe00] sm:$0xff]
        %v5055 = vld [vmem:[#allocation7 + $0xe08] sm:$0xff]
        %v5056 = vld [vmem:[#allocation7 + $0xe10] sm:$0xff]
        %v5057 = vld [vmem:[#allocation7 + $0xe18] sm:$0xff]
        %v5058 = vld [vmem:[#allocation7 + $0xe20] sm:$0xff]
        %v5059 = vld [vmem:[#allocation7 + $0xe28] sm:$0xff]
        %v5060 = vld [vmem:[#allocation7 + $0xe30] sm:$0xff]
        %v5061 = vld [vmem:[#allocation7 + $0xe38] sm:$0xff]
        %v5062 = vld [vmem:[#allocation7 + $0xe40] sm:$0xff]
        %v5063 = vld [vmem:[#allocation7 + $0xe48] sm:$0xff]
        %v5064 = vld [vmem:[#allocation7 + $0xe50] sm:$0xff]
        %v5065 = vld [vmem:[#allocation7 + $0xe58] sm:$0xff]
        %v5066 = vld [vmem:[#allocation7 + $0xe60] sm:$0xff]
        %v5067 = vld [vmem:[#allocation7 + $0xe68] sm:$0xff]
        %v5068 = vld [vmem:[#allocation7 + $0xe70] sm:$0xff]
        %v5069 = vld [vmem:[#allocation7 + $0xe78] sm:$0xff]
        %v5070 = vld [vmem:[#allocation7 + $0xe80] sm:$0xff]
        %v5071 = vld [vmem:[#allocation7 + $0xe88] sm:$0xff]
        %v5072 = vld [vmem:[#allocation7 + $0xe90] sm:$0xff]
        %v5073 = vld [vmem:[#allocation7 + $0xe98] sm:$0xff]
        %v5074 = vld [vmem:[#allocation7 + $0xea0] sm:$0xff]
        %v5075 = vld [vmem:[#allocation7 + $0xea8] sm:$0xff]
        %v5076 = vld [vmem:[#allocation7 + $0xeb0] sm:$0xff]
        %v5077 = vld [vmem:[#allocation7 + $0xeb8] sm:$0xff]
        %v5078 = vld [vmem:[#allocation7 + $0xec0] sm:$0xff]
        %v5079 = vld [vmem:[#allocation7 + $0xec8] sm:$0xff]
        %v5080 = vld [vmem:[#allocation7 + $0xed0] sm:$0xff]
        %v5081 = vld [vmem:[#allocation7 + $0xed8] sm:$0xff]
        %v5082 = vld [vmem:[#allocation7 + $0xee0] sm:$0xff]
        %v5083 = vld [vmem:[#allocation7 + $0xee8] sm:$0xff]
        %v5084 = vld [vmem:[#allocation7 + $0xef0] sm:$0xff]
        %v5085 = vld [vmem:[#allocation7 + $0xef8] sm:$0xff]
        %v5086 = vld [vmem:[#allocation7 + $0xf00] sm:$0xff]
        %v5087 = vld [vmem:[#allocation7 + $0xf08] sm:$0xff]
        %v5088 = vld [vmem:[#allocation7 + $0xf10] sm:$0xff]
        %v5089 = vld [vmem:[#allocation7 + $0xf18] sm:$0xff]
        %v5090 = vld [vmem:[#allocation7 + $0xf20] sm:$0xff]
        %v5091 = vld [vmem:[#allocation7 + $0xf28] sm:$0xff]
        %v5092 = vld [vmem:[#allocation7 + $0xf30] sm:$0xff]
        %v5093 = vld [vmem:[#allocation7 + $0xf38] sm:$0xff]
        %v5094 = vld [vmem:[#allocation7 + $0xf40] sm:$0xff]
        %v5095 = vld [vmem:[#allocation7 + $0xf48] sm:$0xff]
        %v5096 = vld [vmem:[#allocation7 + $0xf50] sm:$0xff]
        %v5097 = vld [vmem:[#allocation7 + $0xf58] sm:$0xff]
        %v5098 = vld [vmem:[#allocation7 + $0xf60] sm:$0xff]
        %v5099 = vld [vmem:[#allocation7 + $0xf68] sm:$0xff]
        %v5100 = vld [vmem:[#allocation7 + $0xf70] sm:$0xff]
        %v5101 = vld [vmem:[#allocation7 + $0xf78] sm:$0xff]
        %v5102 = vld [vmem:[#allocation7 + $0xf80] sm:$0xff]
        %v5103 = vld [vmem:[#allocation7 + $0xf88] sm:$0xff]
        %v5104 = vld [vmem:[#allocation7 + $0xf90] sm:$0xff]
        %v5105 = vld [vmem:[#allocation7 + $0xf98] sm:$0xff]
        %v5106 = vld [vmem:[#allocation7 + $0xfa0] sm:$0xff]
        %v5107 = vld [vmem:[#allocation7 + $0xfa8] sm:$0xff]
        %v5108 = vld [vmem:[#allocation7 + $0xfb0] sm:$0xff]
        %v5109 = vld [vmem:[#allocation7 + $0xfb8] sm:$0xff]
        %v5110 = vld [vmem:[#allocation7 + $0xfc0] sm:$0xff]
        %v5111 = vld [vmem:[#allocation7 + $0xfc8] sm:$0xff]
        %v5112 = vld [vmem:[#allocation7 + $0xfd0] sm:$0xff]
        %v5113 = vld [vmem:[#allocation7 + $0xfd8] sm:$0xff]
        %v5114 = vld [vmem:[#allocation7 + $0xfe0] sm:$0xff]
        %v5115 = vld [vmem:[#allocation7 + $0xfe8] sm:$0xff]
        %v5116 = vld [vmem:[#allocation7 + $0xff0] sm:$0xff]
        %v5117 = vld [vmem:[#allocation7 + $0xff8] sm:$0xff]
        %v5119 = vlaneseq
        %v5120 = vshrl.u32 %v5119, 7
        %v5121 = vsub.s32 0, %v5120
        %v5122 = vrot.slane %v4545, %v5121
        %v5123 = vlaneseq
        %v5124 = vshrl.u32 %v5123, 7
        %v5125 = vsub.s32 1, %v5124
        %v5126 = vrot.slane %v4545, %v5125
        %v5127 = vlaneseq
        %v5128 = vshrl.u32 %v5127, 7
        %v5129 = vsub.s32 2, %v5128
        %v5130 = vrot.slane %v4545, %v5129
        %v5131 = vlaneseq
        %v5132 = vshrl.u32 %v5131, 7
        %v5133 = vsub.s32 3, %v5132
        %v5134 = vrot.slane %v4545, %v5133
        %v5651 = vunpack.c.l.b16 %v4606
        %v5652 = vunpack.c.h.b16 %v4606
        %v5653 = vunpack.c.l.b16 %v4607
        %v5654 = vunpack.c.h.b16 %v4607
        %v5655 = vunpack.c.l.b16 %v4608
        %v5656 = vunpack.c.h.b16 %v4608
        %v5657 = vunpack.c.l.b16 %v4609
        %v5658 = vunpack.c.h.b16 %v4609
        %v5659 = vunpack.c.l.b16 %v4610
        %v5660 = vunpack.c.h.b16 %v4610
        %v5661 = vunpack.c.l.b16 %v4611
        %v5662 = vunpack.c.h.b16 %v4611
        %v5663 = vunpack.c.l.b16 %v4612
        %v5664 = vunpack.c.h.b16 %v4612
        %v5665 = vunpack.c.l.b16 %v4613
        %v5666 = vunpack.c.h.b16 %v4613
        %v5667 = vunpack.c.l.b16 %v4614
        %v5668 = vunpack.c.h.b16 %v4614
        %v5669 = vunpack.c.l.b16 %v4615
        %v5670 = vunpack.c.h.b16 %v4615
        %v5671 = vunpack.c.l.b16 %v4616
        %v5672 = vunpack.c.h.b16 %v4616
        %v5673 = vunpack.c.l.b16 %v4617
        %v5674 = vunpack.c.h.b16 %v4617
        %v5675 = vunpack.c.l.b16 %v4618
        %v5676 = vunpack.c.h.b16 %v4618
        %v5677 = vunpack.c.l.b16 %v4619
        %v5678 = vunpack.c.h.b16 %v4619
        %v5679 = vunpack.c.l.b16 %v4620
        %v5680 = vunpack.c.h.b16 %v4620
        %v5681 = vunpack.c.l.b16 %v4621
        %v5682 = vunpack.c.h.b16 %v4621
        %v5683 = vunpack.c.l.b16 %v4622
        %v5684 = vunpack.c.h.b16 %v4622
        %v5685 = vunpack.c.l.b16 %v4623
        %v5686 = vunpack.c.h.b16 %v4623
        %v5687 = vunpack.c.l.b16 %v4624
        %v5688 = vunpack.c.h.b16 %v4624
        %v5689 = vunpack.c.l.b16 %v4625
        %v5690 = vunpack.c.h.b16 %v4625
        %v5691 = vunpack.c.l.b16 %v4626
        %v5692 = vunpack.c.h.b16 %v4626
        %v5693 = vunpack.c.l.b16 %v4627
        %v5694 = vunpack.c.h.b16 %v4627
        %v5695 = vunpack.c.l.b16 %v4628
        %v5696 = vunpack.c.h.b16 %v4628
        %v5697 = vunpack.c.l.b16 %v4629
        %v5698 = vunpack.c.h.b16 %v4629
        %v5699 = vunpack.c.l.b16 %v4630
        %v5700 = vunpack.c.h.b16 %v4630
        %v5701 = vunpack.c.l.b16 %v4631
        %v5702 = vunpack.c.h.b16 %v4631
        %v5703 = vunpack.c.l.b16 %v4632
        %v5704 = vunpack.c.h.b16 %v4632
        %v5705 = vunpack.c.l.b16 %v4633
        %v5706 = vunpack.c.h.b16 %v4633
        %v5707 = vunpack.c.l.b16 %v4634
        %v5708 = vunpack.c.h.b16 %v4634
        %v5709 = vunpack.c.l.b16 %v4635
        %v5710 = vunpack.c.h.b16 %v4635
        %v5711 = vunpack.c.l.b16 %v4636
        %v5712 = vunpack.c.h.b16 %v4636
        %v5713 = vunpack.c.l.b16 %v4637
        %v5714 = vunpack.c.h.b16 %v4637
        %v5715 = vunpack.c.l.b16 %v4638
        %v5716 = vunpack.c.h.b16 %v4638
        %v5717 = vunpack.c.l.b16 %v4639
        %v5718 = vunpack.c.h.b16 %v4639
        %v5719 = vunpack.c.l.b16 %v4640
        %v5720 = vunpack.c.h.b16 %v4640
        %v5721 = vunpack.c.l.b16 %v4641
        %v5722 = vunpack.c.h.b16 %v4641
        %v5723 = vunpack.c.l.b16 %v4642
        %v5724 = vunpack.c.h.b16 %v4642
        %v5725 = vunpack.c.l.b16 %v4643
        %v5726 = vunpack.c.h.b16 %v4643
        %v5727 = vunpack.c.l.b16 %v4644
        %v5728 = vunpack.c.h.b16 %v4644
        %v5729 = vunpack.c.l.b16 %v4645
        %v5730 = vunpack.c.h.b16 %v4645
        %v5731 = vunpack.c.l.b16 %v4646
        %v5732 = vunpack.c.h.b16 %v4646
        %v5733 = vunpack.c.l.b16 %v4647
        %v5734 = vunpack.c.h.b16 %v4647
        %v5735 = vunpack.c.l.b16 %v4648
        %v5736 = vunpack.c.h.b16 %v4648
        %v5737 = vunpack.c.l.b16 %v4649
        %v5738 = vunpack.c.h.b16 %v4649
        %v5739 = vunpack.c.l.b16 %v4650
        %v5740 = vunpack.c.h.b16 %v4650
        %v5741 = vunpack.c.l.b16 %v4651
        %v5742 = vunpack.c.h.b16 %v4651
        %v5743 = vunpack.c.l.b16 %v4652
        %v5744 = vunpack.c.h.b16 %v4652
        %v5745 = vunpack.c.l.b16 %v4653
        %v5746 = vunpack.c.h.b16 %v4653
        %v5747 = vunpack.c.l.b16 %v4654
        %v5748 = vunpack.c.h.b16 %v4654
        %v5749 = vunpack.c.l.b16 %v4655
        %v5750 = vunpack.c.h.b16 %v4655
        %v5751 = vunpack.c.l.b16 %v4656
        %v5752 = vunpack.c.h.b16 %v4656
        %v5753 = vunpack.c.l.b16 %v4657
        %v5754 = vunpack.c.h.b16 %v4657
        %v5755 = vunpack.c.l.b16 %v4658
        %v5756 = vunpack.c.h.b16 %v4658
        %v5757 = vunpack.c.l.b16 %v4659
        %v5758 = vunpack.c.h.b16 %v4659
        %v5759 = vunpack.c.l.b16 %v4660
        %v5760 = vunpack.c.h.b16 %v4660
        %v5761 = vunpack.c.l.b16 %v4661
        %v5762 = vunpack.c.h.b16 %v4661
        %v5763 = vunpack.c.l.b16 %v4662
        %v5764 = vunpack.c.h.b16 %v4662
        %v5765 = vunpack.c.l.b16 %v4663
        %v5766 = vunpack.c.h.b16 %v4663
        %v5767 = vunpack.c.l.b16 %v4664
        %v5768 = vunpack.c.h.b16 %v4664
        %v5769 = vunpack.c.l.b16 %v4665
        %v5770 = vunpack.c.h.b16 %v4665
        %v5771 = vunpack.c.l.b16 %v4666
        %v5772 = vunpack.c.h.b16 %v4666
        %v5773 = vunpack.c.l.b16 %v4667
        %v5774 = vunpack.c.h.b16 %v4667
        %v5775 = vunpack.c.l.b16 %v4668
        %v5776 = vunpack.c.h.b16 %v4668
        %v5777 = vunpack.c.l.b16 %v4669
        %v5778 = vunpack.c.h.b16 %v4669
        %v5779 = vunpack.c.l.b16 %v4670
        %v5780 = vunpack.c.h.b16 %v4670
        %v5781 = vunpack.c.l.b16 %v4671
        %v5782 = vunpack.c.h.b16 %v4671
        %v5783 = vunpack.c.l.b16 %v4672
        %v5784 = vunpack.c.h.b16 %v4672
        %v5785 = vunpack.c.l.b16 %v4673
        %v5786 = vunpack.c.h.b16 %v4673
        %v5787 = vunpack.c.l.b16 %v4674
        %v5788 = vunpack.c.h.b16 %v4674
        %v5789 = vunpack.c.l.b16 %v4675
        %v5790 = vunpack.c.h.b16 %v4675
        %v5791 = vunpack.c.l.b16 %v4676
        %v5792 = vunpack.c.h.b16 %v4676
        %v5793 = vunpack.c.l.b16 %v4677
        %v5794 = vunpack.c.h.b16 %v4677
        %v5795 = vunpack.c.l.b16 %v4678
        %v5796 = vunpack.c.h.b16 %v4678
        %v5797 = vunpack.c.l.b16 %v4679
        %v5798 = vunpack.c.h.b16 %v4679
        %v5799 = vunpack.c.l.b16 %v4680
        %v5800 = vunpack.c.h.b16 %v4680
        %v5801 = vunpack.c.l.b16 %v4681
        %v5802 = vunpack.c.h.b16 %v4681
        %v5803 = vunpack.c.l.b16 %v4682
        %v5804 = vunpack.c.h.b16 %v4682
        %v5805 = vunpack.c.l.b16 %v4683
        %v5806 = vunpack.c.h.b16 %v4683
        %v5807 = vunpack.c.l.b16 %v4684
        %v5808 = vunpack.c.h.b16 %v4684
        %v5809 = vunpack.c.l.b16 %v4685
        %v5810 = vunpack.c.h.b16 %v4685
        %v5811 = vunpack.c.l.b16 %v4686
        %v5812 = vunpack.c.h.b16 %v4686
        %v5813 = vunpack.c.l.b16 %v4687
        %v5814 = vunpack.c.h.b16 %v4687
        %v5815 = vunpack.c.l.b16 %v4688
        %v5816 = vunpack.c.h.b16 %v4688
        %v5817 = vunpack.c.l.b16 %v4689
        %v5818 = vunpack.c.h.b16 %v4689
        %v5819 = vunpack.c.l.b16 %v4690
        %v5820 = vunpack.c.h.b16 %v4690
        %v5821 = vunpack.c.l.b16 %v4691
        %v5822 = vunpack.c.h.b16 %v4691
        %v5823 = vunpack.c.l.b16 %v4692
        %v5824 = vunpack.c.h.b16 %v4692
        %v5825 = vunpack.c.l.b16 %v4693
        %v5826 = vunpack.c.h.b16 %v4693
        %v5827 = vunpack.c.l.b16 %v4694
        %v5828 = vunpack.c.h.b16 %v4694
        %v5829 = vunpack.c.l.b16 %v4695
        %v5830 = vunpack.c.h.b16 %v4695
        %v5831 = vunpack.c.l.b16 %v4696
        %v5832 = vunpack.c.h.b16 %v4696
        %v5833 = vunpack.c.l.b16 %v4697
        %v5834 = vunpack.c.h.b16 %v4697
        %v5835 = vunpack.c.l.b16 %v4698
        %v5836 = vunpack.c.h.b16 %v4698
        %v5837 = vunpack.c.l.b16 %v4699
        %v5838 = vunpack.c.h.b16 %v4699
        %v5839 = vunpack.c.l.b16 %v4700
        %v5840 = vunpack.c.h.b16 %v4700
        %v5841 = vunpack.c.l.b16 %v4701
        %v5842 = vunpack.c.h.b16 %v4701
        %v5843 = vunpack.c.l.b16 %v4702
        %v5844 = vunpack.c.h.b16 %v4702
        %v5845 = vunpack.c.l.b16 %v4703
        %v5846 = vunpack.c.h.b16 %v4703
        %v5847 = vunpack.c.l.b16 %v4704
        %v5848 = vunpack.c.h.b16 %v4704
        %v5849 = vunpack.c.l.b16 %v4705
        %v5850 = vunpack.c.h.b16 %v4705
        %v5851 = vunpack.c.l.b16 %v4706
        %v5852 = vunpack.c.h.b16 %v4706
        %v5853 = vunpack.c.l.b16 %v4707
        %v5854 = vunpack.c.h.b16 %v4707
        %v5855 = vunpack.c.l.b16 %v4708
        %v5856 = vunpack.c.h.b16 %v4708
        %v5857 = vunpack.c.l.b16 %v4709
        %v5858 = vunpack.c.h.b16 %v4709
        %v5859 = vunpack.c.l.b16 %v4710
        %v5860 = vunpack.c.h.b16 %v4710
        %v5861 = vunpack.c.l.b16 %v4711
        %v5862 = vunpack.c.h.b16 %v4711
        %v5863 = vunpack.c.l.b16 %v4712
        %v5864 = vunpack.c.h.b16 %v4712
        %v5865 = vunpack.c.l.b16 %v4713
        %v5866 = vunpack.c.h.b16 %v4713
        %v5867 = vunpack.c.l.b16 %v4714
        %v5868 = vunpack.c.h.b16 %v4714
        %v5869 = vunpack.c.l.b16 %v4715
        %v5870 = vunpack.c.h.b16 %v4715
        %v5871 = vunpack.c.l.b16 %v4716
        %v5872 = vunpack.c.h.b16 %v4716
        %v5873 = vunpack.c.l.b16 %v4717
        %v5874 = vunpack.c.h.b16 %v4717
        %v5875 = vunpack.c.l.b16 %v4718
        %v5876 = vunpack.c.h.b16 %v4718
        %v5877 = vunpack.c.l.b16 %v4719
        %v5878 = vunpack.c.h.b16 %v4719
        %v5879 = vunpack.c.l.b16 %v4720
        %v5880 = vunpack.c.h.b16 %v4720
        %v5881 = vunpack.c.l.b16 %v4721
        %v5882 = vunpack.c.h.b16 %v4721
        %v5883 = vunpack.c.l.b16 %v4722
        %v5884 = vunpack.c.h.b16 %v4722
        %v5885 = vunpack.c.l.b16 %v4723
        %v5886 = vunpack.c.h.b16 %v4723
        %v5887 = vunpack.c.l.b16 %v4724
        %v5888 = vunpack.c.h.b16 %v4724
        %v5889 = vunpack.c.l.b16 %v4725
        %v5890 = vunpack.c.h.b16 %v4725
        %v5891 = vunpack.c.l.b16 %v4726
        %v5892 = vunpack.c.h.b16 %v4726
        %v5893 = vunpack.c.l.b16 %v4727
        %v5894 = vunpack.c.h.b16 %v4727
        %v5895 = vunpack.c.l.b16 %v4728
        %v5896 = vunpack.c.h.b16 %v4728
        %v5897 = vunpack.c.l.b16 %v4729
        %v5898 = vunpack.c.h.b16 %v4729
        %v5899 = vunpack.c.l.b16 %v4730
        %v5900 = vunpack.c.h.b16 %v4730
        %v5901 = vunpack.c.l.b16 %v4731
        %v5902 = vunpack.c.h.b16 %v4731
        %v5903 = vunpack.c.l.b16 %v4732
        %v5904 = vunpack.c.h.b16 %v4732
        %v5905 = vunpack.c.l.b16 %v4733
        %v5906 = vunpack.c.h.b16 %v4733
        %v5907 = vunpack.c.l.b16 %v4734
        %v5908 = vunpack.c.h.b16 %v4734
        %v5909 = vunpack.c.l.b16 %v4735
        %v5910 = vunpack.c.h.b16 %v4735
        %v5911 = vunpack.c.l.b16 %v4736
        %v5912 = vunpack.c.h.b16 %v4736
        %v5913 = vunpack.c.l.b16 %v4737
        %v5914 = vunpack.c.h.b16 %v4737
        %v5915 = vunpack.c.l.b16 %v4738
        %v5916 = vunpack.c.h.b16 %v4738
        %v5917 = vunpack.c.l.b16 %v4739
        %v5918 = vunpack.c.h.b16 %v4739
        %v5919 = vunpack.c.l.b16 %v4740
        %v5920 = vunpack.c.h.b16 %v4740
        %v5921 = vunpack.c.l.b16 %v4741
        %v5922 = vunpack.c.h.b16 %v4741
        %v5923 = vunpack.c.l.b16 %v4742
        %v5924 = vunpack.c.h.b16 %v4742
        %v5925 = vunpack.c.l.b16 %v4743
        %v5926 = vunpack.c.h.b16 %v4743
        %v5927 = vunpack.c.l.b16 %v4744
        %v5928 = vunpack.c.h.b16 %v4744
        %v5929 = vunpack.c.l.b16 %v4745
        %v5930 = vunpack.c.h.b16 %v4745
        %v5931 = vunpack.c.l.b16 %v4746
        %v5932 = vunpack.c.h.b16 %v4746
        %v5933 = vunpack.c.l.b16 %v4747
        %v5934 = vunpack.c.h.b16 %v4747
        %v5935 = vunpack.c.l.b16 %v4748
        %v5936 = vunpack.c.h.b16 %v4748
        %v5937 = vunpack.c.l.b16 %v4749
        %v5938 = vunpack.c.h.b16 %v4749
        %v5939 = vunpack.c.l.b16 %v4750
        %v5940 = vunpack.c.h.b16 %v4750
        %v5941 = vunpack.c.l.b16 %v4751
        %v5942 = vunpack.c.h.b16 %v4751
        %v5943 = vunpack.c.l.b16 %v4752
        %v5944 = vunpack.c.h.b16 %v4752
        %v5945 = vunpack.c.l.b16 %v4753
        %v5946 = vunpack.c.h.b16 %v4753
        %v5947 = vunpack.c.l.b16 %v4754
        %v5948 = vunpack.c.h.b16 %v4754
        %v5949 = vunpack.c.l.b16 %v4755
        %v5950 = vunpack.c.h.b16 %v4755
        %v5951 = vunpack.c.l.b16 %v4756
        %v5952 = vunpack.c.h.b16 %v4756
        %v5953 = vunpack.c.l.b16 %v4757
        %v5954 = vunpack.c.h.b16 %v4757
        %v5955 = vunpack.c.l.b16 %v4758
        %v5956 = vunpack.c.h.b16 %v4758
        %v5957 = vunpack.c.l.b16 %v4759
        %v5958 = vunpack.c.h.b16 %v4759
        %v5959 = vunpack.c.l.b16 %v4760
        %v5960 = vunpack.c.h.b16 %v4760
        %v5961 = vunpack.c.l.b16 %v4761
        %v5962 = vunpack.c.h.b16 %v4761
        %v5963 = vunpack.c.l.b16 %v4762
        %v5964 = vunpack.c.h.b16 %v4762
        %v5965 = vunpack.c.l.b16 %v4763
        %v5966 = vunpack.c.h.b16 %v4763
        %v5967 = vunpack.c.l.b16 %v4764
        %v5968 = vunpack.c.h.b16 %v4764
        %v5969 = vunpack.c.l.b16 %v4765
        %v5970 = vunpack.c.h.b16 %v4765
        %v5971 = vunpack.c.l.b16 %v4766
        %v5972 = vunpack.c.h.b16 %v4766
        %v5973 = vunpack.c.l.b16 %v4767
        %v5974 = vunpack.c.h.b16 %v4767
        %v5975 = vunpack.c.l.b16 %v4768
        %v5976 = vunpack.c.h.b16 %v4768
        %v5977 = vunpack.c.l.b16 %v4769
        %v5978 = vunpack.c.h.b16 %v4769
        %v5979 = vunpack.c.l.b16 %v4770
        %v5980 = vunpack.c.h.b16 %v4770
        %v5981 = vunpack.c.l.b16 %v4771
        %v5982 = vunpack.c.h.b16 %v4771
        %v5983 = vunpack.c.l.b16 %v4772
        %v5984 = vunpack.c.h.b16 %v4772
        %v5985 = vunpack.c.l.b16 %v4773
        %v5986 = vunpack.c.h.b16 %v4773
        %v5987 = vunpack.c.l.b16 %v4774
        %v5988 = vunpack.c.h.b16 %v4774
        %v5989 = vunpack.c.l.b16 %v4775
        %v5990 = vunpack.c.h.b16 %v4775
        %v5991 = vunpack.c.l.b16 %v4776
        %v5992 = vunpack.c.h.b16 %v4776
        %v5993 = vunpack.c.l.b16 %v4777
        %v5994 = vunpack.c.h.b16 %v4777
        %v5995 = vunpack.c.l.b16 %v4778
        %v5996 = vunpack.c.h.b16 %v4778
        %v5997 = vunpack.c.l.b16 %v4779
        %v5998 = vunpack.c.h.b16 %v4779
        %v5999 = vunpack.c.l.b16 %v4780
        %v6000 = vunpack.c.h.b16 %v4780
        %v6001 = vunpack.c.l.b16 %v4781
        %v6002 = vunpack.c.h.b16 %v4781
        %v6003 = vunpack.c.l.b16 %v4782
        %v6004 = vunpack.c.h.b16 %v4782
        %v6005 = vunpack.c.l.b16 %v4783
        %v6006 = vunpack.c.h.b16 %v4783
        %v6007 = vunpack.c.l.b16 %v4784
        %v6008 = vunpack.c.h.b16 %v4784
        %v6009 = vunpack.c.l.b16 %v4785
        %v6010 = vunpack.c.h.b16 %v4785
        %v6011 = vunpack.c.l.b16 %v4786
        %v6012 = vunpack.c.h.b16 %v4786
        %v6013 = vunpack.c.l.b16 %v4787
        %v6014 = vunpack.c.h.b16 %v4787
        %v6015 = vunpack.c.l.b16 %v4788
        %v6016 = vunpack.c.h.b16 %v4788
        %v6017 = vunpack.c.l.b16 %v4789
        %v6018 = vunpack.c.h.b16 %v4789
        %v6019 = vunpack.c.l.b16 %v4790
        %v6020 = vunpack.c.h.b16 %v4790
        %v6021 = vunpack.c.l.b16 %v4791
        %v6022 = vunpack.c.h.b16 %v4791
        %v6023 = vunpack.c.l.b16 %v4792
        %v6024 = vunpack.c.h.b16 %v4792
        %v6025 = vunpack.c.l.b16 %v4793
        %v6026 = vunpack.c.h.b16 %v4793
        %v6027 = vunpack.c.l.b16 %v4794
        %v6028 = vunpack.c.h.b16 %v4794
        %v6029 = vunpack.c.l.b16 %v4795
        %v6030 = vunpack.c.h.b16 %v4795
        %v6031 = vunpack.c.l.b16 %v4796
        %v6032 = vunpack.c.h.b16 %v4796
        %v6033 = vunpack.c.l.b16 %v4797
        %v6034 = vunpack.c.h.b16 %v4797
        %v6035 = vunpack.c.l.b16 %v4798
        %v6036 = vunpack.c.h.b16 %v4798
        %v6037 = vunpack.c.l.b16 %v4799
        %v6038 = vunpack.c.h.b16 %v4799
        %v6039 = vunpack.c.l.b16 %v4800
        %v6040 = vunpack.c.h.b16 %v4800
        %v6041 = vunpack.c.l.b16 %v4801
        %v6042 = vunpack.c.h.b16 %v4801
        %v6043 = vunpack.c.l.b16 %v4802
        %v6044 = vunpack.c.h.b16 %v4802
        %v6045 = vunpack.c.l.b16 %v4803
        %v6046 = vunpack.c.h.b16 %v4803
        %v6047 = vunpack.c.l.b16 %v4804
        %v6048 = vunpack.c.h.b16 %v4804
        %v6049 = vunpack.c.l.b16 %v4805
        %v6050 = vunpack.c.h.b16 %v4805
        %v6051 = vunpack.c.l.b16 %v4806
        %v6052 = vunpack.c.h.b16 %v4806
        %v6053 = vunpack.c.l.b16 %v4807
        %v6054 = vunpack.c.h.b16 %v4807
        %v6055 = vunpack.c.l.b16 %v4808
        %v6056 = vunpack.c.h.b16 %v4808
        %v6057 = vunpack.c.l.b16 %v4809
        %v6058 = vunpack.c.h.b16 %v4809
        %v6059 = vunpack.c.l.b16 %v4810
        %v6060 = vunpack.c.h.b16 %v4810
        %v6061 = vunpack.c.l.b16 %v4811
        %v6062 = vunpack.c.h.b16 %v4811
        %v6063 = vunpack.c.l.b16 %v4812
        %v6064 = vunpack.c.h.b16 %v4812
        %v6065 = vunpack.c.l.b16 %v4813
        %v6066 = vunpack.c.h.b16 %v4813
        %v6067 = vunpack.c.l.b16 %v4814
        %v6068 = vunpack.c.h.b16 %v4814
        %v6069 = vunpack.c.l.b16 %v4815
        %v6070 = vunpack.c.h.b16 %v4815
        %v6071 = vunpack.c.l.b16 %v4816
        %v6072 = vunpack.c.h.b16 %v4816
        %v6073 = vunpack.c.l.b16 %v4817
        %v6074 = vunpack.c.h.b16 %v4817
        %v6075 = vunpack.c.l.b16 %v4818
        %v6076 = vunpack.c.h.b16 %v4818
        %v6077 = vunpack.c.l.b16 %v4819
        %v6078 = vunpack.c.h.b16 %v4819
        %v6079 = vunpack.c.l.b16 %v4820
        %v6080 = vunpack.c.h.b16 %v4820
        %v6081 = vunpack.c.l.b16 %v4821
        %v6082 = vunpack.c.h.b16 %v4821
        %v6083 = vunpack.c.l.b16 %v4822
        %v6084 = vunpack.c.h.b16 %v4822
        %v6085 = vunpack.c.l.b16 %v4823
        %v6086 = vunpack.c.h.b16 %v4823
        %v6087 = vunpack.c.l.b16 %v4824
        %v6088 = vunpack.c.h.b16 %v4824
        %v6089 = vunpack.c.l.b16 %v4825
        %v6090 = vunpack.c.h.b16 %v4825
        %v6091 = vunpack.c.l.b16 %v4826
        %v6092 = vunpack.c.h.b16 %v4826
        %v6093 = vunpack.c.l.b16 %v4827
        %v6094 = vunpack.c.h.b16 %v4827
        %v6095 = vunpack.c.l.b16 %v4828
        %v6096 = vunpack.c.h.b16 %v4828
        %v6097 = vunpack.c.l.b16 %v4829
        %v6098 = vunpack.c.h.b16 %v4829
        %v6099 = vunpack.c.l.b16 %v4830
        %v6100 = vunpack.c.h.b16 %v4830
        %v6101 = vunpack.c.l.b16 %v4831
        %v6102 = vunpack.c.h.b16 %v4831
        %v6103 = vunpack.c.l.b16 %v4832
        %v6104 = vunpack.c.h.b16 %v4832
        %v6105 = vunpack.c.l.b16 %v4833
        %v6106 = vunpack.c.h.b16 %v4833
        %v6107 = vunpack.c.l.b16 %v4834
        %v6108 = vunpack.c.h.b16 %v4834
        %v6109 = vunpack.c.l.b16 %v4835
        %v6110 = vunpack.c.h.b16 %v4835
        %v6111 = vunpack.c.l.b16 %v4836
        %v6112 = vunpack.c.h.b16 %v4836
        %v6113 = vunpack.c.l.b16 %v4837
        %v6114 = vunpack.c.h.b16 %v4837
        %v6115 = vunpack.c.l.b16 %v4838
        %v6116 = vunpack.c.h.b16 %v4838
        %v6117 = vunpack.c.l.b16 %v4839
        %v6118 = vunpack.c.h.b16 %v4839
        %v6119 = vunpack.c.l.b16 %v4840
        %v6120 = vunpack.c.h.b16 %v4840
        %v6121 = vunpack.c.l.b16 %v4841
        %v6122 = vunpack.c.h.b16 %v4841
        %v6123 = vunpack.c.l.b16 %v4842
        %v6124 = vunpack.c.h.b16 %v4842
        %v6125 = vunpack.c.l.b16 %v4843
        %v6126 = vunpack.c.h.b16 %v4843
        %v6127 = vunpack.c.l.b16 %v4844
        %v6128 = vunpack.c.h.b16 %v4844
        %v6129 = vunpack.c.l.b16 %v4845
        %v6130 = vunpack.c.h.b16 %v4845
        %v6131 = vunpack.c.l.b16 %v4846
        %v6132 = vunpack.c.h.b16 %v4846
        %v6133 = vunpack.c.l.b16 %v4847
        %v6134 = vunpack.c.h.b16 %v4847
        %v6135 = vunpack.c.l.b16 %v4848
        %v6136 = vunpack.c.h.b16 %v4848
        %v6137 = vunpack.c.l.b16 %v4849
        %v6138 = vunpack.c.h.b16 %v4849
        %v6139 = vunpack.c.l.b16 %v4850
        %v6140 = vunpack.c.h.b16 %v4850
        %v6141 = vunpack.c.l.b16 %v4851
        %v6142 = vunpack.c.h.b16 %v4851
        %v6143 = vunpack.c.l.b16 %v4852
        %v6144 = vunpack.c.h.b16 %v4852
        %v6145 = vunpack.c.l.b16 %v4853
        %v6146 = vunpack.c.h.b16 %v4853
        %v6147 = vunpack.c.l.b16 %v4854
        %v6148 = vunpack.c.h.b16 %v4854
        %v6149 = vunpack.c.l.b16 %v4855
        %v6150 = vunpack.c.h.b16 %v4855
        %v6151 = vunpack.c.l.b16 %v4856
        %v6152 = vunpack.c.h.b16 %v4856
        %v6153 = vunpack.c.l.b16 %v4857
        %v6154 = vunpack.c.h.b16 %v4857
        %v6155 = vunpack.c.l.b16 %v4858
        %v6156 = vunpack.c.h.b16 %v4858
        %v6157 = vunpack.c.l.b16 %v4859
        %v6158 = vunpack.c.h.b16 %v4859
        %v6159 = vunpack.c.l.b16 %v4860
        %v6160 = vunpack.c.h.b16 %v4860
        %v6161 = vunpack.c.l.b16 %v4861
        %v6162 = vunpack.c.h.b16 %v4861
        %v6163 = vunpack.c.l.b16 %v4862
        %v6164 = vunpack.c.h.b16 %v4862
        %v6165 = vunpack.c.l.b16 %v4863
        %v6166 = vunpack.c.h.b16 %v4863
        %v6167 = vunpack.c.l.b16 %v4864
        %v6168 = vunpack.c.h.b16 %v4864
        %v6169 = vunpack.c.l.b16 %v4865
        %v6170 = vunpack.c.h.b16 %v4865
        %v6171 = vunpack.c.l.b16 %v4866
        %v6172 = vunpack.c.h.b16 %v4866
        %v6173 = vunpack.c.l.b16 %v4867
        %v6174 = vunpack.c.h.b16 %v4867
        %v6175 = vunpack.c.l.b16 %v4868
        %v6176 = vunpack.c.h.b16 %v4868
        %v6177 = vunpack.c.l.b16 %v4869
        %v6178 = vunpack.c.h.b16 %v4869
        %v6179 = vunpack.c.l.b16 %v4870
        %v6180 = vunpack.c.h.b16 %v4870
        %v6181 = vunpack.c.l.b16 %v4871
        %v6182 = vunpack.c.h.b16 %v4871
        %v6183 = vunpack.c.l.b16 %v4872
        %v6184 = vunpack.c.h.b16 %v4872
        %v6185 = vunpack.c.l.b16 %v4873
        %v6186 = vunpack.c.h.b16 %v4873
        %v6187 = vunpack.c.l.b16 %v4874
        %v6188 = vunpack.c.h.b16 %v4874
        %v6189 = vunpack.c.l.b16 %v4875
        %v6190 = vunpack.c.h.b16 %v4875
        %v6191 = vunpack.c.l.b16 %v4876
        %v6192 = vunpack.c.h.b16 %v4876
        %v6193 = vunpack.c.l.b16 %v4877
        %v6194 = vunpack.c.h.b16 %v4877
        %v6195 = vunpack.c.l.b16 %v4878
        %v6196 = vunpack.c.h.b16 %v4878
        %v6197 = vunpack.c.l.b16 %v4879
        %v6198 = vunpack.c.h.b16 %v4879
        %v6199 = vunpack.c.l.b16 %v4880
        %v6200 = vunpack.c.h.b16 %v4880
        %v6201 = vunpack.c.l.b16 %v4881
        %v6202 = vunpack.c.h.b16 %v4881
        %v6203 = vunpack.c.l.b16 %v4882
        %v6204 = vunpack.c.h.b16 %v4882
        %v6205 = vunpack.c.l.b16 %v4883
        %v6206 = vunpack.c.h.b16 %v4883
        %v6207 = vunpack.c.l.b16 %v4884
        %v6208 = vunpack.c.h.b16 %v4884
        %v6209 = vunpack.c.l.b16 %v4885
        %v6210 = vunpack.c.h.b16 %v4885
        %v6211 = vunpack.c.l.b16 %v4886
        %v6212 = vunpack.c.h.b16 %v4886
        %v6213 = vunpack.c.l.b16 %v4887
        %v6214 = vunpack.c.h.b16 %v4887
        %v6215 = vunpack.c.l.b16 %v4888
        %v6216 = vunpack.c.h.b16 %v4888
        %v6217 = vunpack.c.l.b16 %v4889
        %v6218 = vunpack.c.h.b16 %v4889
        %v6219 = vunpack.c.l.b16 %v4890
        %v6220 = vunpack.c.h.b16 %v4890
        %v6221 = vunpack.c.l.b16 %v4891
        %v6222 = vunpack.c.h.b16 %v4891
        %v6223 = vunpack.c.l.b16 %v4892
        %v6224 = vunpack.c.h.b16 %v4892
        %v6225 = vunpack.c.l.b16 %v4893
        %v6226 = vunpack.c.h.b16 %v4893
        %v6227 = vunpack.c.l.b16 %v4894
        %v6228 = vunpack.c.h.b16 %v4894
        %v6229 = vunpack.c.l.b16 %v4895
        %v6230 = vunpack.c.h.b16 %v4895
        %v6231 = vunpack.c.l.b16 %v4896
        %v6232 = vunpack.c.h.b16 %v4896
        %v6233 = vunpack.c.l.b16 %v4897
        %v6234 = vunpack.c.h.b16 %v4897
        %v6235 = vunpack.c.l.b16 %v4898
        %v6236 = vunpack.c.h.b16 %v4898
        %v6237 = vunpack.c.l.b16 %v4899
        %v6238 = vunpack.c.h.b16 %v4899
        %v6239 = vunpack.c.l.b16 %v4900
        %v6240 = vunpack.c.h.b16 %v4900
        %v6241 = vunpack.c.l.b16 %v4901
        %v6242 = vunpack.c.h.b16 %v4901
        %v6243 = vunpack.c.l.b16 %v4902
        %v6244 = vunpack.c.h.b16 %v4902
        %v6245 = vunpack.c.l.b16 %v4903
        %v6246 = vunpack.c.h.b16 %v4903
        %v6247 = vunpack.c.l.b16 %v4904
        %v6248 = vunpack.c.h.b16 %v4904
        %v6249 = vunpack.c.l.b16 %v4905
        %v6250 = vunpack.c.h.b16 %v4905
        %v6251 = vunpack.c.l.b16 %v4906
        %v6252 = vunpack.c.h.b16 %v4906
        %v6253 = vunpack.c.l.b16 %v4907
        %v6254 = vunpack.c.h.b16 %v4907
        %v6255 = vunpack.c.l.b16 %v4908
        %v6256 = vunpack.c.h.b16 %v4908
        %v6257 = vunpack.c.l.b16 %v4909
        %v6258 = vunpack.c.h.b16 %v4909
        %v6259 = vunpack.c.l.b16 %v4910
        %v6260 = vunpack.c.h.b16 %v4910
        %v6261 = vunpack.c.l.b16 %v4911
        %v6262 = vunpack.c.h.b16 %v4911
        %v6263 = vunpack.c.l.b16 %v4912
        %v6264 = vunpack.c.h.b16 %v4912
        %v6265 = vunpack.c.l.b16 %v4913
        %v6266 = vunpack.c.h.b16 %v4913
        %v6267 = vunpack.c.l.b16 %v4914
        %v6268 = vunpack.c.h.b16 %v4914
        %v6269 = vunpack.c.l.b16 %v4915
        %v6270 = vunpack.c.h.b16 %v4915
        %v6271 = vunpack.c.l.b16 %v4916
        %v6272 = vunpack.c.h.b16 %v4916
        %v6273 = vunpack.c.l.b16 %v4917
        %v6274 = vunpack.c.h.b16 %v4917
        %v6275 = vunpack.c.l.b16 %v4918
        %v6276 = vunpack.c.h.b16 %v4918
        %v6277 = vunpack.c.l.b16 %v4919
        %v6278 = vunpack.c.h.b16 %v4919
        %v6279 = vunpack.c.l.b16 %v4920
        %v6280 = vunpack.c.h.b16 %v4920
        %v6281 = vunpack.c.l.b16 %v4921
        %v6282 = vunpack.c.h.b16 %v4921
        %v6283 = vunpack.c.l.b16 %v4922
        %v6284 = vunpack.c.h.b16 %v4922
        %v6285 = vunpack.c.l.b16 %v4923
        %v6286 = vunpack.c.h.b16 %v4923
        %v6287 = vunpack.c.l.b16 %v4924
        %v6288 = vunpack.c.h.b16 %v4924
        %v6289 = vunpack.c.l.b16 %v4925
        %v6290 = vunpack.c.h.b16 %v4925
        %v6291 = vunpack.c.l.b16 %v4926
        %v6292 = vunpack.c.h.b16 %v4926
        %v6293 = vunpack.c.l.b16 %v4927
        %v6294 = vunpack.c.h.b16 %v4927
        %v6295 = vunpack.c.l.b16 %v4928
        %v6296 = vunpack.c.h.b16 %v4928
        %v6297 = vunpack.c.l.b16 %v4929
        %v6298 = vunpack.c.h.b16 %v4929
        %v6299 = vunpack.c.l.b16 %v4930
        %v6300 = vunpack.c.h.b16 %v4930
        %v6301 = vunpack.c.l.b16 %v4931
        %v6302 = vunpack.c.h.b16 %v4931
        %v6303 = vunpack.c.l.b16 %v4932
        %v6304 = vunpack.c.h.b16 %v4932
        %v6305 = vunpack.c.l.b16 %v4933
        %v6306 = vunpack.c.h.b16 %v4933
        %v6307 = vunpack.c.l.b16 %v4934
        %v6308 = vunpack.c.h.b16 %v4934
        %v6309 = vunpack.c.l.b16 %v4935
        %v6310 = vunpack.c.h.b16 %v4935
        %v6311 = vunpack.c.l.b16 %v4936
        %v6312 = vunpack.c.h.b16 %v4936
        %v6313 = vunpack.c.l.b16 %v4937
        %v6314 = vunpack.c.h.b16 %v4937
        %v6315 = vunpack.c.l.b16 %v4938
        %v6316 = vunpack.c.h.b16 %v4938
        %v6317 = vunpack.c.l.b16 %v4939
        %v6318 = vunpack.c.h.b16 %v4939
        %v6319 = vunpack.c.l.b16 %v4940
        %v6320 = vunpack.c.h.b16 %v4940
        %v6321 = vunpack.c.l.b16 %v4941
        %v6322 = vunpack.c.h.b16 %v4941
        %v6323 = vunpack.c.l.b16 %v4942
        %v6324 = vunpack.c.h.b16 %v4942
        %v6325 = vunpack.c.l.b16 %v4943
        %v6326 = vunpack.c.h.b16 %v4943
        %v6327 = vunpack.c.l.b16 %v4944
        %v6328 = vunpack.c.h.b16 %v4944
        %v6329 = vunpack.c.l.b16 %v4945
        %v6330 = vunpack.c.h.b16 %v4945
        %v6331 = vunpack.c.l.b16 %v4946
        %v6332 = vunpack.c.h.b16 %v4946
        %v6333 = vunpack.c.l.b16 %v4947
        %v6334 = vunpack.c.h.b16 %v4947
        %v6335 = vunpack.c.l.b16 %v4948
        %v6336 = vunpack.c.h.b16 %v4948
        %v6337 = vunpack.c.l.b16 %v4949
        %v6338 = vunpack.c.h.b16 %v4949
        %v6339 = vunpack.c.l.b16 %v4950
        %v6340 = vunpack.c.h.b16 %v4950
        %v6341 = vunpack.c.l.b16 %v4951
        %v6342 = vunpack.c.h.b16 %v4951
        %v6343 = vunpack.c.l.b16 %v4952
        %v6344 = vunpack.c.h.b16 %v4952
        %v6345 = vunpack.c.l.b16 %v4953
        %v6346 = vunpack.c.h.b16 %v4953
        %v6347 = vunpack.c.l.b16 %v4954
        %v6348 = vunpack.c.h.b16 %v4954
        %v6349 = vunpack.c.l.b16 %v4955
        %v6350 = vunpack.c.h.b16 %v4955
        %v6351 = vunpack.c.l.b16 %v4956
        %v6352 = vunpack.c.h.b16 %v4956
        %v6353 = vunpack.c.l.b16 %v4957
        %v6354 = vunpack.c.h.b16 %v4957
        %v6355 = vunpack.c.l.b16 %v4958
        %v6356 = vunpack.c.h.b16 %v4958
        %v6357 = vunpack.c.l.b16 %v4959
        %v6358 = vunpack.c.h.b16 %v4959
        %v6359 = vunpack.c.l.b16 %v4960
        %v6360 = vunpack.c.h.b16 %v4960
        %v6361 = vunpack.c.l.b16 %v4961
        %v6362 = vunpack.c.h.b16 %v4961
        %v6363 = vunpack.c.l.b16 %v4962
        %v6364 = vunpack.c.h.b16 %v4962
        %v6365 = vunpack.c.l.b16 %v4963
        %v6366 = vunpack.c.h.b16 %v4963
        %v6367 = vunpack.c.l.b16 %v4964
        %v6368 = vunpack.c.h.b16 %v4964
        %v6369 = vunpack.c.l.b16 %v4965
        %v6370 = vunpack.c.h.b16 %v4965
        %v6371 = vunpack.c.l.b16 %v4966
        %v6372 = vunpack.c.h.b16 %v4966
        %v6373 = vunpack.c.l.b16 %v4967
        %v6374 = vunpack.c.h.b16 %v4967
        %v6375 = vunpack.c.l.b16 %v4968
        %v6376 = vunpack.c.h.b16 %v4968
        %v6377 = vunpack.c.l.b16 %v4969
        %v6378 = vunpack.c.h.b16 %v4969
        %v6379 = vunpack.c.l.b16 %v4970
        %v6380 = vunpack.c.h.b16 %v4970
        %v6381 = vunpack.c.l.b16 %v4971
        %v6382 = vunpack.c.h.b16 %v4971
        %v6383 = vunpack.c.l.b16 %v4972
        %v6384 = vunpack.c.h.b16 %v4972
        %v6385 = vunpack.c.l.b16 %v4973
        %v6386 = vunpack.c.h.b16 %v4973
        %v6387 = vunpack.c.l.b16 %v4974
        %v6388 = vunpack.c.h.b16 %v4974
        %v6389 = vunpack.c.l.b16 %v4975
        %v6390 = vunpack.c.h.b16 %v4975
        %v6391 = vunpack.c.l.b16 %v4976
        %v6392 = vunpack.c.h.b16 %v4976
        %v6393 = vunpack.c.l.b16 %v4977
        %v6394 = vunpack.c.h.b16 %v4977
        %v6395 = vunpack.c.l.b16 %v4978
        %v6396 = vunpack.c.h.b16 %v4978
        %v6397 = vunpack.c.l.b16 %v4979
        %v6398 = vunpack.c.h.b16 %v4979
        %v6399 = vunpack.c.l.b16 %v4980
        %v6400 = vunpack.c.h.b16 %v4980
        %v6401 = vunpack.c.l.b16 %v4981
        %v6402 = vunpack.c.h.b16 %v4981
        %v6403 = vunpack.c.l.b16 %v4982
        %v6404 = vunpack.c.h.b16 %v4982
        %v6405 = vunpack.c.l.b16 %v4983
        %v6406 = vunpack.c.h.b16 %v4983
        %v6407 = vunpack.c.l.b16 %v4984
        %v6408 = vunpack.c.h.b16 %v4984
        %v6409 = vunpack.c.l.b16 %v4985
        %v6410 = vunpack.c.h.b16 %v4985
        %v6411 = vunpack.c.l.b16 %v4986
        %v6412 = vunpack.c.h.b16 %v4986
        %v6413 = vunpack.c.l.b16 %v4987
        %v6414 = vunpack.c.h.b16 %v4987
        %v6415 = vunpack.c.l.b16 %v4988
        %v6416 = vunpack.c.h.b16 %v4988
        %v6417 = vunpack.c.l.b16 %v4989
        %v6418 = vunpack.c.h.b16 %v4989
        %v6419 = vunpack.c.l.b16 %v4990
        %v6420 = vunpack.c.h.b16 %v4990
        %v6421 = vunpack.c.l.b16 %v4991
        %v6422 = vunpack.c.h.b16 %v4991
        %v6423 = vunpack.c.l.b16 %v4992
        %v6424 = vunpack.c.h.b16 %v4992
        %v6425 = vunpack.c.l.b16 %v4993
        %v6426 = vunpack.c.h.b16 %v4993
        %v6427 = vunpack.c.l.b16 %v4994
        %v6428 = vunpack.c.h.b16 %v4994
        %v6429 = vunpack.c.l.b16 %v4995
        %v6430 = vunpack.c.h.b16 %v4995
        %v6431 = vunpack.c.l.b16 %v4996
        %v6432 = vunpack.c.h.b16 %v4996
        %v6433 = vunpack.c.l.b16 %v4997
        %v6434 = vunpack.c.h.b16 %v4997
        %v6435 = vunpack.c.l.b16 %v4998
        %v6436 = vunpack.c.h.b16 %v4998
        %v6437 = vunpack.c.l.b16 %v4999
        %v6438 = vunpack.c.h.b16 %v4999
        %v6439 = vunpack.c.l.b16 %v5000
        %v6440 = vunpack.c.h.b16 %v5000
        %v6441 = vunpack.c.l.b16 %v5001
        %v6442 = vunpack.c.h.b16 %v5001
        %v6443 = vunpack.c.l.b16 %v5002
        %v6444 = vunpack.c.h.b16 %v5002
        %v6445 = vunpack.c.l.b16 %v5003
        %v6446 = vunpack.c.h.b16 %v5003
        %v6447 = vunpack.c.l.b16 %v5004
        %v6448 = vunpack.c.h.b16 %v5004
        %v6449 = vunpack.c.l.b16 %v5005
        %v6450 = vunpack.c.h.b16 %v5005
        %v6451 = vunpack.c.l.b16 %v5006
        %v6452 = vunpack.c.h.b16 %v5006
        %v6453 = vunpack.c.l.b16 %v5007
        %v6454 = vunpack.c.h.b16 %v5007
        %v6455 = vunpack.c.l.b16 %v5008
        %v6456 = vunpack.c.h.b16 %v5008
        %v6457 = vunpack.c.l.b16 %v5009
        %v6458 = vunpack.c.h.b16 %v5009
        %v6459 = vunpack.c.l.b16 %v5010
        %v6460 = vunpack.c.h.b16 %v5010
        %v6461 = vunpack.c.l.b16 %v5011
        %v6462 = vunpack.c.h.b16 %v5011
        %v6463 = vunpack.c.l.b16 %v5012
        %v6464 = vunpack.c.h.b16 %v5012
        %v6465 = vunpack.c.l.b16 %v5013
        %v6466 = vunpack.c.h.b16 %v5013
        %v6467 = vunpack.c.l.b16 %v5014
        %v6468 = vunpack.c.h.b16 %v5014
        %v6469 = vunpack.c.l.b16 %v5015
        %v6470 = vunpack.c.h.b16 %v5015
        %v6471 = vunpack.c.l.b16 %v5016
        %v6472 = vunpack.c.h.b16 %v5016
        %v6473 = vunpack.c.l.b16 %v5017
        %v6474 = vunpack.c.h.b16 %v5017
        %v6475 = vunpack.c.l.b16 %v5018
        %v6476 = vunpack.c.h.b16 %v5018
        %v6477 = vunpack.c.l.b16 %v5019
        %v6478 = vunpack.c.h.b16 %v5019
        %v6479 = vunpack.c.l.b16 %v5020
        %v6480 = vunpack.c.h.b16 %v5020
        %v6481 = vunpack.c.l.b16 %v5021
        %v6482 = vunpack.c.h.b16 %v5021
        %v6483 = vunpack.c.l.b16 %v5022
        %v6484 = vunpack.c.h.b16 %v5022
        %v6485 = vunpack.c.l.b16 %v5023
        %v6486 = vunpack.c.h.b16 %v5023
        %v6487 = vunpack.c.l.b16 %v5024
        %v6488 = vunpack.c.h.b16 %v5024
        %v6489 = vunpack.c.l.b16 %v5025
        %v6490 = vunpack.c.h.b16 %v5025
        %v6491 = vunpack.c.l.b16 %v5026
        %v6492 = vunpack.c.h.b16 %v5026
        %v6493 = vunpack.c.l.b16 %v5027
        %v6494 = vunpack.c.h.b16 %v5027
        %v6495 = vunpack.c.l.b16 %v5028
        %v6496 = vunpack.c.h.b16 %v5028
        %v6497 = vunpack.c.l.b16 %v5029
        %v6498 = vunpack.c.h.b16 %v5029
        %v6499 = vunpack.c.l.b16 %v5030
        %v6500 = vunpack.c.h.b16 %v5030
        %v6501 = vunpack.c.l.b16 %v5031
        %v6502 = vunpack.c.h.b16 %v5031
        %v6503 = vunpack.c.l.b16 %v5032
        %v6504 = vunpack.c.h.b16 %v5032
        %v6505 = vunpack.c.l.b16 %v5033
        %v6506 = vunpack.c.h.b16 %v5033
        %v6507 = vunpack.c.l.b16 %v5034
        %v6508 = vunpack.c.h.b16 %v5034
        %v6509 = vunpack.c.l.b16 %v5035
        %v6510 = vunpack.c.h.b16 %v5035
        %v6511 = vunpack.c.l.b16 %v5036
        %v6512 = vunpack.c.h.b16 %v5036
        %v6513 = vunpack.c.l.b16 %v5037
        %v6514 = vunpack.c.h.b16 %v5037
        %v6515 = vunpack.c.l.b16 %v5038
        %v6516 = vunpack.c.h.b16 %v5038
        %v6517 = vunpack.c.l.b16 %v5039
        %v6518 = vunpack.c.h.b16 %v5039
        %v6519 = vunpack.c.l.b16 %v5040
        %v6520 = vunpack.c.h.b16 %v5040
        %v6521 = vunpack.c.l.b16 %v5041
        %v6522 = vunpack.c.h.b16 %v5041
        %v6523 = vunpack.c.l.b16 %v5042
        %v6524 = vunpack.c.h.b16 %v5042
        %v6525 = vunpack.c.l.b16 %v5043
        %v6526 = vunpack.c.h.b16 %v5043
        %v6527 = vunpack.c.l.b16 %v5044
        %v6528 = vunpack.c.h.b16 %v5044
        %v6529 = vunpack.c.l.b16 %v5045
        %v6530 = vunpack.c.h.b16 %v5045
        %v6531 = vunpack.c.l.b16 %v5046
        %v6532 = vunpack.c.h.b16 %v5046
        %v6533 = vunpack.c.l.b16 %v5047
        %v6534 = vunpack.c.h.b16 %v5047
        %v6535 = vunpack.c.l.b16 %v5048
        %v6536 = vunpack.c.h.b16 %v5048
        %v6537 = vunpack.c.l.b16 %v5049
        %v6538 = vunpack.c.h.b16 %v5049
        %v6539 = vunpack.c.l.b16 %v5050
        %v6540 = vunpack.c.h.b16 %v5050
        %v6541 = vunpack.c.l.b16 %v5051
        %v6542 = vunpack.c.h.b16 %v5051
        %v6543 = vunpack.c.l.b16 %v5052
        %v6544 = vunpack.c.h.b16 %v5052
        %v6545 = vunpack.c.l.b16 %v5053
        %v6546 = vunpack.c.h.b16 %v5053
        %v6547 = vunpack.c.l.b16 %v5054
        %v6548 = vunpack.c.h.b16 %v5054
        %v6549 = vunpack.c.l.b16 %v5055
        %v6550 = vunpack.c.h.b16 %v5055
        %v6551 = vunpack.c.l.b16 %v5056
        %v6552 = vunpack.c.h.b16 %v5056
        %v6553 = vunpack.c.l.b16 %v5057
        %v6554 = vunpack.c.h.b16 %v5057
        %v6555 = vunpack.c.l.b16 %v5058
        %v6556 = vunpack.c.h.b16 %v5058
        %v6557 = vunpack.c.l.b16 %v5059
        %v6558 = vunpack.c.h.b16 %v5059
        %v6559 = vunpack.c.l.b16 %v5060
        %v6560 = vunpack.c.h.b16 %v5060
        %v6561 = vunpack.c.l.b16 %v5061
        %v6562 = vunpack.c.h.b16 %v5061
        %v6563 = vunpack.c.l.b16 %v5062
        %v6564 = vunpack.c.h.b16 %v5062
        %v6565 = vunpack.c.l.b16 %v5063
        %v6566 = vunpack.c.h.b16 %v5063
        %v6567 = vunpack.c.l.b16 %v5064
        %v6568 = vunpack.c.h.b16 %v5064
        %v6569 = vunpack.c.l.b16 %v5065
        %v6570 = vunpack.c.h.b16 %v5065
        %v6571 = vunpack.c.l.b16 %v5066
        %v6572 = vunpack.c.h.b16 %v5066
        %v6573 = vunpack.c.l.b16 %v5067
        %v6574 = vunpack.c.h.b16 %v5067
        %v6575 = vunpack.c.l.b16 %v5068
        %v6576 = vunpack.c.h.b16 %v5068
        %v6577 = vunpack.c.l.b16 %v5069
        %v6578 = vunpack.c.h.b16 %v5069
        %v6579 = vunpack.c.l.b16 %v5070
        %v6580 = vunpack.c.h.b16 %v5070
        %v6581 = vunpack.c.l.b16 %v5071
        %v6582 = vunpack.c.h.b16 %v5071
        %v6583 = vunpack.c.l.b16 %v5072
        %v6584 = vunpack.c.h.b16 %v5072
        %v6585 = vunpack.c.l.b16 %v5073
        %v6586 = vunpack.c.h.b16 %v5073
        %v6587 = vunpack.c.l.b16 %v5074
        %v6588 = vunpack.c.h.b16 %v5074
        %v6589 = vunpack.c.l.b16 %v5075
        %v6590 = vunpack.c.h.b16 %v5075
        %v6591 = vunpack.c.l.b16 %v5076
        %v6592 = vunpack.c.h.b16 %v5076
        %v6593 = vunpack.c.l.b16 %v5077
        %v6594 = vunpack.c.h.b16 %v5077
        %v6595 = vunpack.c.l.b16 %v5078
        %v6596 = vunpack.c.h.b16 %v5078
        %v6597 = vunpack.c.l.b16 %v5079
        %v6598 = vunpack.c.h.b16 %v5079
        %v6599 = vunpack.c.l.b16 %v5080
        %v6600 = vunpack.c.h.b16 %v5080
        %v6601 = vunpack.c.l.b16 %v5081
        %v6602 = vunpack.c.h.b16 %v5081
        %v6603 = vunpack.c.l.b16 %v5082
        %v6604 = vunpack.c.h.b16 %v5082
        %v6605 = vunpack.c.l.b16 %v5083
        %v6606 = vunpack.c.h.b16 %v5083
        %v6607 = vunpack.c.l.b16 %v5084
        %v6608 = vunpack.c.h.b16 %v5084
        %v6609 = vunpack.c.l.b16 %v5085
        %v6610 = vunpack.c.h.b16 %v5085
        %v6611 = vunpack.c.l.b16 %v5086
        %v6612 = vunpack.c.h.b16 %v5086
        %v6613 = vunpack.c.l.b16 %v5087
        %v6614 = vunpack.c.h.b16 %v5087
        %v6615 = vunpack.c.l.b16 %v5088
        %v6616 = vunpack.c.h.b16 %v5088
        %v6617 = vunpack.c.l.b16 %v5089
        %v6618 = vunpack.c.h.b16 %v5089
        %v6619 = vunpack.c.l.b16 %v5090
        %v6620 = vunpack.c.h.b16 %v5090
        %v6621 = vunpack.c.l.b16 %v5091
        %v6622 = vunpack.c.h.b16 %v5091
        %v6623 = vunpack.c.l.b16 %v5092
        %v6624 = vunpack.c.h.b16 %v5092
        %v6625 = vunpack.c.l.b16 %v5093
        %v6626 = vunpack.c.h.b16 %v5093
        %v6627 = vunpack.c.l.b16 %v5094
        %v6628 = vunpack.c.h.b16 %v5094
        %v6629 = vunpack.c.l.b16 %v5095
        %v6630 = vunpack.c.h.b16 %v5095
        %v6631 = vunpack.c.l.b16 %v5096
        %v6632 = vunpack.c.h.b16 %v5096
        %v6633 = vunpack.c.l.b16 %v5097
        %v6634 = vunpack.c.h.b16 %v5097
        %v6635 = vunpack.c.l.b16 %v5098
        %v6636 = vunpack.c.h.b16 %v5098
        %v6637 = vunpack.c.l.b16 %v5099
        %v6638 = vunpack.c.h.b16 %v5099
        %v6639 = vunpack.c.l.b16 %v5100
        %v6640 = vunpack.c.h.b16 %v5100
        %v6641 = vunpack.c.l.b16 %v5101
        %v6642 = vunpack.c.h.b16 %v5101
        %v6643 = vunpack.c.l.b16 %v5102
        %v6644 = vunpack.c.h.b16 %v5102
        %v6645 = vunpack.c.l.b16 %v5103
        %v6646 = vunpack.c.h.b16 %v5103
        %v6647 = vunpack.c.l.b16 %v5104
        %v6648 = vunpack.c.h.b16 %v5104
        %v6649 = vunpack.c.l.b16 %v5105
        %v6650 = vunpack.c.h.b16 %v5105
        %v6651 = vunpack.c.l.b16 %v5106
        %v6652 = vunpack.c.h.b16 %v5106
        %v6653 = vunpack.c.l.b16 %v5107
        %v6654 = vunpack.c.h.b16 %v5107
        %v6655 = vunpack.c.l.b16 %v5108
        %v6656 = vunpack.c.h.b16 %v5108
        %v6657 = vunpack.c.l.b16 %v5109
        %v6658 = vunpack.c.h.b16 %v5109
        %v6659 = vunpack.c.l.b16 %v5110
        %v6660 = vunpack.c.h.b16 %v5110
        %v6661 = vunpack.c.l.b16 %v5111
        %v6662 = vunpack.c.h.b16 %v5111
        %v6663 = vunpack.c.l.b16 %v5112
        %v6664 = vunpack.c.h.b16 %v5112
        %v6665 = vunpack.c.l.b16 %v5113
        %v6666 = vunpack.c.h.b16 %v5113
        %v6667 = vunpack.c.l.b16 %v5114
        %v6668 = vunpack.c.h.b16 %v5114
        %v6669 = vunpack.c.l.b16 %v5115
        %v6670 = vunpack.c.h.b16 %v5115
        %v6671 = vunpack.c.l.b16 %v5116
        %v6672 = vunpack.c.h.b16 %v5116
        %v6673 = vunpack.c.l.b16 %v5117
        %v6674 = vunpack.c.h.b16 %v5117
        %v6675 = vpack.c.b16 %v5655, %v5651
        %v6676 = vpack.c.b16 %v5656, %v5652
        %v6677 = vpack.c.b16 %v5657, %v5653
        %v6678 = vpack.c.b16 %v5658, %v5654
        %v6679 = vpack.c.b16 %v5663, %v5659
        %v6680 = vpack.c.b16 %v5664, %v5660
        %v6681 = vpack.c.b16 %v5665, %v5661
        %v6682 = vpack.c.b16 %v5666, %v5662
        %v6683 = vpack.c.b16 %v5671, %v5667
        %v6684 = vpack.c.b16 %v5672, %v5668
        %v6685 = vpack.c.b16 %v5673, %v5669
        %v6686 = vpack.c.b16 %v5674, %v5670
        %v6687 = vpack.c.b16 %v5679, %v5675
        %v6688 = vpack.c.b16 %v5680, %v5676
        %v6689 = vpack.c.b16 %v5681, %v5677
        %v6690 = vpack.c.b16 %v5682, %v5678
        %v6691 = vpack.c.b16 %v5687, %v5683
        %v6692 = vpack.c.b16 %v5688, %v5684
        %v6693 = vpack.c.b16 %v5689, %v5685
        %v6694 = vpack.c.b16 %v5690, %v5686
        %v6695 = vpack.c.b16 %v5695, %v5691
        %v6696 = vpack.c.b16 %v5696, %v5692
        %v6697 = vpack.c.b16 %v5697, %v5693
        %v6698 = vpack.c.b16 %v5698, %v5694
        %v6699 = vpack.c.b16 %v5703, %v5699
        %v6700 = vpack.c.b16 %v5704, %v5700
        %v6701 = vpack.c.b16 %v5705, %v5701
        %v6702 = vpack.c.b16 %v5706, %v5702
        %v6703 = vpack.c.b16 %v5711, %v5707
        %v6704 = vpack.c.b16 %v5712, %v5708
        %v6705 = vpack.c.b16 %v5713, %v5709
        %v6706 = vpack.c.b16 %v5714, %v5710
        %v6707 = vpack.c.b16 %v5719, %v5715
        %v6708 = vpack.c.b16 %v5720, %v5716
        %v6709 = vpack.c.b16 %v5721, %v5717
        %v6710 = vpack.c.b16 %v5722, %v5718
        %v6711 = vpack.c.b16 %v5727, %v5723
        %v6712 = vpack.c.b16 %v5728, %v5724
        %v6713 = vpack.c.b16 %v5729, %v5725
        %v6714 = vpack.c.b16 %v5730, %v5726
        %v6715 = vpack.c.b16 %v5735, %v5731
        %v6716 = vpack.c.b16 %v5736, %v5732
        %v6717 = vpack.c.b16 %v5737, %v5733
        %v6718 = vpack.c.b16 %v5738, %v5734
        %v6719 = vpack.c.b16 %v5743, %v5739
        %v6720 = vpack.c.b16 %v5744, %v5740
        %v6721 = vpack.c.b16 %v5745, %v5741
        %v6722 = vpack.c.b16 %v5746, %v5742
        %v6723 = vpack.c.b16 %v5751, %v5747
        %v6724 = vpack.c.b16 %v5752, %v5748
        %v6725 = vpack.c.b16 %v5753, %v5749
        %v6726 = vpack.c.b16 %v5754, %v5750
        %v6727 = vpack.c.b16 %v5759, %v5755
        %v6728 = vpack.c.b16 %v5760, %v5756
        %v6729 = vpack.c.b16 %v5761, %v5757
        %v6730 = vpack.c.b16 %v5762, %v5758
        %v6731 = vpack.c.b16 %v5767, %v5763
        %v6732 = vpack.c.b16 %v5768, %v5764
        %v6733 = vpack.c.b16 %v5769, %v5765
        %v6734 = vpack.c.b16 %v5770, %v5766
        %v6735 = vpack.c.b16 %v5775, %v5771
        %v6736 = vpack.c.b16 %v5776, %v5772
        %v6737 = vpack.c.b16 %v5777, %v5773
        %v6738 = vpack.c.b16 %v5778, %v5774
        %v6739 = vpack.c.b16 %v5783, %v5779
        %v6740 = vpack.c.b16 %v5784, %v5780
        %v6741 = vpack.c.b16 %v5785, %v5781
        %v6742 = vpack.c.b16 %v5786, %v5782
        %v6743 = vpack.c.b16 %v5791, %v5787
        %v6744 = vpack.c.b16 %v5792, %v5788
        %v6745 = vpack.c.b16 %v5793, %v5789
        %v6746 = vpack.c.b16 %v5794, %v5790
        %v6747 = vpack.c.b16 %v5799, %v5795
        %v6748 = vpack.c.b16 %v5800, %v5796
        %v6749 = vpack.c.b16 %v5801, %v5797
        %v6750 = vpack.c.b16 %v5802, %v5798
        %v6751 = vpack.c.b16 %v5807, %v5803
        %v6752 = vpack.c.b16 %v5808, %v5804
        %v6753 = vpack.c.b16 %v5809, %v5805
        %v6754 = vpack.c.b16 %v5810, %v5806
        %v6755 = vpack.c.b16 %v5815, %v5811
        %v6756 = vpack.c.b16 %v5816, %v5812
        %v6757 = vpack.c.b16 %v5817, %v5813
        %v6758 = vpack.c.b16 %v5818, %v5814
        %v6759 = vpack.c.b16 %v5823, %v5819
        %v6760 = vpack.c.b16 %v5824, %v5820
        %v6761 = vpack.c.b16 %v5825, %v5821
        %v6762 = vpack.c.b16 %v5826, %v5822
        %v6763 = vpack.c.b16 %v5831, %v5827
        %v6764 = vpack.c.b16 %v5832, %v5828
        %v6765 = vpack.c.b16 %v5833, %v5829
        %v6766 = vpack.c.b16 %v5834, %v5830
        %v6767 = vpack.c.b16 %v5839, %v5835
        %v6768 = vpack.c.b16 %v5840, %v5836
        %v6769 = vpack.c.b16 %v5841, %v5837
        %v6770 = vpack.c.b16 %v5842, %v5838
        %v6771 = vpack.c.b16 %v5847, %v5843
        %v6772 = vpack.c.b16 %v5848, %v5844
        %v6773 = vpack.c.b16 %v5849, %v5845
        %v6774 = vpack.c.b16 %v5850, %v5846
        %v6775 = vpack.c.b16 %v5855, %v5851
        %v6776 = vpack.c.b16 %v5856, %v5852
        %v6777 = vpack.c.b16 %v5857, %v5853
        %v6778 = vpack.c.b16 %v5858, %v5854
        %v6779 = vpack.c.b16 %v5863, %v5859
        %v6780 = vpack.c.b16 %v5864, %v5860
        %v6781 = vpack.c.b16 %v5865, %v5861
        %v6782 = vpack.c.b16 %v5866, %v5862
        %v6783 = vpack.c.b16 %v5871, %v5867
        %v6784 = vpack.c.b16 %v5872, %v5868
        %v6785 = vpack.c.b16 %v5873, %v5869
        %v6786 = vpack.c.b16 %v5874, %v5870
        %v6787 = vpack.c.b16 %v5879, %v5875
        %v6788 = vpack.c.b16 %v5880, %v5876
        %v6789 = vpack.c.b16 %v5881, %v5877
        %v6790 = vpack.c.b16 %v5882, %v5878
        %v6791 = vpack.c.b16 %v5887, %v5883
        %v6792 = vpack.c.b16 %v5888, %v5884
        %v6793 = vpack.c.b16 %v5889, %v5885
        %v6794 = vpack.c.b16 %v5890, %v5886
        %v6795 = vpack.c.b16 %v5895, %v5891
        %v6796 = vpack.c.b16 %v5896, %v5892
        %v6797 = vpack.c.b16 %v5897, %v5893
        %v6798 = vpack.c.b16 %v5898, %v5894
        %v6799 = vpack.c.b16 %v5903, %v5899
        %v6800 = vpack.c.b16 %v5904, %v5900
        %v6801 = vpack.c.b16 %v5905, %v5901
        %v6802 = vpack.c.b16 %v5906, %v5902
        %v6803 = vpack.c.b16 %v5911, %v5907
        %v6804 = vpack.c.b16 %v5912, %v5908
        %v6805 = vpack.c.b16 %v5913, %v5909
        %v6806 = vpack.c.b16 %v5914, %v5910
        %v6807 = vpack.c.b16 %v5919, %v5915
        %v6808 = vpack.c.b16 %v5920, %v5916
        %v6809 = vpack.c.b16 %v5921, %v5917
        %v6810 = vpack.c.b16 %v5922, %v5918
        %v6811 = vpack.c.b16 %v5927, %v5923
        %v6812 = vpack.c.b16 %v5928, %v5924
        %v6813 = vpack.c.b16 %v5929, %v5925
        %v6814 = vpack.c.b16 %v5930, %v5926
        %v6815 = vpack.c.b16 %v5935, %v5931
        %v6816 = vpack.c.b16 %v5936, %v5932
        %v6817 = vpack.c.b16 %v5937, %v5933
        %v6818 = vpack.c.b16 %v5938, %v5934
        %v6819 = vpack.c.b16 %v5943, %v5939
        %v6820 = vpack.c.b16 %v5944, %v5940
        %v6821 = vpack.c.b16 %v5945, %v5941
        %v6822 = vpack.c.b16 %v5946, %v5942
        %v6823 = vpack.c.b16 %v5951, %v5947
        %v6824 = vpack.c.b16 %v5952, %v5948
        %v6825 = vpack.c.b16 %v5953, %v5949
        %v6826 = vpack.c.b16 %v5954, %v5950
        %v6827 = vpack.c.b16 %v5959, %v5955
        %v6828 = vpack.c.b16 %v5960, %v5956
        %v6829 = vpack.c.b16 %v5961, %v5957
        %v6830 = vpack.c.b16 %v5962, %v5958
        %v6831 = vpack.c.b16 %v5967, %v5963
        %v6832 = vpack.c.b16 %v5968, %v5964
        %v6833 = vpack.c.b16 %v5969, %v5965
        %v6834 = vpack.c.b16 %v5970, %v5966
        %v6835 = vpack.c.b16 %v5975, %v5971
        %v6836 = vpack.c.b16 %v5976, %v5972
        %v6837 = vpack.c.b16 %v5977, %v5973
        %v6838 = vpack.c.b16 %v5978, %v5974
        %v6839 = vpack.c.b16 %v5983, %v5979
        %v6840 = vpack.c.b16 %v5984, %v5980
        %v6841 = vpack.c.b16 %v5985, %v5981
        %v6842 = vpack.c.b16 %v5986, %v5982
        %v6843 = vpack.c.b16 %v5991, %v5987
        %v6844 = vpack.c.b16 %v5992, %v5988
        %v6845 = vpack.c.b16 %v5993, %v5989
        %v6846 = vpack.c.b16 %v5994, %v5990
        %v6847 = vpack.c.b16 %v5999, %v5995
        %v6848 = vpack.c.b16 %v6000, %v5996
        %v6849 = vpack.c.b16 %v6001, %v5997
        %v6850 = vpack.c.b16 %v6002, %v5998
        %v6851 = vpack.c.b16 %v6007, %v6003
        %v6852 = vpack.c.b16 %v6008, %v6004
        %v6853 = vpack.c.b16 %v6009, %v6005
        %v6854 = vpack.c.b16 %v6010, %v6006
        %v6855 = vpack.c.b16 %v6015, %v6011
        %v6856 = vpack.c.b16 %v6016, %v6012
        %v6857 = vpack.c.b16 %v6017, %v6013
        %v6858 = vpack.c.b16 %v6018, %v6014
        %v6859 = vpack.c.b16 %v6023, %v6019
        %v6860 = vpack.c.b16 %v6024, %v6020
        %v6861 = vpack.c.b16 %v6025, %v6021
        %v6862 = vpack.c.b16 %v6026, %v6022
        %v6863 = vpack.c.b16 %v6031, %v6027
        %v6864 = vpack.c.b16 %v6032, %v6028
        %v6865 = vpack.c.b16 %v6033, %v6029
        %v6866 = vpack.c.b16 %v6034, %v6030
        %v6867 = vpack.c.b16 %v6039, %v6035
        %v6868 = vpack.c.b16 %v6040, %v6036
        %v6869 = vpack.c.b16 %v6041, %v6037
        %v6870 = vpack.c.b16 %v6042, %v6038
        %v6871 = vpack.c.b16 %v6047, %v6043
        %v6872 = vpack.c.b16 %v6048, %v6044
        %v6873 = vpack.c.b16 %v6049, %v6045
        %v6874 = vpack.c.b16 %v6050, %v6046
        %v6875 = vpack.c.b16 %v6055, %v6051
        %v6876 = vpack.c.b16 %v6056, %v6052
        %v6877 = vpack.c.b16 %v6057, %v6053
        %v6878 = vpack.c.b16 %v6058, %v6054
        %v6879 = vpack.c.b16 %v6063, %v6059
        %v6880 = vpack.c.b16 %v6064, %v6060
        %v6881 = vpack.c.b16 %v6065, %v6061
        %v6882 = vpack.c.b16 %v6066, %v6062
        %v6883 = vpack.c.b16 %v6071, %v6067
        %v6884 = vpack.c.b16 %v6072, %v6068
        %v6885 = vpack.c.b16 %v6073, %v6069
        %v6886 = vpack.c.b16 %v6074, %v6070
        %v6887 = vpack.c.b16 %v6079, %v6075
        %v6888 = vpack.c.b16 %v6080, %v6076
        %v6889 = vpack.c.b16 %v6081, %v6077
        %v6890 = vpack.c.b16 %v6082, %v6078
        %v6891 = vpack.c.b16 %v6087, %v6083
        %v6892 = vpack.c.b16 %v6088, %v6084
        %v6893 = vpack.c.b16 %v6089, %v6085
        %v6894 = vpack.c.b16 %v6090, %v6086
        %v6895 = vpack.c.b16 %v6095, %v6091
        %v6896 = vpack.c.b16 %v6096, %v6092
        %v6897 = vpack.c.b16 %v6097, %v6093
        %v6898 = vpack.c.b16 %v6098, %v6094
        %v6899 = vpack.c.b16 %v6103, %v6099
        %v6900 = vpack.c.b16 %v6104, %v6100
        %v6901 = vpack.c.b16 %v6105, %v6101
        %v6902 = vpack.c.b16 %v6106, %v6102
        %v6903 = vpack.c.b16 %v6111, %v6107
        %v6904 = vpack.c.b16 %v6112, %v6108
        %v6905 = vpack.c.b16 %v6113, %v6109
        %v6906 = vpack.c.b16 %v6114, %v6110
        %v6907 = vpack.c.b16 %v6119, %v6115
        %v6908 = vpack.c.b16 %v6120, %v6116
        %v6909 = vpack.c.b16 %v6121, %v6117
        %v6910 = vpack.c.b16 %v6122, %v6118
        %v6911 = vpack.c.b16 %v6127, %v6123
        %v6912 = vpack.c.b16 %v6128, %v6124
        %v6913 = vpack.c.b16 %v6129, %v6125
        %v6914 = vpack.c.b16 %v6130, %v6126
        %v6915 = vpack.c.b16 %v6135, %v6131
        %v6916 = vpack.c.b16 %v6136, %v6132
        %v6917 = vpack.c.b16 %v6137, %v6133
        %v6918 = vpack.c.b16 %v6138, %v6134
        %v6919 = vpack.c.b16 %v6143, %v6139
        %v6920 = vpack.c.b16 %v6144, %v6140
        %v6921 = vpack.c.b16 %v6145, %v6141
        %v6922 = vpack.c.b16 %v6146, %v6142
        %v6923 = vpack.c.b16 %v6151, %v6147
        %v6924 = vpack.c.b16 %v6152, %v6148
        %v6925 = vpack.c.b16 %v6153, %v6149
        %v6926 = vpack.c.b16 %v6154, %v6150
        %v6927 = vpack.c.b16 %v6159, %v6155
        %v6928 = vpack.c.b16 %v6160, %v6156
        %v6929 = vpack.c.b16 %v6161, %v6157
        %v6930 = vpack.c.b16 %v6162, %v6158
        %v6931 = vpack.c.b16 %v6167, %v6163
        %v6932 = vpack.c.b16 %v6168, %v6164
        %v6933 = vpack.c.b16 %v6169, %v6165
        %v6934 = vpack.c.b16 %v6170, %v6166
        %v6935 = vpack.c.b16 %v6175, %v6171
        %v6936 = vpack.c.b16 %v6176, %v6172
        %v6937 = vpack.c.b16 %v6177, %v6173
        %v6938 = vpack.c.b16 %v6178, %v6174
        %v6939 = vpack.c.b16 %v6183, %v6179
        %v6940 = vpack.c.b16 %v6184, %v6180
        %v6941 = vpack.c.b16 %v6185, %v6181
        %v6942 = vpack.c.b16 %v6186, %v6182
        %v6943 = vpack.c.b16 %v6191, %v6187
        %v6944 = vpack.c.b16 %v6192, %v6188
        %v6945 = vpack.c.b16 %v6193, %v6189
        %v6946 = vpack.c.b16 %v6194, %v6190
        %v6947 = vpack.c.b16 %v6199, %v6195
        %v6948 = vpack.c.b16 %v6200, %v6196
        %v6949 = vpack.c.b16 %v6201, %v6197
        %v6950 = vpack.c.b16 %v6202, %v6198
        %v6951 = vpack.c.b16 %v6207, %v6203
        %v6952 = vpack.c.b16 %v6208, %v6204
        %v6953 = vpack.c.b16 %v6209, %v6205
        %v6954 = vpack.c.b16 %v6210, %v6206
        %v6955 = vpack.c.b16 %v6215, %v6211
        %v6956 = vpack.c.b16 %v6216, %v6212
        %v6957 = vpack.c.b16 %v6217, %v6213
        %v6958 = vpack.c.b16 %v6218, %v6214
        %v6959 = vpack.c.b16 %v6223, %v6219
        %v6960 = vpack.c.b16 %v6224, %v6220
        %v6961 = vpack.c.b16 %v6225, %v6221
        %v6962 = vpack.c.b16 %v6226, %v6222
        %v6963 = vpack.c.b16 %v6231, %v6227
        %v6964 = vpack.c.b16 %v6232, %v6228
        %v6965 = vpack.c.b16 %v6233, %v6229
        %v6966 = vpack.c.b16 %v6234, %v6230
        %v6967 = vpack.c.b16 %v6239, %v6235
        %v6968 = vpack.c.b16 %v6240, %v6236
        %v6969 = vpack.c.b16 %v6241, %v6237
        %v6970 = vpack.c.b16 %v6242, %v6238
        %v6971 = vpack.c.b16 %v6247, %v6243
        %v6972 = vpack.c.b16 %v6248, %v6244
        %v6973 = vpack.c.b16 %v6249, %v6245
        %v6974 = vpack.c.b16 %v6250, %v6246
        %v6975 = vpack.c.b16 %v6255, %v6251
        %v6976 = vpack.c.b16 %v6256, %v6252
        %v6977 = vpack.c.b16 %v6257, %v6253
        %v6978 = vpack.c.b16 %v6258, %v6254
        %v6979 = vpack.c.b16 %v6263, %v6259
        %v6980 = vpack.c.b16 %v6264, %v6260
        %v6981 = vpack.c.b16 %v6265, %v6261
        %v6982 = vpack.c.b16 %v6266, %v6262
        %v6983 = vpack.c.b16 %v6271, %v6267
        %v6984 = vpack.c.b16 %v6272, %v6268
        %v6985 = vpack.c.b16 %v6273, %v6269
        %v6986 = vpack.c.b16 %v6274, %v6270
        %v6987 = vpack.c.b16 %v6279, %v6275
        %v6988 = vpack.c.b16 %v6280, %v6276
        %v6989 = vpack.c.b16 %v6281, %v6277
        %v6990 = vpack.c.b16 %v6282, %v6278
        %v6991 = vpack.c.b16 %v6287, %v6283
        %v6992 = vpack.c.b16 %v6288, %v6284
        %v6993 = vpack.c.b16 %v6289, %v6285
        %v6994 = vpack.c.b16 %v6290, %v6286
        %v6995 = vpack.c.b16 %v6295, %v6291
        %v6996 = vpack.c.b16 %v6296, %v6292
        %v6997 = vpack.c.b16 %v6297, %v6293
        %v6998 = vpack.c.b16 %v6298, %v6294
        %v6999 = vpack.c.b16 %v6303, %v6299
        %v7000 = vpack.c.b16 %v6304, %v6300
        %v7001 = vpack.c.b16 %v6305, %v6301
        %v7002 = vpack.c.b16 %v6306, %v6302
        %v7003 = vpack.c.b16 %v6311, %v6307
        %v7004 = vpack.c.b16 %v6312, %v6308
        %v7005 = vpack.c.b16 %v6313, %v6309
        %v7006 = vpack.c.b16 %v6314, %v6310
        %v7007 = vpack.c.b16 %v6319, %v6315
        %v7008 = vpack.c.b16 %v6320, %v6316
        %v7009 = vpack.c.b16 %v6321, %v6317
        %v7010 = vpack.c.b16 %v6322, %v6318
        %v7011 = vpack.c.b16 %v6327, %v6323
        %v7012 = vpack.c.b16 %v6328, %v6324
        %v7013 = vpack.c.b16 %v6329, %v6325
        %v7014 = vpack.c.b16 %v6330, %v6326
        %v7015 = vpack.c.b16 %v6335, %v6331
        %v7016 = vpack.c.b16 %v6336, %v6332
        %v7017 = vpack.c.b16 %v6337, %v6333
        %v7018 = vpack.c.b16 %v6338, %v6334
        %v7019 = vpack.c.b16 %v6343, %v6339
        %v7020 = vpack.c.b16 %v6344, %v6340
        %v7021 = vpack.c.b16 %v6345, %v6341
        %v7022 = vpack.c.b16 %v6346, %v6342
        %v7023 = vpack.c.b16 %v6351, %v6347
        %v7024 = vpack.c.b16 %v6352, %v6348
        %v7025 = vpack.c.b16 %v6353, %v6349
        %v7026 = vpack.c.b16 %v6354, %v6350
        %v7027 = vpack.c.b16 %v6359, %v6355
        %v7028 = vpack.c.b16 %v6360, %v6356
        %v7029 = vpack.c.b16 %v6361, %v6357
        %v7030 = vpack.c.b16 %v6362, %v6358
        %v7031 = vpack.c.b16 %v6367, %v6363
        %v7032 = vpack.c.b16 %v6368, %v6364
        %v7033 = vpack.c.b16 %v6369, %v6365
        %v7034 = vpack.c.b16 %v6370, %v6366
        %v7035 = vpack.c.b16 %v6375, %v6371
        %v7036 = vpack.c.b16 %v6376, %v6372
        %v7037 = vpack.c.b16 %v6377, %v6373
        %v7038 = vpack.c.b16 %v6378, %v6374
        %v7039 = vpack.c.b16 %v6383, %v6379
        %v7040 = vpack.c.b16 %v6384, %v6380
        %v7041 = vpack.c.b16 %v6385, %v6381
        %v7042 = vpack.c.b16 %v6386, %v6382
        %v7043 = vpack.c.b16 %v6391, %v6387
        %v7044 = vpack.c.b16 %v6392, %v6388
        %v7045 = vpack.c.b16 %v6393, %v6389
        %v7046 = vpack.c.b16 %v6394, %v6390
        %v7047 = vpack.c.b16 %v6399, %v6395
        %v7048 = vpack.c.b16 %v6400, %v6396
        %v7049 = vpack.c.b16 %v6401, %v6397
        %v7050 = vpack.c.b16 %v6402, %v6398
        %v7051 = vpack.c.b16 %v6407, %v6403
        %v7052 = vpack.c.b16 %v6408, %v6404
        %v7053 = vpack.c.b16 %v6409, %v6405
        %v7054 = vpack.c.b16 %v6410, %v6406
        %v7055 = vpack.c.b16 %v6415, %v6411
        %v7056 = vpack.c.b16 %v6416, %v6412
        %v7057 = vpack.c.b16 %v6417, %v6413
        %v7058 = vpack.c.b16 %v6418, %v6414
        %v7059 = vpack.c.b16 %v6423, %v6419
        %v7060 = vpack.c.b16 %v6424, %v6420
        %v7061 = vpack.c.b16 %v6425, %v6421
        %v7062 = vpack.c.b16 %v6426, %v6422
        %v7063 = vpack.c.b16 %v6431, %v6427
        %v7064 = vpack.c.b16 %v6432, %v6428
        %v7065 = vpack.c.b16 %v6433, %v6429
        %v7066 = vpack.c.b16 %v6434, %v6430
        %v7067 = vpack.c.b16 %v6439, %v6435
        %v7068 = vpack.c.b16 %v6440, %v6436
        %v7069 = vpack.c.b16 %v6441, %v6437
        %v7070 = vpack.c.b16 %v6442, %v6438
        %v7071 = vpack.c.b16 %v6447, %v6443
        %v7072 = vpack.c.b16 %v6448, %v6444
        %v7073 = vpack.c.b16 %v6449, %v6445
        %v7074 = vpack.c.b16 %v6450, %v6446
        %v7075 = vpack.c.b16 %v6455, %v6451
        %v7076 = vpack.c.b16 %v6456, %v6452
        %v7077 = vpack.c.b16 %v6457, %v6453
        %v7078 = vpack.c.b16 %v6458, %v6454
        %v7079 = vpack.c.b16 %v6463, %v6459
        %v7080 = vpack.c.b16 %v6464, %v6460
        %v7081 = vpack.c.b16 %v6465, %v6461
        %v7082 = vpack.c.b16 %v6466, %v6462
        %v7083 = vpack.c.b16 %v6471, %v6467
        %v7084 = vpack.c.b16 %v6472, %v6468
        %v7085 = vpack.c.b16 %v6473, %v6469
        %v7086 = vpack.c.b16 %v6474, %v6470
        %v7087 = vpack.c.b16 %v6479, %v6475
        %v7088 = vpack.c.b16 %v6480, %v6476
        %v7089 = vpack.c.b16 %v6481, %v6477
        %v7090 = vpack.c.b16 %v6482, %v6478
        %v7091 = vpack.c.b16 %v6487, %v6483
        %v7092 = vpack.c.b16 %v6488, %v6484
        %v7093 = vpack.c.b16 %v6489, %v6485
        %v7094 = vpack.c.b16 %v6490, %v6486
        %v7095 = vpack.c.b16 %v6495, %v6491
        %v7096 = vpack.c.b16 %v6496, %v6492
        %v7097 = vpack.c.b16 %v6497, %v6493
        %v7098 = vpack.c.b16 %v6498, %v6494
        %v7099 = vpack.c.b16 %v6503, %v6499
        %v7100 = vpack.c.b16 %v6504, %v6500
        %v7101 = vpack.c.b16 %v6505, %v6501
        %v7102 = vpack.c.b16 %v6506, %v6502
        %v7103 = vpack.c.b16 %v6511, %v6507
        %v7104 = vpack.c.b16 %v6512, %v6508
        %v7105 = vpack.c.b16 %v6513, %v6509
        %v7106 = vpack.c.b16 %v6514, %v6510
        %v7107 = vpack.c.b16 %v6519, %v6515
        %v7108 = vpack.c.b16 %v6520, %v6516
        %v7109 = vpack.c.b16 %v6521, %v6517
        %v7110 = vpack.c.b16 %v6522, %v6518
        %v7111 = vpack.c.b16 %v6527, %v6523
        %v7112 = vpack.c.b16 %v6528, %v6524
        %v7113 = vpack.c.b16 %v6529, %v6525
        %v7114 = vpack.c.b16 %v6530, %v6526
        %v7115 = vpack.c.b16 %v6535, %v6531
        %v7116 = vpack.c.b16 %v6536, %v6532
        %v7117 = vpack.c.b16 %v6537, %v6533
        %v7118 = vpack.c.b16 %v6538, %v6534
        %v7119 = vpack.c.b16 %v6543, %v6539
        %v7120 = vpack.c.b16 %v6544, %v6540
        %v7121 = vpack.c.b16 %v6545, %v6541
        %v7122 = vpack.c.b16 %v6546, %v6542
        %v7123 = vpack.c.b16 %v6551, %v6547
        %v7124 = vpack.c.b16 %v6552, %v6548
        %v7125 = vpack.c.b16 %v6553, %v6549
        %v7126 = vpack.c.b16 %v6554, %v6550
        %v7127 = vpack.c.b16 %v6559, %v6555
        %v7128 = vpack.c.b16 %v6560, %v6556
        %v7129 = vpack.c.b16 %v6561, %v6557
        %v7130 = vpack.c.b16 %v6562, %v6558
        %v7131 = vpack.c.b16 %v6567, %v6563
        %v7132 = vpack.c.b16 %v6568, %v6564
        %v7133 = vpack.c.b16 %v6569, %v6565
        %v7134 = vpack.c.b16 %v6570, %v6566
        %v7135 = vpack.c.b16 %v6575, %v6571
        %v7136 = vpack.c.b16 %v6576, %v6572
        %v7137 = vpack.c.b16 %v6577, %v6573
        %v7138 = vpack.c.b16 %v6578, %v6574
        %v7139 = vpack.c.b16 %v6583, %v6579
        %v7140 = vpack.c.b16 %v6584, %v6580
        %v7141 = vpack.c.b16 %v6585, %v6581
        %v7142 = vpack.c.b16 %v6586, %v6582
        %v7143 = vpack.c.b16 %v6591, %v6587
        %v7144 = vpack.c.b16 %v6592, %v6588
        %v7145 = vpack.c.b16 %v6593, %v6589
        %v7146 = vpack.c.b16 %v6594, %v6590
        %v7147 = vpack.c.b16 %v6599, %v6595
        %v7148 = vpack.c.b16 %v6600, %v6596
        %v7149 = vpack.c.b16 %v6601, %v6597
        %v7150 = vpack.c.b16 %v6602, %v6598
        %v7151 = vpack.c.b16 %v6607, %v6603
        %v7152 = vpack.c.b16 %v6608, %v6604
        %v7153 = vpack.c.b16 %v6609, %v6605
        %v7154 = vpack.c.b16 %v6610, %v6606
        %v7155 = vpack.c.b16 %v6615, %v6611
        %v7156 = vpack.c.b16 %v6616, %v6612
        %v7157 = vpack.c.b16 %v6617, %v6613
        %v7158 = vpack.c.b16 %v6618, %v6614
        %v7159 = vpack.c.b16 %v6623, %v6619
        %v7160 = vpack.c.b16 %v6624, %v6620
        %v7161 = vpack.c.b16 %v6625, %v6621
        %v7162 = vpack.c.b16 %v6626, %v6622
        %v7163 = vpack.c.b16 %v6631, %v6627
        %v7164 = vpack.c.b16 %v6632, %v6628
        %v7165 = vpack.c.b16 %v6633, %v6629
        %v7166 = vpack.c.b16 %v6634, %v6630
        %v7167 = vpack.c.b16 %v6639, %v6635
        %v7168 = vpack.c.b16 %v6640, %v6636
        %v7169 = vpack.c.b16 %v6641, %v6637
        %v7170 = vpack.c.b16 %v6642, %v6638
        %v7171 = vpack.c.b16 %v6647, %v6643
        %v7172 = vpack.c.b16 %v6648, %v6644
        %v7173 = vpack.c.b16 %v6649, %v6645
        %v7174 = vpack.c.b16 %v6650, %v6646
        %v7175 = vpack.c.b16 %v6655, %v6651
        %v7176 = vpack.c.b16 %v6656, %v6652
        %v7177 = vpack.c.b16 %v6657, %v6653
        %v7178 = vpack.c.b16 %v6658, %v6654
        %v7179 = vpack.c.b16 %v6663, %v6659
        %v7180 = vpack.c.b16 %v6664, %v6660
        %v7181 = vpack.c.b16 %v6665, %v6661
        %v7182 = vpack.c.b16 %v6666, %v6662
        %v7183 = vpack.c.b16 %v6671, %v6667
        %v7184 = vpack.c.b16 %v6672, %v6668
        %v7185 = vpack.c.b16 %v6673, %v6669
        %v7186 = vpack.c.b16 %v6674, %v6670
        %7699 = vmatprep.subr.bf16.mxu0 %v6676
        %7700 = vmatpush1.bf16.msra.mxu0 %v6675
        %7701 = vmatprep.subr.bf16.mxu0 %v6680
        %7702 = vmatpush1.bf16.msra.mxu0 %v6679
        %7703 = vmatprep.subr.bf16.mxu0 %v6684
        %7704 = vmatpush1.bf16.msra.mxu0 %v6683
        %7705 = vmatprep.subr.bf16.mxu0 %v6688
        %7706 = vmatpush1.bf16.msra.mxu0 %v6687
        %7707 = vmatprep.subr.bf16.mxu0 %v6692
        %7708 = vmatpush1.bf16.msra.mxu0 %v6691
        %7709 = vmatprep.subr.bf16.mxu0 %v6696
        %7710 = vmatpush1.bf16.msra.mxu0 %v6695
        %7711 = vmatprep.subr.bf16.mxu0 %v6700
        %7712 = vmatpush1.bf16.msra.mxu0 %v6699
        %7713 = vmatprep.subr.bf16.mxu0 %v6704
        %7714 = vmatpush1.bf16.msra.mxu0 %v6703
        %7715 = vmatprep.subr.bf16.mxu0 %v6708
        %7716 = vmatpush1.bf16.msra.mxu0 %v6707
        %7717 = vmatprep.subr.bf16.mxu0 %v6712
        %7718 = vmatpush1.bf16.msra.mxu0 %v6711
        %7719 = vmatprep.subr.bf16.mxu0 %v6716
        %7720 = vmatpush1.bf16.msra.mxu0 %v6715
        %7721 = vmatprep.subr.bf16.mxu0 %v6720
        %7722 = vmatpush1.bf16.msra.mxu0 %v6719
        %7723 = vmatprep.subr.bf16.mxu0 %v6724
        %7724 = vmatpush1.bf16.msra.mxu0 %v6723
        %7725 = vmatprep.subr.bf16.mxu0 %v6728
        %7726 = vmatpush1.bf16.msra.mxu0 %v6727
        %7727 = vmatprep.subr.bf16.mxu0 %v6732
        %7728 = vmatpush1.bf16.msra.mxu0 %v6731
        %7729 = vmatprep.subr.bf16.mxu0 %v6736
        %7730 = vmatpush1.bf16.msra.mxu0 %v6735
        %7731 = vmatprep.mubr.bf16.mxu0 %v4541
        %7732 = vmatmul.mubr.bf16.gmra.mrb[0].mxu0 %v4540
        %v7733 = vpop.f32.mrb[0].mxu0
        %v7734 = vadd.f32 %v5122, %v7733
        %v7735 = vpop.f32.mrb[0].mxu0
        %v7736 = vadd.f32 %v5126, %v7735
        %v7737 = vpop.f32.mrb[0].mxu0
        %v7738 = vpop.f32.mrb[0].mxu0
        %7739 = vdwg.mxu0
        %7740 = vmatprep.subr.bf16.mxu0 %v6740
        %7741 = vmatpush1.bf16.msra.mxu0 %v6739
        %7742 = vmatprep.subr.bf16.mxu0 %v6744
        %7743 = vmatpush1.bf16.msra.mxu0 %v6743
        %7744 = vmatprep.subr.bf16.mxu0 %v6748
        %7745 = vmatpush1.bf16.msra.mxu0 %v6747
        %7746 = vmatprep.subr.bf16.mxu0 %v6752
        %7747 = vmatpush1.bf16.msra.mxu0 %v6751
        %7748 = vmatprep.subr.bf16.mxu0 %v6756
        %7749 = vmatpush1.bf16.msra.mxu0 %v6755
        %7750 = vmatprep.subr.bf16.mxu0 %v6760
        %7751 = vmatpush1.bf16.msra.mxu0 %v6759
        %7752 = vmatprep.subr.bf16.mxu0 %v6764
        %7753 = vmatpush1.bf16.msra.mxu0 %v6763
        %7754 = vmatprep.subr.bf16.mxu0 %v6768
        %7755 = vmatpush1.bf16.msra.mxu0 %v6767
        %7756 = vmatprep.subr.bf16.mxu0 %v6772
        %7757 = vmatpush1.bf16.msra.mxu0 %v6771
        %7758 = vmatprep.subr.bf16.mxu0 %v6776
        %7759 = vmatpush1.bf16.msra.mxu0 %v6775
        %7760 = vmatprep.subr.bf16.mxu0 %v6780
        %7761 = vmatpush1.bf16.msra.mxu0 %v6779
        %7762 = vmatprep.subr.bf16.mxu0 %v6784
        %7763 = vmatpush1.bf16.msra.mxu0 %v6783
        %7764 = vmatprep.subr.bf16.mxu0 %v6788
        %7765 = vmatpush1.bf16.msra.mxu0 %v6787
        %7766 = vmatprep.subr.bf16.mxu0 %v6792
        %7767 = vmatpush1.bf16.msra.mxu0 %v6791
        %7768 = vmatprep.subr.bf16.mxu0 %v6796
        %7769 = vmatpush1.bf16.msra.mxu0 %v6795
        %7770 = vmatprep.subr.bf16.mxu0 %v6800
        %7771 = vmatpush1.bf16.msra.mxu0 %v6799
        %7772 = vmatprep.mubr.bf16.mxu0 %v4543
        %7773 = vmatmul.mubr.bf16.gmra.mrb[0].mxu0 %v4542
        %v7774 = vpop.f32.mrb[0].mxu0
        %v7775 = vadd.f32 %v7734, %v7774
        %v7776 = vpop.f32.mrb[0].mxu0
        %v7777 = vadd.f32 %v7736, %v7776
        %v7778 = vpop.f32.mrb[0].mxu0
        %v7779 = vpop.f32.mrb[0].mxu0
        %7780 = vdwg.mxu0
        %7781 = vmatprep.subr.bf16.mxu0 %v6804
        %7782 = vmatpush1.bf16.msra.mxu0 %v6803
        %7783 = vmatprep.subr.bf16.mxu0 %v6808
        %7784 = vmatpush1.bf16.msra.mxu0 %v6807
        %7785 = vmatprep.subr.bf16.mxu0 %v6812
        %7786 = vmatpush1.bf16.msra.mxu0 %v6811
        %7787 = vmatprep.subr.bf16.mxu0 %v6816
        %7788 = vmatpush1.bf16.msra.mxu0 %v6815
        %7789 = vmatprep.subr.bf16.mxu0 %v6820
        %7790 = vmatpush1.bf16.msra.mxu0 %v6819
        %7791 = vmatprep.subr.bf16.mxu0 %v6824
        %7792 = vmatpush1.bf16.msra.mxu0 %v6823
        %7793 = vmatprep.subr.bf16.mxu0 %v6828
        %7794 = vmatpush1.bf16.msra.mxu0 %v6827
        %7795 = vmatprep.subr.bf16.mxu0 %v6832
        %7796 = vmatpush1.bf16.msra.mxu0 %v6831
        %7797 = vmatprep.subr.bf16.mxu0 %v6836
        %7798 = vmatpush1.bf16.msra.mxu0 %v6835
        %7799 = vmatprep.subr.bf16.mxu0 %v6840
        %7800 = vmatpush1.bf16.msra.mxu0 %v6839
        %7801 = vmatprep.subr.bf16.mxu0 %v6844
        %7802 = vmatpush1.bf16.msra.mxu0 %v6843
        %7803 = vmatprep.subr.bf16.mxu0 %v6848
        %7804 = vmatpush1.bf16.msra.mxu0 %v6847
        %7805 = vmatprep.subr.bf16.mxu0 %v6852
        %7806 = vmatpush1.bf16.msra.mxu0 %v6851
        %7807 = vmatprep.subr.bf16.mxu0 %v6856
        %7808 = vmatpush1.bf16.msra.mxu0 %v6855
        %7809 = vmatprep.subr.bf16.mxu0 %v6860
        %7810 = vmatpush1.bf16.msra.mxu0 %v6859
        %7811 = vmatprep.subr.bf16.mxu0 %v6864
        %7812 = vmatpush1.bf16.msra.mxu0 %v6863
        %7813 = vmatprep.mubr.bf16.mxu0 %v4559
        %7814 = vmatmul.mubr.bf16.gmra.mrb[0].mxu0 %v4552
        %v7815 = vpop.f32.mrb[0].mxu0
        %v7816 = vadd.f32 %v7775, %v7815
        %v7817 = vpop.f32.mrb[0].mxu0
        %v7818 = vadd.f32 %v7777, %v7817
        %v7819 = vpop.f32.mrb[0].mxu0
        %v7820 = vpop.f32.mrb[0].mxu0
        %7821 = vdwg.mxu0
        %7822 = vmatprep.subr.bf16.mxu0 %v6868
        %7823 = vmatpush1.bf16.msra.mxu0 %v6867
        %7824 = vmatprep.subr.bf16.mxu0 %v6872
        %7825 = vmatpush1.bf16.msra.mxu0 %v6871
        %7826 = vmatprep.subr.bf16.mxu0 %v6876
        %7827 = vmatpush1.bf16.msra.mxu0 %v6875
        %7828 = vmatprep.subr.bf16.mxu0 %v6880
        %7829 = vmatpush1.bf16.msra.mxu0 %v6879
        %7830 = vmatprep.subr.bf16.mxu0 %v6884
        %7831 = vmatpush1.bf16.msra.mxu0 %v6883
        %7832 = vmatprep.subr.bf16.mxu0 %v6888
        %7833 = vmatpush1.bf16.msra.mxu0 %v6887
        %7834 = vmatprep.subr.bf16.mxu0 %v6892
        %7835 = vmatpush1.bf16.msra.mxu0 %v6891
        %7836 = vmatprep.subr.bf16.mxu0 %v6896
        %7837 = vmatpush1.bf16.msra.mxu0 %v6895
        %7838 = vmatprep.subr.bf16.mxu0 %v6900
        %7839 = vmatpush1.bf16.msra.mxu0 %v6899
        %7840 = vmatprep.subr.bf16.mxu0 %v6904
        %7841 = vmatpush1.bf16.msra.mxu0 %v6903
        %7842 = vmatprep.subr.bf16.mxu0 %v6908
        %7843 = vmatpush1.bf16.msra.mxu0 %v6907
        %7844 = vmatprep.subr.bf16.mxu0 %v6912
        %7845 = vmatpush1.bf16.msra.mxu0 %v6911
        %7846 = vmatprep.subr.bf16.mxu0 %v6916
        %7847 = vmatpush1.bf16.msra.mxu0 %v6915
        %7848 = vmatprep.subr.bf16.mxu0 %v6920
        %7849 = vmatpush1.bf16.msra.mxu0 %v6919
        %7850 = vmatprep.subr.bf16.mxu0 %v6924
        %7851 = vmatpush1.bf16.msra.mxu0 %v6923
        %7852 = vmatprep.subr.bf16.mxu0 %v6928
        %7853 = vmatpush1.bf16.msra.mxu0 %v6927
        %7854 = vmatprep.mubr.bf16.mxu0 %v4573
        %7855 = vmatmul.mubr.bf16.gmra.mrb[0].mxu0 %v4566
        %v7856 = vpop.f32.mrb[0].mxu0
        %v7857 = vadd.f32 %v7816, %v7856
        %v7858 = vpop.f32.mrb[0].mxu0
        %v7859 = vadd.f32 %v7818, %v7858
        %v7860 = vpop.f32.mrb[0].mxu0
        %v7861 = vpop.f32.mrb[0].mxu0
        %7862 = vdwg.mxu0
        %7863 = vmatprep.subr.bf16.mxu0 %v6932
        %7864 = vmatpush1.bf16.msra.mxu0 %v6931
        %7865 = vmatprep.subr.bf16.mxu0 %v6936
        %7866 = vmatpush1.bf16.msra.mxu0 %v6935
        %7867 = vmatprep.subr.bf16.mxu0 %v6940
        %7868 = vmatpush1.bf16.msra.mxu0 %v6939
        %7869 = vmatprep.subr.bf16.mxu0 %v6944
        %7870 = vmatpush1.bf16.msra.mxu0 %v6943
        %7871 = vmatprep.subr.bf16.mxu0 %v6948
        %7872 = vmatpush1.bf16.msra.mxu0 %v6947
        %7873 = vmatprep.subr.bf16.mxu0 %v6952
        %7874 = vmatpush1.bf16.msra.mxu0 %v6951
        %7875 = vmatprep.subr.bf16.mxu0 %v6956
        %7876 = vmatpush1.bf16.msra.mxu0 %v6955
        %7877 = vmatprep.subr.bf16.mxu0 %v6960
        %7878 = vmatpush1.bf16.msra.mxu0 %v6959
        %7879 = vmatprep.subr.bf16.mxu0 %v6964
        %7880 = vmatpush1.bf16.msra.mxu0 %v6963
        %7881 = vmatprep.subr.bf16.mxu0 %v6968
        %7882 = vmatpush1.bf16.msra.mxu0 %v6967
        %7883 = vmatprep.subr.bf16.mxu0 %v6972
        %7884 = vmatpush1.bf16.msra.mxu0 %v6971
        %7885 = vmatprep.subr.bf16.mxu0 %v6976
        %7886 = vmatpush1.bf16.msra.mxu0 %v6975
        %7887 = vmatprep.subr.bf16.mxu0 %v6980
        %7888 = vmatpush1.bf16.msra.mxu0 %v6979
        %7889 = vmatprep.subr.bf16.mxu0 %v6984
        %7890 = vmatpush1.bf16.msra.mxu0 %v6983
        %7891 = vmatprep.subr.bf16.mxu0 %v6988
        %7892 = vmatpush1.bf16.msra.mxu0 %v6987
        %7893 = vmatprep.subr.bf16.mxu0 %v6992
        %7894 = vmatpush1.bf16.msra.mxu0 %v6991
        %7895 = vmatprep.mubr.bf16.mxu0 %v4583
        %7896 = vmatmul.mubr.bf16.gmra.mrb[0].mxu0 %v4582
        %v7897 = vpop.f32.mrb[0].mxu0
        %v7898 = vadd.f32 %v7857, %v7897
        %v7899 = vpop.f32.mrb[0].mxu0
        %v7900 = vadd.f32 %v7859, %v7899
        %v7901 = vpop.f32.mrb[0].mxu0
        %v7902 = vpop.f32.mrb[0].mxu0
        %7903 = vdwg.mxu0
        %7904 = vmatprep.subr.bf16.mxu0 %v6996
        %7905 = vmatpush1.bf16.msra.mxu0 %v6995
        %7906 = vmatprep.subr.bf16.mxu0 %v7000
        %7907 = vmatpush1.bf16.msra.mxu0 %v6999
        %7908 = vmatprep.subr.bf16.mxu0 %v7004
        %7909 = vmatpush1.bf16.msra.mxu0 %v7003
        %7910 = vmatprep.subr.bf16.mxu0 %v7008
        %7911 = vmatpush1.bf16.msra.mxu0 %v7007
        %7912 = vmatprep.subr.bf16.mxu0 %v7012
        %7913 = vmatpush1.bf16.msra.mxu0 %v7011
        %7914 = vmatprep.subr.bf16.mxu0 %v7016
        %7915 = vmatpush1.bf16.msra.mxu0 %v7015
        %7916 = vmatprep.subr.bf16.mxu0 %v7020
        %7917 = vmatpush1.bf16.msra.mxu0 %v7019
        %7918 = vmatprep.subr.bf16.mxu0 %v7024
        %7919 = vmatpush1.bf16.msra.mxu0 %v7023
        %7920 = vmatprep.subr.bf16.mxu0 %v7028
        %7921 = vmatpush1.bf16.msra.mxu0 %v7027
        %7922 = vmatprep.subr.bf16.mxu0 %v7032
        %7923 = vmatpush1.bf16.msra.mxu0 %v7031
        %7924 = vmatprep.subr.bf16.mxu0 %v7036
        %7925 = vmatpush1.bf16.msra.mxu0 %v7035
        %7926 = vmatprep.subr.bf16.mxu0 %v7040
        %7927 = vmatpush1.bf16.msra.mxu0 %v7039
        %7928 = vmatprep.subr.bf16.mxu0 %v7044
        %7929 = vmatpush1.bf16.msra.mxu0 %v7043
        %7930 = vmatprep.subr.bf16.mxu0 %v7048
        %7931 = vmatpush1.bf16.msra.mxu0 %v7047
        %7932 = vmatprep.subr.bf16.mxu0 %v7052
        %7933 = vmatpush1.bf16.msra.mxu0 %v7051
        %7934 = vmatprep.subr.bf16.mxu0 %v7056
        %7935 = vmatpush1.bf16.msra.mxu0 %v7055
        %7936 = vmatprep.mubr.bf16.mxu0 %v4585
        %7937 = vmatmul.mubr.bf16.gmra.mrb[0].mxu0 %v4584
        %v7938 = vpop.f32.mrb[0].mxu0
        %v7939 = vadd.f32 %v7898, %v7938
        %v7940 = vpop.f32.mrb[0].mxu0
        %v7941 = vadd.f32 %v7900, %v7940
        %v7942 = vpop.f32.mrb[0].mxu0
        %v7943 = vpop.f32.mrb[0].mxu0
        %7944 = vdwg.mxu0
        %7945 = vmatprep.subr.bf16.mxu0 %v7060
        %7946 = vmatpush1.bf16.msra.mxu0 %v7059
        %7947 = vmatprep.subr.bf16.mxu0 %v7064
        %7948 = vmatpush1.bf16.msra.mxu0 %v7063
        %7949 = vmatprep.subr.bf16.mxu0 %v7068
        %7950 = vmatpush1.bf16.msra.mxu0 %v7067
        %7951 = vmatprep.subr.bf16.mxu0 %v7072
        %7952 = vmatpush1.bf16.msra.mxu0 %v7071
        %7953 = vmatprep.subr.bf16.mxu0 %v7076
        %7954 = vmatpush1.bf16.msra.mxu0 %v7075
        %7955 = vmatprep.subr.bf16.mxu0 %v7080
        %7956 = vmatpush1.bf16.msra.mxu0 %v7079
        %7957 = vmatprep.subr.bf16.mxu0 %v7084
        %7958 = vmatpush1.bf16.msra.mxu0 %v7083
        %7959 = vmatprep.subr.bf16.mxu0 %v7088
        %7960 = vmatpush1.bf16.msra.mxu0 %v7087
        %7961 = vmatprep.subr.bf16.mxu0 %v7092
        %7962 = vmatpush1.bf16.msra.mxu0 %v7091
        %7963 = vmatprep.subr.bf16.mxu0 %v7096
        %7964 = vmatpush1.bf16.msra.mxu0 %v7095
        %7965 = vmatprep.subr.bf16.mxu0 %v7100
        %7966 = vmatpush1.bf16.msra.mxu0 %v7099
        %7967 = vmatprep.subr.bf16.mxu0 %v7104
        %7968 = vmatpush1.bf16.msra.mxu0 %v7103
        %7969 = vmatprep.subr.bf16.mxu0 %v7108
        %7970 = vmatpush1.bf16.msra.mxu0 %v7107
        %7971 = vmatprep.subr.bf16.mxu0 %v7112
        %7972 = vmatpush1.bf16.msra.mxu0 %v7111
        %7973 = vmatprep.subr.bf16.mxu0 %v7116
        %7974 = vmatpush1.bf16.msra.mxu0 %v7115
        %7975 = vmatprep.subr.bf16.mxu0 %v7120
        %7976 = vmatpush1.bf16.msra.mxu0 %v7119
        %7977 = vmatprep.mubr.bf16.mxu0 %v4595
        %7978 = vmatmul.mubr.bf16.gmra.mrb[0].mxu0 %v4592
        %v7979 = vpop.f32.mrb[0].mxu0
        %v7980 = vadd.f32 %v7939, %v7979
        %v7981 = vpop.f32.mrb[0].mxu0
        %v7982 = vadd.f32 %v7941, %v7981
        %v7983 = vpop.f32.mrb[0].mxu0
        %v7984 = vpop.f32.mrb[0].mxu0
        %7985 = vdwg.mxu0
        %7986 = vmatprep.subr.bf16.mxu0 %v7124
        %7987 = vmatpush1.bf16.msra.mxu0 %v7123
        %7988 = vmatprep.subr.bf16.mxu0 %v7128
        %7989 = vmatpush1.bf16.msra.mxu0 %v7127
        %7990 = vmatprep.subr.bf16.mxu0 %v7132
        %7991 = vmatpush1.bf16.msra.mxu0 %v7131
        %7992 = vmatprep.subr.bf16.mxu0 %v7136
        %7993 = vmatpush1.bf16.msra.mxu0 %v7135
        %7994 = vmatprep.subr.bf16.mxu0 %v7140
        %7995 = vmatpush1.bf16.msra.mxu0 %v7139
        %7996 = vmatprep.subr.bf16.mxu0 %v7144
        %7997 = vmatpush1.bf16.msra.mxu0 %v7143
        %7998 = vmatprep.subr.bf16.mxu0 %v7148
        %7999 = vmatpush1.bf16.msra.mxu0 %v7147
        %8000 = vmatprep.subr.bf16.mxu0 %v7152
        %8001 = vmatpush1.bf16.msra.mxu0 %v7151
        %8002 = vmatprep.subr.bf16.mxu0 %v7156
        %8003 = vmatpush1.bf16.msra.mxu0 %v7155
        %8004 = vmatprep.subr.bf16.mxu0 %v7160
        %8005 = vmatpush1.bf16.msra.mxu0 %v7159
        %8006 = vmatprep.subr.bf16.mxu0 %v7164
        %8007 = vmatpush1.bf16.msra.mxu0 %v7163
        %8008 = vmatprep.subr.bf16.mxu0 %v7168
        %8009 = vmatpush1.bf16.msra.mxu0 %v7167
        %8010 = vmatprep.subr.bf16.mxu0 %v7172
        %8011 = vmatpush1.bf16.msra.mxu0 %v7171
        %8012 = vmatprep.subr.bf16.mxu0 %v7176
        %8013 = vmatpush1.bf16.msra.mxu0 %v7175
        %8014 = vmatprep.subr.bf16.mxu0 %v7180
        %8015 = vmatpush1.bf16.msra.mxu0 %v7179
        %8016 = vmatprep.subr.bf16.mxu0 %v7184
        %8017 = vmatpush1.bf16.msra.mxu0 %v7183
        %8018 = vmatprep.mubr.bf16.mxu0 %v4601
        %8019 = vmatmul.mubr.bf16.gmra.mrb[0].mxu0 %v4598
        %v8020 = vpop.f32.mrb[0].mxu0
        %v8021 = vadd.f32 %v7980, %v8020
        %v8022 = vpop.f32.mrb[0].mxu0
        %v8023 = vadd.f32 %v7982, %v8022
        %v8024 = vpop.f32.mrb[0].mxu0
        %v8025 = vpop.f32.mrb[0].mxu0
        %8026 = vdwg.mxu0
        %8027 = vmatprep.subr.bf16.mxu0 %v6678
        %8028 = vmatpush1.bf16.msra.mxu0 %v6677
        %8029 = vmatprep.subr.bf16.mxu0 %v6682
        %8030 = vmatpush1.bf16.msra.mxu0 %v6681
        %8031 = vmatprep.subr.bf16.mxu0 %v6686
        %8032 = vmatpush1.bf16.msra.mxu0 %v6685
        %8033 = vmatprep.subr.bf16.mxu0 %v6690
        %8034 = vmatpush1.bf16.msra.mxu0 %v6689
        %8035 = vmatprep.subr.bf16.mxu0 %v6694
        %8036 = vmatpush1.bf16.msra.mxu0 %v6693
        %8037 = vmatprep.subr.bf16.mxu0 %v6698
        %8038 = vmatpush1.bf16.msra.mxu0 %v6697
        %8039 = vmatprep.subr.bf16.mxu0 %v6702
        %8040 = vmatpush1.bf16.msra.mxu0 %v6701
        %8041 = vmatprep.subr.bf16.mxu0 %v6706
        %8042 = vmatpush1.bf16.msra.mxu0 %v6705
        %8043 = vmatprep.subr.bf16.mxu0 %v6710
        %8044 = vmatpush1.bf16.msra.mxu0 %v6709
        %8045 = vmatprep.subr.bf16.mxu0 %v6714
        %8046 = vmatpush1.bf16.msra.mxu0 %v6713
        %8047 = vmatprep.subr.bf16.mxu0 %v6718
        %8048 = vmatpush1.bf16.msra.mxu0 %v6717
        %8049 = vmatprep.subr.bf16.mxu0 %v6722
        %8050 = vmatpush1.bf16.msra.mxu0 %v6721
        %8051 = vmatprep.subr.bf16.mxu0 %v6726
        %8052 = vmatpush1.bf16.msra.mxu0 %v6725
        %8053 = vmatprep.subr.bf16.mxu0 %v6730
        %8054 = vmatpush1.bf16.msra.mxu0 %v6729
        %8055 = vmatprep.subr.bf16.mxu0 %v6734
        %8056 = vmatpush1.bf16.msra.mxu0 %v6733
        %8057 = vmatprep.subr.bf16.mxu0 %v6738
        %8058 = vmatpush1.bf16.msra.mxu0 %v6737
        %8059 = vmatprep.mubr.bf16.mxu0 %v4541
        %8060 = vmatmul.mubr.bf16.gmra.mrb[0].mxu0 %v4540
        %v8061 = vpop.f32.mrb[0].mxu0
        %v8062 = vadd.f32 %v5130, %v8061
        %v8063 = vpop.f32.mrb[0].mxu0
        %v8064 = vadd.f32 %v5134, %v8063
        %v8065 = vpop.f32.mrb[0].mxu0
        %v8066 = vpop.f32.mrb[0].mxu0
        %8067 = vdwg.mxu0
        %8068 = vmatprep.subr.bf16.mxu0 %v6742
        %8069 = vmatpush1.bf16.msra.mxu0 %v6741
        %8070 = vmatprep.subr.bf16.mxu0 %v6746
        %8071 = vmatpush1.bf16.msra.mxu0 %v6745
        %8072 = vmatprep.subr.bf16.mxu0 %v6750
        %8073 = vmatpush1.bf16.msra.mxu0 %v6749
        %8074 = vmatprep.subr.bf16.mxu0 %v6754
        %8075 = vmatpush1.bf16.msra.mxu0 %v6753
        %8076 = vmatprep.subr.bf16.mxu0 %v6758
        %8077 = vmatpush1.bf16.msra.mxu0 %v6757
        %8078 = vmatprep.subr.bf16.mxu0 %v6762
        %8079 = vmatpush1.bf16.msra.mxu0 %v6761
        %8080 = vmatprep.subr.bf16.mxu0 %v6766
        %8081 = vmatpush1.bf16.msra.mxu0 %v6765
        %8082 = vmatprep.subr.bf16.mxu0 %v6770
        %8083 = vmatpush1.bf16.msra.mxu0 %v6769
        %8084 = vmatprep.subr.bf16.mxu0 %v6774
        %8085 = vmatpush1.bf16.msra.mxu0 %v6773
        %8086 = vmatprep.subr.bf16.mxu0 %v6778
        %8087 = vmatpush1.bf16.msra.mxu0 %v6777
        %8088 = vmatprep.subr.bf16.mxu0 %v6782
        %8089 = vmatpush1.bf16.msra.mxu0 %v6781
        %8090 = vmatprep.subr.bf16.mxu0 %v6786
        %8091 = vmatpush1.bf16.msra.mxu0 %v6785
        %8092 = vmatprep.subr.bf16.mxu0 %v6790
        %8093 = vmatpush1.bf16.msra.mxu0 %v6789
        %8094 = vmatprep.subr.bf16.mxu0 %v6794
        %8095 = vmatpush1.bf16.msra.mxu0 %v6793
        %8096 = vmatprep.subr.bf16.mxu0 %v6798
        %8097 = vmatpush1.bf16.msra.mxu0 %v6797
        %8098 = vmatprep.subr.bf16.mxu0 %v6802
        %8099 = vmatpush1.bf16.msra.mxu0 %v6801
        %8100 = vmatprep.mubr.bf16.mxu0 %v4543
        %8101 = vmatmul.mubr.bf16.gmra.mrb[0].mxu0 %v4542
        %v8102 = vpop.f32.mrb[0].mxu0
        %v8103 = vadd.f32 %v8062, %v8102
        %v8104 = vpop.f32.mrb[0].mxu0
        %v8105 = vadd.f32 %v8064, %v8104
        %v8106 = vpop.f32.mrb[0].mxu0
        %v8107 = vpop.f32.mrb[0].mxu0
        %8108 = vdwg.mxu0
        %8109 = vmatprep.subr.bf16.mxu0 %v6806
        %8110 = vmatpush1.bf16.msra.mxu0 %v6805
        %8111 = vmatprep.subr.bf16.mxu0 %v6810
        %8112 = vmatpush1.bf16.msra.mxu0 %v6809
        %8113 = vmatprep.subr.bf16.mxu0 %v6814
        %8114 = vmatpush1.bf16.msra.mxu0 %v6813
        %8115 = vmatprep.subr.bf16.mxu0 %v6818
        %8116 = vmatpush1.bf16.msra.mxu0 %v6817
        %8117 = vmatprep.subr.bf16.mxu0 %v6822
        %8118 = vmatpush1.bf16.msra.mxu0 %v6821
        %8119 = vmatprep.subr.bf16.mxu0 %v6826
        %8120 = vmatpush1.bf16.msra.mxu0 %v6825
        %8121 = vmatprep.subr.bf16.mxu0 %v6830
        %8122 = vmatpush1.bf16.msra.mxu0 %v6829
        %8123 = vmatprep.subr.bf16.mxu0 %v6834
        %8124 = vmatpush1.bf16.msra.mxu0 %v6833
        %8125 = vmatprep.subr.bf16.mxu0 %v6838
        %8126 = vmatpush1.bf16.msra.mxu0 %v6837
        %8127 = vmatprep.subr.bf16.mxu0 %v6842
        %8128 = vmatpush1.bf16.msra.mxu0 %v6841
        %8129 = vmatprep.subr.bf16.mxu0 %v6846
        %8130 = vmatpush1.bf16.msra.mxu0 %v6845
        %8131 = vmatprep.subr.bf16.mxu0 %v6850
        %8132 = vmatpush1.bf16.msra.mxu0 %v6849
        %8133 = vmatprep.subr.bf16.mxu0 %v6854
        %8134 = vmatpush1.bf16.msra.mxu0 %v6853
        %8135 = vmatprep.subr.bf16.mxu0 %v6858
        %8136 = vmatpush1.bf16.msra.mxu0 %v6857
        %8137 = vmatprep.subr.bf16.mxu0 %v6862
        %8138 = vmatpush1.bf16.msra.mxu0 %v6861
        %8139 = vmatprep.subr.bf16.mxu0 %v6866
        %8140 = vmatpush1.bf16.msra.mxu0 %v6865
        %8141 = vmatprep.mubr.bf16.mxu0 %v4559
        %8142 = vmatmul.mubr.bf16.gmra.mrb[0].mxu0 %v4552
        %v8143 = vpop.f32.mrb[0].mxu0
        %v8144 = vadd.f32 %v8103, %v8143
        %v8145 = vpop.f32.mrb[0].mxu0
        %v8146 = vadd.f32 %v8105, %v8145
        %v8147 = vpop.f32.mrb[0].mxu0
        %v8148 = vpop.f32.mrb[0].mxu0
        %8149 = vdwg.mxu0
        %8150 = vmatprep.subr.bf16.mxu0 %v6870
        %8151 = vmatpush1.bf16.msra.mxu0 %v6869
        %8152 = vmatprep.subr.bf16.mxu0 %v6874
        %8153 = vmatpush1.bf16.msra.mxu0 %v6873
        %8154 = vmatprep.subr.bf16.mxu0 %v6878
        %8155 = vmatpush1.bf16.msra.mxu0 %v6877
        %8156 = vmatprep.subr.bf16.mxu0 %v6882
        %8157 = vmatpush1.bf16.msra.mxu0 %v6881
        %8158 = vmatprep.subr.bf16.mxu0 %v6886
        %8159 = vmatpush1.bf16.msra.mxu0 %v6885
        %8160 = vmatprep.subr.bf16.mxu0 %v6890
        %8161 = vmatpush1.bf16.msra.mxu0 %v6889
        %8162 = vmatprep.subr.bf16.mxu0 %v6894
        %8163 = vmatpush1.bf16.msra.mxu0 %v6893
        %8164 = vmatprep.subr.bf16.mxu0 %v6898
        %8165 = vmatpush1.bf16.msra.mxu0 %v6897
        %8166 = vmatprep.subr.bf16.mxu0 %v6902
        %8167 = vmatpush1.bf16.msra.mxu0 %v6901
        %8168 = vmatprep.subr.bf16.mxu0 %v6906
        %8169 = vmatpush1.bf16.msra.mxu0 %v6905
        %8170 = vmatprep.subr.bf16.mxu0 %v6910
        %8171 = vmatpush1.bf16.msra.mxu0 %v6909
        %8172 = vmatprep.subr.bf16.mxu0 %v6914
        %8173 = vmatpush1.bf16.msra.mxu0 %v6913
        %8174 = vmatprep.subr.bf16.mxu0 %v6918
        %8175 = vmatpush1.bf16.msra.mxu0 %v6917
        %8176 = vmatprep.subr.bf16.mxu0 %v6922
        %8177 = vmatpush1.bf16.msra.mxu0 %v6921
        %8178 = vmatprep.subr.bf16.mxu0 %v6926
        %8179 = vmatpush1.bf16.msra.mxu0 %v6925
        %8180 = vmatprep.subr.bf16.mxu0 %v6930
        %8181 = vmatpush1.bf16.msra.mxu0 %v6929
        %8182 = vmatprep.mubr.bf16.mxu0 %v4573
        %8183 = vmatmul.mubr.bf16.gmra.mrb[0].mxu0 %v4566
        %v8184 = vpop.f32.mrb[0].mxu0
        %v8185 = vadd.f32 %v8144, %v8184
        %v8186 = vpop.f32.mrb[0].mxu0
        %v8187 = vadd.f32 %v8146, %v8186
        %v8188 = vpop.f32.mrb[0].mxu0
        %v8189 = vpop.f32.mrb[0].mxu0
        %8190 = vdwg.mxu0
        %8191 = vmatprep.subr.bf16.mxu0 %v6934
        %8192 = vmatpush1.bf16.msra.mxu0 %v6933
        %8193 = vmatprep.subr.bf16.mxu0 %v6938
        %8194 = vmatpush1.bf16.msra.mxu0 %v6937
        %8195 = vmatprep.subr.bf16.mxu0 %v6942
        %8196 = vmatpush1.bf16.msra.mxu0 %v6941
        %8197 = vmatprep.subr.bf16.mxu0 %v6946
        %8198 = vmatpush1.bf16.msra.mxu0 %v6945
        %8199 = vmatprep.subr.bf16.mxu0 %v6950
        %8200 = vmatpush1.bf16.msra.mxu0 %v6949
        %8201 = vmatprep.subr.bf16.mxu0 %v6954
        %8202 = vmatpush1.bf16.msra.mxu0 %v6953
        %8203 = vmatprep.subr.bf16.mxu0 %v6958
        %8204 = vmatpush1.bf16.msra.mxu0 %v6957
        %8205 = vmatprep.subr.bf16.mxu0 %v6962
        %8206 = vmatpush1.bf16.msra.mxu0 %v6961
        %8207 = vmatprep.subr.bf16.mxu0 %v6966
        %8208 = vmatpush1.bf16.msra.mxu0 %v6965
        %8209 = vmatprep.subr.bf16.mxu0 %v6970
        %8210 = vmatpush1.bf16.msra.mxu0 %v6969
        %8211 = vmatprep.subr.bf16.mxu0 %v6974
        %8212 = vmatpush1.bf16.msra.mxu0 %v6973
        %8213 = vmatprep.subr.bf16.mxu0 %v6978
        %8214 = vmatpush1.bf16.msra.mxu0 %v6977
        %8215 = vmatprep.subr.bf16.mxu0 %v6982
        %8216 = vmatpush1.bf16.msra.mxu0 %v6981
        %8217 = vmatprep.subr.bf16.mxu0 %v6986
        %8218 = vmatpush1.bf16.msra.mxu0 %v6985
        %8219 = vmatprep.subr.bf16.mxu0 %v6990
        %8220 = vmatpush1.bf16.msra.mxu0 %v6989
        %8221 = vmatprep.subr.bf16.mxu0 %v6994
        %8222 = vmatpush1.bf16.msra.mxu0 %v6993
        %8223 = vmatprep.mubr.bf16.mxu0 %v4583
        %8224 = vmatmul.mubr.bf16.gmra.mrb[0].mxu0 %v4582
        %v8225 = vpop.f32.mrb[0].mxu0
        %v8226 = vadd.f32 %v8185, %v8225
        %v8227 = vpop.f32.mrb[0].mxu0
        %v8228 = vadd.f32 %v8187, %v8227
        %v8229 = vpop.f32.mrb[0].mxu0
        %v8230 = vpop.f32.mrb[0].mxu0
        %8231 = vdwg.mxu0
        %8232 = vmatprep.subr.bf16.mxu0 %v6998
        %8233 = vmatpush1.bf16.msra.mxu0 %v6997
        %8234 = vmatprep.subr.bf16.mxu0 %v7002
        %8235 = vmatpush1.bf16.msra.mxu0 %v7001
        %8236 = vmatprep.subr.bf16.mxu0 %v7006
        %8237 = vmatpush1.bf16.msra.mxu0 %v7005
        %8238 = vmatprep.subr.bf16.mxu0 %v7010
        %8239 = vmatpush1.bf16.msra.mxu0 %v7009
        %8240 = vmatprep.subr.bf16.mxu0 %v7014
        %8241 = vmatpush1.bf16.msra.mxu0 %v7013
        %8242 = vmatprep.subr.bf16.mxu0 %v7018
        %8243 = vmatpush1.bf16.msra.mxu0 %v7017
        %8244 = vmatprep.subr.bf16.mxu0 %v7022
        %8245 = vmatpush1.bf16.msra.mxu0 %v7021
        %8246 = vmatprep.subr.bf16.mxu0 %v7026
        %8247 = vmatpush1.bf16.msra.mxu0 %v7025
        %8248 = vmatprep.subr.bf16.mxu0 %v7030
        %8249 = vmatpush1.bf16.msra.mxu0 %v7029
        %8250 = vmatprep.subr.bf16.mxu0 %v7034
        %8251 = vmatpush1.bf16.msra.mxu0 %v7033
        %8252 = vmatprep.subr.bf16.mxu0 %v7038
        %8253 = vmatpush1.bf16.msra.mxu0 %v7037
        %8254 = vmatprep.subr.bf16.mxu0 %v7042
        %8255 = vmatpush1.bf16.msra.mxu0 %v7041
        %8256 = vmatprep.subr.bf16.mxu0 %v7046
        %8257 = vmatpush1.bf16.msra.mxu0 %v7045
        %8258 = vmatprep.subr.bf16.mxu0 %v7050
        %8259 = vmatpush1.bf16.msra.mxu0 %v7049
        %8260 = vmatprep.subr.bf16.mxu0 %v7054
        %8261 = vmatpush1.bf16.msra.mxu0 %v7053
        %8262 = vmatprep.subr.bf16.mxu0 %v7058
        %8263 = vmatpush1.bf16.msra.mxu0 %v7057
        %8264 = vmatprep.mubr.bf16.mxu0 %v4585
        %8265 = vmatmul.mubr.bf16.gmra.mrb[0].mxu0 %v4584
        %v8266 = vpop.f32.mrb[0].mxu0
        %v8267 = vadd.f32 %v8226, %v8266
        %v8268 = vpop.f32.mrb[0].mxu0
        %v8269 = vadd.f32 %v8228, %v8268
        %v8270 = vpop.f32.mrb[0].mxu0
        %v8271 = vpop.f32.mrb[0].mxu0
        %8272 = vdwg.mxu0
        %8273 = vmatprep.subr.bf16.mxu0 %v7062
        %8274 = vmatpush1.bf16.msra.mxu0 %v7061
        %8275 = vmatprep.subr.bf16.mxu0 %v7066
        %8276 = vmatpush1.bf16.msra.mxu0 %v7065
        %8277 = vmatprep.subr.bf16.mxu0 %v7070
        %8278 = vmatpush1.bf16.msra.mxu0 %v7069
        %8279 = vmatprep.subr.bf16.mxu0 %v7074
        %8280 = vmatpush1.bf16.msra.mxu0 %v7073
        %8281 = vmatprep.subr.bf16.mxu0 %v7078
        %8282 = vmatpush1.bf16.msra.mxu0 %v7077
        %8283 = vmatprep.subr.bf16.mxu0 %v7082
        %8284 = vmatpush1.bf16.msra.mxu0 %v7081
        %8285 = vmatprep.subr.bf16.mxu0 %v7086
        %8286 = vmatpush1.bf16.msra.mxu0 %v7085
        %8287 = vmatprep.subr.bf16.mxu0 %v7090
        %8288 = vmatpush1.bf16.msra.mxu0 %v7089
        %8289 = vmatprep.subr.bf16.mxu0 %v7094
        %8290 = vmatpush1.bf16.msra.mxu0 %v7093
        %8291 = vmatprep.subr.bf16.mxu0 %v7098
        %8292 = vmatpush1.bf16.msra.mxu0 %v7097
        %8293 = vmatprep.subr.bf16.mxu0 %v7102
        %8294 = vmatpush1.bf16.msra.mxu0 %v7101
        %8295 = vmatprep.subr.bf16.mxu0 %v7106
        %8296 = vmatpush1.bf16.msra.mxu0 %v7105
        %8297 = vmatprep.subr.bf16.mxu0 %v7110
        %8298 = vmatpush1.bf16.msra.mxu0 %v7109
        %8299 = vmatprep.subr.bf16.mxu0 %v7114
        %8300 = vmatpush1.bf16.msra.mxu0 %v7113
        %8301 = vmatprep.subr.bf16.mxu0 %v7118
        %8302 = vmatpush1.bf16.msra.mxu0 %v7117
        %8303 = vmatprep.subr.bf16.mxu0 %v7122
        %8304 = vmatpush1.bf16.msra.mxu0 %v7121
        %8305 = vmatprep.mubr.bf16.mxu0 %v4595
        %8306 = vmatmul.mubr.bf16.gmra.mrb[0].mxu0 %v4592
        %v8307 = vpop.f32.mrb[0].mxu0
        %v8308 = vadd.f32 %v8267, %v8307
        %v8309 = vpop.f32.mrb[0].mxu0
        %v8310 = vadd.f32 %v8269, %v8309
        %v8311 = vpop.f32.mrb[0].mxu0
        %v8312 = vpop.f32.mrb[0].mxu0
        %8313 = vdwg.mxu0
        %8314 = vmatprep.subr.bf16.mxu0 %v7126
        %8315 = vmatpush1.bf16.msra.mxu0 %v7125
        %8316 = vmatprep.subr.bf16.mxu0 %v7130
        %8317 = vmatpush1.bf16.msra.mxu0 %v7129
        %8318 = vmatprep.subr.bf16.mxu0 %v7134
        %8319 = vmatpush1.bf16.msra.mxu0 %v7133
        %8320 = vmatprep.subr.bf16.mxu0 %v7138
        %8321 = vmatpush1.bf16.msra.mxu0 %v7137
        %8322 = vmatprep.subr.bf16.mxu0 %v7142
        %8323 = vmatpush1.bf16.msra.mxu0 %v7141
        %8324 = vmatprep.subr.bf16.mxu0 %v7146
        %8325 = vmatpush1.bf16.msra.mxu0 %v7145
        %8326 = vmatprep.subr.bf16.mxu0 %v7150
        %8327 = vmatpush1.bf16.msra.mxu0 %v7149
        %8328 = vmatprep.subr.bf16.mxu0 %v7154
        %8329 = vmatpush1.bf16.msra.mxu0 %v7153
        %8330 = vmatprep.subr.bf16.mxu0 %v7158
        %8331 = vmatpush1.bf16.msra.mxu0 %v7157
        %8332 = vmatprep.subr.bf16.mxu0 %v7162
        %8333 = vmatpush1.bf16.msra.mxu0 %v7161
        %8334 = vmatprep.subr.bf16.mxu0 %v7166
        %8335 = vmatpush1.bf16.msra.mxu0 %v7165
        %8336 = vmatprep.subr.bf16.mxu0 %v7170
        %8337 = vmatpush1.bf16.msra.mxu0 %v7169
        %8338 = vmatprep.subr.bf16.mxu0 %v7174
        %8339 = vmatpush1.bf16.msra.mxu0 %v7173
        %8340 = vmatprep.subr.bf16.mxu0 %v7178
        %8341 = vmatpush1.bf16.msra.mxu0 %v7177
        %8342 = vmatprep.subr.bf16.mxu0 %v7182
        %8343 = vmatpush1.bf16.msra.mxu0 %v7181
        %8344 = vmatprep.subr.bf16.mxu0 %v7186
        %8345 = vmatpush1.bf16.msra.mxu0 %v7185
        %8346 = vmatprep.mubr.bf16.mxu0 %v4601
        %8347 = vmatmul.mubr.bf16.gmra.mrb[0].mxu0 %v4598
        %v8348 = vpop.f32.mrb[0].mxu0
        %v8349 = vadd.f32 %v8308, %v8348
        %v8350 = vpop.f32.mrb[0].mxu0
        %v8351 = vadd.f32 %v8310, %v8350
        %v8352 = vpop.f32.mrb[0].mxu0
        %v8353 = vpop.f32.mrb[0].mxu0
        %8354 = vdwg.mxu0
        %v8355 = vmax.f32 %v8021, 0.0
        %v8356 = vmax.f32 %v8023, 0.0
        %v8357 = vmax.f32 %v8349, 0.0
        %v8358 = vmax.f32 %v8351, 0.0
        %v8359 = vpack.c.bf16 %v8355, %v8355
        %v8360 = vpack.c.bf16 %v8356, %v8356
        %v8361 = vpack.c.bf16 %v8357, %v8357
        %v8362 = vpack.c.bf16 %v8358, %v8358
        %s8363 = scalar_lea.vmem [#allocation14], 3
        %v8364 = vld [vmem:[%s8363] ss:$8 sm:$0xf]
        %v8365 = vld [vmem:[#allocation8] sm:$0xff]
        %v8366 = vld [vmem:[#allocation8 + $0x8] sm:$0xff]
        %v8367 = vld [vmem:[#allocation8 + $0x10] sm:$0xff]
        %v8368 = vld [vmem:[#allocation8 + $0x18] sm:$0xff]
        %v8369 = vld [vmem:[#allocation8 + $0x20] sm:$0xff]
        %v8370 = vld [vmem:[#allocation8 + $0x28] sm:$0xff]
        %v8371 = vld [vmem:[#allocation8 + $0x30] sm:$0xff]
        %v8372 = vld [vmem:[#allocation8 + $0x38] sm:$0xff]
        %v8373 = vld [vmem:[#allocation8 + $0x40] sm:$0xff]
        %v8374 = vld [vmem:[#allocation8 + $0x48] sm:$0xff]
        %v8375 = vld [vmem:[#allocation8 + $0x50] sm:$0xff]
        %v8376 = vld [vmem:[#allocation8 + $0x58] sm:$0xff]
        %v8377 = vld [vmem:[#allocation8 + $0x60] sm:$0xff]
        %v8378 = vld [vmem:[#allocation8 + $0x68] sm:$0xff]
        %v8379 = vld [vmem:[#allocation8 + $0x70] sm:$0xff]
        %v8380 = vld [vmem:[#allocation8 + $0x78] sm:$0xff]
        %v8381 = vld [vmem:[#allocation8 + $0x80] sm:$0xff]
        %v8382 = vld [vmem:[#allocation8 + $0x88] sm:$0xff]
        %v8383 = vld [vmem:[#allocation8 + $0x90] sm:$0xff]
        %v8384 = vld [vmem:[#allocation8 + $0x98] sm:$0xff]
        %v8385 = vld [vmem:[#allocation8 + $0xa0] sm:$0xff]
        %v8386 = vld [vmem:[#allocation8 + $0xa8] sm:$0xff]
        %v8387 = vld [vmem:[#allocation8 + $0xb0] sm:$0xff]
        %v8388 = vld [vmem:[#allocation8 + $0xb8] sm:$0xff]
        %v8389 = vld [vmem:[#allocation8 + $0xc0] sm:$0xff]
        %v8390 = vld [vmem:[#allocation8 + $0xc8] sm:$0xff]
        %v8391 = vld [vmem:[#allocation8 + $0xd0] sm:$0xff]
        %v8392 = vld [vmem:[#allocation8 + $0xd8] sm:$0xff]
        %v8393 = vld [vmem:[#allocation8 + $0xe0] sm:$0xff]
        %v8394 = vld [vmem:[#allocation8 + $0xe8] sm:$0xff]
        %v8395 = vld [vmem:[#allocation8 + $0xf0] sm:$0xff]
        %v8396 = vld [vmem:[#allocation8 + $0xf8] sm:$0xff]
        %v8397 = vld [vmem:[#allocation8 + $0x100] sm:$0xff]
        %v8398 = vld [vmem:[#allocation8 + $0x108] sm:$0xff]
        %v8399 = vld [vmem:[#allocation8 + $0x110] sm:$0xff]
        %v8400 = vld [vmem:[#allocation8 + $0x118] sm:$0xff]
        %v8401 = vld [vmem:[#allocation8 + $0x120] sm:$0xff]
        %v8402 = vld [vmem:[#allocation8 + $0x128] sm:$0xff]
        %v8403 = vld [vmem:[#allocation8 + $0x130] sm:$0xff]
        %v8404 = vld [vmem:[#allocation8 + $0x138] sm:$0xff]
        %v8405 = vld [vmem:[#allocation8 + $0x140] sm:$0xff]
        %v8406 = vld [vmem:[#allocation8 + $0x148] sm:$0xff]
        %v8407 = vld [vmem:[#allocation8 + $0x150] sm:$0xff]
        %v8408 = vld [vmem:[#allocation8 + $0x158] sm:$0xff]
        %v8409 = vld [vmem:[#allocation8 + $0x160] sm:$0xff]
        %v8410 = vld [vmem:[#allocation8 + $0x168] sm:$0xff]
        %v8411 = vld [vmem:[#allocation8 + $0x170] sm:$0xff]
        %v8412 = vld [vmem:[#allocation8 + $0x178] sm:$0xff]
        %v8413 = vld [vmem:[#allocation8 + $0x180] sm:$0xff]
        %v8414 = vld [vmem:[#allocation8 + $0x188] sm:$0xff]
        %v8415 = vld [vmem:[#allocation8 + $0x190] sm:$0xff]
        %v8416 = vld [vmem:[#allocation8 + $0x198] sm:$0xff]
        %v8417 = vld [vmem:[#allocation8 + $0x1a0] sm:$0xff]
        %v8418 = vld [vmem:[#allocation8 + $0x1a8] sm:$0xff]
        %v8419 = vld [vmem:[#allocation8 + $0x1b0] sm:$0xff]
        %v8420 = vld [vmem:[#allocation8 + $0x1b8] sm:$0xff]
        %v8421 = vld [vmem:[#allocation8 + $0x1c0] sm:$0xff]
        %v8422 = vld [vmem:[#allocation8 + $0x1c8] sm:$0xff]
        %v8423 = vld [vmem:[#allocation8 + $0x1d0] sm:$0xff]
        %v8424 = vld [vmem:[#allocation8 + $0x1d8] sm:$0xff]
        %v8425 = vld [vmem:[#allocation8 + $0x1e0] sm:$0xff]
        %v8426 = vld [vmem:[#allocation8 + $0x1e8] sm:$0xff]
        %v8427 = vld [vmem:[#allocation8 + $0x1f0] sm:$0xff]
        %v8428 = vld [vmem:[#allocation8 + $0x1f8] sm:$0xff]
        %v8429 = vld [vmem:[#allocation8 + $0x200] sm:$0xff]
        %v8430 = vld [vmem:[#allocation8 + $0x208] sm:$0xff]
        %v8431 = vld [vmem:[#allocation8 + $0x210] sm:$0xff]
        %v8432 = vld [vmem:[#allocation8 + $0x218] sm:$0xff]
        %v8433 = vld [vmem:[#allocation8 + $0x220] sm:$0xff]
        %v8434 = vld [vmem:[#allocation8 + $0x228] sm:$0xff]
        %v8435 = vld [vmem:[#allocation8 + $0x230] sm:$0xff]
        %v8436 = vld [vmem:[#allocation8 + $0x238] sm:$0xff]
        %v8437 = vld [vmem:[#allocation8 + $0x240] sm:$0xff]
        %v8438 = vld [vmem:[#allocation8 + $0x248] sm:$0xff]
        %v8439 = vld [vmem:[#allocation8 + $0x250] sm:$0xff]
        %v8440 = vld [vmem:[#allocation8 + $0x258] sm:$0xff]
        %v8441 = vld [vmem:[#allocation8 + $0x260] sm:$0xff]
        %v8442 = vld [vmem:[#allocation8 + $0x268] sm:$0xff]
        %v8443 = vld [vmem:[#allocation8 + $0x270] sm:$0xff]
        %v8444 = vld [vmem:[#allocation8 + $0x278] sm:$0xff]
        %v8445 = vld [vmem:[#allocation8 + $0x280] sm:$0xff]
        %v8446 = vld [vmem:[#allocation8 + $0x288] sm:$0xff]
        %v8447 = vld [vmem:[#allocation8 + $0x290] sm:$0xff]
        %v8448 = vld [vmem:[#allocation8 + $0x298] sm:$0xff]
        %v8449 = vld [vmem:[#allocation8 + $0x2a0] sm:$0xff]
        %v8450 = vld [vmem:[#allocation8 + $0x2a8] sm:$0xff]
        %v8451 = vld [vmem:[#allocation8 + $0x2b0] sm:$0xff]
        %v8452 = vld [vmem:[#allocation8 + $0x2b8] sm:$0xff]
        %v8453 = vld [vmem:[#allocation8 + $0x2c0] sm:$0xff]
        %v8454 = vld [vmem:[#allocation8 + $0x2c8] sm:$0xff]
        %v8455 = vld [vmem:[#allocation8 + $0x2d0] sm:$0xff]
        %v8456 = vld [vmem:[#allocation8 + $0x2d8] sm:$0xff]
        %v8457 = vld [vmem:[#allocation8 + $0x2e0] sm:$0xff]
        %v8458 = vld [vmem:[#allocation8 + $0x2e8] sm:$0xff]
        %v8459 = vld [vmem:[#allocation8 + $0x2f0] sm:$0xff]
        %v8460 = vld [vmem:[#allocation8 + $0x2f8] sm:$0xff]
        %v8461 = vld [vmem:[#allocation8 + $0x300] sm:$0xff]
        %v8462 = vld [vmem:[#allocation8 + $0x308] sm:$0xff]
        %v8463 = vld [vmem:[#allocation8 + $0x310] sm:$0xff]
        %v8464 = vld [vmem:[#allocation8 + $0x318] sm:$0xff]
        %v8465 = vld [vmem:[#allocation8 + $0x320] sm:$0xff]
        %v8466 = vld [vmem:[#allocation8 + $0x328] sm:$0xff]
        %v8467 = vld [vmem:[#allocation8 + $0x330] sm:$0xff]
        %v8468 = vld [vmem:[#allocation8 + $0x338] sm:$0xff]
        %v8469 = vld [vmem:[#allocation8 + $0x340] sm:$0xff]
        %v8470 = vld [vmem:[#allocation8 + $0x348] sm:$0xff]
        %v8471 = vld [vmem:[#allocation8 + $0x350] sm:$0xff]
        %v8472 = vld [vmem:[#allocation8 + $0x358] sm:$0xff]
        %v8473 = vld [vmem:[#allocation8 + $0x360] sm:$0xff]
        %v8474 = vld [vmem:[#allocation8 + $0x368] sm:$0xff]
        %v8475 = vld [vmem:[#allocation8 + $0x370] sm:$0xff]
        %v8476 = vld [vmem:[#allocation8 + $0x378] sm:$0xff]
        %v8477 = vld [vmem:[#allocation8 + $0x380] sm:$0xff]
        %v8478 = vld [vmem:[#allocation8 + $0x388] sm:$0xff]
        %v8479 = vld [vmem:[#allocation8 + $0x390] sm:$0xff]
        %v8480 = vld [vmem:[#allocation8 + $0x398] sm:$0xff]
        %v8481 = vld [vmem:[#allocation8 + $0x3a0] sm:$0xff]
        %v8482 = vld [vmem:[#allocation8 + $0x3a8] sm:$0xff]
        %v8483 = vld [vmem:[#allocation8 + $0x3b0] sm:$0xff]
        %v8484 = vld [vmem:[#allocation8 + $0x3b8] sm:$0xff]
        %v8485 = vld [vmem:[#allocation8 + $0x3c0] sm:$0xff]
        %v8486 = vld [vmem:[#allocation8 + $0x3c8] sm:$0xff]
        %v8487 = vld [vmem:[#allocation8 + $0x3d0] sm:$0xff]
        %v8488 = vld [vmem:[#allocation8 + $0x3d8] sm:$0xff]
        %v8489 = vld [vmem:[#allocation8 + $0x3e0] sm:$0xff]
        %v8490 = vld [vmem:[#allocation8 + $0x3e8] sm:$0xff]
        %v8491 = vld [vmem:[#allocation8 + $0x3f0] sm:$0xff]
        %v8492 = vld [vmem:[#allocation8 + $0x3f8] sm:$0xff]
        %v8494 = vlaneseq
        %v8495 = vshrl.u32 %v8494, 7
        %v8496 = vsub.s32 0, %v8495
        %v8497 = vrot.slane %v8364, %v8496
        %v8498 = vlaneseq
        %v8499 = vshrl.u32 %v8498, 7
        %v8500 = vsub.s32 1, %v8499
        %v8501 = vrot.slane %v8364, %v8500
        %v8502 = vlaneseq
        %v8503 = vshrl.u32 %v8502, 7
        %v8504 = vsub.s32 2, %v8503
        %v8505 = vrot.slane %v8364, %v8504
        %v8506 = vlaneseq
        %v8507 = vshrl.u32 %v8506, 7
        %v8508 = vsub.s32 3, %v8507
        %v8509 = vrot.slane %v8364, %v8508
        %v8642 = vunpack.c.l.b16 %v8365
        %v8643 = vunpack.c.h.b16 %v8365
        %v8644 = vunpack.c.l.b16 %v8366
        %v8645 = vunpack.c.h.b16 %v8366
        %v8646 = vunpack.c.l.b16 %v8367
        %v8647 = vunpack.c.h.b16 %v8367
        %v8648 = vunpack.c.l.b16 %v8368
        %v8649 = vunpack.c.h.b16 %v8368
        %v8650 = vunpack.c.l.b16 %v8369
        %v8651 = vunpack.c.h.b16 %v8369
        %v8652 = vunpack.c.l.b16 %v8370
        %v8653 = vunpack.c.h.b16 %v8370
        %v8654 = vunpack.c.l.b16 %v8371
        %v8655 = vunpack.c.h.b16 %v8371
        %v8656 = vunpack.c.l.b16 %v8372
        %v8657 = vunpack.c.h.b16 %v8372
        %v8658 = vunpack.c.l.b16 %v8373
        %v8659 = vunpack.c.h.b16 %v8373
        %v8660 = vunpack.c.l.b16 %v8374
        %v8661 = vunpack.c.h.b16 %v8374
        %v8662 = vunpack.c.l.b16 %v8375
        %v8663 = vunpack.c.h.b16 %v8375
        %v8664 = vunpack.c.l.b16 %v8376
        %v8665 = vunpack.c.h.b16 %v8376
        %v8666 = vunpack.c.l.b16 %v8377
        %v8667 = vunpack.c.h.b16 %v8377
        %v8668 = vunpack.c.l.b16 %v8378
        %v8669 = vunpack.c.h.b16 %v8378
        %v8670 = vunpack.c.l.b16 %v8379
        %v8671 = vunpack.c.h.b16 %v8379
        %v8672 = vunpack.c.l.b16 %v8380
        %v8673 = vunpack.c.h.b16 %v8380
        %v8674 = vunpack.c.l.b16 %v8381
        %v8675 = vunpack.c.h.b16 %v8381
        %v8676 = vunpack.c.l.b16 %v8382
        %v8677 = vunpack.c.h.b16 %v8382
        %v8678 = vunpack.c.l.b16 %v8383
        %v8679 = vunpack.c.h.b16 %v8383
        %v8680 = vunpack.c.l.b16 %v8384
        %v8681 = vunpack.c.h.b16 %v8384
        %v8682 = vunpack.c.l.b16 %v8385
        %v8683 = vunpack.c.h.b16 %v8385
        %v8684 = vunpack.c.l.b16 %v8386
        %v8685 = vunpack.c.h.b16 %v8386
        %v8686 = vunpack.c.l.b16 %v8387
        %v8687 = vunpack.c.h.b16 %v8387
        %v8688 = vunpack.c.l.b16 %v8388
        %v8689 = vunpack.c.h.b16 %v8388
        %v8690 = vunpack.c.l.b16 %v8389
        %v8691 = vunpack.c.h.b16 %v8389
        %v8692 = vunpack.c.l.b16 %v8390
        %v8693 = vunpack.c.h.b16 %v8390
        %v8694 = vunpack.c.l.b16 %v8391
        %v8695 = vunpack.c.h.b16 %v8391
        %v8696 = vunpack.c.l.b16 %v8392
        %v8697 = vunpack.c.h.b16 %v8392
        %v8698 = vunpack.c.l.b16 %v8393
        %v8699 = vunpack.c.h.b16 %v8393
        %v8700 = vunpack.c.l.b16 %v8394
        %v8701 = vunpack.c.h.b16 %v8394
        %v8702 = vunpack.c.l.b16 %v8395
        %v8703 = vunpack.c.h.b16 %v8395
        %v8704 = vunpack.c.l.b16 %v8396
        %v8705 = vunpack.c.h.b16 %v8396
        %v8706 = vunpack.c.l.b16 %v8397
        %v8707 = vunpack.c.h.b16 %v8397
        %v8708 = vunpack.c.l.b16 %v8398
        %v8709 = vunpack.c.h.b16 %v8398
        %v8710 = vunpack.c.l.b16 %v8399
        %v8711 = vunpack.c.h.b16 %v8399
        %v8712 = vunpack.c.l.b16 %v8400
        %v8713 = vunpack.c.h.b16 %v8400
        %v8714 = vunpack.c.l.b16 %v8401
        %v8715 = vunpack.c.h.b16 %v8401
        %v8716 = vunpack.c.l.b16 %v8402
        %v8717 = vunpack.c.h.b16 %v8402
        %v8718 = vunpack.c.l.b16 %v8403
        %v8719 = vunpack.c.h.b16 %v8403
        %v8720 = vunpack.c.l.b16 %v8404
        %v8721 = vunpack.c.h.b16 %v8404
        %v8722 = vunpack.c.l.b16 %v8405
        %v8723 = vunpack.c.h.b16 %v8405
        %v8724 = vunpack.c.l.b16 %v8406
        %v8725 = vunpack.c.h.b16 %v8406
        %v8726 = vunpack.c.l.b16 %v8407
        %v8727 = vunpack.c.h.b16 %v8407
        %v8728 = vunpack.c.l.b16 %v8408
        %v8729 = vunpack.c.h.b16 %v8408
        %v8730 = vunpack.c.l.b16 %v8409
        %v8731 = vunpack.c.h.b16 %v8409
        %v8732 = vunpack.c.l.b16 %v8410
        %v8733 = vunpack.c.h.b16 %v8410
        %v8734 = vunpack.c.l.b16 %v8411
        %v8735 = vunpack.c.h.b16 %v8411
        %v8736 = vunpack.c.l.b16 %v8412
        %v8737 = vunpack.c.h.b16 %v8412
        %v8738 = vunpack.c.l.b16 %v8413
        %v8739 = vunpack.c.h.b16 %v8413
        %v8740 = vunpack.c.l.b16 %v8414
        %v8741 = vunpack.c.h.b16 %v8414
        %v8742 = vunpack.c.l.b16 %v8415
        %v8743 = vunpack.c.h.b16 %v8415
        %v8744 = vunpack.c.l.b16 %v8416
        %v8745 = vunpack.c.h.b16 %v8416
        %v8746 = vunpack.c.l.b16 %v8417
        %v8747 = vunpack.c.h.b16 %v8417
        %v8748 = vunpack.c.l.b16 %v8418
        %v8749 = vunpack.c.h.b16 %v8418
        %v8750 = vunpack.c.l.b16 %v8419
        %v8751 = vunpack.c.h.b16 %v8419
        %v8752 = vunpack.c.l.b16 %v8420
        %v8753 = vunpack.c.h.b16 %v8420
        %v8754 = vunpack.c.l.b16 %v8421
        %v8755 = vunpack.c.h.b16 %v8421
        %v8756 = vunpack.c.l.b16 %v8422
        %v8757 = vunpack.c.h.b16 %v8422
        %v8758 = vunpack.c.l.b16 %v8423
        %v8759 = vunpack.c.h.b16 %v8423
        %v8760 = vunpack.c.l.b16 %v8424
        %v8761 = vunpack.c.h.b16 %v8424
        %v8762 = vunpack.c.l.b16 %v8425
        %v8763 = vunpack.c.h.b16 %v8425
        %v8764 = vunpack.c.l.b16 %v8426
        %v8765 = vunpack.c.h.b16 %v8426
        %v8766 = vunpack.c.l.b16 %v8427
        %v8767 = vunpack.c.h.b16 %v8427
        %v8768 = vunpack.c.l.b16 %v8428
        %v8769 = vunpack.c.h.b16 %v8428
        %v8770 = vunpack.c.l.b16 %v8429
        %v8771 = vunpack.c.h.b16 %v8429
        %v8772 = vunpack.c.l.b16 %v8430
        %v8773 = vunpack.c.h.b16 %v8430
        %v8774 = vunpack.c.l.b16 %v8431
        %v8775 = vunpack.c.h.b16 %v8431
        %v8776 = vunpack.c.l.b16 %v8432
        %v8777 = vunpack.c.h.b16 %v8432
        %v8778 = vunpack.c.l.b16 %v8433
        %v8779 = vunpack.c.h.b16 %v8433
        %v8780 = vunpack.c.l.b16 %v8434
        %v8781 = vunpack.c.h.b16 %v8434
        %v8782 = vunpack.c.l.b16 %v8435
        %v8783 = vunpack.c.h.b16 %v8435
        %v8784 = vunpack.c.l.b16 %v8436
        %v8785 = vunpack.c.h.b16 %v8436
        %v8786 = vunpack.c.l.b16 %v8437
        %v8787 = vunpack.c.h.b16 %v8437
        %v8788 = vunpack.c.l.b16 %v8438
        %v8789 = vunpack.c.h.b16 %v8438
        %v8790 = vunpack.c.l.b16 %v8439
        %v8791 = vunpack.c.h.b16 %v8439
        %v8792 = vunpack.c.l.b16 %v8440
        %v8793 = vunpack.c.h.b16 %v8440
        %v8794 = vunpack.c.l.b16 %v8441
        %v8795 = vunpack.c.h.b16 %v8441
        %v8796 = vunpack.c.l.b16 %v8442
        %v8797 = vunpack.c.h.b16 %v8442
        %v8798 = vunpack.c.l.b16 %v8443
        %v8799 = vunpack.c.h.b16 %v8443
        %v8800 = vunpack.c.l.b16 %v8444
        %v8801 = vunpack.c.h.b16 %v8444
        %v8802 = vunpack.c.l.b16 %v8445
        %v8803 = vunpack.c.h.b16 %v8445
        %v8804 = vunpack.c.l.b16 %v8446
        %v8805 = vunpack.c.h.b16 %v8446
        %v8806 = vunpack.c.l.b16 %v8447
        %v8807 = vunpack.c.h.b16 %v8447
        %v8808 = vunpack.c.l.b16 %v8448
        %v8809 = vunpack.c.h.b16 %v8448
        %v8810 = vunpack.c.l.b16 %v8449
        %v8811 = vunpack.c.h.b16 %v8449
        %v8812 = vunpack.c.l.b16 %v8450
        %v8813 = vunpack.c.h.b16 %v8450
        %v8814 = vunpack.c.l.b16 %v8451
        %v8815 = vunpack.c.h.b16 %v8451
        %v8816 = vunpack.c.l.b16 %v8452
        %v8817 = vunpack.c.h.b16 %v8452
        %v8818 = vunpack.c.l.b16 %v8453
        %v8819 = vunpack.c.h.b16 %v8453
        %v8820 = vunpack.c.l.b16 %v8454
        %v8821 = vunpack.c.h.b16 %v8454
        %v8822 = vunpack.c.l.b16 %v8455
        %v8823 = vunpack.c.h.b16 %v8455
        %v8824 = vunpack.c.l.b16 %v8456
        %v8825 = vunpack.c.h.b16 %v8456
        %v8826 = vunpack.c.l.b16 %v8457
        %v8827 = vunpack.c.h.b16 %v8457
        %v8828 = vunpack.c.l.b16 %v8458
        %v8829 = vunpack.c.h.b16 %v8458
        %v8830 = vunpack.c.l.b16 %v8459
        %v8831 = vunpack.c.h.b16 %v8459
        %v8832 = vunpack.c.l.b16 %v8460
        %v8833 = vunpack.c.h.b16 %v8460
        %v8834 = vunpack.c.l.b16 %v8461
        %v8835 = vunpack.c.h.b16 %v8461
        %v8836 = vunpack.c.l.b16 %v8462
        %v8837 = vunpack.c.h.b16 %v8462
        %v8838 = vunpack.c.l.b16 %v8463
        %v8839 = vunpack.c.h.b16 %v8463
        %v8840 = vunpack.c.l.b16 %v8464
        %v8841 = vunpack.c.h.b16 %v8464
        %v8842 = vunpack.c.l.b16 %v8465
        %v8843 = vunpack.c.h.b16 %v8465
        %v8844 = vunpack.c.l.b16 %v8466
        %v8845 = vunpack.c.h.b16 %v8466
        %v8846 = vunpack.c.l.b16 %v8467
        %v8847 = vunpack.c.h.b16 %v8467
        %v8848 = vunpack.c.l.b16 %v8468
        %v8849 = vunpack.c.h.b16 %v8468
        %v8850 = vunpack.c.l.b16 %v8469
        %v8851 = vunpack.c.h.b16 %v8469
        %v8852 = vunpack.c.l.b16 %v8470
        %v8853 = vunpack.c.h.b16 %v8470
        %v8854 = vunpack.c.l.b16 %v8471
        %v8855 = vunpack.c.h.b16 %v8471
        %v8856 = vunpack.c.l.b16 %v8472
        %v8857 = vunpack.c.h.b16 %v8472
        %v8858 = vunpack.c.l.b16 %v8473
        %v8859 = vunpack.c.h.b16 %v8473
        %v8860 = vunpack.c.l.b16 %v8474
        %v8861 = vunpack.c.h.b16 %v8474
        %v8862 = vunpack.c.l.b16 %v8475
        %v8863 = vunpack.c.h.b16 %v8475
        %v8864 = vunpack.c.l.b16 %v8476
        %v8865 = vunpack.c.h.b16 %v8476
        %v8866 = vunpack.c.l.b16 %v8477
        %v8867 = vunpack.c.h.b16 %v8477
        %v8868 = vunpack.c.l.b16 %v8478
        %v8869 = vunpack.c.h.b16 %v8478
        %v8870 = vunpack.c.l.b16 %v8479
        %v8871 = vunpack.c.h.b16 %v8479
        %v8872 = vunpack.c.l.b16 %v8480
        %v8873 = vunpack.c.h.b16 %v8480
        %v8874 = vunpack.c.l.b16 %v8481
        %v8875 = vunpack.c.h.b16 %v8481
        %v8876 = vunpack.c.l.b16 %v8482
        %v8877 = vunpack.c.h.b16 %v8482
        %v8878 = vunpack.c.l.b16 %v8483
        %v8879 = vunpack.c.h.b16 %v8483
        %v8880 = vunpack.c.l.b16 %v8484
        %v8881 = vunpack.c.h.b16 %v8484
        %v8882 = vunpack.c.l.b16 %v8485
        %v8883 = vunpack.c.h.b16 %v8485
        %v8884 = vunpack.c.l.b16 %v8486
        %v8885 = vunpack.c.h.b16 %v8486
        %v8886 = vunpack.c.l.b16 %v8487
        %v8887 = vunpack.c.h.b16 %v8487
        %v8888 = vunpack.c.l.b16 %v8488
        %v8889 = vunpack.c.h.b16 %v8488
        %v8890 = vunpack.c.l.b16 %v8489
        %v8891 = vunpack.c.h.b16 %v8489
        %v8892 = vunpack.c.l.b16 %v8490
        %v8893 = vunpack.c.h.b16 %v8490
        %v8894 = vunpack.c.l.b16 %v8491
        %v8895 = vunpack.c.h.b16 %v8491
        %v8896 = vunpack.c.l.b16 %v8492
        %v8897 = vunpack.c.h.b16 %v8492
        %v8898 = vpack.c.b16 %v8646, %v8642
        %v8899 = vpack.c.b16 %v8647, %v8643
        %v8900 = vpack.c.b16 %v8648, %v8644
        %v8901 = vpack.c.b16 %v8649, %v8645
        %v8902 = vpack.c.b16 %v8654, %v8650
        %v8903 = vpack.c.b16 %v8655, %v8651
        %v8904 = vpack.c.b16 %v8656, %v8652
        %v8905 = vpack.c.b16 %v8657, %v8653
        %v8906 = vpack.c.b16 %v8662, %v8658
        %v8907 = vpack.c.b16 %v8663, %v8659
        %v8908 = vpack.c.b16 %v8664, %v8660
        %v8909 = vpack.c.b16 %v8665, %v8661
        %v8910 = vpack.c.b16 %v8670, %v8666
        %v8911 = vpack.c.b16 %v8671, %v8667
        %v8912 = vpack.c.b16 %v8672, %v8668
        %v8913 = vpack.c.b16 %v8673, %v8669
        %v8914 = vpack.c.b16 %v8678, %v8674
        %v8915 = vpack.c.b16 %v8679, %v8675
        %v8916 = vpack.c.b16 %v8680, %v8676
        %v8917 = vpack.c.b16 %v8681, %v8677
        %v8918 = vpack.c.b16 %v8686, %v8682
        %v8919 = vpack.c.b16 %v8687, %v8683
        %v8920 = vpack.c.b16 %v8688, %v8684
        %v8921 = vpack.c.b16 %v8689, %v8685
        %v8922 = vpack.c.b16 %v8694, %v8690
        %v8923 = vpack.c.b16 %v8695, %v8691
        %v8924 = vpack.c.b16 %v8696, %v8692
        %v8925 = vpack.c.b16 %v8697, %v8693
        %v8926 = vpack.c.b16 %v8702, %v8698
        %v8927 = vpack.c.b16 %v8703, %v8699
        %v8928 = vpack.c.b16 %v8704, %v8700
        %v8929 = vpack.c.b16 %v8705, %v8701
        %v8930 = vpack.c.b16 %v8710, %v8706
        %v8931 = vpack.c.b16 %v8711, %v8707
        %v8932 = vpack.c.b16 %v8712, %v8708
        %v8933 = vpack.c.b16 %v8713, %v8709
        %v8934 = vpack.c.b16 %v8718, %v8714
        %v8935 = vpack.c.b16 %v8719, %v8715
        %v8936 = vpack.c.b16 %v8720, %v8716
        %v8937 = vpack.c.b16 %v8721, %v8717
        %v8938 = vpack.c.b16 %v8726, %v8722
        %v8939 = vpack.c.b16 %v8727, %v8723
        %v8940 = vpack.c.b16 %v8728, %v8724
        %v8941 = vpack.c.b16 %v8729, %v8725
        %v8942 = vpack.c.b16 %v8734, %v8730
        %v8943 = vpack.c.b16 %v8735, %v8731
        %v8944 = vpack.c.b16 %v8736, %v8732
        %v8945 = vpack.c.b16 %v8737, %v8733
        %v8946 = vpack.c.b16 %v8742, %v8738
        %v8947 = vpack.c.b16 %v8743, %v8739
        %v8948 = vpack.c.b16 %v8744, %v8740
        %v8949 = vpack.c.b16 %v8745, %v8741
        %v8950 = vpack.c.b16 %v8750, %v8746
        %v8951 = vpack.c.b16 %v8751, %v8747
        %v8952 = vpack.c.b16 %v8752, %v8748
        %v8953 = vpack.c.b16 %v8753, %v8749
        %v8954 = vpack.c.b16 %v8758, %v8754
        %v8955 = vpack.c.b16 %v8759, %v8755
        %v8956 = vpack.c.b16 %v8760, %v8756
        %v8957 = vpack.c.b16 %v8761, %v8757
        %v8958 = vpack.c.b16 %v8766, %v8762
        %v8959 = vpack.c.b16 %v8767, %v8763
        %v8960 = vpack.c.b16 %v8768, %v8764
        %v8961 = vpack.c.b16 %v8769, %v8765
        %v8962 = vpack.c.b16 %v8774, %v8770
        %v8963 = vpack.c.b16 %v8775, %v8771
        %v8964 = vpack.c.b16 %v8776, %v8772
        %v8965 = vpack.c.b16 %v8777, %v8773
        %v8966 = vpack.c.b16 %v8782, %v8778
        %v8967 = vpack.c.b16 %v8783, %v8779
        %v8968 = vpack.c.b16 %v8784, %v8780
        %v8969 = vpack.c.b16 %v8785, %v8781
        %v8970 = vpack.c.b16 %v8790, %v8786
        %v8971 = vpack.c.b16 %v8791, %v8787
        %v8972 = vpack.c.b16 %v8792, %v8788
        %v8973 = vpack.c.b16 %v8793, %v8789
        %v8974 = vpack.c.b16 %v8798, %v8794
        %v8975 = vpack.c.b16 %v8799, %v8795
        %v8976 = vpack.c.b16 %v8800, %v8796
        %v8977 = vpack.c.b16 %v8801, %v8797
        %v8978 = vpack.c.b16 %v8806, %v8802
        %v8979 = vpack.c.b16 %v8807, %v8803
        %v8980 = vpack.c.b16 %v8808, %v8804
        %v8981 = vpack.c.b16 %v8809, %v8805
        %v8982 = vpack.c.b16 %v8814, %v8810
        %v8983 = vpack.c.b16 %v8815, %v8811
        %v8984 = vpack.c.b16 %v8816, %v8812
        %v8985 = vpack.c.b16 %v8817, %v8813
        %v8986 = vpack.c.b16 %v8822, %v8818
        %v8987 = vpack.c.b16 %v8823, %v8819
        %v8988 = vpack.c.b16 %v8824, %v8820
        %v8989 = vpack.c.b16 %v8825, %v8821
        %v8990 = vpack.c.b16 %v8830, %v8826
        %v8991 = vpack.c.b16 %v8831, %v8827
        %v8992 = vpack.c.b16 %v8832, %v8828
        %v8993 = vpack.c.b16 %v8833, %v8829
        %v8994 = vpack.c.b16 %v8838, %v8834
        %v8995 = vpack.c.b16 %v8839, %v8835
        %v8996 = vpack.c.b16 %v8840, %v8836
        %v8997 = vpack.c.b16 %v8841, %v8837
        %v8998 = vpack.c.b16 %v8846, %v8842
        %v8999 = vpack.c.b16 %v8847, %v8843
        %v9000 = vpack.c.b16 %v8848, %v8844
        %v9001 = vpack.c.b16 %v8849, %v8845
        %v9002 = vpack.c.b16 %v8854, %v8850
        %v9003 = vpack.c.b16 %v8855, %v8851
        %v9004 = vpack.c.b16 %v8856, %v8852
        %v9005 = vpack.c.b16 %v8857, %v8853
        %v9006 = vpack.c.b16 %v8862, %v8858
        %v9007 = vpack.c.b16 %v8863, %v8859
        %v9008 = vpack.c.b16 %v8864, %v8860
        %v9009 = vpack.c.b16 %v8865, %v8861
        %v9010 = vpack.c.b16 %v8870, %v8866
        %v9011 = vpack.c.b16 %v8871, %v8867
        %v9012 = vpack.c.b16 %v8872, %v8868
        %v9013 = vpack.c.b16 %v8873, %v8869
        %v9014 = vpack.c.b16 %v8878, %v8874
        %v9015 = vpack.c.b16 %v8879, %v8875
        %v9016 = vpack.c.b16 %v8880, %v8876
        %v9017 = vpack.c.b16 %v8881, %v8877
        %v9018 = vpack.c.b16 %v8886, %v8882
        %v9019 = vpack.c.b16 %v8887, %v8883
        %v9020 = vpack.c.b16 %v8888, %v8884
        %v9021 = vpack.c.b16 %v8889, %v8885
        %v9022 = vpack.c.b16 %v8894, %v8890
        %v9023 = vpack.c.b16 %v8895, %v8891
        %v9024 = vpack.c.b16 %v8896, %v8892
        %v9025 = vpack.c.b16 %v8897, %v8893
        %9154 = vmatprep.subr.bf16.mxu0 %v8899
        %9155 = vmatpush1.bf16.msra.mxu0 %v8898
        %9156 = vmatprep.subr.bf16.mxu0 %v8903
        %9157 = vmatpush1.bf16.msra.mxu0 %v8902
        %9158 = vmatprep.subr.bf16.mxu0 %v8907
        %9159 = vmatpush1.bf16.msra.mxu0 %v8906
        %9160 = vmatprep.subr.bf16.mxu0 %v8911
        %9161 = vmatpush1.bf16.msra.mxu0 %v8910
        %9162 = vmatprep.subr.bf16.mxu0 %v8915
        %9163 = vmatpush1.bf16.msra.mxu0 %v8914
        %9164 = vmatprep.subr.bf16.mxu0 %v8919
        %9165 = vmatpush1.bf16.msra.mxu0 %v8918
        %9166 = vmatprep.subr.bf16.mxu0 %v8923
        %9167 = vmatpush1.bf16.msra.mxu0 %v8922
        %9168 = vmatprep.subr.bf16.mxu0 %v8927
        %9169 = vmatpush1.bf16.msra.mxu0 %v8926
        %9170 = vmatprep.subr.bf16.mxu0 %v8931
        %9171 = vmatpush1.bf16.msra.mxu0 %v8930
        %9172 = vmatprep.subr.bf16.mxu0 %v8935
        %9173 = vmatpush1.bf16.msra.mxu0 %v8934
        %9174 = vmatprep.subr.bf16.mxu0 %v8939
        %9175 = vmatpush1.bf16.msra.mxu0 %v8938
        %9176 = vmatprep.subr.bf16.mxu0 %v8943
        %9177 = vmatpush1.bf16.msra.mxu0 %v8942
        %9178 = vmatprep.subr.bf16.mxu0 %v8947
        %9179 = vmatpush1.bf16.msra.mxu0 %v8946
        %9180 = vmatprep.subr.bf16.mxu0 %v8951
        %9181 = vmatpush1.bf16.msra.mxu0 %v8950
        %9182 = vmatprep.subr.bf16.mxu0 %v8955
        %9183 = vmatpush1.bf16.msra.mxu0 %v8954
        %9184 = vmatprep.subr.bf16.mxu0 %v8959
        %9185 = vmatpush1.bf16.msra.mxu0 %v8958
        %9186 = vmatprep.mubr.bf16.mxu0 %v8360
        %9187 = vmatmul.mubr.bf16.gmra.mrb[0].mxu0 %v8359
        %v9188 = vpop.f32.mrb[0].mxu0
        %v9189 = vadd.f32 %v8497, %v9188
        %v9190 = vpop.f32.mrb[0].mxu0
        %v9191 = vadd.f32 %v8501, %v9190
        %v9192 = vpop.f32.mrb[0].mxu0
        %v9193 = vpop.f32.mrb[0].mxu0
        %9194 = vdwg.mxu0
        %9195 = vmatprep.subr.bf16.mxu0 %v8963
        %9196 = vmatpush1.bf16.msra.mxu0 %v8962
        %9197 = vmatprep.subr.bf16.mxu0 %v8967
        %9198 = vmatpush1.bf16.msra.mxu0 %v8966
        %9199 = vmatprep.subr.bf16.mxu0 %v8971
        %9200 = vmatpush1.bf16.msra.mxu0 %v8970
        %9201 = vmatprep.subr.bf16.mxu0 %v8975
        %9202 = vmatpush1.bf16.msra.mxu0 %v8974
        %9203 = vmatprep.subr.bf16.mxu0 %v8979
        %9204 = vmatpush1.bf16.msra.mxu0 %v8978
        %9205 = vmatprep.subr.bf16.mxu0 %v8983
        %9206 = vmatpush1.bf16.msra.mxu0 %v8982
        %9207 = vmatprep.subr.bf16.mxu0 %v8987
        %9208 = vmatpush1.bf16.msra.mxu0 %v8986
        %9209 = vmatprep.subr.bf16.mxu0 %v8991
        %9210 = vmatpush1.bf16.msra.mxu0 %v8990
        %9211 = vmatprep.subr.bf16.mxu0 %v8995
        %9212 = vmatpush1.bf16.msra.mxu0 %v8994
        %9213 = vmatprep.subr.bf16.mxu0 %v8999
        %9214 = vmatpush1.bf16.msra.mxu0 %v8998
        %9215 = vmatprep.subr.bf16.mxu0 %v9003
        %9216 = vmatpush1.bf16.msra.mxu0 %v9002
        %9217 = vmatprep.subr.bf16.mxu0 %v9007
        %9218 = vmatpush1.bf16.msra.mxu0 %v9006
        %9219 = vmatprep.subr.bf16.mxu0 %v9011
        %9220 = vmatpush1.bf16.msra.mxu0 %v9010
        %9221 = vmatprep.subr.bf16.mxu0 %v9015
        %9222 = vmatpush1.bf16.msra.mxu0 %v9014
        %9223 = vmatprep.subr.bf16.mxu0 %v9019
        %9224 = vmatpush1.bf16.msra.mxu0 %v9018
        %9225 = vmatprep.subr.bf16.mxu0 %v9023
        %9226 = vmatpush1.bf16.msra.mxu0 %v9022
        %9227 = vmatprep.mubr.bf16.mxu0 %v8362
        %9228 = vmatmul.mubr.bf16.gmra.mrb[0].mxu0 %v8361
        %v9229 = vpop.f32.mrb[0].mxu0
        %v9230 = vadd.f32 %v9189, %v9229
        %v9231 = vpop.f32.mrb[0].mxu0
        %v9232 = vadd.f32 %v9191, %v9231
        %v9233 = vpop.f32.mrb[0].mxu0
        %v9234 = vpop.f32.mrb[0].mxu0
        %9235 = vdwg.mxu0
        %9236 = vmatprep.subr.bf16.mxu0 %v8901
        %9237 = vmatpush1.bf16.msra.mxu0 %v8900
        %9238 = vmatprep.subr.bf16.mxu0 %v8905
        %9239 = vmatpush1.bf16.msra.mxu0 %v8904
        %9240 = vmatprep.subr.bf16.mxu0 %v8909
        %9241 = vmatpush1.bf16.msra.mxu0 %v8908
        %9242 = vmatprep.subr.bf16.mxu0 %v8913
        %9243 = vmatpush1.bf16.msra.mxu0 %v8912
        %9244 = vmatprep.subr.bf16.mxu0 %v8917
        %9245 = vmatpush1.bf16.msra.mxu0 %v8916
        %9246 = vmatprep.subr.bf16.mxu0 %v8921
        %9247 = vmatpush1.bf16.msra.mxu0 %v8920
        %9248 = vmatprep.subr.bf16.mxu0 %v8925
        %9249 = vmatpush1.bf16.msra.mxu0 %v8924
        %9250 = vmatprep.subr.bf16.mxu0 %v8929
        %9251 = vmatpush1.bf16.msra.mxu0 %v8928
        %9252 = vmatprep.subr.bf16.mxu0 %v8933
        %9253 = vmatpush1.bf16.msra.mxu0 %v8932
        %9254 = vmatprep.subr.bf16.mxu0 %v8937
        %9255 = vmatpush1.bf16.msra.mxu0 %v8936
        %9256 = vmatprep.subr.bf16.mxu0 %v8941
        %9257 = vmatpush1.bf16.msra.mxu0 %v8940
        %9258 = vmatprep.subr.bf16.mxu0 %v8945
        %9259 = vmatpush1.bf16.msra.mxu0 %v8944
        %9260 = vmatprep.subr.bf16.mxu0 %v8949
        %9261 = vmatpush1.bf16.msra.mxu0 %v8948
        %9262 = vmatprep.subr.bf16.mxu0 %v8953
        %9263 = vmatpush1.bf16.msra.mxu0 %v8952
        %9264 = vmatprep.subr.bf16.mxu0 %v8957
        %9265 = vmatpush1.bf16.msra.mxu0 %v8956
        %9266 = vmatprep.subr.bf16.mxu0 %v8961
        %9267 = vmatpush1.bf16.msra.mxu0 %v8960
        %9268 = vmatprep.mubr.bf16.mxu0 %v8360
        %9269 = vmatmul.mubr.bf16.gmra.mrb[0].mxu0 %v8359
        %v9270 = vpop.f32.mrb[0].mxu0
        %v9271 = vadd.f32 %v8505, %v9270
        %v9272 = vpop.f32.mrb[0].mxu0
        %v9273 = vadd.f32 %v8509, %v9272
        %v9274 = vpop.f32.mrb[0].mxu0
        %v9275 = vpop.f32.mrb[0].mxu0
        %9276 = vdwg.mxu0
        %9277 = vmatprep.subr.bf16.mxu0 %v8965
        %9278 = vmatpush1.bf16.msra.mxu0 %v8964
        %9279 = vmatprep.subr.bf16.mxu0 %v8969
        %9280 = vmatpush1.bf16.msra.mxu0 %v8968
        %9281 = vmatprep.subr.bf16.mxu0 %v8973
        %9282 = vmatpush1.bf16.msra.mxu0 %v8972
        %9283 = vmatprep.subr.bf16.mxu0 %v8977
        %9284 = vmatpush1.bf16.msra.mxu0 %v8976
        %9285 = vmatprep.subr.bf16.mxu0 %v8981
        %9286 = vmatpush1.bf16.msra.mxu0 %v8980
        %9287 = vmatprep.subr.bf16.mxu0 %v8985
        %9288 = vmatpush1.bf16.msra.mxu0 %v8984
        %9289 = vmatprep.subr.bf16.mxu0 %v8989
        %9290 = vmatpush1.bf16.msra.mxu0 %v8988
        %9291 = vmatprep.subr.bf16.mxu0 %v8993
        %9292 = vmatpush1.bf16.msra.mxu0 %v8992
        %9293 = vmatprep.subr.bf16.mxu0 %v8997
        %9294 = vmatpush1.bf16.msra.mxu0 %v8996
        %9295 = vmatprep.subr.bf16.mxu0 %v9001
        %9296 = vmatpush1.bf16.msra.mxu0 %v9000
        %9297 = vmatprep.subr.bf16.mxu0 %v9005
        %9298 = vmatpush1.bf16.msra.mxu0 %v9004
        %9299 = vmatprep.subr.bf16.mxu0 %v9009
        %9300 = vmatpush1.bf16.msra.mxu0 %v9008
        %9301 = vmatprep.subr.bf16.mxu0 %v9013
        %9302 = vmatpush1.bf16.msra.mxu0 %v9012
        %9303 = vmatprep.subr.bf16.mxu0 %v9017
        %9304 = vmatpush1.bf16.msra.mxu0 %v9016
        %9305 = vmatprep.subr.bf16.mxu0 %v9021
        %9306 = vmatpush1.bf16.msra.mxu0 %v9020
        %9307 = vmatprep.subr.bf16.mxu0 %v9025
        %9308 = vmatpush1.bf16.msra.mxu0 %v9024
        %9309 = vmatprep.mubr.bf16.mxu0 %v8362
        %9310 = vmatmul.mubr.bf16.gmra.mrb[0].mxu0 %v8361
        %v9311 = vpop.f32.mrb[0].mxu0
        %v9312 = vadd.f32 %v9271, %v9311
        %v9313 = vpop.f32.mrb[0].mxu0
        %v9314 = vadd.f32 %v9273, %v9313
        %v9315 = vpop.f32.mrb[0].mxu0
        %v9316 = vpop.f32.mrb[0].mxu0
        %9317 = vdwg.mxu0
        %v9318 = vmax.f32 %v9230, 0.0
        %v9319 = vmax.f32 %v9232, 0.0
        %v9320 = vmax.f32 %v9312, 0.0
        %v9321 = vmax.f32 %v9314, 0.0
        %v9322 = vunpack.c.l.bf16 %v8359
        %v9323 = vunpack.c.l.bf16 %v8360
        %v9324 = vunpack.c.l.bf16 %v8361
        %v9325 = vunpack.c.l.bf16 %v8362
        %v9326 = vadd.f32 %v9318, %v9322
        %v9327 = vadd.f32 %v9319, %v9323
        %v9328 = vadd.f32 %v9320, %v9324
        %v9329 = vadd.f32 %v9321, %v9325
        %v9330 = vpack.c.bf16 %v9326, %v9326
        %v9331 = vpack.c.bf16 %v9327, %v9327
        %v9332 = vpack.c.bf16 %v9328, %v9328
        %v9333 = vpack.c.bf16 %v9329, %v9329
        %s9334 = scalar_lea.vmem [#allocation14], 4
        %v9335 = vld [vmem:[%s9334] ss:$8 sm:$0xf]
        %v9336 = vld [vmem:[#allocation10] sm:$0xff]
        %v9337 = vld [vmem:[#allocation10 + $0x8] sm:$0xff]
        %v9338 = vld [vmem:[#allocation10 + $0x10] sm:$0xff]
        %v9339 = vld [vmem:[#allocation10 + $0x18] sm:$0xff]
        %v9340 = vld [vmem:[#allocation10 + $0x20] sm:$0xff]
        %v9341 = vld [vmem:[#allocation10 + $0x28] sm:$0xff]
        %v9342 = vld [vmem:[#allocation10 + $0x30] sm:$0xff]
        %v9343 = vld [vmem:[#allocation10 + $0x38] sm:$0xff]
        %v9344 = vld [vmem:[#allocation10 + $0x40] sm:$0xff]
        %v9345 = vld [vmem:[#allocation10 + $0x48] sm:$0xff]
        %v9346 = vld [vmem:[#allocation10 + $0x50] sm:$0xff]
        %v9347 = vld [vmem:[#allocation10 + $0x58] sm:$0xff]
        %v9348 = vld [vmem:[#allocation10 + $0x60] sm:$0xff]
        %v9349 = vld [vmem:[#allocation10 + $0x68] sm:$0xff]
        %v9350 = vld [vmem:[#allocation10 + $0x70] sm:$0xff]
        %v9351 = vld [vmem:[#allocation10 + $0x78] sm:$0xff]
        %v9352 = vld [vmem:[#allocation10 + $0x80] sm:$0xff]
        %v9353 = vld [vmem:[#allocation10 + $0x88] sm:$0xff]
        %v9354 = vld [vmem:[#allocation10 + $0x90] sm:$0xff]
        %v9355 = vld [vmem:[#allocation10 + $0x98] sm:$0xff]
        %v9356 = vld [vmem:[#allocation10 + $0xa0] sm:$0xff]
        %v9357 = vld [vmem:[#allocation10 + $0xa8] sm:$0xff]
        %v9358 = vld [vmem:[#allocation10 + $0xb0] sm:$0xff]
        %v9359 = vld [vmem:[#allocation10 + $0xb8] sm:$0xff]
        %v9360 = vld [vmem:[#allocation10 + $0xc0] sm:$0xff]
        %v9361 = vld [vmem:[#allocation10 + $0xc8] sm:$0xff]
        %v9362 = vld [vmem:[#allocation10 + $0xd0] sm:$0xff]
        %v9363 = vld [vmem:[#allocation10 + $0xd8] sm:$0xff]
        %v9364 = vld [vmem:[#allocation10 + $0xe0] sm:$0xff]
        %v9365 = vld [vmem:[#allocation10 + $0xe8] sm:$0xff]
        %v9366 = vld [vmem:[#allocation10 + $0xf0] sm:$0xff]
        %v9367 = vld [vmem:[#allocation10 + $0xf8] sm:$0xff]
        %v9368 = vld [vmem:[#allocation10 + $0x100] sm:$0xff]
        %v9369 = vld [vmem:[#allocation10 + $0x108] sm:$0xff]
        %v9370 = vld [vmem:[#allocation10 + $0x110] sm:$0xff]
        %v9371 = vld [vmem:[#allocation10 + $0x118] sm:$0xff]
        %v9372 = vld [vmem:[#allocation10 + $0x120] sm:$0xff]
        %v9373 = vld [vmem:[#allocation10 + $0x128] sm:$0xff]
        %v9374 = vld [vmem:[#allocation10 + $0x130] sm:$0xff]
        %v9375 = vld [vmem:[#allocation10 + $0x138] sm:$0xff]
        %v9376 = vld [vmem:[#allocation10 + $0x140] sm:$0xff]
        %v9377 = vld [vmem:[#allocation10 + $0x148] sm:$0xff]
        %v9378 = vld [vmem:[#allocation10 + $0x150] sm:$0xff]
        %v9379 = vld [vmem:[#allocation10 + $0x158] sm:$0xff]
        %v9380 = vld [vmem:[#allocation10 + $0x160] sm:$0xff]
        %v9381 = vld [vmem:[#allocation10 + $0x168] sm:$0xff]
        %v9382 = vld [vmem:[#allocation10 + $0x170] sm:$0xff]
        %v9383 = vld [vmem:[#allocation10 + $0x178] sm:$0xff]
        %v9384 = vld [vmem:[#allocation10 + $0x180] sm:$0xff]
        %v9385 = vld [vmem:[#allocation10 + $0x188] sm:$0xff]
        %v9386 = vld [vmem:[#allocation10 + $0x190] sm:$0xff]
        %v9387 = vld [vmem:[#allocation10 + $0x198] sm:$0xff]
        %v9388 = vld [vmem:[#allocation10 + $0x1a0] sm:$0xff]
        %v9389 = vld [vmem:[#allocation10 + $0x1a8] sm:$0xff]
        %v9390 = vld [vmem:[#allocation10 + $0x1b0] sm:$0xff]
        %v9391 = vld [vmem:[#allocation10 + $0x1b8] sm:$0xff]
        %v9392 = vld [vmem:[#allocation10 + $0x1c0] sm:$0xff]
        %v9393 = vld [vmem:[#allocation10 + $0x1c8] sm:$0xff]
        %v9394 = vld [vmem:[#allocation10 + $0x1d0] sm:$0xff]
        %v9395 = vld [vmem:[#allocation10 + $0x1d8] sm:$0xff]
        %v9396 = vld [vmem:[#allocation10 + $0x1e0] sm:$0xff]
        %v9397 = vld [vmem:[#allocation10 + $0x1e8] sm:$0xff]
        %v9398 = vld [vmem:[#allocation10 + $0x1f0] sm:$0xff]
        %v9399 = vld [vmem:[#allocation10 + $0x1f8] sm:$0xff]
        %v9400 = vld [vmem:[#allocation10 + $0x200] sm:$0xff]
        %v9401 = vld [vmem:[#allocation10 + $0x208] sm:$0xff]
        %v9402 = vld [vmem:[#allocation10 + $0x210] sm:$0xff]
        %v9403 = vld [vmem:[#allocation10 + $0x218] sm:$0xff]
        %v9404 = vld [vmem:[#allocation10 + $0x220] sm:$0xff]
        %v9405 = vld [vmem:[#allocation10 + $0x228] sm:$0xff]
        %v9406 = vld [vmem:[#allocation10 + $0x230] sm:$0xff]
        %v9407 = vld [vmem:[#allocation10 + $0x238] sm:$0xff]
        %v9408 = vld [vmem:[#allocation10 + $0x240] sm:$0xff]
        %v9409 = vld [vmem:[#allocation10 + $0x248] sm:$0xff]
        %v9410 = vld [vmem:[#allocation10 + $0x250] sm:$0xff]
        %v9411 = vld [vmem:[#allocation10 + $0x258] sm:$0xff]
        %v9412 = vld [vmem:[#allocation10 + $0x260] sm:$0xff]
        %v9413 = vld [vmem:[#allocation10 + $0x268] sm:$0xff]
        %v9414 = vld [vmem:[#allocation10 + $0x270] sm:$0xff]
        %v9415 = vld [vmem:[#allocation10 + $0x278] sm:$0xff]
        %v9416 = vld [vmem:[#allocation10 + $0x280] sm:$0xff]
        %v9417 = vld [vmem:[#allocation10 + $0x288] sm:$0xff]
        %v9418 = vld [vmem:[#allocation10 + $0x290] sm:$0xff]
        %v9419 = vld [vmem:[#allocation10 + $0x298] sm:$0xff]
        %v9420 = vld [vmem:[#allocation10 + $0x2a0] sm:$0xff]
        %v9421 = vld [vmem:[#allocation10 + $0x2a8] sm:$0xff]
        %v9422 = vld [vmem:[#allocation10 + $0x2b0] sm:$0xff]
        %v9423 = vld [vmem:[#allocation10 + $0x2b8] sm:$0xff]
        %v9424 = vld [vmem:[#allocation10 + $0x2c0] sm:$0xff]
        %v9425 = vld [vmem:[#allocation10 + $0x2c8] sm:$0xff]
        %v9426 = vld [vmem:[#allocation10 + $0x2d0] sm:$0xff]
        %v9427 = vld [vmem:[#allocation10 + $0x2d8] sm:$0xff]
        %v9428 = vld [vmem:[#allocation10 + $0x2e0] sm:$0xff]
        %v9429 = vld [vmem:[#allocation10 + $0x2e8] sm:$0xff]
        %v9430 = vld [vmem:[#allocation10 + $0x2f0] sm:$0xff]
        %v9431 = vld [vmem:[#allocation10 + $0x2f8] sm:$0xff]
        %v9432 = vld [vmem:[#allocation10 + $0x300] sm:$0xff]
        %v9433 = vld [vmem:[#allocation10 + $0x308] sm:$0xff]
        %v9434 = vld [vmem:[#allocation10 + $0x310] sm:$0xff]
        %v9435 = vld [vmem:[#allocation10 + $0x318] sm:$0xff]
        %v9436 = vld [vmem:[#allocation10 + $0x320] sm:$0xff]
        %v9437 = vld [vmem:[#allocation10 + $0x328] sm:$0xff]
        %v9438 = vld [vmem:[#allocation10 + $0x330] sm:$0xff]
        %v9439 = vld [vmem:[#allocation10 + $0x338] sm:$0xff]
        %v9440 = vld [vmem:[#allocation10 + $0x340] sm:$0xff]
        %v9441 = vld [vmem:[#allocation10 + $0x348] sm:$0xff]
        %v9442 = vld [vmem:[#allocation10 + $0x350] sm:$0xff]
        %v9443 = vld [vmem:[#allocation10 + $0x358] sm:$0xff]
        %v9444 = vld [vmem:[#allocation10 + $0x360] sm:$0xff]
        %v9445 = vld [vmem:[#allocation10 + $0x368] sm:$0xff]
        %v9446 = vld [vmem:[#allocation10 + $0x370] sm:$0xff]
        %v9447 = vld [vmem:[#allocation10 + $0x378] sm:$0xff]
        %v9448 = vld [vmem:[#allocation10 + $0x380] sm:$0xff]
        %v9449 = vld [vmem:[#allocation10 + $0x388] sm:$0xff]
        %v9450 = vld [vmem:[#allocation10 + $0x390] sm:$0xff]
        %v9451 = vld [vmem:[#allocation10 + $0x398] sm:$0xff]
        %v9452 = vld [vmem:[#allocation10 + $0x3a0] sm:$0xff]
        %v9453 = vld [vmem:[#allocation10 + $0x3a8] sm:$0xff]
        %v9454 = vld [vmem:[#allocation10 + $0x3b0] sm:$0xff]
        %v9455 = vld [vmem:[#allocation10 + $0x3b8] sm:$0xff]
        %v9456 = vld [vmem:[#allocation10 + $0x3c0] sm:$0xff]
        %v9457 = vld [vmem:[#allocation10 + $0x3c8] sm:$0xff]
        %v9458 = vld [vmem:[#allocation10 + $0x3d0] sm:$0xff]
        %v9459 = vld [vmem:[#allocation10 + $0x3d8] sm:$0xff]
        %v9460 = vld [vmem:[#allocation10 + $0x3e0] sm:$0xff]
        %v9461 = vld [vmem:[#allocation10 + $0x3e8] sm:$0xff]
        %v9462 = vld [vmem:[#allocation10 + $0x3f0] sm:$0xff]
        %v9463 = vld [vmem:[#allocation10 + $0x3f8] sm:$0xff]
        %v9465 = vlaneseq
        %v9466 = vshrl.u32 %v9465, 7
        %v9467 = vsub.s32 0, %v9466
        %v9468 = vrot.slane %v9335, %v9467
        %v9469 = vlaneseq
        %v9470 = vshrl.u32 %v9469, 7
        %v9471 = vsub.s32 1, %v9470
        %v9472 = vrot.slane %v9335, %v9471
        %v9473 = vlaneseq
        %v9474 = vshrl.u32 %v9473, 7
        %v9475 = vsub.s32 2, %v9474
        %v9476 = vrot.slane %v9335, %v9475
        %v9477 = vlaneseq
        %v9478 = vshrl.u32 %v9477, 7
        %v9479 = vsub.s32 3, %v9478
        %v9480 = vrot.slane %v9335, %v9479
        %v9613 = vunpack.c.l.b16 %v9336
        %v9614 = vunpack.c.h.b16 %v9336
        %v9615 = vunpack.c.l.b16 %v9337
        %v9616 = vunpack.c.h.b16 %v9337
        %v9617 = vunpack.c.l.b16 %v9338
        %v9618 = vunpack.c.h.b16 %v9338
        %v9619 = vunpack.c.l.b16 %v9339
        %v9620 = vunpack.c.h.b16 %v9339
        %v9621 = vunpack.c.l.b16 %v9340
        %v9622 = vunpack.c.h.b16 %v9340
        %v9623 = vunpack.c.l.b16 %v9341
        %v9624 = vunpack.c.h.b16 %v9341
        %v9625 = vunpack.c.l.b16 %v9342
        %v9626 = vunpack.c.h.b16 %v9342
        %v9627 = vunpack.c.l.b16 %v9343
        %v9628 = vunpack.c.h.b16 %v9343
        %v9629 = vunpack.c.l.b16 %v9344
        %v9630 = vunpack.c.h.b16 %v9344
        %v9631 = vunpack.c.l.b16 %v9345
        %v9632 = vunpack.c.h.b16 %v9345
        %v9633 = vunpack.c.l.b16 %v9346
        %v9634 = vunpack.c.h.b16 %v9346
        %v9635 = vunpack.c.l.b16 %v9347
        %v9636 = vunpack.c.h.b16 %v9347
        %v9637 = vunpack.c.l.b16 %v9348
        %v9638 = vunpack.c.h.b16 %v9348
        %v9639 = vunpack.c.l.b16 %v9349
        %v9640 = vunpack.c.h.b16 %v9349
        %v9641 = vunpack.c.l.b16 %v9350
        %v9642 = vunpack.c.h.b16 %v9350
        %v9643 = vunpack.c.l.b16 %v9351
        %v9644 = vunpack.c.h.b16 %v9351
        %v9645 = vunpack.c.l.b16 %v9352
        %v9646 = vunpack.c.h.b16 %v9352
        %v9647 = vunpack.c.l.b16 %v9353
        %v9648 = vunpack.c.h.b16 %v9353
        %v9649 = vunpack.c.l.b16 %v9354
        %v9650 = vunpack.c.h.b16 %v9354
        %v9651 = vunpack.c.l.b16 %v9355
        %v9652 = vunpack.c.h.b16 %v9355
        %v9653 = vunpack.c.l.b16 %v9356
        %v9654 = vunpack.c.h.b16 %v9356
        %v9655 = vunpack.c.l.b16 %v9357
        %v9656 = vunpack.c.h.b16 %v9357
        %v9657 = vunpack.c.l.b16 %v9358
        %v9658 = vunpack.c.h.b16 %v9358
        %v9659 = vunpack.c.l.b16 %v9359
        %v9660 = vunpack.c.h.b16 %v9359
        %v9661 = vunpack.c.l.b16 %v9360
        %v9662 = vunpack.c.h.b16 %v9360
        %v9663 = vunpack.c.l.b16 %v9361
        %v9664 = vunpack.c.h.b16 %v9361
        %v9665 = vunpack.c.l.b16 %v9362
        %v9666 = vunpack.c.h.b16 %v9362
        %v9667 = vunpack.c.l.b16 %v9363
        %v9668 = vunpack.c.h.b16 %v9363
        %v9669 = vunpack.c.l.b16 %v9364
        %v9670 = vunpack.c.h.b16 %v9364
        %v9671 = vunpack.c.l.b16 %v9365
        %v9672 = vunpack.c.h.b16 %v9365
        %v9673 = vunpack.c.l.b16 %v9366
        %v9674 = vunpack.c.h.b16 %v9366
        %v9675 = vunpack.c.l.b16 %v9367
        %v9676 = vunpack.c.h.b16 %v9367
        %v9677 = vunpack.c.l.b16 %v9368
        %v9678 = vunpack.c.h.b16 %v9368
        %v9679 = vunpack.c.l.b16 %v9369
        %v9680 = vunpack.c.h.b16 %v9369
        %v9681 = vunpack.c.l.b16 %v9370
        %v9682 = vunpack.c.h.b16 %v9370
        %v9683 = vunpack.c.l.b16 %v9371
        %v9684 = vunpack.c.h.b16 %v9371
        %v9685 = vunpack.c.l.b16 %v9372
        %v9686 = vunpack.c.h.b16 %v9372
        %v9687 = vunpack.c.l.b16 %v9373
        %v9688 = vunpack.c.h.b16 %v9373
        %v9689 = vunpack.c.l.b16 %v9374
        %v9690 = vunpack.c.h.b16 %v9374
        %v9691 = vunpack.c.l.b16 %v9375
        %v9692 = vunpack.c.h.b16 %v9375
        %v9693 = vunpack.c.l.b16 %v9376
        %v9694 = vunpack.c.h.b16 %v9376
        %v9695 = vunpack.c.l.b16 %v9377
        %v9696 = vunpack.c.h.b16 %v9377
        %v9697 = vunpack.c.l.b16 %v9378
        %v9698 = vunpack.c.h.b16 %v9378
        %v9699 = vunpack.c.l.b16 %v9379
        %v9700 = vunpack.c.h.b16 %v9379
        %v9701 = vunpack.c.l.b16 %v9380
        %v9702 = vunpack.c.h.b16 %v9380
        %v9703 = vunpack.c.l.b16 %v9381
        %v9704 = vunpack.c.h.b16 %v9381
        %v9705 = vunpack.c.l.b16 %v9382
        %v9706 = vunpack.c.h.b16 %v9382
        %v9707 = vunpack.c.l.b16 %v9383
        %v9708 = vunpack.c.h.b16 %v9383
        %v9709 = vunpack.c.l.b16 %v9384
        %v9710 = vunpack.c.h.b16 %v9384
        %v9711 = vunpack.c.l.b16 %v9385
        %v9712 = vunpack.c.h.b16 %v9385
        %v9713 = vunpack.c.l.b16 %v9386
        %v9714 = vunpack.c.h.b16 %v9386
        %v9715 = vunpack.c.l.b16 %v9387
        %v9716 = vunpack.c.h.b16 %v9387
        %v9717 = vunpack.c.l.b16 %v9388
        %v9718 = vunpack.c.h.b16 %v9388
        %v9719 = vunpack.c.l.b16 %v9389
        %v9720 = vunpack.c.h.b16 %v9389
        %v9721 = vunpack.c.l.b16 %v9390
        %v9722 = vunpack.c.h.b16 %v9390
        %v9723 = vunpack.c.l.b16 %v9391
        %v9724 = vunpack.c.h.b16 %v9391
        %v9725 = vunpack.c.l.b16 %v9392
        %v9726 = vunpack.c.h.b16 %v9392
        %v9727 = vunpack.c.l.b16 %v9393
        %v9728 = vunpack.c.h.b16 %v9393
        %v9729 = vunpack.c.l.b16 %v9394
        %v9730 = vunpack.c.h.b16 %v9394
        %v9731 = vunpack.c.l.b16 %v9395
        %v9732 = vunpack.c.h.b16 %v9395
        %v9733 = vunpack.c.l.b16 %v9396
        %v9734 = vunpack.c.h.b16 %v9396
        %v9735 = vunpack.c.l.b16 %v9397
        %v9736 = vunpack.c.h.b16 %v9397
        %v9737 = vunpack.c.l.b16 %v9398
        %v9738 = vunpack.c.h.b16 %v9398
        %v9739 = vunpack.c.l.b16 %v9399
        %v9740 = vunpack.c.h.b16 %v9399
        %v9741 = vunpack.c.l.b16 %v9400
        %v9742 = vunpack.c.h.b16 %v9400
        %v9743 = vunpack.c.l.b16 %v9401
        %v9744 = vunpack.c.h.b16 %v9401
        %v9745 = vunpack.c.l.b16 %v9402
        %v9746 = vunpack.c.h.b16 %v9402
        %v9747 = vunpack.c.l.b16 %v9403
        %v9748 = vunpack.c.h.b16 %v9403
        %v9749 = vunpack.c.l.b16 %v9404
        %v9750 = vunpack.c.h.b16 %v9404
        %v9751 = vunpack.c.l.b16 %v9405
        %v9752 = vunpack.c.h.b16 %v9405
        %v9753 = vunpack.c.l.b16 %v9406
        %v9754 = vunpack.c.h.b16 %v9406
        %v9755 = vunpack.c.l.b16 %v9407
        %v9756 = vunpack.c.h.b16 %v9407
        %v9757 = vunpack.c.l.b16 %v9408
        %v9758 = vunpack.c.h.b16 %v9408
        %v9759 = vunpack.c.l.b16 %v9409
        %v9760 = vunpack.c.h.b16 %v9409
        %v9761 = vunpack.c.l.b16 %v9410
        %v9762 = vunpack.c.h.b16 %v9410
        %v9763 = vunpack.c.l.b16 %v9411
        %v9764 = vunpack.c.h.b16 %v9411
        %v9765 = vunpack.c.l.b16 %v9412
        %v9766 = vunpack.c.h.b16 %v9412
        %v9767 = vunpack.c.l.b16 %v9413
        %v9768 = vunpack.c.h.b16 %v9413
        %v9769 = vunpack.c.l.b16 %v9414
        %v9770 = vunpack.c.h.b16 %v9414
        %v9771 = vunpack.c.l.b16 %v9415
        %v9772 = vunpack.c.h.b16 %v9415
        %v9773 = vunpack.c.l.b16 %v9416
        %v9774 = vunpack.c.h.b16 %v9416
        %v9775 = vunpack.c.l.b16 %v9417
        %v9776 = vunpack.c.h.b16 %v9417
        %v9777 = vunpack.c.l.b16 %v9418
        %v9778 = vunpack.c.h.b16 %v9418
        %v9779 = vunpack.c.l.b16 %v9419
        %v9780 = vunpack.c.h.b16 %v9419
        %v9781 = vunpack.c.l.b16 %v9420
        %v9782 = vunpack.c.h.b16 %v9420
        %v9783 = vunpack.c.l.b16 %v9421
        %v9784 = vunpack.c.h.b16 %v9421
        %v9785 = vunpack.c.l.b16 %v9422
        %v9786 = vunpack.c.h.b16 %v9422
        %v9787 = vunpack.c.l.b16 %v9423
        %v9788 = vunpack.c.h.b16 %v9423
        %v9789 = vunpack.c.l.b16 %v9424
        %v9790 = vunpack.c.h.b16 %v9424
        %v9791 = vunpack.c.l.b16 %v9425
        %v9792 = vunpack.c.h.b16 %v9425
        %v9793 = vunpack.c.l.b16 %v9426
        %v9794 = vunpack.c.h.b16 %v9426
        %v9795 = vunpack.c.l.b16 %v9427
        %v9796 = vunpack.c.h.b16 %v9427
        %v9797 = vunpack.c.l.b16 %v9428
        %v9798 = vunpack.c.h.b16 %v9428
        %v9799 = vunpack.c.l.b16 %v9429
        %v9800 = vunpack.c.h.b16 %v9429
        %v9801 = vunpack.c.l.b16 %v9430
        %v9802 = vunpack.c.h.b16 %v9430
        %v9803 = vunpack.c.l.b16 %v9431
        %v9804 = vunpack.c.h.b16 %v9431
        %v9805 = vunpack.c.l.b16 %v9432
        %v9806 = vunpack.c.h.b16 %v9432
        %v9807 = vunpack.c.l.b16 %v9433
        %v9808 = vunpack.c.h.b16 %v9433
        %v9809 = vunpack.c.l.b16 %v9434
        %v9810 = vunpack.c.h.b16 %v9434
        %v9811 = vunpack.c.l.b16 %v9435
        %v9812 = vunpack.c.h.b16 %v9435
        %v9813 = vunpack.c.l.b16 %v9436
        %v9814 = vunpack.c.h.b16 %v9436
        %v9815 = vunpack.c.l.b16 %v9437
        %v9816 = vunpack.c.h.b16 %v9437
        %v9817 = vunpack.c.l.b16 %v9438
        %v9818 = vunpack.c.h.b16 %v9438
        %v9819 = vunpack.c.l.b16 %v9439
        %v9820 = vunpack.c.h.b16 %v9439
        %v9821 = vunpack.c.l.b16 %v9440
        %v9822 = vunpack.c.h.b16 %v9440
        %v9823 = vunpack.c.l.b16 %v9441
        %v9824 = vunpack.c.h.b16 %v9441
        %v9825 = vunpack.c.l.b16 %v9442
        %v9826 = vunpack.c.h.b16 %v9442
        %v9827 = vunpack.c.l.b16 %v9443
        %v9828 = vunpack.c.h.b16 %v9443
        %v9829 = vunpack.c.l.b16 %v9444
        %v9830 = vunpack.c.h.b16 %v9444
        %v9831 = vunpack.c.l.b16 %v9445
        %v9832 = vunpack.c.h.b16 %v9445
        %v9833 = vunpack.c.l.b16 %v9446
        %v9834 = vunpack.c.h.b16 %v9446
        %v9835 = vunpack.c.l.b16 %v9447
        %v9836 = vunpack.c.h.b16 %v9447
        %v9837 = vunpack.c.l.b16 %v9448
        %v9838 = vunpack.c.h.b16 %v9448
        %v9839 = vunpack.c.l.b16 %v9449
        %v9840 = vunpack.c.h.b16 %v9449
        %v9841 = vunpack.c.l.b16 %v9450
        %v9842 = vunpack.c.h.b16 %v9450
        %v9843 = vunpack.c.l.b16 %v9451
        %v9844 = vunpack.c.h.b16 %v9451
        %v9845 = vunpack.c.l.b16 %v9452
        %v9846 = vunpack.c.h.b16 %v9452
        %v9847 = vunpack.c.l.b16 %v9453
        %v9848 = vunpack.c.h.b16 %v9453
        %v9849 = vunpack.c.l.b16 %v9454
        %v9850 = vunpack.c.h.b16 %v9454
        %v9851 = vunpack.c.l.b16 %v9455
        %v9852 = vunpack.c.h.b16 %v9455
        %v9853 = vunpack.c.l.b16 %v9456
        %v9854 = vunpack.c.h.b16 %v9456
        %v9855 = vunpack.c.l.b16 %v9457
        %v9856 = vunpack.c.h.b16 %v9457
        %v9857 = vunpack.c.l.b16 %v9458
        %v9858 = vunpack.c.h.b16 %v9458
        %v9859 = vunpack.c.l.b16 %v9459
        %v9860 = vunpack.c.h.b16 %v9459
        %v9861 = vunpack.c.l.b16 %v9460
        %v9862 = vunpack.c.h.b16 %v9460
        %v9863 = vunpack.c.l.b16 %v9461
        %v9864 = vunpack.c.h.b16 %v9461
        %v9865 = vunpack.c.l.b16 %v9462
        %v9866 = vunpack.c.h.b16 %v9462
        %v9867 = vunpack.c.l.b16 %v9463
        %v9868 = vunpack.c.h.b16 %v9463
        %v9869 = vpack.c.b16 %v9617, %v9613
        %v9870 = vpack.c.b16 %v9618, %v9614
        %v9871 = vpack.c.b16 %v9619, %v9615
        %v9872 = vpack.c.b16 %v9620, %v9616
        %v9873 = vpack.c.b16 %v9625, %v9621
        %v9874 = vpack.c.b16 %v9626, %v9622
        %v9875 = vpack.c.b16 %v9627, %v9623
        %v9876 = vpack.c.b16 %v9628, %v9624
        %v9877 = vpack.c.b16 %v9633, %v9629
        %v9878 = vpack.c.b16 %v9634, %v9630
        %v9879 = vpack.c.b16 %v9635, %v9631
        %v9880 = vpack.c.b16 %v9636, %v9632
        %v9881 = vpack.c.b16 %v9641, %v9637
        %v9882 = vpack.c.b16 %v9642, %v9638
        %v9883 = vpack.c.b16 %v9643, %v9639
        %v9884 = vpack.c.b16 %v9644, %v9640
        %v9885 = vpack.c.b16 %v9649, %v9645
        %v9886 = vpack.c.b16 %v9650, %v9646
        %v9887 = vpack.c.b16 %v9651, %v9647
        %v9888 = vpack.c.b16 %v9652, %v9648
        %v9889 = vpack.c.b16 %v9657, %v9653
        %v9890 = vpack.c.b16 %v9658, %v9654
        %v9891 = vpack.c.b16 %v9659, %v9655
        %v9892 = vpack.c.b16 %v9660, %v9656
        %v9893 = vpack.c.b16 %v9665, %v9661
        %v9894 = vpack.c.b16 %v9666, %v9662
        %v9895 = vpack.c.b16 %v9667, %v9663
        %v9896 = vpack.c.b16 %v9668, %v9664
        %v9897 = vpack.c.b16 %v9673, %v9669
        %v9898 = vpack.c.b16 %v9674, %v9670
        %v9899 = vpack.c.b16 %v9675, %v9671
        %v9900 = vpack.c.b16 %v9676, %v9672
        %v9901 = vpack.c.b16 %v9681, %v9677
        %v9902 = vpack.c.b16 %v9682, %v9678
        %v9903 = vpack.c.b16 %v9683, %v9679
        %v9904 = vpack.c.b16 %v9684, %v9680
        %v9905 = vpack.c.b16 %v9689, %v9685
        %v9906 = vpack.c.b16 %v9690, %v9686
        %v9907 = vpack.c.b16 %v9691, %v9687
        %v9908 = vpack.c.b16 %v9692, %v9688
        %v9909 = vpack.c.b16 %v9697, %v9693
        %v9910 = vpack.c.b16 %v9698, %v9694
        %v9911 = vpack.c.b16 %v9699, %v9695
        %v9912 = vpack.c.b16 %v9700, %v9696
        %v9913 = vpack.c.b16 %v9705, %v9701
        %v9914 = vpack.c.b16 %v9706, %v9702
        %v9915 = vpack.c.b16 %v9707, %v9703
        %v9916 = vpack.c.b16 %v9708, %v9704
        %v9917 = vpack.c.b16 %v9713, %v9709
        %v9918 = vpack.c.b16 %v9714, %v9710
        %v9919 = vpack.c.b16 %v9715, %v9711
        %v9920 = vpack.c.b16 %v9716, %v9712
        %v9921 = vpack.c.b16 %v9721, %v9717
        %v9922 = vpack.c.b16 %v9722, %v9718
        %v9923 = vpack.c.b16 %v9723, %v9719
        %v9924 = vpack.c.b16 %v9724, %v9720
        %v9925 = vpack.c.b16 %v9729, %v9725
        %v9926 = vpack.c.b16 %v9730, %v9726
        %v9927 = vpack.c.b16 %v9731, %v9727
        %v9928 = vpack.c.b16 %v9732, %v9728
        %v9929 = vpack.c.b16 %v9737, %v9733
        %v9930 = vpack.c.b16 %v9738, %v9734
        %v9931 = vpack.c.b16 %v9739, %v9735
        %v9932 = vpack.c.b16 %v9740, %v9736
        %v9933 = vpack.c.b16 %v9745, %v9741
        %v9934 = vpack.c.b16 %v9746, %v9742
        %v9935 = vpack.c.b16 %v9747, %v9743
        %v9936 = vpack.c.b16 %v9748, %v9744
        %v9937 = vpack.c.b16 %v9753, %v9749
        %v9938 = vpack.c.b16 %v9754, %v9750
        %v9939 = vpack.c.b16 %v9755, %v9751
        %v9940 = vpack.c.b16 %v9756, %v9752
        %v9941 = vpack.c.b16 %v9761, %v9757
        %v9942 = vpack.c.b16 %v9762, %v9758
        %v9943 = vpack.c.b16 %v9763, %v9759
        %v9944 = vpack.c.b16 %v9764, %v9760
        %v9945 = vpack.c.b16 %v9769, %v9765
        %v9946 = vpack.c.b16 %v9770, %v9766
        %v9947 = vpack.c.b16 %v9771, %v9767
        %v9948 = vpack.c.b16 %v9772, %v9768
        %v9949 = vpack.c.b16 %v9777, %v9773
        %v9950 = vpack.c.b16 %v9778, %v9774
        %v9951 = vpack.c.b16 %v9779, %v9775
        %v9952 = vpack.c.b16 %v9780, %v9776
        %v9953 = vpack.c.b16 %v9785, %v9781
        %v9954 = vpack.c.b16 %v9786, %v9782
        %v9955 = vpack.c.b16 %v9787, %v9783
        %v9956 = vpack.c.b16 %v9788, %v9784
        %v9957 = vpack.c.b16 %v9793, %v9789
        %v9958 = vpack.c.b16 %v9794, %v9790
        %v9959 = vpack.c.b16 %v9795, %v9791
        %v9960 = vpack.c.b16 %v9796, %v9792
        %v9961 = vpack.c.b16 %v9801, %v9797
        %v9962 = vpack.c.b16 %v9802, %v9798
        %v9963 = vpack.c.b16 %v9803, %v9799
        %v9964 = vpack.c.b16 %v9804, %v9800
        %v9965 = vpack.c.b16 %v9809, %v9805
        %v9966 = vpack.c.b16 %v9810, %v9806
        %v9967 = vpack.c.b16 %v9811, %v9807
        %v9968 = vpack.c.b16 %v9812, %v9808
        %v9969 = vpack.c.b16 %v9817, %v9813
        %v9970 = vpack.c.b16 %v9818, %v9814
        %v9971 = vpack.c.b16 %v9819, %v9815
        %v9972 = vpack.c.b16 %v9820, %v9816
        %v9973 = vpack.c.b16 %v9825, %v9821
        %v9974 = vpack.c.b16 %v9826, %v9822
        %v9975 = vpack.c.b16 %v9827, %v9823
        %v9976 = vpack.c.b16 %v9828, %v9824
        %v9977 = vpack.c.b16 %v9833, %v9829
        %v9978 = vpack.c.b16 %v9834, %v9830
        %v9979 = vpack.c.b16 %v9835, %v9831
        %v9980 = vpack.c.b16 %v9836, %v9832
        %v9981 = vpack.c.b16 %v9841, %v9837
        %v9982 = vpack.c.b16 %v9842, %v9838
        %v9983 = vpack.c.b16 %v9843, %v9839
        %v9984 = vpack.c.b16 %v9844, %v9840
        %v9985 = vpack.c.b16 %v9849, %v9845
        %v9986 = vpack.c.b16 %v9850, %v9846
        %v9987 = vpack.c.b16 %v9851, %v9847
        %v9988 = vpack.c.b16 %v9852, %v9848
        %v9989 = vpack.c.b16 %v9857, %v9853
        %v9990 = vpack.c.b16 %v9858, %v9854
        %v9991 = vpack.c.b16 %v9859, %v9855
        %v9992 = vpack.c.b16 %v9860, %v9856
        %v9993 = vpack.c.b16 %v9865, %v9861
        %v9994 = vpack.c.b16 %v9866, %v9862
        %v9995 = vpack.c.b16 %v9867, %v9863
        %v9996 = vpack.c.b16 %v9868, %v9864
        %10125 = vmatprep.subr.bf16.mxu0 %v9870
        %10126 = vmatpush1.bf16.msra.mxu0 %v9869
        %10127 = vmatprep.subr.bf16.mxu0 %v9874
        %10128 = vmatpush1.bf16.msra.mxu0 %v9873
        %10129 = vmatprep.subr.bf16.mxu0 %v9878
        %10130 = vmatpush1.bf16.msra.mxu0 %v9877
        %10131 = vmatprep.subr.bf16.mxu0 %v9882
        %10132 = vmatpush1.bf16.msra.mxu0 %v9881
        %10133 = vmatprep.subr.bf16.mxu0 %v9886
        %10134 = vmatpush1.bf16.msra.mxu0 %v9885
        %10135 = vmatprep.subr.bf16.mxu0 %v9890
        %10136 = vmatpush1.bf16.msra.mxu0 %v9889
        %10137 = vmatprep.subr.bf16.mxu0 %v9894
        %10138 = vmatpush1.bf16.msra.mxu0 %v9893
        %10139 = vmatprep.subr.bf16.mxu0 %v9898
        %10140 = vmatpush1.bf16.msra.mxu0 %v9897
        %10141 = vmatprep.subr.bf16.mxu0 %v9902
        %10142 = vmatpush1.bf16.msra.mxu0 %v9901
        %10143 = vmatprep.subr.bf16.mxu0 %v9906
        %10144 = vmatpush1.bf16.msra.mxu0 %v9905
        %10145 = vmatprep.subr.bf16.mxu0 %v9910
        %10146 = vmatpush1.bf16.msra.mxu0 %v9909
        %10147 = vmatprep.subr.bf16.mxu0 %v9914
        %10148 = vmatpush1.bf16.msra.mxu0 %v9913
        %10149 = vmatprep.subr.bf16.mxu0 %v9918
        %10150 = vmatpush1.bf16.msra.mxu0 %v9917
        %10151 = vmatprep.subr.bf16.mxu0 %v9922
        %10152 = vmatpush1.bf16.msra.mxu0 %v9921
        %10153 = vmatprep.subr.bf16.mxu0 %v9926
        %10154 = vmatpush1.bf16.msra.mxu0 %v9925
        %10155 = vmatprep.subr.bf16.mxu0 %v9930
        %10156 = vmatpush1.bf16.msra.mxu0 %v9929
        %10157 = vmatprep.mubr.bf16.mxu0 %v9331
        %10158 = vmatmul.mubr.bf16.gmra.mrb[0].mxu0 %v9330
        %v10159 = vpop.f32.mrb[0].mxu0
        %v10160 = vadd.f32 %v9468, %v10159
        %v10161 = vpop.f32.mrb[0].mxu0
        %v10162 = vadd.f32 %v9472, %v10161
        %v10163 = vpop.f32.mrb[0].mxu0
        %v10164 = vpop.f32.mrb[0].mxu0
        %10165 = vdwg.mxu0
        %10166 = vmatprep.subr.bf16.mxu0 %v9934
        %10167 = vmatpush1.bf16.msra.mxu0 %v9933
        %10168 = vmatprep.subr.bf16.mxu0 %v9938
        %10169 = vmatpush1.bf16.msra.mxu0 %v9937
        %10170 = vmatprep.subr.bf16.mxu0 %v9942
        %10171 = vmatpush1.bf16.msra.mxu0 %v9941
        %10172 = vmatprep.subr.bf16.mxu0 %v9946
        %10173 = vmatpush1.bf16.msra.mxu0 %v9945
        %10174 = vmatprep.subr.bf16.mxu0 %v9950
        %10175 = vmatpush1.bf16.msra.mxu0 %v9949
        %10176 = vmatprep.subr.bf16.mxu0 %v9954
        %10177 = vmatpush1.bf16.msra.mxu0 %v9953
        %10178 = vmatprep.subr.bf16.mxu0 %v9958
        %10179 = vmatpush1.bf16.msra.mxu0 %v9957
        %10180 = vmatprep.subr.bf16.mxu0 %v9962
        %10181 = vmatpush1.bf16.msra.mxu0 %v9961
        %10182 = vmatprep.subr.bf16.mxu0 %v9966
        %10183 = vmatpush1.bf16.msra.mxu0 %v9965
        %10184 = vmatprep.subr.bf16.mxu0 %v9970
        %10185 = vmatpush1.bf16.msra.mxu0 %v9969
        %10186 = vmatprep.subr.bf16.mxu0 %v9974
        %10187 = vmatpush1.bf16.msra.mxu0 %v9973
        %10188 = vmatprep.subr.bf16.mxu0 %v9978
        %10189 = vmatpush1.bf16.msra.mxu0 %v9977
        %10190 = vmatprep.subr.bf16.mxu0 %v9982
        %10191 = vmatpush1.bf16.msra.mxu0 %v9981
        %10192 = vmatprep.subr.bf16.mxu0 %v9986
        %10193 = vmatpush1.bf16.msra.mxu0 %v9985
        %10194 = vmatprep.subr.bf16.mxu0 %v9990
        %10195 = vmatpush1.bf16.msra.mxu0 %v9989
        %10196 = vmatprep.subr.bf16.mxu0 %v9994
        %10197 = vmatpush1.bf16.msra.mxu0 %v9993
        %10198 = vmatprep.mubr.bf16.mxu0 %v9333
        %10199 = vmatmul.mubr.bf16.gmra.mrb[0].mxu0 %v9332
        %v10200 = vpop.f32.mrb[0].mxu0
        %v10201 = vadd.f32 %v10160, %v10200
        %v10202 = vpop.f32.mrb[0].mxu0
        %v10203 = vadd.f32 %v10162, %v10202
        %v10204 = vpop.f32.mrb[0].mxu0
        %v10205 = vpop.f32.mrb[0].mxu0
        %10206 = vdwg.mxu0
        %10207 = vmatprep.subr.bf16.mxu0 %v9872
        %10208 = vmatpush1.bf16.msra.mxu0 %v9871
        %10209 = vmatprep.subr.bf16.mxu0 %v9876
        %10210 = vmatpush1.bf16.msra.mxu0 %v9875
        %10211 = vmatprep.subr.bf16.mxu0 %v9880
        %10212 = vmatpush1.bf16.msra.mxu0 %v9879
        %10213 = vmatprep.subr.bf16.mxu0 %v9884
        %10214 = vmatpush1.bf16.msra.mxu0 %v9883
        %10215 = vmatprep.subr.bf16.mxu0 %v9888
        %10216 = vmatpush1.bf16.msra.mxu0 %v9887
        %10217 = vmatprep.subr.bf16.mxu0 %v9892
        %10218 = vmatpush1.bf16.msra.mxu0 %v9891
        %10219 = vmatprep.subr.bf16.mxu0 %v9896
        %10220 = vmatpush1.bf16.msra.mxu0 %v9895
        %10221 = vmatprep.subr.bf16.mxu0 %v9900
        %10222 = vmatpush1.bf16.msra.mxu0 %v9899
        %10223 = vmatprep.subr.bf16.mxu0 %v9904
        %10224 = vmatpush1.bf16.msra.mxu0 %v9903
        %10225 = vmatprep.subr.bf16.mxu0 %v9908
        %10226 = vmatpush1.bf16.msra.mxu0 %v9907
        %10227 = vmatprep.subr.bf16.mxu0 %v9912
        %10228 = vmatpush1.bf16.msra.mxu0 %v9911
        %10229 = vmatprep.subr.bf16.mxu0 %v9916
        %10230 = vmatpush1.bf16.msra.mxu0 %v9915
        %10231 = vmatprep.subr.bf16.mxu0 %v9920
        %10232 = vmatpush1.bf16.msra.mxu0 %v9919
        %10233 = vmatprep.subr.bf16.mxu0 %v9924
        %10234 = vmatpush1.bf16.msra.mxu0 %v9923
        %10235 = vmatprep.subr.bf16.mxu0 %v9928
        %10236 = vmatpush1.bf16.msra.mxu0 %v9927
        %10237 = vmatprep.subr.bf16.mxu0 %v9932
        %10238 = vmatpush1.bf16.msra.mxu0 %v9931
        %10239 = vmatprep.mubr.bf16.mxu0 %v9331
        %10240 = vmatmul.mubr.bf16.gmra.mrb[0].mxu0 %v9330
        %v10241 = vpop.f32.mrb[0].mxu0
        %v10242 = vadd.f32 %v9476, %v10241
        %v10243 = vpop.f32.mrb[0].mxu0
        %v10244 = vadd.f32 %v9480, %v10243
        %v10245 = vpop.f32.mrb[0].mxu0
        %v10246 = vpop.f32.mrb[0].mxu0
        %10247 = vdwg.mxu0
        %10248 = vmatprep.subr.bf16.mxu0 %v9936
        %10249 = vmatpush1.bf16.msra.mxu0 %v9935
        %10250 = vmatprep.subr.bf16.mxu0 %v9940
        %10251 = vmatpush1.bf16.msra.mxu0 %v9939
        %10252 = vmatprep.subr.bf16.mxu0 %v9944
        %10253 = vmatpush1.bf16.msra.mxu0 %v9943
        %10254 = vmatprep.subr.bf16.mxu0 %v9948
        %10255 = vmatpush1.bf16.msra.mxu0 %v9947
        %10256 = vmatprep.subr.bf16.mxu0 %v9952
        %10257 = vmatpush1.bf16.msra.mxu0 %v9951
        %10258 = vmatprep.subr.bf16.mxu0 %v9956
        %10259 = vmatpush1.bf16.msra.mxu0 %v9955
        %10260 = vmatprep.subr.bf16.mxu0 %v9960
        %10261 = vmatpush1.bf16.msra.mxu0 %v9959
        %10262 = vmatprep.subr.bf16.mxu0 %v9964
        %10263 = vmatpush1.bf16.msra.mxu0 %v9963
        %10264 = vmatprep.subr.bf16.mxu0 %v9968
        %10265 = vmatpush1.bf16.msra.mxu0 %v9967
        %10266 = vmatprep.subr.bf16.mxu0 %v9972
        %10267 = vmatpush1.bf16.msra.mxu0 %v9971
        %10268 = vmatprep.subr.bf16.mxu0 %v9976
        %10269 = vmatpush1.bf16.msra.mxu0 %v9975
        %10270 = vmatprep.subr.bf16.mxu0 %v9980
        %10271 = vmatpush1.bf16.msra.mxu0 %v9979
        %10272 = vmatprep.subr.bf16.mxu0 %v9984
        %10273 = vmatpush1.bf16.msra.mxu0 %v9983
        %10274 = vmatprep.subr.bf16.mxu0 %v9988
        %10275 = vmatpush1.bf16.msra.mxu0 %v9987
        %10276 = vmatprep.subr.bf16.mxu0 %v9992
        %10277 = vmatpush1.bf16.msra.mxu0 %v9991
        %10278 = vmatprep.subr.bf16.mxu0 %v9996
        %10279 = vmatpush1.bf16.msra.mxu0 %v9995
        %10280 = vmatprep.mubr.bf16.mxu0 %v9333
        %10281 = vmatmul.mubr.bf16.gmra.mrb[0].mxu0 %v9332
        %v10282 = vpop.f32.mrb[0].mxu0
        %v10283 = vadd.f32 %v10242, %v10282
        %v10284 = vpop.f32.mrb[0].mxu0
        %v10285 = vadd.f32 %v10244, %v10284
        %v10286 = vpop.f32.mrb[0].mxu0
        %v10287 = vpop.f32.mrb[0].mxu0
        %10288 = vdwg.mxu0
        %v10289 = vmax.f32 %v10201, 0.0
        %v10290 = vmax.f32 %v10203, 0.0
        %v10291 = vmax.f32 %v10283, 0.0
        %v10292 = vmax.f32 %v10285, 0.0
        %v10293 = vunpack.c.l.bf16 %v9330
        %v10294 = vunpack.c.l.bf16 %v9331
        %v10295 = vunpack.c.l.bf16 %v9332
        %v10296 = vunpack.c.l.bf16 %v9333
        %v10297 = vadd.f32 %v10289, %v10293
        %v10298 = vadd.f32 %v10290, %v10294
        %v10299 = vadd.f32 %v10291, %v10295
        %v10300 = vadd.f32 %v10292, %v10296
        %v10301 = vpack.c.bf16 %v10297, %v10297
        %v10302 = vpack.c.bf16 %v10298, %v10298
        %v10303 = vpack.c.bf16 %v10299, %v10299
        %v10304 = vpack.c.bf16 %v10300, %v10300
        %s10305 = scalar_lea.vmem [#allocation14], 5
        %v10306 = vld [vmem:[%s10305] ss:$8 sm:$0xf]
        %v10307 = vld [vmem:[#allocation11] sm:$0xff]
        %v10308 = vld [vmem:[#allocation11 + $0x8] sm:$0xff]
        %v10309 = vld [vmem:[#allocation11 + $0x10] sm:$0xff]
        %v10310 = vld [vmem:[#allocation11 + $0x18] sm:$0xff]
        %v10311 = vld [vmem:[#allocation11 + $0x20] sm:$0xff]
        %v10312 = vld [vmem:[#allocation11 + $0x28] sm:$0xff]
        %v10313 = vld [vmem:[#allocation11 + $0x30] sm:$0xff]
        %v10314 = vld [vmem:[#allocation11 + $0x38] sm:$0xff]
        %v10315 = vld [vmem:[#allocation11 + $0x40] sm:$0xff]
        %v10316 = vld [vmem:[#allocation11 + $0x48] sm:$0xff]
        %v10317 = vld [vmem:[#allocation11 + $0x50] sm:$0xff]
        %v10318 = vld [vmem:[#allocation11 + $0x58] sm:$0xff]
        %v10319 = vld [vmem:[#allocation11 + $0x60] sm:$0xff]
        %v10320 = vld [vmem:[#allocation11 + $0x68] sm:$0xff]
        %v10321 = vld [vmem:[#allocation11 + $0x70] sm:$0xff]
        %v10322 = vld [vmem:[#allocation11 + $0x78] sm:$0xff]
        %v10323 = vld [vmem:[#allocation11 + $0x80] sm:$0xff]
        %v10324 = vld [vmem:[#allocation11 + $0x88] sm:$0xff]
        %v10325 = vld [vmem:[#allocation11 + $0x90] sm:$0xff]
        %v10326 = vld [vmem:[#allocation11 + $0x98] sm:$0xff]
        %v10327 = vld [vmem:[#allocation11 + $0xa0] sm:$0xff]
        %v10328 = vld [vmem:[#allocation11 + $0xa8] sm:$0xff]
        %v10329 = vld [vmem:[#allocation11 + $0xb0] sm:$0xff]
        %v10330 = vld [vmem:[#allocation11 + $0xb8] sm:$0xff]
        %v10331 = vld [vmem:[#allocation11 + $0xc0] sm:$0xff]
        %v10332 = vld [vmem:[#allocation11 + $0xc8] sm:$0xff]
        %v10333 = vld [vmem:[#allocation11 + $0xd0] sm:$0xff]
        %v10334 = vld [vmem:[#allocation11 + $0xd8] sm:$0xff]
        %v10335 = vld [vmem:[#allocation11 + $0xe0] sm:$0xff]
        %v10336 = vld [vmem:[#allocation11 + $0xe8] sm:$0xff]
        %v10337 = vld [vmem:[#allocation11 + $0xf0] sm:$0xff]
        %v10338 = vld [vmem:[#allocation11 + $0xf8] sm:$0xff]
        %v10339 = vld [vmem:[#allocation11 + $0x100] sm:$0xff]
        %v10340 = vld [vmem:[#allocation11 + $0x108] sm:$0xff]
        %v10341 = vld [vmem:[#allocation11 + $0x110] sm:$0xff]
        %v10342 = vld [vmem:[#allocation11 + $0x118] sm:$0xff]
        %v10343 = vld [vmem:[#allocation11 + $0x120] sm:$0xff]
        %v10344 = vld [vmem:[#allocation11 + $0x128] sm:$0xff]
        %v10345 = vld [vmem:[#allocation11 + $0x130] sm:$0xff]
        %v10346 = vld [vmem:[#allocation11 + $0x138] sm:$0xff]
        %v10347 = vld [vmem:[#allocation11 + $0x140] sm:$0xff]
        %v10348 = vld [vmem:[#allocation11 + $0x148] sm:$0xff]
        %v10349 = vld [vmem:[#allocation11 + $0x150] sm:$0xff]
        %v10350 = vld [vmem:[#allocation11 + $0x158] sm:$0xff]
        %v10351 = vld [vmem:[#allocation11 + $0x160] sm:$0xff]
        %v10352 = vld [vmem:[#allocation11 + $0x168] sm:$0xff]
        %v10353 = vld [vmem:[#allocation11 + $0x170] sm:$0xff]
        %v10354 = vld [vmem:[#allocation11 + $0x178] sm:$0xff]
        %v10355 = vld [vmem:[#allocation11 + $0x180] sm:$0xff]
        %v10356 = vld [vmem:[#allocation11 + $0x188] sm:$0xff]
        %v10357 = vld [vmem:[#allocation11 + $0x190] sm:$0xff]
        %v10358 = vld [vmem:[#allocation11 + $0x198] sm:$0xff]
        %v10359 = vld [vmem:[#allocation11 + $0x1a0] sm:$0xff]
        %v10360 = vld [vmem:[#allocation11 + $0x1a8] sm:$0xff]
        %v10361 = vld [vmem:[#allocation11 + $0x1b0] sm:$0xff]
        %v10362 = vld [vmem:[#allocation11 + $0x1b8] sm:$0xff]
        %v10363 = vld [vmem:[#allocation11 + $0x1c0] sm:$0xff]
        %v10364 = vld [vmem:[#allocation11 + $0x1c8] sm:$0xff]
        %v10365 = vld [vmem:[#allocation11 + $0x1d0] sm:$0xff]
        %v10366 = vld [vmem:[#allocation11 + $0x1d8] sm:$0xff]
        %v10367 = vld [vmem:[#allocation11 + $0x1e0] sm:$0xff]
        %v10368 = vld [vmem:[#allocation11 + $0x1e8] sm:$0xff]
        %v10369 = vld [vmem:[#allocation11 + $0x1f0] sm:$0xff]
        %v10370 = vld [vmem:[#allocation11 + $0x1f8] sm:$0xff]
        %v10371 = vld [vmem:[#allocation11 + $0x200] sm:$0xff]
        %v10372 = vld [vmem:[#allocation11 + $0x208] sm:$0xff]
        %v10373 = vld [vmem:[#allocation11 + $0x210] sm:$0xff]
        %v10374 = vld [vmem:[#allocation11 + $0x218] sm:$0xff]
        %v10375 = vld [vmem:[#allocation11 + $0x220] sm:$0xff]
        %v10376 = vld [vmem:[#allocation11 + $0x228] sm:$0xff]
        %v10377 = vld [vmem:[#allocation11 + $0x230] sm:$0xff]
        %v10378 = vld [vmem:[#allocation11 + $0x238] sm:$0xff]
        %v10379 = vld [vmem:[#allocation11 + $0x240] sm:$0xff]
        %v10380 = vld [vmem:[#allocation11 + $0x248] sm:$0xff]
        %v10381 = vld [vmem:[#allocation11 + $0x250] sm:$0xff]
        %v10382 = vld [vmem:[#allocation11 + $0x258] sm:$0xff]
        %v10383 = vld [vmem:[#allocation11 + $0x260] sm:$0xff]
        %v10384 = vld [vmem:[#allocation11 + $0x268] sm:$0xff]
        %v10385 = vld [vmem:[#allocation11 + $0x270] sm:$0xff]
        %v10386 = vld [vmem:[#allocation11 + $0x278] sm:$0xff]
        %v10387 = vld [vmem:[#allocation11 + $0x280] sm:$0xff]
        %v10388 = vld [vmem:[#allocation11 + $0x288] sm:$0xff]
        %v10389 = vld [vmem:[#allocation11 + $0x290] sm:$0xff]
        %v10390 = vld [vmem:[#allocation11 + $0x298] sm:$0xff]
        %v10391 = vld [vmem:[#allocation11 + $0x2a0] sm:$0xff]
        %v10392 = vld [vmem:[#allocation11 + $0x2a8] sm:$0xff]
        %v10393 = vld [vmem:[#allocation11 + $0x2b0] sm:$0xff]
        %v10394 = vld [vmem:[#allocation11 + $0x2b8] sm:$0xff]
        %v10395 = vld [vmem:[#allocation11 + $0x2c0] sm:$0xff]
        %v10396 = vld [vmem:[#allocation11 + $0x2c8] sm:$0xff]
        %v10397 = vld [vmem:[#allocation11 + $0x2d0] sm:$0xff]
        %v10398 = vld [vmem:[#allocation11 + $0x2d8] sm:$0xff]
        %v10399 = vld [vmem:[#allocation11 + $0x2e0] sm:$0xff]
        %v10400 = vld [vmem:[#allocation11 + $0x2e8] sm:$0xff]
        %v10401 = vld [vmem:[#allocation11 + $0x2f0] sm:$0xff]
        %v10402 = vld [vmem:[#allocation11 + $0x2f8] sm:$0xff]
        %v10403 = vld [vmem:[#allocation11 + $0x300] sm:$0xff]
        %v10404 = vld [vmem:[#allocation11 + $0x308] sm:$0xff]
        %v10405 = vld [vmem:[#allocation11 + $0x310] sm:$0xff]
        %v10406 = vld [vmem:[#allocation11 + $0x318] sm:$0xff]
        %v10407 = vld [vmem:[#allocation11 + $0x320] sm:$0xff]
        %v10408 = vld [vmem:[#allocation11 + $0x328] sm:$0xff]
        %v10409 = vld [vmem:[#allocation11 + $0x330] sm:$0xff]
        %v10410 = vld [vmem:[#allocation11 + $0x338] sm:$0xff]
        %v10411 = vld [vmem:[#allocation11 + $0x340] sm:$0xff]
        %v10412 = vld [vmem:[#allocation11 + $0x348] sm:$0xff]
        %v10413 = vld [vmem:[#allocation11 + $0x350] sm:$0xff]
        %v10414 = vld [vmem:[#allocation11 + $0x358] sm:$0xff]
        %v10415 = vld [vmem:[#allocation11 + $0x360] sm:$0xff]
        %v10416 = vld [vmem:[#allocation11 + $0x368] sm:$0xff]
        %v10417 = vld [vmem:[#allocation11 + $0x370] sm:$0xff]
        %v10418 = vld [vmem:[#allocation11 + $0x378] sm:$0xff]
        %v10419 = vld [vmem:[#allocation11 + $0x380] sm:$0xff]
        %v10420 = vld [vmem:[#allocation11 + $0x388] sm:$0xff]
        %v10421 = vld [vmem:[#allocation11 + $0x390] sm:$0xff]
        %v10422 = vld [vmem:[#allocation11 + $0x398] sm:$0xff]
        %v10423 = vld [vmem:[#allocation11 + $0x3a0] sm:$0xff]
        %v10424 = vld [vmem:[#allocation11 + $0x3a8] sm:$0xff]
        %v10425 = vld [vmem:[#allocation11 + $0x3b0] sm:$0xff]
        %v10426 = vld [vmem:[#allocation11 + $0x3b8] sm:$0xff]
        %v10427 = vld [vmem:[#allocation11 + $0x3c0] sm:$0xff]
        %v10428 = vld [vmem:[#allocation11 + $0x3c8] sm:$0xff]
        %v10429 = vld [vmem:[#allocation11 + $0x3d0] sm:$0xff]
        %v10430 = vld [vmem:[#allocation11 + $0x3d8] sm:$0xff]
        %v10431 = vld [vmem:[#allocation11 + $0x3e0] sm:$0xff]
        %v10432 = vld [vmem:[#allocation11 + $0x3e8] sm:$0xff]
        %v10433 = vld [vmem:[#allocation11 + $0x3f0] sm:$0xff]
        %v10434 = vld [vmem:[#allocation11 + $0x3f8] sm:$0xff]
        %v10436 = vlaneseq
        %v10437 = vshrl.u32 %v10436, 7
        %v10438 = vsub.s32 0, %v10437
        %v10439 = vrot.slane %v10306, %v10438
        %v10440 = vlaneseq
        %v10441 = vshrl.u32 %v10440, 7
        %v10442 = vsub.s32 1, %v10441
        %v10443 = vrot.slane %v10306, %v10442
        %v10444 = vlaneseq
        %v10445 = vshrl.u32 %v10444, 7
        %v10446 = vsub.s32 2, %v10445
        %v10447 = vrot.slane %v10306, %v10446
        %v10448 = vlaneseq
        %v10449 = vshrl.u32 %v10448, 7
        %v10450 = vsub.s32 3, %v10449
        %v10451 = vrot.slane %v10306, %v10450
        %v10584 = vunpack.c.l.b16 %v10307
        %v10585 = vunpack.c.h.b16 %v10307
        %v10586 = vunpack.c.l.b16 %v10308
        %v10587 = vunpack.c.h.b16 %v10308
        %v10588 = vunpack.c.l.b16 %v10309
        %v10589 = vunpack.c.h.b16 %v10309
        %v10590 = vunpack.c.l.b16 %v10310
        %v10591 = vunpack.c.h.b16 %v10310
        %v10592 = vunpack.c.l.b16 %v10311
        %v10593 = vunpack.c.h.b16 %v10311
        %v10594 = vunpack.c.l.b16 %v10312
        %v10595 = vunpack.c.h.b16 %v10312
        %v10596 = vunpack.c.l.b16 %v10313
        %v10597 = vunpack.c.h.b16 %v10313
        %v10598 = vunpack.c.l.b16 %v10314
        %v10599 = vunpack.c.h.b16 %v10314
        %v10600 = vunpack.c.l.b16 %v10315
        %v10601 = vunpack.c.h.b16 %v10315
        %v10602 = vunpack.c.l.b16 %v10316
        %v10603 = vunpack.c.h.b16 %v10316
        %v10604 = vunpack.c.l.b16 %v10317
        %v10605 = vunpack.c.h.b16 %v10317
        %v10606 = vunpack.c.l.b16 %v10318
        %v10607 = vunpack.c.h.b16 %v10318
        %v10608 = vunpack.c.l.b16 %v10319
        %v10609 = vunpack.c.h.b16 %v10319
        %v10610 = vunpack.c.l.b16 %v10320
        %v10611 = vunpack.c.h.b16 %v10320
        %v10612 = vunpack.c.l.b16 %v10321
        %v10613 = vunpack.c.h.b16 %v10321
        %v10614 = vunpack.c.l.b16 %v10322
        %v10615 = vunpack.c.h.b16 %v10322
        %v10616 = vunpack.c.l.b16 %v10323
        %v10617 = vunpack.c.h.b16 %v10323
        %v10618 = vunpack.c.l.b16 %v10324
        %v10619 = vunpack.c.h.b16 %v10324
        %v10620 = vunpack.c.l.b16 %v10325
        %v10621 = vunpack.c.h.b16 %v10325
        %v10622 = vunpack.c.l.b16 %v10326
        %v10623 = vunpack.c.h.b16 %v10326
        %v10624 = vunpack.c.l.b16 %v10327
        %v10625 = vunpack.c.h.b16 %v10327
        %v10626 = vunpack.c.l.b16 %v10328
        %v10627 = vunpack.c.h.b16 %v10328
        %v10628 = vunpack.c.l.b16 %v10329
        %v10629 = vunpack.c.h.b16 %v10329
        %v10630 = vunpack.c.l.b16 %v10330
        %v10631 = vunpack.c.h.b16 %v10330
        %v10632 = vunpack.c.l.b16 %v10331
        %v10633 = vunpack.c.h.b16 %v10331
        %v10634 = vunpack.c.l.b16 %v10332
        %v10635 = vunpack.c.h.b16 %v10332
        %v10636 = vunpack.c.l.b16 %v10333
        %v10637 = vunpack.c.h.b16 %v10333
        %v10638 = vunpack.c.l.b16 %v10334
        %v10639 = vunpack.c.h.b16 %v10334
        %v10640 = vunpack.c.l.b16 %v10335
        %v10641 = vunpack.c.h.b16 %v10335
        %v10642 = vunpack.c.l.b16 %v10336
        %v10643 = vunpack.c.h.b16 %v10336
        %v10644 = vunpack.c.l.b16 %v10337
        %v10645 = vunpack.c.h.b16 %v10337
        %v10646 = vunpack.c.l.b16 %v10338
        %v10647 = vunpack.c.h.b16 %v10338
        %v10648 = vunpack.c.l.b16 %v10339
        %v10649 = vunpack.c.h.b16 %v10339
        %v10650 = vunpack.c.l.b16 %v10340
        %v10651 = vunpack.c.h.b16 %v10340
        %v10652 = vunpack.c.l.b16 %v10341
        %v10653 = vunpack.c.h.b16 %v10341
        %v10654 = vunpack.c.l.b16 %v10342
        %v10655 = vunpack.c.h.b16 %v10342
        %v10656 = vunpack.c.l.b16 %v10343
        %v10657 = vunpack.c.h.b16 %v10343
        %v10658 = vunpack.c.l.b16 %v10344
        %v10659 = vunpack.c.h.b16 %v10344
        %v10660 = vunpack.c.l.b16 %v10345
        %v10661 = vunpack.c.h.b16 %v10345
        %v10662 = vunpack.c.l.b16 %v10346
        %v10663 = vunpack.c.h.b16 %v10346
        %v10664 = vunpack.c.l.b16 %v10347
        %v10665 = vunpack.c.h.b16 %v10347
        %v10666 = vunpack.c.l.b16 %v10348
        %v10667 = vunpack.c.h.b16 %v10348
        %v10668 = vunpack.c.l.b16 %v10349
        %v10669 = vunpack.c.h.b16 %v10349
        %v10670 = vunpack.c.l.b16 %v10350
        %v10671 = vunpack.c.h.b16 %v10350
        %v10672 = vunpack.c.l.b16 %v10351
        %v10673 = vunpack.c.h.b16 %v10351
        %v10674 = vunpack.c.l.b16 %v10352
        %v10675 = vunpack.c.h.b16 %v10352
        %v10676 = vunpack.c.l.b16 %v10353
        %v10677 = vunpack.c.h.b16 %v10353
        %v10678 = vunpack.c.l.b16 %v10354
        %v10679 = vunpack.c.h.b16 %v10354
        %v10680 = vunpack.c.l.b16 %v10355
        %v10681 = vunpack.c.h.b16 %v10355
        %v10682 = vunpack.c.l.b16 %v10356
        %v10683 = vunpack.c.h.b16 %v10356
        %v10684 = vunpack.c.l.b16 %v10357
        %v10685 = vunpack.c.h.b16 %v10357
        %v10686 = vunpack.c.l.b16 %v10358
        %v10687 = vunpack.c.h.b16 %v10358
        %v10688 = vunpack.c.l.b16 %v10359
        %v10689 = vunpack.c.h.b16 %v10359
        %v10690 = vunpack.c.l.b16 %v10360
        %v10691 = vunpack.c.h.b16 %v10360
        %v10692 = vunpack.c.l.b16 %v10361
        %v10693 = vunpack.c.h.b16 %v10361
        %v10694 = vunpack.c.l.b16 %v10362
        %v10695 = vunpack.c.h.b16 %v10362
        %v10696 = vunpack.c.l.b16 %v10363
        %v10697 = vunpack.c.h.b16 %v10363
        %v10698 = vunpack.c.l.b16 %v10364
        %v10699 = vunpack.c.h.b16 %v10364
        %v10700 = vunpack.c.l.b16 %v10365
        %v10701 = vunpack.c.h.b16 %v10365
        %v10702 = vunpack.c.l.b16 %v10366
        %v10703 = vunpack.c.h.b16 %v10366
        %v10704 = vunpack.c.l.b16 %v10367
        %v10705 = vunpack.c.h.b16 %v10367
        %v10706 = vunpack.c.l.b16 %v10368
        %v10707 = vunpack.c.h.b16 %v10368
        %v10708 = vunpack.c.l.b16 %v10369
        %v10709 = vunpack.c.h.b16 %v10369
        %v10710 = vunpack.c.l.b16 %v10370
        %v10711 = vunpack.c.h.b16 %v10370
        %v10712 = vunpack.c.l.b16 %v10371
        %v10713 = vunpack.c.h.b16 %v10371
        %v10714 = vunpack.c.l.b16 %v10372
        %v10715 = vunpack.c.h.b16 %v10372
        %v10716 = vunpack.c.l.b16 %v10373
        %v10717 = vunpack.c.h.b16 %v10373
        %v10718 = vunpack.c.l.b16 %v10374
        %v10719 = vunpack.c.h.b16 %v10374
        %v10720 = vunpack.c.l.b16 %v10375
        %v10721 = vunpack.c.h.b16 %v10375
        %v10722 = vunpack.c.l.b16 %v10376
        %v10723 = vunpack.c.h.b16 %v10376
        %v10724 = vunpack.c.l.b16 %v10377
        %v10725 = vunpack.c.h.b16 %v10377
        %v10726 = vunpack.c.l.b16 %v10378
        %v10727 = vunpack.c.h.b16 %v10378
        %v10728 = vunpack.c.l.b16 %v10379
        %v10729 = vunpack.c.h.b16 %v10379
        %v10730 = vunpack.c.l.b16 %v10380
        %v10731 = vunpack.c.h.b16 %v10380
        %v10732 = vunpack.c.l.b16 %v10381
        %v10733 = vunpack.c.h.b16 %v10381
        %v10734 = vunpack.c.l.b16 %v10382
        %v10735 = vunpack.c.h.b16 %v10382
        %v10736 = vunpack.c.l.b16 %v10383
        %v10737 = vunpack.c.h.b16 %v10383
        %v10738 = vunpack.c.l.b16 %v10384
        %v10739 = vunpack.c.h.b16 %v10384
        %v10740 = vunpack.c.l.b16 %v10385
        %v10741 = vunpack.c.h.b16 %v10385
        %v10742 = vunpack.c.l.b16 %v10386
        %v10743 = vunpack.c.h.b16 %v10386
        %v10744 = vunpack.c.l.b16 %v10387
        %v10745 = vunpack.c.h.b16 %v10387
        %v10746 = vunpack.c.l.b16 %v10388
        %v10747 = vunpack.c.h.b16 %v10388
        %v10748 = vunpack.c.l.b16 %v10389
        %v10749 = vunpack.c.h.b16 %v10389
        %v10750 = vunpack.c.l.b16 %v10390
        %v10751 = vunpack.c.h.b16 %v10390
        %v10752 = vunpack.c.l.b16 %v10391
        %v10753 = vunpack.c.h.b16 %v10391
        %v10754 = vunpack.c.l.b16 %v10392
        %v10755 = vunpack.c.h.b16 %v10392
        %v10756 = vunpack.c.l.b16 %v10393
        %v10757 = vunpack.c.h.b16 %v10393
        %v10758 = vunpack.c.l.b16 %v10394
        %v10759 = vunpack.c.h.b16 %v10394
        %v10760 = vunpack.c.l.b16 %v10395
        %v10761 = vunpack.c.h.b16 %v10395
        %v10762 = vunpack.c.l.b16 %v10396
        %v10763 = vunpack.c.h.b16 %v10396
        %v10764 = vunpack.c.l.b16 %v10397
        %v10765 = vunpack.c.h.b16 %v10397
        %v10766 = vunpack.c.l.b16 %v10398
        %v10767 = vunpack.c.h.b16 %v10398
        %v10768 = vunpack.c.l.b16 %v10399
        %v10769 = vunpack.c.h.b16 %v10399
        %v10770 = vunpack.c.l.b16 %v10400
        %v10771 = vunpack.c.h.b16 %v10400
        %v10772 = vunpack.c.l.b16 %v10401
        %v10773 = vunpack.c.h.b16 %v10401
        %v10774 = vunpack.c.l.b16 %v10402
        %v10775 = vunpack.c.h.b16 %v10402
        %v10776 = vunpack.c.l.b16 %v10403
        %v10777 = vunpack.c.h.b16 %v10403
        %v10778 = vunpack.c.l.b16 %v10404
        %v10779 = vunpack.c.h.b16 %v10404
        %v10780 = vunpack.c.l.b16 %v10405
        %v10781 = vunpack.c.h.b16 %v10405
        %v10782 = vunpack.c.l.b16 %v10406
        %v10783 = vunpack.c.h.b16 %v10406
        %v10784 = vunpack.c.l.b16 %v10407
        %v10785 = vunpack.c.h.b16 %v10407
        %v10786 = vunpack.c.l.b16 %v10408
        %v10787 = vunpack.c.h.b16 %v10408
        %v10788 = vunpack.c.l.b16 %v10409
        %v10789 = vunpack.c.h.b16 %v10409
        %v10790 = vunpack.c.l.b16 %v10410
        %v10791 = vunpack.c.h.b16 %v10410
        %v10792 = vunpack.c.l.b16 %v10411
        %v10793 = vunpack.c.h.b16 %v10411
        %v10794 = vunpack.c.l.b16 %v10412
        %v10795 = vunpack.c.h.b16 %v10412
        %v10796 = vunpack.c.l.b16 %v10413
        %v10797 = vunpack.c.h.b16 %v10413
        %v10798 = vunpack.c.l.b16 %v10414
        %v10799 = vunpack.c.h.b16 %v10414
        %v10800 = vunpack.c.l.b16 %v10415
        %v10801 = vunpack.c.h.b16 %v10415
        %v10802 = vunpack.c.l.b16 %v10416
        %v10803 = vunpack.c.h.b16 %v10416
        %v10804 = vunpack.c.l.b16 %v10417
        %v10805 = vunpack.c.h.b16 %v10417
        %v10806 = vunpack.c.l.b16 %v10418
        %v10807 = vunpack.c.h.b16 %v10418
        %v10808 = vunpack.c.l.b16 %v10419
        %v10809 = vunpack.c.h.b16 %v10419
        %v10810 = vunpack.c.l.b16 %v10420
        %v10811 = vunpack.c.h.b16 %v10420
        %v10812 = vunpack.c.l.b16 %v10421
        %v10813 = vunpack.c.h.b16 %v10421
        %v10814 = vunpack.c.l.b16 %v10422
        %v10815 = vunpack.c.h.b16 %v10422
        %v10816 = vunpack.c.l.b16 %v10423
        %v10817 = vunpack.c.h.b16 %v10423
        %v10818 = vunpack.c.l.b16 %v10424
        %v10819 = vunpack.c.h.b16 %v10424
        %v10820 = vunpack.c.l.b16 %v10425
        %v10821 = vunpack.c.h.b16 %v10425
        %v10822 = vunpack.c.l.b16 %v10426
        %v10823 = vunpack.c.h.b16 %v10426
        %v10824 = vunpack.c.l.b16 %v10427
        %v10825 = vunpack.c.h.b16 %v10427
        %v10826 = vunpack.c.l.b16 %v10428
        %v10827 = vunpack.c.h.b16 %v10428
        %v10828 = vunpack.c.l.b16 %v10429
        %v10829 = vunpack.c.h.b16 %v10429
        %v10830 = vunpack.c.l.b16 %v10430
        %v10831 = vunpack.c.h.b16 %v10430
        %v10832 = vunpack.c.l.b16 %v10431
        %v10833 = vunpack.c.h.b16 %v10431
        %v10834 = vunpack.c.l.b16 %v10432
        %v10835 = vunpack.c.h.b16 %v10432
        %v10836 = vunpack.c.l.b16 %v10433
        %v10837 = vunpack.c.h.b16 %v10433
        %v10838 = vunpack.c.l.b16 %v10434
        %v10839 = vunpack.c.h.b16 %v10434
        %v10840 = vpack.c.b16 %v10588, %v10584
        %v10841 = vpack.c.b16 %v10589, %v10585
        %v10842 = vpack.c.b16 %v10590, %v10586
        %v10843 = vpack.c.b16 %v10591, %v10587
        %v10844 = vpack.c.b16 %v10596, %v10592
        %v10845 = vpack.c.b16 %v10597, %v10593
        %v10846 = vpack.c.b16 %v10598, %v10594
        %v10847 = vpack.c.b16 %v10599, %v10595
        %v10848 = vpack.c.b16 %v10604, %v10600
        %v10849 = vpack.c.b16 %v10605, %v10601
        %v10850 = vpack.c.b16 %v10606, %v10602
        %v10851 = vpack.c.b16 %v10607, %v10603
        %v10852 = vpack.c.b16 %v10612, %v10608
        %v10853 = vpack.c.b16 %v10613, %v10609
        %v10854 = vpack.c.b16 %v10614, %v10610
        %v10855 = vpack.c.b16 %v10615, %v10611
        %v10856 = vpack.c.b16 %v10620, %v10616
        %v10857 = vpack.c.b16 %v10621, %v10617
        %v10858 = vpack.c.b16 %v10622, %v10618
        %v10859 = vpack.c.b16 %v10623, %v10619
        %v10860 = vpack.c.b16 %v10628, %v10624
        %v10861 = vpack.c.b16 %v10629, %v10625
        %v10862 = vpack.c.b16 %v10630, %v10626
        %v10863 = vpack.c.b16 %v10631, %v10627
        %v10864 = vpack.c.b16 %v10636, %v10632
        %v10865 = vpack.c.b16 %v10637, %v10633
        %v10866 = vpack.c.b16 %v10638, %v10634
        %v10867 = vpack.c.b16 %v10639, %v10635
        %v10868 = vpack.c.b16 %v10644, %v10640
        %v10869 = vpack.c.b16 %v10645, %v10641
        %v10870 = vpack.c.b16 %v10646, %v10642
        %v10871 = vpack.c.b16 %v10647, %v10643
        %v10872 = vpack.c.b16 %v10652, %v10648
        %v10873 = vpack.c.b16 %v10653, %v10649
        %v10874 = vpack.c.b16 %v10654, %v10650
        %v10875 = vpack.c.b16 %v10655, %v10651
        %v10876 = vpack.c.b16 %v10660, %v10656
        %v10877 = vpack.c.b16 %v10661, %v10657
        %v10878 = vpack.c.b16 %v10662, %v10658
        %v10879 = vpack.c.b16 %v10663, %v10659
        %v10880 = vpack.c.b16 %v10668, %v10664
        %v10881 = vpack.c.b16 %v10669, %v10665
        %v10882 = vpack.c.b16 %v10670, %v10666
        %v10883 = vpack.c.b16 %v10671, %v10667
        %v10884 = vpack.c.b16 %v10676, %v10672
        %v10885 = vpack.c.b16 %v10677, %v10673
        %v10886 = vpack.c.b16 %v10678, %v10674
        %v10887 = vpack.c.b16 %v10679, %v10675
        %v10888 = vpack.c.b16 %v10684, %v10680
        %v10889 = vpack.c.b16 %v10685, %v10681
        %v10890 = vpack.c.b16 %v10686, %v10682
        %v10891 = vpack.c.b16 %v10687, %v10683
        %v10892 = vpack.c.b16 %v10692, %v10688
        %v10893 = vpack.c.b16 %v10693, %v10689
        %v10894 = vpack.c.b16 %v10694, %v10690
        %v10895 = vpack.c.b16 %v10695, %v10691
        %v10896 = vpack.c.b16 %v10700, %v10696
        %v10897 = vpack.c.b16 %v10701, %v10697
        %v10898 = vpack.c.b16 %v10702, %v10698
        %v10899 = vpack.c.b16 %v10703, %v10699
        %v10900 = vpack.c.b16 %v10708, %v10704
        %v10901 = vpack.c.b16 %v10709, %v10705
        %v10902 = vpack.c.b16 %v10710, %v10706
        %v10903 = vpack.c.b16 %v10711, %v10707
        %v10904 = vpack.c.b16 %v10716, %v10712
        %v10905 = vpack.c.b16 %v10717, %v10713
        %v10906 = vpack.c.b16 %v10718, %v10714
        %v10907 = vpack.c.b16 %v10719, %v10715
        %v10908 = vpack.c.b16 %v10724, %v10720
        %v10909 = vpack.c.b16 %v10725, %v10721
        %v10910 = vpack.c.b16 %v10726, %v10722
        %v10911 = vpack.c.b16 %v10727, %v10723
        %v10912 = vpack.c.b16 %v10732, %v10728
        %v10913 = vpack.c.b16 %v10733, %v10729
        %v10914 = vpack.c.b16 %v10734, %v10730
        %v10915 = vpack.c.b16 %v10735, %v10731
        %v10916 = vpack.c.b16 %v10740, %v10736
        %v10917 = vpack.c.b16 %v10741, %v10737
        %v10918 = vpack.c.b16 %v10742, %v10738
        %v10919 = vpack.c.b16 %v10743, %v10739
        %v10920 = vpack.c.b16 %v10748, %v10744
        %v10921 = vpack.c.b16 %v10749, %v10745
        %v10922 = vpack.c.b16 %v10750, %v10746
        %v10923 = vpack.c.b16 %v10751, %v10747
        %v10924 = vpack.c.b16 %v10756, %v10752
        %v10925 = vpack.c.b16 %v10757, %v10753
        %v10926 = vpack.c.b16 %v10758, %v10754
        %v10927 = vpack.c.b16 %v10759, %v10755
        %v10928 = vpack.c.b16 %v10764, %v10760
        %v10929 = vpack.c.b16 %v10765, %v10761
        %v10930 = vpack.c.b16 %v10766, %v10762
        %v10931 = vpack.c.b16 %v10767, %v10763
        %v10932 = vpack.c.b16 %v10772, %v10768
        %v10933 = vpack.c.b16 %v10773, %v10769
        %v10934 = vpack.c.b16 %v10774, %v10770
        %v10935 = vpack.c.b16 %v10775, %v10771
        %v10936 = vpack.c.b16 %v10780, %v10776
        %v10937 = vpack.c.b16 %v10781, %v10777
        %v10938 = vpack.c.b16 %v10782, %v10778
        %v10939 = vpack.c.b16 %v10783, %v10779
        %v10940 = vpack.c.b16 %v10788, %v10784
        %v10941 = vpack.c.b16 %v10789, %v10785
        %v10942 = vpack.c.b16 %v10790, %v10786
        %v10943 = vpack.c.b16 %v10791, %v10787
        %v10944 = vpack.c.b16 %v10796, %v10792
        %v10945 = vpack.c.b16 %v10797, %v10793
        %v10946 = vpack.c.b16 %v10798, %v10794
        %v10947 = vpack.c.b16 %v10799, %v10795
        %v10948 = vpack.c.b16 %v10804, %v10800
        %v10949 = vpack.c.b16 %v10805, %v10801
        %v10950 = vpack.c.b16 %v10806, %v10802
        %v10951 = vpack.c.b16 %v10807, %v10803
        %v10952 = vpack.c.b16 %v10812, %v10808
        %v10953 = vpack.c.b16 %v10813, %v10809
        %v10954 = vpack.c.b16 %v10814, %v10810
        %v10955 = vpack.c.b16 %v10815, %v10811
        %v10956 = vpack.c.b16 %v10820, %v10816
        %v10957 = vpack.c.b16 %v10821, %v10817
        %v10958 = vpack.c.b16 %v10822, %v10818
        %v10959 = vpack.c.b16 %v10823, %v10819
        %v10960 = vpack.c.b16 %v10828, %v10824
        %v10961 = vpack.c.b16 %v10829, %v10825
        %v10962 = vpack.c.b16 %v10830, %v10826
        %v10963 = vpack.c.b16 %v10831, %v10827
        %v10964 = vpack.c.b16 %v10836, %v10832
        %v10965 = vpack.c.b16 %v10837, %v10833
        %v10966 = vpack.c.b16 %v10838, %v10834
        %v10967 = vpack.c.b16 %v10839, %v10835
        %11096 = vmatprep.subr.bf16.mxu0 %v10841
        %11097 = vmatpush1.bf16.msra.mxu0 %v10840
        %11098 = vmatprep.subr.bf16.mxu0 %v10845
        %11099 = vmatpush1.bf16.msra.mxu0 %v10844
        %11100 = vmatprep.subr.bf16.mxu0 %v10849
        %11101 = vmatpush1.bf16.msra.mxu0 %v10848
        %11102 = vmatprep.subr.bf16.mxu0 %v10853
        %11103 = vmatpush1.bf16.msra.mxu0 %v10852
        %11104 = vmatprep.subr.bf16.mxu0 %v10857
        %11105 = vmatpush1.bf16.msra.mxu0 %v10856
        %11106 = vmatprep.subr.bf16.mxu0 %v10861
        %11107 = vmatpush1.bf16.msra.mxu0 %v10860
        %11108 = vmatprep.subr.bf16.mxu0 %v10865
        %11109 = vmatpush1.bf16.msra.mxu0 %v10864
        %11110 = vmatprep.subr.bf16.mxu0 %v10869
        %11111 = vmatpush1.bf16.msra.mxu0 %v10868
        %11112 = vmatprep.subr.bf16.mxu0 %v10873
        %11113 = vmatpush1.bf16.msra.mxu0 %v10872
        %11114 = vmatprep.subr.bf16.mxu0 %v10877
        %11115 = vmatpush1.bf16.msra.mxu0 %v10876
        %11116 = vmatprep.subr.bf16.mxu0 %v10881
        %11117 = vmatpush1.bf16.msra.mxu0 %v10880
        %11118 = vmatprep.subr.bf16.mxu0 %v10885
        %11119 = vmatpush1.bf16.msra.mxu0 %v10884
        %11120 = vmatprep.subr.bf16.mxu0 %v10889
        %11121 = vmatpush1.bf16.msra.mxu0 %v10888
        %11122 = vmatprep.subr.bf16.mxu0 %v10893
        %11123 = vmatpush1.bf16.msra.mxu0 %v10892
        %11124 = vmatprep.subr.bf16.mxu0 %v10897
        %11125 = vmatpush1.bf16.msra.mxu0 %v10896
        %11126 = vmatprep.subr.bf16.mxu0 %v10901
        %11127 = vmatpush1.bf16.msra.mxu0 %v10900
        %11128 = vmatprep.mubr.bf16.mxu0 %v10302
        %11129 = vmatmul.mubr.bf16.gmra.mrb[0].mxu0 %v10301
        %v11130 = vpop.f32.mrb[0].mxu0
        %v11131 = vadd.f32 %v10439, %v11130
        %v11132 = vpop.f32.mrb[0].mxu0
        %v11133 = vadd.f32 %v10443, %v11132
        %v11134 = vpop.f32.mrb[0].mxu0
        %v11135 = vpop.f32.mrb[0].mxu0
        %11136 = vdwg.mxu0
        %11137 = vmatprep.subr.bf16.mxu0 %v10905
        %11138 = vmatpush1.bf16.msra.mxu0 %v10904
        %11139 = vmatprep.subr.bf16.mxu0 %v10909
        %11140 = vmatpush1.bf16.msra.mxu0 %v10908
        %11141 = vmatprep.subr.bf16.mxu0 %v10913
        %11142 = vmatpush1.bf16.msra.mxu0 %v10912
        %11143 = vmatprep.subr.bf16.mxu0 %v10917
        %11144 = vmatpush1.bf16.msra.mxu0 %v10916
        %11145 = vmatprep.subr.bf16.mxu0 %v10921
        %11146 = vmatpush1.bf16.msra.mxu0 %v10920
        %11147 = vmatprep.subr.bf16.mxu0 %v10925
        %11148 = vmatpush1.bf16.msra.mxu0 %v10924
        %11149 = vmatprep.subr.bf16.mxu0 %v10929
        %11150 = vmatpush1.bf16.msra.mxu0 %v10928
        %11151 = vmatprep.subr.bf16.mxu0 %v10933
        %11152 = vmatpush1.bf16.msra.mxu0 %v10932
        %11153 = vmatprep.subr.bf16.mxu0 %v10937
        %11154 = vmatpush1.bf16.msra.mxu0 %v10936
        %11155 = vmatprep.subr.bf16.mxu0 %v10941
        %11156 = vmatpush1.bf16.msra.mxu0 %v10940
        %11157 = vmatprep.subr.bf16.mxu0 %v10945
        %11158 = vmatpush1.bf16.msra.mxu0 %v10944
        %11159 = vmatprep.subr.bf16.mxu0 %v10949
        %11160 = vmatpush1.bf16.msra.mxu0 %v10948
        %11161 = vmatprep.subr.bf16.mxu0 %v10953
        %11162 = vmatpush1.bf16.msra.mxu0 %v10952
        %11163 = vmatprep.subr.bf16.mxu0 %v10957
        %11164 = vmatpush1.bf16.msra.mxu0 %v10956
        %11165 = vmatprep.subr.bf16.mxu0 %v10961
        %11166 = vmatpush1.bf16.msra.mxu0 %v10960
        %11167 = vmatprep.subr.bf16.mxu0 %v10965
        %11168 = vmatpush1.bf16.msra.mxu0 %v10964
        %11169 = vmatprep.mubr.bf16.mxu0 %v10304
        %11170 = vmatmul.mubr.bf16.gmra.mrb[0].mxu0 %v10303
        %v11171 = vpop.f32.mrb[0].mxu0
        %v11172 = vadd.f32 %v11131, %v11171
        %v11173 = vpop.f32.mrb[0].mxu0
        %v11174 = vadd.f32 %v11133, %v11173
        %v11175 = vpop.f32.mrb[0].mxu0
        %v11176 = vpop.f32.mrb[0].mxu0
        %11177 = vdwg.mxu0
        %11178 = vmatprep.subr.bf16.mxu0 %v10843
        %11179 = vmatpush1.bf16.msra.mxu0 %v10842
        %11180 = vmatprep.subr.bf16.mxu0 %v10847
        %11181 = vmatpush1.bf16.msra.mxu0 %v10846
        %11182 = vmatprep.subr.bf16.mxu0 %v10851
        %11183 = vmatpush1.bf16.msra.mxu0 %v10850
        %11184 = vmatprep.subr.bf16.mxu0 %v10855
        %11185 = vmatpush1.bf16.msra.mxu0 %v10854
        %11186 = vmatprep.subr.bf16.mxu0 %v10859
        %11187 = vmatpush1.bf16.msra.mxu0 %v10858
        %11188 = vmatprep.subr.bf16.mxu0 %v10863
        %11189 = vmatpush1.bf16.msra.mxu0 %v10862
        %11190 = vmatprep.subr.bf16.mxu0 %v10867
        %11191 = vmatpush1.bf16.msra.mxu0 %v10866
        %11192 = vmatprep.subr.bf16.mxu0 %v10871
        %11193 = vmatpush1.bf16.msra.mxu0 %v10870
        %11194 = vmatprep.subr.bf16.mxu0 %v10875
        %11195 = vmatpush1.bf16.msra.mxu0 %v10874
        %11196 = vmatprep.subr.bf16.mxu0 %v10879
        %11197 = vmatpush1.bf16.msra.mxu0 %v10878
        %11198 = vmatprep.subr.bf16.mxu0 %v10883
        %11199 = vmatpush1.bf16.msra.mxu0 %v10882
        %11200 = vmatprep.subr.bf16.mxu0 %v10887
        %11201 = vmatpush1.bf16.msra.mxu0 %v10886
        %11202 = vmatprep.subr.bf16.mxu0 %v10891
        %11203 = vmatpush1.bf16.msra.mxu0 %v10890
        %11204 = vmatprep.subr.bf16.mxu0 %v10895
        %11205 = vmatpush1.bf16.msra.mxu0 %v10894
        %11206 = vmatprep.subr.bf16.mxu0 %v10899
        %11207 = vmatpush1.bf16.msra.mxu0 %v10898
        %11208 = vmatprep.subr.bf16.mxu0 %v10903
        %11209 = vmatpush1.bf16.msra.mxu0 %v10902
        %11210 = vmatprep.mubr.bf16.mxu0 %v10302
        %11211 = vmatmul.mubr.bf16.gmra.mrb[0].mxu0 %v10301
        %v11212 = vpop.f32.mrb[0].mxu0
        %v11213 = vadd.f32 %v10447, %v11212
        %v11214 = vpop.f32.mrb[0].mxu0
        %v11215 = vadd.f32 %v10451, %v11214
        %v11216 = vpop.f32.mrb[0].mxu0
        %v11217 = vpop.f32.mrb[0].mxu0
        %11218 = vdwg.mxu0
        %11219 = vmatprep.subr.bf16.mxu0 %v10907
        %11220 = vmatpush1.bf16.msra.mxu0 %v10906
        %11221 = vmatprep.subr.bf16.mxu0 %v10911
        %11222 = vmatpush1.bf16.msra.mxu0 %v10910
        %11223 = vmatprep.subr.bf16.mxu0 %v10915
        %11224 = vmatpush1.bf16.msra.mxu0 %v10914
        %11225 = vmatprep.subr.bf16.mxu0 %v10919
        %11226 = vmatpush1.bf16.msra.mxu0 %v10918
        %11227 = vmatprep.subr.bf16.mxu0 %v10923
        %11228 = vmatpush1.bf16.msra.mxu0 %v10922
        %11229 = vmatprep.subr.bf16.mxu0 %v10927
        %11230 = vmatpush1.bf16.msra.mxu0 %v10926
        %11231 = vmatprep.subr.bf16.mxu0 %v10931
        %11232 = vmatpush1.bf16.msra.mxu0 %v10930
        %11233 = vmatprep.subr.bf16.mxu0 %v10935
        %11234 = vmatpush1.bf16.msra.mxu0 %v10934
        %11235 = vmatprep.subr.bf16.mxu0 %v10939
        %11236 = vmatpush1.bf16.msra.mxu0 %v10938
        %11237 = vmatprep.subr.bf16.mxu0 %v10943
        %11238 = vmatpush1.bf16.msra.mxu0 %v10942
        %11239 = vmatprep.subr.bf16.mxu0 %v10947
        %11240 = vmatpush1.bf16.msra.mxu0 %v10946
        %11241 = vmatprep.subr.bf16.mxu0 %v10951
        %11242 = vmatpush1.bf16.msra.mxu0 %v10950
        %11243 = vmatprep.subr.bf16.mxu0 %v10955
        %11244 = vmatpush1.bf16.msra.mxu0 %v10954
        %11245 = vmatprep.subr.bf16.mxu0 %v10959
        %11246 = vmatpush1.bf16.msra.mxu0 %v10958
        %11247 = vmatprep.subr.bf16.mxu0 %v10963
        %11248 = vmatpush1.bf16.msra.mxu0 %v10962
        %11249 = vmatprep.subr.bf16.mxu0 %v10967
        %11250 = vmatpush1.bf16.msra.mxu0 %v10966
        %11251 = vmatprep.mubr.bf16.mxu0 %v10304
        %11252 = vmatmul.mubr.bf16.gmra.mrb[0].mxu0 %v10303
        %v11253 = vpop.f32.mrb[0].mxu0
        %v11254 = vadd.f32 %v11213, %v11253
        %v11255 = vpop.f32.mrb[0].mxu0
        %v11256 = vadd.f32 %v11215, %v11255
        %v11257 = vpop.f32.mrb[0].mxu0
        %v11258 = vpop.f32.mrb[0].mxu0
        %11259 = vdwg.mxu0
        %v11260 = vmax.f32 %v11172, 0.0
        %v11261 = vmax.f32 %v11174, 0.0
        %v11262 = vmax.f32 %v11254, 0.0
        %v11263 = vmax.f32 %v11256, 0.0
        %v11264 = vunpack.c.l.bf16 %v10301
        %v11265 = vunpack.c.l.bf16 %v10302
        %v11266 = vunpack.c.l.bf16 %v10303
        %v11267 = vunpack.c.l.bf16 %v10304
        %v11268 = vadd.f32 %v11260, %v11264
        %v11269 = vadd.f32 %v11261, %v11265
        %v11270 = vadd.f32 %v11262, %v11266
        %v11271 = vadd.f32 %v11263, %v11267
        %v11272 = vpack.c.bf16 %v11268, %v11268
        %v11273 = vpack.c.bf16 %v11269, %v11269
        %v11274 = vpack.c.bf16 %v11270, %v11270
        %v11275 = vpack.c.bf16 %v11271, %v11271
        %v11276 = vld [vmem:[#allocation16] sm:$0x1]
        %v11278 = vshrl.u32 %v11272, 16
        %v11280 = vshll.u32 %v11272, 16
        %v11282 = vrot.slane %v11280, 1
        %v11283 = vor.u32 %v11278, %v11282
        %v11285 = vshrl.u32 %v11273, 16
        %v11287 = vshll.u32 %v11273, 16
        %v11289 = vrot.slane %v11287, 1
        %v11290 = vor.u32 %v11285, %v11289
        %v11292 = vshrl.u32 %v11274, 16
        %v11294 = vshll.u32 %v11274, 16
        %v11296 = vrot.slane %v11294, 1
        %v11297 = vor.u32 %v11292, %v11296
        %v11299 = vshrl.u32 %v11275, 16
        %v11301 = vshll.u32 %v11275, 16
        %v11303 = vrot.slane %v11301, 1
        %v11304 = vor.u32 %v11299, %v11303
        %v11313 = vrot.slane %v11272, 1
        %v11314 = vrot.slane %v11273, 1
        %v11315 = vrot.slane %v11274, 1
        %v11316 = vrot.slane %v11275, 1
        %v11321 = vrot.slane %v11278, 1
        %v11322 = vrot.slane %v11280, 2
        %v11323 = vor.u32 %v11321, %v11322
        %v11324 = vrot.slane %v11285, 1
        %v11325 = vrot.slane %v11287, 2
        %v11326 = vor.u32 %v11324, %v11325
        %v11327 = vrot.slane %v11292, 1
        %v11328 = vrot.slane %v11294, 2
        %v11329 = vor.u32 %v11327, %v11328
        %v11330 = vrot.slane %v11299, 1
        %v11331 = vrot.slane %v11301, 2
        %v11332 = vor.u32 %v11330, %v11331
        %v11337 = vld [vmem:[#allocation13] sm:$0xf]
        %v11338 = vld [vmem:[#allocation13 + $0x4] sm:$0xf]
        %v11339 = vld [vmem:[#allocation13 + $0x8] sm:$0xf]
        %v11340 = vld [vmem:[#allocation13 + $0xc] sm:$0xf]
        %v11341 = vld [vmem:[#allocation13 + $0x10] sm:$0xf]
        %v11342 = vld [vmem:[#allocation13 + $0x14] sm:$0xf]
        %v11343 = vld [vmem:[#allocation13 + $0x18] sm:$0xf]
        %v11344 = vld [vmem:[#allocation13 + $0x1c] sm:$0xf]
        %v11345 = vld [vmem:[#allocation13 + $0x20] sm:$0xf]
        %v11346 = vld [vmem:[#allocation13 + $0x24] sm:$0xf]
        %v11347 = vld [vmem:[#allocation13 + $0x28] sm:$0xf]
        %v11348 = vld [vmem:[#allocation13 + $0x2c] sm:$0xf]
        %v11349 = vld [vmem:[#allocation13 + $0x30] sm:$0xf]
        %v11350 = vld [vmem:[#allocation13 + $0x34] sm:$0xf]
        %v11351 = vld [vmem:[#allocation13 + $0x38] sm:$0xf]
        %v11352 = vld [vmem:[#allocation13 + $0x3c] sm:$0xf]
        %v11353 = vld [vmem:[#allocation13 + $0x40] sm:$0xf]
        %v11354 = vld [vmem:[#allocation13 + $0x44] sm:$0xf]
        %v11355 = vld [vmem:[#allocation13 + $0x48] sm:$0xf]
        %v11356 = vld [vmem:[#allocation13 + $0x4c] sm:$0xf]
        %v11357 = vld [vmem:[#allocation13 + $0x50] sm:$0xf]
        %v11358 = vld [vmem:[#allocation13 + $0x54] sm:$0xf]
        %v11359 = vld [vmem:[#allocation13 + $0x58] sm:$0xf]
        %v11360 = vld [vmem:[#allocation13 + $0x5c] sm:$0xf]
        %v11361 = vld [vmem:[#allocation13 + $0x60] sm:$0xf]
        %v11362 = vld [vmem:[#allocation13 + $0x64] sm:$0xf]
        %v11363 = vld [vmem:[#allocation13 + $0x68] sm:$0xf]
        %v11364 = vld [vmem:[#allocation13 + $0x6c] sm:$0xf]
        %v11365 = vld [vmem:[#allocation13 + $0x70] sm:$0xf]
        %v11366 = vld [vmem:[#allocation13 + $0x74] sm:$0xf]
        %v11367 = vld [vmem:[#allocation13 + $0x78] sm:$0xf]
        %v11368 = vld [vmem:[#allocation13 + $0x7c] sm:$0xf]
        %v11369 = vld [vmem:[#allocation13 + $0x80] sm:$0xf]
        %v11370 = vld [vmem:[#allocation13 + $0x84] sm:$0xf]
        %v11371 = vld [vmem:[#allocation13 + $0x88] sm:$0xf]
        %v11372 = vld [vmem:[#allocation13 + $0x8c] sm:$0xf]
        %v11373 = vld [vmem:[#allocation13 + $0x90] sm:$0xf]
        %v11374 = vld [vmem:[#allocation13 + $0x94] sm:$0xf]
        %v11375 = vld [vmem:[#allocation13 + $0x98] sm:$0xf]
        %v11376 = vld [vmem:[#allocation13 + $0x9c] sm:$0xf]
        %v11377 = vld [vmem:[#allocation13 + $0xa0] sm:$0xf]
        %v11378 = vld [vmem:[#allocation13 + $0xa4] sm:$0xf]
        %v11379 = vld [vmem:[#allocation13 + $0xa8] sm:$0xf]
        %v11380 = vld [vmem:[#allocation13 + $0xac] sm:$0xf]
        %v11381 = vld [vmem:[#allocation13 + $0xb0] sm:$0xf]
        %v11382 = vld [vmem:[#allocation13 + $0xb4] sm:$0xf]
        %v11383 = vld [vmem:[#allocation13 + $0xb8] sm:$0xf]
        %v11384 = vld [vmem:[#allocation13 + $0xbc] sm:$0xf]
        %v11385 = vld [vmem:[#allocation13 + $0xc0] sm:$0xf]
        %v11386 = vld [vmem:[#allocation13 + $0xc4] sm:$0xf]
        %v11387 = vld [vmem:[#allocation13 + $0xc8] sm:$0xf]
        %v11388 = vld [vmem:[#allocation13 + $0xcc] sm:$0xf]
        %v11389 = vld [vmem:[#allocation13 + $0xd0] sm:$0xf]
        %v11390 = vld [vmem:[#allocation13 + $0xd4] sm:$0xf]
        %v11391 = vld [vmem:[#allocation13 + $0xd8] sm:$0xf]
        %v11392 = vld [vmem:[#allocation13 + $0xdc] sm:$0xf]
        %v11393 = vld [vmem:[#allocation13 + $0xe0] sm:$0xf]
        %v11394 = vld [vmem:[#allocation13 + $0xe4] sm:$0xf]
        %v11395 = vld [vmem:[#allocation13 + $0xe8] sm:$0xf]
        %v11396 = vld [vmem:[#allocation13 + $0xec] sm:$0xf]
        %v11397 = vld [vmem:[#allocation13 + $0xf0] sm:$0xf]
        %v11398 = vld [vmem:[#allocation13 + $0xf4] sm:$0xf]
        %v11399 = vld [vmem:[#allocation13 + $0xf8] sm:$0xf]
        %v11400 = vld [vmem:[#allocation13 + $0xfc] sm:$0xf]
        %v11401 = vld [vmem:[#allocation13 + $0x100] sm:$0xf]
        %v11402 = vld [vmem:[#allocation13 + $0x104] sm:$0xf]
        %v11403 = vld [vmem:[#allocation13 + $0x108] sm:$0xf]
        %v11404 = vld [vmem:[#allocation13 + $0x10c] sm:$0xf]
        %v11405 = vld [vmem:[#allocation13 + $0x110] sm:$0xf]
        %v11406 = vld [vmem:[#allocation13 + $0x114] sm:$0xf]
        %v11407 = vld [vmem:[#allocation13 + $0x118] sm:$0xf]
        %v11408 = vld [vmem:[#allocation13 + $0x11c] sm:$0xf]
        %v11409 = vld [vmem:[#allocation13 + $0x120] sm:$0xf]
        %v11410 = vld [vmem:[#allocation13 + $0x124] sm:$0xf]
        %v11411 = vld [vmem:[#allocation13 + $0x128] sm:$0xf]
        %v11412 = vld [vmem:[#allocation13 + $0x12c] sm:$0xf]
        %v11413 = vld [vmem:[#allocation13 + $0x130] sm:$0xf]
        %v11414 = vld [vmem:[#allocation13 + $0x134] sm:$0xf]
        %v11415 = vld [vmem:[#allocation13 + $0x138] sm:$0xf]
        %v11416 = vld [vmem:[#allocation13 + $0x13c] sm:$0xf]
        %v11417 = vld [vmem:[#allocation13 + $0x140] sm:$0xf]
        %v11418 = vld [vmem:[#allocation13 + $0x144] sm:$0xf]
        %v11419 = vld [vmem:[#allocation13 + $0x148] sm:$0xf]
        %v11420 = vld [vmem:[#allocation13 + $0x14c] sm:$0xf]
        %v11421 = vld [vmem:[#allocation13 + $0x150] sm:$0xf]
        %v11422 = vld [vmem:[#allocation13 + $0x154] sm:$0xf]
        %v11423 = vld [vmem:[#allocation13 + $0x158] sm:$0xf]
        %v11424 = vld [vmem:[#allocation13 + $0x15c] sm:$0xf]
        %v11425 = vld [vmem:[#allocation13 + $0x160] sm:$0xf]
        %v11426 = vld [vmem:[#allocation13 + $0x164] sm:$0xf]
        %v11427 = vld [vmem:[#allocation13 + $0x168] sm:$0xf]
        %v11428 = vld [vmem:[#allocation13 + $0x16c] sm:$0xf]
        %v11429 = vld [vmem:[#allocation13 + $0x170] sm:$0xf]
        %v11430 = vld [vmem:[#allocation13 + $0x174] sm:$0xf]
        %v11431 = vld [vmem:[#allocation13 + $0x178] sm:$0xf]
        %v11432 = vld [vmem:[#allocation13 + $0x17c] sm:$0xf]
        %v11433 = vld [vmem:[#allocation13 + $0x180] sm:$0xf]
        %v11434 = vld [vmem:[#allocation13 + $0x184] sm:$0xf]
        %v11435 = vld [vmem:[#allocation13 + $0x188] sm:$0xf]
        %v11436 = vld [vmem:[#allocation13 + $0x18c] sm:$0xf]
        %v11437 = vld [vmem:[#allocation13 + $0x190] sm:$0xf]
        %v11438 = vld [vmem:[#allocation13 + $0x194] sm:$0xf]
        %v11439 = vld [vmem:[#allocation13 + $0x198] sm:$0xf]
        %v11440 = vld [vmem:[#allocation13 + $0x19c] sm:$0xf]
        %v11441 = vld [vmem:[#allocation13 + $0x1a0] sm:$0xf]
        %v11442 = vld [vmem:[#allocation13 + $0x1a4] sm:$0xf]
        %v11443 = vld [vmem:[#allocation13 + $0x1a8] sm:$0xf]
        %v11444 = vld [vmem:[#allocation13 + $0x1ac] sm:$0xf]
        %v11445 = vld [vmem:[#allocation13 + $0x1b0] sm:$0xf]
        %v11446 = vld [vmem:[#allocation13 + $0x1b4] sm:$0xf]
        %v11447 = vld [vmem:[#allocation13 + $0x1b8] sm:$0xf]
        %v11448 = vld [vmem:[#allocation13 + $0x1bc] sm:$0xf]
        %v11449 = vld [vmem:[#allocation13 + $0x1c0] sm:$0xf]
        %v11450 = vld [vmem:[#allocation13 + $0x1c4] sm:$0xf]
        %v11451 = vld [vmem:[#allocation13 + $0x1c8] sm:$0xf]
        %v11452 = vld [vmem:[#allocation13 + $0x1cc] sm:$0xf]
        %v11453 = vld [vmem:[#allocation13 + $0x1d0] sm:$0xf]
        %v11454 = vld [vmem:[#allocation13 + $0x1d4] sm:$0xf]
        %v11455 = vld [vmem:[#allocation13 + $0x1d8] sm:$0xf]
        %v11456 = vld [vmem:[#allocation13 + $0x1dc] sm:$0xf]
        %v11457 = vld [vmem:[#allocation13 + $0x1e0] sm:$0xf]
        %v11458 = vld [vmem:[#allocation13 + $0x1e4] sm:$0xf]
        %v11459 = vld [vmem:[#allocation13 + $0x1e8] sm:$0xf]
        %v11460 = vld [vmem:[#allocation13 + $0x1ec] sm:$0xf]
        %v11461 = vld [vmem:[#allocation13 + $0x1f0] sm:$0xf]
        %v11462 = vld [vmem:[#allocation13 + $0x1f4] sm:$0xf]
        %v11463 = vld [vmem:[#allocation13 + $0x1f8] sm:$0xf]
        %v11464 = vld [vmem:[#allocation13 + $0x1fc] sm:$0xf]
        %v11465 = vld [vmem:[#allocation13 + $0x200] sm:$0xf]
        %v11466 = vld [vmem:[#allocation13 + $0x204] sm:$0xf]
        %v11467 = vld [vmem:[#allocation13 + $0x208] sm:$0xf]
        %v11468 = vld [vmem:[#allocation13 + $0x20c] sm:$0xf]
        %v11469 = vld [vmem:[#allocation13 + $0x210] sm:$0xf]
        %v11470 = vld [vmem:[#allocation13 + $0x214] sm:$0xf]
        %v11471 = vld [vmem:[#allocation13 + $0x218] sm:$0xf]
        %v11472 = vld [vmem:[#allocation13 + $0x21c] sm:$0xf]
        %v11473 = vld [vmem:[#allocation13 + $0x220] sm:$0xf]
        %v11474 = vld [vmem:[#allocation13 + $0x224] sm:$0xf]
        %v11475 = vld [vmem:[#allocation13 + $0x228] sm:$0xf]
        %v11476 = vld [vmem:[#allocation13 + $0x22c] sm:$0xf]
        %v11477 = vld [vmem:[#allocation13 + $0x230] sm:$0xf]
        %v11478 = vld [vmem:[#allocation13 + $0x234] sm:$0xf]
        %v11479 = vld [vmem:[#allocation13 + $0x238] sm:$0xf]
        %v11480 = vld [vmem:[#allocation13 + $0x23c] sm:$0xf]
        %v11481 = vld [vmem:[#allocation13 + $0x240] sm:$0xf]
        %v11482 = vld [vmem:[#allocation13 + $0x244] sm:$0xf]
        %v11483 = vld [vmem:[#allocation13 + $0x248] sm:$0xf]
        %v11484 = vld [vmem:[#allocation13 + $0x24c] sm:$0xf]
        %v11485 = vld [vmem:[#allocation13 + $0x250] sm:$0xf]
        %v11486 = vld [vmem:[#allocation13 + $0x254] sm:$0xf]
        %v11487 = vld [vmem:[#allocation13 + $0x258] sm:$0xf]
        %v11488 = vld [vmem:[#allocation13 + $0x25c] sm:$0xf]
        %v11489 = vld [vmem:[#allocation13 + $0x260] sm:$0xf]
        %v11490 = vld [vmem:[#allocation13 + $0x264] sm:$0xf]
        %v11491 = vld [vmem:[#allocation13 + $0x268] sm:$0xf]
        %v11492 = vld [vmem:[#allocation13 + $0x26c] sm:$0xf]
        %v11493 = vld [vmem:[#allocation13 + $0x270] sm:$0xf]
        %v11494 = vld [vmem:[#allocation13 + $0x274] sm:$0xf]
        %v11495 = vld [vmem:[#allocation13 + $0x278] sm:$0xf]
        %v11496 = vld [vmem:[#allocation13 + $0x27c] sm:$0xf]
        %v11497 = vld [vmem:[#allocation13 + $0x280] sm:$0xf]
        %v11498 = vld [vmem:[#allocation13 + $0x284] sm:$0xf]
        %v11499 = vld [vmem:[#allocation13 + $0x288] sm:$0xf]
        %v11500 = vld [vmem:[#allocation13 + $0x28c] sm:$0xf]
        %v11501 = vld [vmem:[#allocation13 + $0x290] sm:$0xf]
        %v11502 = vld [vmem:[#allocation13 + $0x294] sm:$0xf]
        %v11503 = vld [vmem:[#allocation13 + $0x298] sm:$0xf]
        %v11504 = vld [vmem:[#allocation13 + $0x29c] sm:$0xf]
        %v11505 = vld [vmem:[#allocation13 + $0x2a0] sm:$0xf]
        %v11506 = vld [vmem:[#allocation13 + $0x2a4] sm:$0xf]
        %v11507 = vld [vmem:[#allocation13 + $0x2a8] sm:$0xf]
        %v11508 = vld [vmem:[#allocation13 + $0x2ac] sm:$0xf]
        %v11509 = vld [vmem:[#allocation13 + $0x2b0] sm:$0xf]
        %v11510 = vld [vmem:[#allocation13 + $0x2b4] sm:$0xf]
        %v11511 = vld [vmem:[#allocation13 + $0x2b8] sm:$0xf]
        %v11512 = vld [vmem:[#allocation13 + $0x2bc] sm:$0xf]
        %v11513 = vld [vmem:[#allocation13 + $0x2c0] sm:$0xf]
        %v11514 = vld [vmem:[#allocation13 + $0x2c4] sm:$0xf]
        %v11515 = vld [vmem:[#allocation13 + $0x2c8] sm:$0xf]
        %v11516 = vld [vmem:[#allocation13 + $0x2cc] sm:$0xf]
        %v11517 = vld [vmem:[#allocation13 + $0x2d0] sm:$0xf]
        %v11518 = vld [vmem:[#allocation13 + $0x2d4] sm:$0xf]
        %v11519 = vld [vmem:[#allocation13 + $0x2d8] sm:$0xf]
        %v11520 = vld [vmem:[#allocation13 + $0x2dc] sm:$0xf]
        %v11521 = vld [vmem:[#allocation13 + $0x2e0] sm:$0xf]
        %v11522 = vld [vmem:[#allocation13 + $0x2e4] sm:$0xf]
        %v11523 = vld [vmem:[#allocation13 + $0x2e8] sm:$0xf]
        %v11524 = vld [vmem:[#allocation13 + $0x2ec] sm:$0xf]
        %v11525 = vld [vmem:[#allocation13 + $0x2f0] sm:$0xf]
        %v11526 = vld [vmem:[#allocation13 + $0x2f4] sm:$0xf]
        %v11527 = vld [vmem:[#allocation13 + $0x2f8] sm:$0xf]
        %v11528 = vld [vmem:[#allocation13 + $0x2fc] sm:$0xf]
        %v11529 = vld [vmem:[#allocation13 + $0x300] sm:$0xf]
        %v11530 = vld [vmem:[#allocation13 + $0x304] sm:$0xf]
        %v11531 = vld [vmem:[#allocation13 + $0x308] sm:$0xf]
        %v11532 = vld [vmem:[#allocation13 + $0x30c] sm:$0xf]
        %v11533 = vld [vmem:[#allocation13 + $0x310] sm:$0xf]
        %v11534 = vld [vmem:[#allocation13 + $0x314] sm:$0xf]
        %v11535 = vld [vmem:[#allocation13 + $0x318] sm:$0xf]
        %v11536 = vld [vmem:[#allocation13 + $0x31c] sm:$0xf]
        %v11537 = vld [vmem:[#allocation13 + $0x320] sm:$0xf]
        %v11538 = vld [vmem:[#allocation13 + $0x324] sm:$0xf]
        %v11539 = vld [vmem:[#allocation13 + $0x328] sm:$0xf]
        %v11540 = vld [vmem:[#allocation13 + $0x32c] sm:$0xf]
        %v11541 = vld [vmem:[#allocation13 + $0x330] sm:$0xf]
        %v11542 = vld [vmem:[#allocation13 + $0x334] sm:$0xf]
        %v11543 = vld [vmem:[#allocation13 + $0x338] sm:$0xf]
        %v11544 = vld [vmem:[#allocation13 + $0x33c] sm:$0xf]
        %v11545 = vld [vmem:[#allocation13 + $0x340] sm:$0xf]
        %v11546 = vld [vmem:[#allocation13 + $0x344] sm:$0xf]
        %v11547 = vld [vmem:[#allocation13 + $0x348] sm:$0xf]
        %v11548 = vld [vmem:[#allocation13 + $0x34c] sm:$0xf]
        %v11549 = vld [vmem:[#allocation13 + $0x350] sm:$0xf]
        %v11550 = vld [vmem:[#allocation13 + $0x354] sm:$0xf]
        %v11551 = vld [vmem:[#allocation13 + $0x358] sm:$0xf]
        %v11552 = vld [vmem:[#allocation13 + $0x35c] sm:$0xf]
        %v11553 = vld [vmem:[#allocation13 + $0x360] sm:$0xf]
        %v11554 = vld [vmem:[#allocation13 + $0x364] sm:$0xf]
        %v11555 = vld [vmem:[#allocation13 + $0x368] sm:$0xf]
        %v11556 = vld [vmem:[#allocation13 + $0x36c] sm:$0xf]
        %v11557 = vld [vmem:[#allocation13 + $0x370] sm:$0xf]
        %v11558 = vld [vmem:[#allocation13 + $0x374] sm:$0xf]
        %v11559 = vld [vmem:[#allocation13 + $0x378] sm:$0xf]
        %v11560 = vld [vmem:[#allocation13 + $0x37c] sm:$0xf]
        %v11561 = vld [vmem:[#allocation13 + $0x380] sm:$0xf]
        %v11562 = vld [vmem:[#allocation13 + $0x384] sm:$0xf]
        %v11563 = vld [vmem:[#allocation13 + $0x388] sm:$0xf]
        %v11564 = vld [vmem:[#allocation13 + $0x38c] sm:$0xf]
        %v11565 = vld [vmem:[#allocation13 + $0x390] sm:$0xf]
        %v11566 = vld [vmem:[#allocation13 + $0x394] sm:$0xf]
        %v11567 = vld [vmem:[#allocation13 + $0x398] sm:$0xf]
        %v11568 = vld [vmem:[#allocation13 + $0x39c] sm:$0xf]
        %v11569 = vld [vmem:[#allocation13 + $0x3a0] sm:$0xf]
        %v11570 = vld [vmem:[#allocation13 + $0x3a4] sm:$0xf]
        %v11571 = vld [vmem:[#allocation13 + $0x3a8] sm:$0xf]
        %v11572 = vld [vmem:[#allocation13 + $0x3ac] sm:$0xf]
        %v11573 = vld [vmem:[#allocation13 + $0x3b0] sm:$0xf]
        %v11574 = vld [vmem:[#allocation13 + $0x3b4] sm:$0xf]
        %v11575 = vld [vmem:[#allocation13 + $0x3b8] sm:$0xf]
        %v11576 = vld [vmem:[#allocation13 + $0x3bc] sm:$0xf]
        %v11577 = vld [vmem:[#allocation13 + $0x3c0] sm:$0xf]
        %v11578 = vld [vmem:[#allocation13 + $0x3c4] sm:$0xf]
        %v11579 = vld [vmem:[#allocation13 + $0x3c8] sm:$0xf]
        %v11580 = vld [vmem:[#allocation13 + $0x3cc] sm:$0xf]
        %v11581 = vld [vmem:[#allocation13 + $0x3d0] sm:$0xf]
        %v11582 = vld [vmem:[#allocation13 + $0x3d4] sm:$0xf]
        %v11583 = vld [vmem:[#allocation13 + $0x3d8] sm:$0xf]
        %v11584 = vld [vmem:[#allocation13 + $0x3dc] sm:$0xf]
        %v11585 = vld [vmem:[#allocation13 + $0x3e0] sm:$0xf]
        %v11586 = vld [vmem:[#allocation13 + $0x3e4] sm:$0xf]
        %v11587 = vld [vmem:[#allocation13 + $0x3e8] sm:$0xf]
        %v11588 = vld [vmem:[#allocation13 + $0x3ec] sm:$0xf]
        %v11589 = vld [vmem:[#allocation13 + $0x3f0] sm:$0xf]
        %v11590 = vld [vmem:[#allocation13 + $0x3f4] sm:$0xf]
        %v11591 = vld [vmem:[#allocation13 + $0x3f8] sm:$0xf]
        %v11592 = vld [vmem:[#allocation13 + $0x3fc] sm:$0xf]
        %v11594 = vlaneseq
        %v11595 = vshrl.u32 %v11594, 7
        %v11596 = vsub.s32 0, %v11595
        %v11597 = vrot.slane %v11276, %v11596
        %v11855 = vunpack.c.l.b16 %v11337
        %v11856 = vunpack.c.l.b16 %v11338
        %v11857 = vunpack.c.l.b16 %v11339
        %v11858 = vunpack.c.l.b16 %v11340
        %v11859 = vunpack.c.l.b16 %v11341
        %v11860 = vunpack.c.l.b16 %v11342
        %v11861 = vunpack.c.l.b16 %v11343
        %v11862 = vunpack.c.l.b16 %v11344
        %v11863 = vunpack.c.l.b16 %v11345
        %v11864 = vunpack.c.l.b16 %v11346
        %v11865 = vunpack.c.l.b16 %v11347
        %v11866 = vunpack.c.l.b16 %v11348
        %v11867 = vunpack.c.l.b16 %v11349
        %v11868 = vunpack.c.l.b16 %v11350
        %v11869 = vunpack.c.l.b16 %v11351
        %v11870 = vunpack.c.l.b16 %v11352
        %v11871 = vunpack.c.l.b16 %v11353
        %v11872 = vunpack.c.l.b16 %v11354
        %v11873 = vunpack.c.l.b16 %v11355
        %v11874 = vunpack.c.l.b16 %v11356
        %v11875 = vunpack.c.l.b16 %v11357
        %v11876 = vunpack.c.l.b16 %v11358
        %v11877 = vunpack.c.l.b16 %v11359
        %v11878 = vunpack.c.l.b16 %v11360
        %v11879 = vunpack.c.l.b16 %v11361
        %v11880 = vunpack.c.l.b16 %v11362
        %v11881 = vunpack.c.l.b16 %v11363
        %v11882 = vunpack.c.l.b16 %v11364
        %v11883 = vunpack.c.l.b16 %v11365
        %v11884 = vunpack.c.l.b16 %v11366
        %v11885 = vunpack.c.l.b16 %v11367
        %v11886 = vunpack.c.l.b16 %v11368
        %v11887 = vunpack.c.l.b16 %v11369
        %v11888 = vunpack.c.l.b16 %v11370
        %v11889 = vunpack.c.l.b16 %v11371
        %v11890 = vunpack.c.l.b16 %v11372
        %v11891 = vunpack.c.l.b16 %v11373
        %v11892 = vunpack.c.l.b16 %v11374
        %v11893 = vunpack.c.l.b16 %v11375
        %v11894 = vunpack.c.l.b16 %v11376
        %v11895 = vunpack.c.l.b16 %v11377
        %v11896 = vunpack.c.l.b16 %v11378
        %v11897 = vunpack.c.l.b16 %v11379
        %v11898 = vunpack.c.l.b16 %v11380
        %v11899 = vunpack.c.l.b16 %v11381
        %v11900 = vunpack.c.l.b16 %v11382
        %v11901 = vunpack.c.l.b16 %v11383
        %v11902 = vunpack.c.l.b16 %v11384
        %v11903 = vunpack.c.l.b16 %v11385
        %v11904 = vunpack.c.l.b16 %v11386
        %v11905 = vunpack.c.l.b16 %v11387
        %v11906 = vunpack.c.l.b16 %v11388
        %v11907 = vunpack.c.l.b16 %v11389
        %v11908 = vunpack.c.l.b16 %v11390
        %v11909 = vunpack.c.l.b16 %v11391
        %v11910 = vunpack.c.l.b16 %v11392
        %v11911 = vunpack.c.l.b16 %v11393
        %v11912 = vunpack.c.l.b16 %v11394
        %v11913 = vunpack.c.l.b16 %v11395
        %v11914 = vunpack.c.l.b16 %v11396
        %v11915 = vunpack.c.l.b16 %v11397
        %v11916 = vunpack.c.l.b16 %v11398
        %v11917 = vunpack.c.l.b16 %v11399
        %v11918 = vunpack.c.l.b16 %v11400
        %v11919 = vunpack.c.l.b16 %v11401
        %v11920 = vunpack.c.l.b16 %v11402
        %v11921 = vunpack.c.l.b16 %v11403
        %v11922 = vunpack.c.l.b16 %v11404
        %v11923 = vunpack.c.l.b16 %v11405
        %v11924 = vunpack.c.l.b16 %v11406
        %v11925 = vunpack.c.l.b16 %v11407
        %v11926 = vunpack.c.l.b16 %v11408
        %v11927 = vunpack.c.l.b16 %v11409
        %v11928 = vunpack.c.l.b16 %v11410
        %v11929 = vunpack.c.l.b16 %v11411
        %v11930 = vunpack.c.l.b16 %v11412
        %v11931 = vunpack.c.l.b16 %v11413
        %v11932 = vunpack.c.l.b16 %v11414
        %v11933 = vunpack.c.l.b16 %v11415
        %v11934 = vunpack.c.l.b16 %v11416
        %v11935 = vunpack.c.l.b16 %v11417
        %v11936 = vunpack.c.l.b16 %v11418
        %v11937 = vunpack.c.l.b16 %v11419
        %v11938 = vunpack.c.l.b16 %v11420
        %v11939 = vunpack.c.l.b16 %v11421
        %v11940 = vunpack.c.l.b16 %v11422
        %v11941 = vunpack.c.l.b16 %v11423
        %v11942 = vunpack.c.l.b16 %v11424
        %v11943 = vunpack.c.l.b16 %v11425
        %v11944 = vunpack.c.l.b16 %v11426
        %v11945 = vunpack.c.l.b16 %v11427
        %v11946 = vunpack.c.l.b16 %v11428
        %v11947 = vunpack.c.l.b16 %v11429
        %v11948 = vunpack.c.l.b16 %v11430
        %v11949 = vunpack.c.l.b16 %v11431
        %v11950 = vunpack.c.l.b16 %v11432
        %v11951 = vunpack.c.l.b16 %v11433
        %v11952 = vunpack.c.l.b16 %v11434
        %v11953 = vunpack.c.l.b16 %v11435
        %v11954 = vunpack.c.l.b16 %v11436
        %v11955 = vunpack.c.l.b16 %v11437
        %v11956 = vunpack.c.l.b16 %v11438
        %v11957 = vunpack.c.l.b16 %v11439
        %v11958 = vunpack.c.l.b16 %v11440
        %v11959 = vunpack.c.l.b16 %v11441
        %v11960 = vunpack.c.l.b16 %v11442
        %v11961 = vunpack.c.l.b16 %v11443
        %v11962 = vunpack.c.l.b16 %v11444
        %v11963 = vunpack.c.l.b16 %v11445
        %v11964 = vunpack.c.l.b16 %v11446
        %v11965 = vunpack.c.l.b16 %v11447
        %v11966 = vunpack.c.l.b16 %v11448
        %v11967 = vunpack.c.l.b16 %v11449
        %v11968 = vunpack.c.l.b16 %v11450
        %v11969 = vunpack.c.l.b16 %v11451
        %v11970 = vunpack.c.l.b16 %v11452
        %v11971 = vunpack.c.l.b16 %v11453
        %v11972 = vunpack.c.l.b16 %v11454
        %v11973 = vunpack.c.l.b16 %v11455
        %v11974 = vunpack.c.l.b16 %v11456
        %v11975 = vunpack.c.l.b16 %v11457
        %v11976 = vunpack.c.l.b16 %v11458
        %v11977 = vunpack.c.l.b16 %v11459
        %v11978 = vunpack.c.l.b16 %v11460
        %v11979 = vunpack.c.l.b16 %v11461
        %v11980 = vunpack.c.l.b16 %v11462
        %v11981 = vunpack.c.l.b16 %v11463
        %v11982 = vunpack.c.l.b16 %v11464
        %v11983 = vunpack.c.l.b16 %v11465
        %v11984 = vunpack.c.l.b16 %v11466
        %v11985 = vunpack.c.l.b16 %v11467
        %v11986 = vunpack.c.l.b16 %v11468
        %v11987 = vunpack.c.l.b16 %v11469
        %v11988 = vunpack.c.l.b16 %v11470
        %v11989 = vunpack.c.l.b16 %v11471
        %v11990 = vunpack.c.l.b16 %v11472
        %v11991 = vunpack.c.l.b16 %v11473
        %v11992 = vunpack.c.l.b16 %v11474
        %v11993 = vunpack.c.l.b16 %v11475
        %v11994 = vunpack.c.l.b16 %v11476
        %v11995 = vunpack.c.l.b16 %v11477
        %v11996 = vunpack.c.l.b16 %v11478
        %v11997 = vunpack.c.l.b16 %v11479
        %v11998 = vunpack.c.l.b16 %v11480
        %v11999 = vunpack.c.l.b16 %v11481
        %v12000 = vunpack.c.l.b16 %v11482
        %v12001 = vunpack.c.l.b16 %v11483
        %v12002 = vunpack.c.l.b16 %v11484
        %v12003 = vunpack.c.l.b16 %v11485
        %v12004 = vunpack.c.l.b16 %v11486
        %v12005 = vunpack.c.l.b16 %v11487
        %v12006 = vunpack.c.l.b16 %v11488
        %v12007 = vunpack.c.l.b16 %v11489
        %v12008 = vunpack.c.l.b16 %v11490
        %v12009 = vunpack.c.l.b16 %v11491
        %v12010 = vunpack.c.l.b16 %v11492
        %v12011 = vunpack.c.l.b16 %v11493
        %v12012 = vunpack.c.l.b16 %v11494
        %v12013 = vunpack.c.l.b16 %v11495
        %v12014 = vunpack.c.l.b16 %v11496
        %v12015 = vunpack.c.l.b16 %v11497
        %v12016 = vunpack.c.l.b16 %v11498
        %v12017 = vunpack.c.l.b16 %v11499
        %v12018 = vunpack.c.l.b16 %v11500
        %v12019 = vunpack.c.l.b16 %v11501
        %v12020 = vunpack.c.l.b16 %v11502
        %v12021 = vunpack.c.l.b16 %v11503
        %v12022 = vunpack.c.l.b16 %v11504
        %v12023 = vunpack.c.l.b16 %v11505
        %v12024 = vunpack.c.l.b16 %v11506
        %v12025 = vunpack.c.l.b16 %v11507
        %v12026 = vunpack.c.l.b16 %v11508
        %v12027 = vunpack.c.l.b16 %v11509
        %v12028 = vunpack.c.l.b16 %v11510
        %v12029 = vunpack.c.l.b16 %v11511
        %v12030 = vunpack.c.l.b16 %v11512
        %v12031 = vunpack.c.l.b16 %v11513
        %v12032 = vunpack.c.l.b16 %v11514
        %v12033 = vunpack.c.l.b16 %v11515
        %v12034 = vunpack.c.l.b16 %v11516
        %v12035 = vunpack.c.l.b16 %v11517
        %v12036 = vunpack.c.l.b16 %v11518
        %v12037 = vunpack.c.l.b16 %v11519
        %v12038 = vunpack.c.l.b16 %v11520
        %v12039 = vunpack.c.l.b16 %v11521
        %v12040 = vunpack.c.l.b16 %v11522
        %v12041 = vunpack.c.l.b16 %v11523
        %v12042 = vunpack.c.l.b16 %v11524
        %v12043 = vunpack.c.l.b16 %v11525
        %v12044 = vunpack.c.l.b16 %v11526
        %v12045 = vunpack.c.l.b16 %v11527
        %v12046 = vunpack.c.l.b16 %v11528
        %v12047 = vunpack.c.l.b16 %v11529
        %v12048 = vunpack.c.l.b16 %v11530
        %v12049 = vunpack.c.l.b16 %v11531
        %v12050 = vunpack.c.l.b16 %v11532
        %v12051 = vunpack.c.l.b16 %v11533
        %v12052 = vunpack.c.l.b16 %v11534
        %v12053 = vunpack.c.l.b16 %v11535
        %v12054 = vunpack.c.l.b16 %v11536
        %v12055 = vunpack.c.l.b16 %v11537
        %v12056 = vunpack.c.l.b16 %v11538
        %v12057 = vunpack.c.l.b16 %v11539
        %v12058 = vunpack.c.l.b16 %v11540
        %v12059 = vunpack.c.l.b16 %v11541
        %v12060 = vunpack.c.l.b16 %v11542
        %v12061 = vunpack.c.l.b16 %v11543
        %v12062 = vunpack.c.l.b16 %v11544
        %v12063 = vunpack.c.l.b16 %v11545
        %v12064 = vunpack.c.l.b16 %v11546
        %v12065 = vunpack.c.l.b16 %v11547
        %v12066 = vunpack.c.l.b16 %v11548
        %v12067 = vunpack.c.l.b16 %v11549
        %v12068 = vunpack.c.l.b16 %v11550
        %v12069 = vunpack.c.l.b16 %v11551
        %v12070 = vunpack.c.l.b16 %v11552
        %v12071 = vunpack.c.l.b16 %v11553
        %v12072 = vunpack.c.l.b16 %v11554
        %v12073 = vunpack.c.l.b16 %v11555
        %v12074 = vunpack.c.l.b16 %v11556
        %v12075 = vunpack.c.l.b16 %v11557
        %v12076 = vunpack.c.l.b16 %v11558
        %v12077 = vunpack.c.l.b16 %v11559
        %v12078 = vunpack.c.l.b16 %v11560
        %v12079 = vunpack.c.l.b16 %v11561
        %v12080 = vunpack.c.l.b16 %v11562
        %v12081 = vunpack.c.l.b16 %v11563
        %v12082 = vunpack.c.l.b16 %v11564
        %v12083 = vunpack.c.l.b16 %v11565
        %v12084 = vunpack.c.l.b16 %v11566
        %v12085 = vunpack.c.l.b16 %v11567
        %v12086 = vunpack.c.l.b16 %v11568
        %v12087 = vunpack.c.l.b16 %v11569
        %v12088 = vunpack.c.l.b16 %v11570
        %v12089 = vunpack.c.l.b16 %v11571
        %v12090 = vunpack.c.l.b16 %v11572
        %v12091 = vunpack.c.l.b16 %v11573
        %v12092 = vunpack.c.l.b16 %v11574
        %v12093 = vunpack.c.l.b16 %v11575
        %v12094 = vunpack.c.l.b16 %v11576
        %v12095 = vunpack.c.l.b16 %v11577
        %v12096 = vunpack.c.l.b16 %v11578
        %v12097 = vunpack.c.l.b16 %v11579
        %v12098 = vunpack.c.l.b16 %v11580
        %v12099 = vunpack.c.l.b16 %v11581
        %v12100 = vunpack.c.l.b16 %v11582
        %v12101 = vunpack.c.l.b16 %v11583
        %v12102 = vunpack.c.l.b16 %v11584
        %v12103 = vunpack.c.l.b16 %v11585
        %v12104 = vunpack.c.l.b16 %v11586
        %v12105 = vunpack.c.l.b16 %v11587
        %v12106 = vunpack.c.l.b16 %v11588
        %v12107 = vunpack.c.l.b16 %v11589
        %v12108 = vunpack.c.l.b16 %v11590
        %v12109 = vunpack.c.l.b16 %v11591
        %v12110 = vunpack.c.l.b16 %v11592
        %v12111 = vpack.c.b16 %v11856, %v11855
        %v12112 = vpack.c.b16 %v11858, %v11857
        %v12113 = vpack.c.b16 %v11860, %v11859
        %v12114 = vpack.c.b16 %v11862, %v11861
        %v12115 = vpack.c.b16 %v11864, %v11863
        %v12116 = vpack.c.b16 %v11866, %v11865
        %v12117 = vpack.c.b16 %v11868, %v11867
        %v12118 = vpack.c.b16 %v11870, %v11869
        %v12119 = vpack.c.b16 %v11872, %v11871
        %v12120 = vpack.c.b16 %v11874, %v11873
        %v12121 = vpack.c.b16 %v11876, %v11875
        %v12122 = vpack.c.b16 %v11878, %v11877
        %v12123 = vpack.c.b16 %v11880, %v11879
        %v12124 = vpack.c.b16 %v11882, %v11881
        %v12125 = vpack.c.b16 %v11884, %v11883
        %v12126 = vpack.c.b16 %v11886, %v11885
        %v12127 = vpack.c.b16 %v11888, %v11887
        %v12128 = vpack.c.b16 %v11890, %v11889
        %v12129 = vpack.c.b16 %v11892, %v11891
        %v12130 = vpack.c.b16 %v11894, %v11893
        %v12131 = vpack.c.b16 %v11896, %v11895
        %v12132 = vpack.c.b16 %v11898, %v11897
        %v12133 = vpack.c.b16 %v11900, %v11899
        %v12134 = vpack.c.b16 %v11902, %v11901
        %v12135 = vpack.c.b16 %v11904, %v11903
        %v12136 = vpack.c.b16 %v11906, %v11905
        %v12137 = vpack.c.b16 %v11908, %v11907
        %v12138 = vpack.c.b16 %v11910, %v11909
        %v12139 = vpack.c.b16 %v11912, %v11911
        %v12140 = vpack.c.b16 %v11914, %v11913
        %v12141 = vpack.c.b16 %v11916, %v11915
        %v12142 = vpack.c.b16 %v11918, %v11917
        %v12143 = vpack.c.b16 %v11920, %v11919
        %v12144 = vpack.c.b16 %v11922, %v11921
        %v12145 = vpack.c.b16 %v11924, %v11923
        %v12146 = vpack.c.b16 %v11926, %v11925
        %v12147 = vpack.c.b16 %v11928, %v11927
        %v12148 = vpack.c.b16 %v11930, %v11929
        %v12149 = vpack.c.b16 %v11932, %v11931
        %v12150 = vpack.c.b16 %v11934, %v11933
        %v12151 = vpack.c.b16 %v11936, %v11935
        %v12152 = vpack.c.b16 %v11938, %v11937
        %v12153 = vpack.c.b16 %v11940, %v11939
        %v12154 = vpack.c.b16 %v11942, %v11941
        %v12155 = vpack.c.b16 %v11944, %v11943
        %v12156 = vpack.c.b16 %v11946, %v11945
        %v12157 = vpack.c.b16 %v11948, %v11947
        %v12158 = vpack.c.b16 %v11950, %v11949
        %v12159 = vpack.c.b16 %v11952, %v11951
        %v12160 = vpack.c.b16 %v11954, %v11953
        %v12161 = vpack.c.b16 %v11956, %v11955
        %v12162 = vpack.c.b16 %v11958, %v11957
        %v12163 = vpack.c.b16 %v11960, %v11959
        %v12164 = vpack.c.b16 %v11962, %v11961
        %v12165 = vpack.c.b16 %v11964, %v11963
        %v12166 = vpack.c.b16 %v11966, %v11965
        %v12167 = vpack.c.b16 %v11968, %v11967
        %v12168 = vpack.c.b16 %v11970, %v11969
        %v12169 = vpack.c.b16 %v11972, %v11971
        %v12170 = vpack.c.b16 %v11974, %v11973
        %v12171 = vpack.c.b16 %v11976, %v11975
        %v12172 = vpack.c.b16 %v11978, %v11977
        %v12173 = vpack.c.b16 %v11980, %v11979
        %v12174 = vpack.c.b16 %v11982, %v11981
        %v12175 = vpack.c.b16 %v11984, %v11983
        %v12176 = vpack.c.b16 %v11986, %v11985
        %v12177 = vpack.c.b16 %v11988, %v11987
        %v12178 = vpack.c.b16 %v11990, %v11989
        %v12179 = vpack.c.b16 %v11992, %v11991
        %v12180 = vpack.c.b16 %v11994, %v11993
        %v12181 = vpack.c.b16 %v11996, %v11995
        %v12182 = vpack.c.b16 %v11998, %v11997
        %v12183 = vpack.c.b16 %v12000, %v11999
        %v12184 = vpack.c.b16 %v12002, %v12001
        %v12185 = vpack.c.b16 %v12004, %v12003
        %v12186 = vpack.c.b16 %v12006, %v12005
        %v12187 = vpack.c.b16 %v12008, %v12007
        %v12188 = vpack.c.b16 %v12010, %v12009
        %v12189 = vpack.c.b16 %v12012, %v12011
        %v12190 = vpack.c.b16 %v12014, %v12013
        %v12191 = vpack.c.b16 %v12016, %v12015
        %v12192 = vpack.c.b16 %v12018, %v12017
        %v12193 = vpack.c.b16 %v12020, %v12019
        %v12194 = vpack.c.b16 %v12022, %v12021
        %v12195 = vpack.c.b16 %v12024, %v12023
        %v12196 = vpack.c.b16 %v12026, %v12025
        %v12197 = vpack.c.b16 %v12028, %v12027
        %v12198 = vpack.c.b16 %v12030, %v12029
        %v12199 = vpack.c.b16 %v12032, %v12031
        %v12200 = vpack.c.b16 %v12034, %v12033
        %v12201 = vpack.c.b16 %v12036, %v12035
        %v12202 = vpack.c.b16 %v12038, %v12037
        %v12203 = vpack.c.b16 %v12040, %v12039
        %v12204 = vpack.c.b16 %v12042, %v12041
        %v12205 = vpack.c.b16 %v12044, %v12043
        %v12206 = vpack.c.b16 %v12046, %v12045
        %v12207 = vpack.c.b16 %v12048, %v12047
        %v12208 = vpack.c.b16 %v12050, %v12049
        %v12209 = vpack.c.b16 %v12052, %v12051
        %v12210 = vpack.c.b16 %v12054, %v12053
        %v12211 = vpack.c.b16 %v12056, %v12055
        %v12212 = vpack.c.b16 %v12058, %v12057
        %v12213 = vpack.c.b16 %v12060, %v12059
        %v12214 = vpack.c.b16 %v12062, %v12061
        %v12215 = vpack.c.b16 %v12064, %v12063
        %v12216 = vpack.c.b16 %v12066, %v12065
        %v12217 = vpack.c.b16 %v12068, %v12067
        %v12218 = vpack.c.b16 %v12070, %v12069
        %v12219 = vpack.c.b16 %v12072, %v12071
        %v12220 = vpack.c.b16 %v12074, %v12073
        %v12221 = vpack.c.b16 %v12076, %v12075
        %v12222 = vpack.c.b16 %v12078, %v12077
        %v12223 = vpack.c.b16 %v12080, %v12079
        %v12224 = vpack.c.b16 %v12082, %v12081
        %v12225 = vpack.c.b16 %v12084, %v12083
        %v12226 = vpack.c.b16 %v12086, %v12085
        %v12227 = vpack.c.b16 %v12088, %v12087
        %v12228 = vpack.c.b16 %v12090, %v12089
        %v12229 = vpack.c.b16 %v12092, %v12091
        %v12230 = vpack.c.b16 %v12094, %v12093
        %v12231 = vpack.c.b16 %v12096, %v12095
        %v12232 = vpack.c.b16 %v12098, %v12097
        %v12233 = vpack.c.b16 %v12100, %v12099
        %v12234 = vpack.c.b16 %v12102, %v12101
        %v12235 = vpack.c.b16 %v12104, %v12103
        %v12236 = vpack.c.b16 %v12106, %v12105
        %v12237 = vpack.c.b16 %v12108, %v12107
        %v12238 = vpack.c.b16 %v12110, %v12109
        %12367 = vmatprep.subr.bf16.mxu0 0
        %12368 = vmatpush1.bf16.msra.mxu0 %v12111
        %12369 = vmatprep.subr.bf16.mxu0 0
        %12370 = vmatpush1.bf16.msra.mxu0 %v12112
        %12371 = vmatprep.subr.bf16.mxu0 0
        %12372 = vmatpush1.bf16.msra.mxu0 %v12113
        %12373 = vmatprep.subr.bf16.mxu0 0
        %12374 = vmatpush1.bf16.msra.mxu0 %v12114
        %12375 = vmatprep.subr.bf16.mxu0 0
        %12376 = vmatpush1.bf16.msra.mxu0 %v12115
        %12377 = vmatprep.subr.bf16.mxu0 0
        %12378 = vmatpush1.bf16.msra.mxu0 %v12116
        %12379 = vmatprep.subr.bf16.mxu0 0
        %12380 = vmatpush1.bf16.msra.mxu0 %v12117
        %12381 = vmatprep.subr.bf16.mxu0 0
        %12382 = vmatpush1.bf16.msra.mxu0 %v12118
        %12383 = vmatprep.subr.bf16.mxu0 0
        %12384 = vmatpush1.bf16.msra.mxu0 %v12119
        %12385 = vmatprep.subr.bf16.mxu0 0
        %12386 = vmatpush1.bf16.msra.mxu0 %v12120
        %12387 = vmatprep.subr.bf16.mxu0 0
        %12388 = vmatpush1.bf16.msra.mxu0 %v12121
        %12389 = vmatprep.subr.bf16.mxu0 0
        %12390 = vmatpush1.bf16.msra.mxu0 %v12122
        %12391 = vmatprep.subr.bf16.mxu0 0
        %12392 = vmatpush1.bf16.msra.mxu0 %v12123
        %12393 = vmatprep.subr.bf16.mxu0 0
        %12394 = vmatpush1.bf16.msra.mxu0 %v12124
        %12395 = vmatprep.subr.bf16.mxu0 0
        %12396 = vmatpush1.bf16.msra.mxu0 %v12125
        %12397 = vmatprep.subr.bf16.mxu0 0
        %12398 = vmatpush1.bf16.msra.mxu0 %v12126
        %12399 = vmatprep.mubr.bf16.mxu0 %v11273
        %12400 = vmatmul.mubr.bf16.gmra.mrb[0].mxu0 %v11272
        %v12401 = vpop.f32.mrb[0].mxu0
        %v12402 = vadd.f32 %v11597, %v12401
        %v12403 = vpop.f32.mrb[0].mxu0
        %v12404 = vpop.f32.mrb[0].mxu0
        %v12405 = vpop.f32.mrb[0].mxu0
        %12406 = vdwg.mxu0
        %12407 = vmatprep.subr.bf16.mxu0 0
        %12408 = vmatpush1.bf16.msra.mxu0 %v12127
        %12409 = vmatprep.subr.bf16.mxu0 0
        %12410 = vmatpush1.bf16.msra.mxu0 %v12128
        %12411 = vmatprep.subr.bf16.mxu0 0
        %12412 = vmatpush1.bf16.msra.mxu0 %v12129
        %12413 = vmatprep.subr.bf16.mxu0 0
        %12414 = vmatpush1.bf16.msra.mxu0 %v12130
        %12415 = vmatprep.subr.bf16.mxu0 0
        %12416 = vmatpush1.bf16.msra.mxu0 %v12131
        %12417 = vmatprep.subr.bf16.mxu0 0
        %12418 = vmatpush1.bf16.msra.mxu0 %v12132
        %12419 = vmatprep.subr.bf16.mxu0 0
        %12420 = vmatpush1.bf16.msra.mxu0 %v12133
        %12421 = vmatprep.subr.bf16.mxu0 0
        %12422 = vmatpush1.bf16.msra.mxu0 %v12134
        %12423 = vmatprep.subr.bf16.mxu0 0
        %12424 = vmatpush1.bf16.msra.mxu0 %v12135
        %12425 = vmatprep.subr.bf16.mxu0 0
        %12426 = vmatpush1.bf16.msra.mxu0 %v12136
        %12427 = vmatprep.subr.bf16.mxu0 0
        %12428 = vmatpush1.bf16.msra.mxu0 %v12137
        %12429 = vmatprep.subr.bf16.mxu0 0
        %12430 = vmatpush1.bf16.msra.mxu0 %v12138
        %12431 = vmatprep.subr.bf16.mxu0 0
        %12432 = vmatpush1.bf16.msra.mxu0 %v12139
        %12433 = vmatprep.subr.bf16.mxu0 0
        %12434 = vmatpush1.bf16.msra.mxu0 %v12140
        %12435 = vmatprep.subr.bf16.mxu0 0
        %12436 = vmatpush1.bf16.msra.mxu0 %v12141
        %12437 = vmatprep.subr.bf16.mxu0 0
        %12438 = vmatpush1.bf16.msra.mxu0 %v12142
        %12439 = vmatprep.mubr.bf16.mxu0 %v11275
        %12440 = vmatmul.mubr.bf16.gmra.mrb[0].mxu0 %v11274
        %v12441 = vpop.f32.mrb[0].mxu0
        %v12442 = vadd.f32 %v12402, %v12441
        %v12443 = vpop.f32.mrb[0].mxu0
        %v12444 = vpop.f32.mrb[0].mxu0
        %v12445 = vpop.f32.mrb[0].mxu0
        %12446 = vdwg.mxu0
        %12447 = vmatprep.subr.bf16.mxu0 0
        %12448 = vmatpush1.bf16.msra.mxu0 %v12143
        %12449 = vmatprep.subr.bf16.mxu0 0
        %12450 = vmatpush1.bf16.msra.mxu0 %v12144
        %12451 = vmatprep.subr.bf16.mxu0 0
        %12452 = vmatpush1.bf16.msra.mxu0 %v12145
        %12453 = vmatprep.subr.bf16.mxu0 0
        %12454 = vmatpush1.bf16.msra.mxu0 %v12146
        %12455 = vmatprep.subr.bf16.mxu0 0
        %12456 = vmatpush1.bf16.msra.mxu0 %v12147
        %12457 = vmatprep.subr.bf16.mxu0 0
        %12458 = vmatpush1.bf16.msra.mxu0 %v12148
        %12459 = vmatprep.subr.bf16.mxu0 0
        %12460 = vmatpush1.bf16.msra.mxu0 %v12149
        %12461 = vmatprep.subr.bf16.mxu0 0
        %12462 = vmatpush1.bf16.msra.mxu0 %v12150
        %12463 = vmatprep.subr.bf16.mxu0 0
        %12464 = vmatpush1.bf16.msra.mxu0 %v12151
        %12465 = vmatprep.subr.bf16.mxu0 0
        %12466 = vmatpush1.bf16.msra.mxu0 %v12152
        %12467 = vmatprep.subr.bf16.mxu0 0
        %12468 = vmatpush1.bf16.msra.mxu0 %v12153
        %12469 = vmatprep.subr.bf16.mxu0 0
        %12470 = vmatpush1.bf16.msra.mxu0 %v12154
        %12471 = vmatprep.subr.bf16.mxu0 0
        %12472 = vmatpush1.bf16.msra.mxu0 %v12155
        %12473 = vmatprep.subr.bf16.mxu0 0
        %12474 = vmatpush1.bf16.msra.mxu0 %v12156
        %12475 = vmatprep.subr.bf16.mxu0 0
        %12476 = vmatpush1.bf16.msra.mxu0 %v12157
        %12477 = vmatprep.subr.bf16.mxu0 0
        %12478 = vmatpush1.bf16.msra.mxu0 %v12158
        %12479 = vmatprep.mubr.bf16.mxu0 %v11290
        %12480 = vmatmul.mubr.bf16.gmra.mrb[0].mxu0 %v11283
        %v12481 = vpop.f32.mrb[0].mxu0
        %v12482 = vadd.f32 %v12442, %v12481
        %v12483 = vpop.f32.mrb[0].mxu0
        %v12484 = vpop.f32.mrb[0].mxu0
        %v12485 = vpop.f32.mrb[0].mxu0
        %12486 = vdwg.mxu0
        %12487 = vmatprep.subr.bf16.mxu0 0
        %12488 = vmatpush1.bf16.msra.mxu0 %v12159
        %12489 = vmatprep.subr.bf16.mxu0 0
        %12490 = vmatpush1.bf16.msra.mxu0 %v12160
        %12491 = vmatprep.subr.bf16.mxu0 0
        %12492 = vmatpush1.bf16.msra.mxu0 %v12161
        %12493 = vmatprep.subr.bf16.mxu0 0
        %12494 = vmatpush1.bf16.msra.mxu0 %v12162
        %12495 = vmatprep.subr.bf16.mxu0 0
        %12496 = vmatpush1.bf16.msra.mxu0 %v12163
        %12497 = vmatprep.subr.bf16.mxu0 0
        %12498 = vmatpush1.bf16.msra.mxu0 %v12164
        %12499 = vmatprep.subr.bf16.mxu0 0
        %12500 = vmatpush1.bf16.msra.mxu0 %v12165
        %12501 = vmatprep.subr.bf16.mxu0 0
        %12502 = vmatpush1.bf16.msra.mxu0 %v12166
        %12503 = vmatprep.subr.bf16.mxu0 0
        %12504 = vmatpush1.bf16.msra.mxu0 %v12167
        %12505 = vmatprep.subr.bf16.mxu0 0
        %12506 = vmatpush1.bf16.msra.mxu0 %v12168
        %12507 = vmatprep.subr.bf16.mxu0 0
        %12508 = vmatpush1.bf16.msra.mxu0 %v12169
        %12509 = vmatprep.subr.bf16.mxu0 0
        %12510 = vmatpush1.bf16.msra.mxu0 %v12170
        %12511 = vmatprep.subr.bf16.mxu0 0
        %12512 = vmatpush1.bf16.msra.mxu0 %v12171
        %12513 = vmatprep.subr.bf16.mxu0 0
        %12514 = vmatpush1.bf16.msra.mxu0 %v12172
        %12515 = vmatprep.subr.bf16.mxu0 0
        %12516 = vmatpush1.bf16.msra.mxu0 %v12173
        %12517 = vmatprep.subr.bf16.mxu0 0
        %12518 = vmatpush1.bf16.msra.mxu0 %v12174
        %12519 = vmatprep.mubr.bf16.mxu0 %v11304
        %12520 = vmatmul.mubr.bf16.gmra.mrb[0].mxu0 %v11297
        %v12521 = vpop.f32.mrb[0].mxu0
        %v12522 = vadd.f32 %v12482, %v12521
        %v12523 = vpop.f32.mrb[0].mxu0
        %v12524 = vpop.f32.mrb[0].mxu0
        %v12525 = vpop.f32.mrb[0].mxu0
        %12526 = vdwg.mxu0
        %12527 = vmatprep.subr.bf16.mxu0 0
        %12528 = vmatpush1.bf16.msra.mxu0 %v12175
        %12529 = vmatprep.subr.bf16.mxu0 0
        %12530 = vmatpush1.bf16.msra.mxu0 %v12176
        %12531 = vmatprep.subr.bf16.mxu0 0
        %12532 = vmatpush1.bf16.msra.mxu0 %v12177
        %12533 = vmatprep.subr.bf16.mxu0 0
        %12534 = vmatpush1.bf16.msra.mxu0 %v12178
        %12535 = vmatprep.subr.bf16.mxu0 0
        %12536 = vmatpush1.bf16.msra.mxu0 %v12179
        %12537 = vmatprep.subr.bf16.mxu0 0
        %12538 = vmatpush1.bf16.msra.mxu0 %v12180
        %12539 = vmatprep.subr.bf16.mxu0 0
        %12540 = vmatpush1.bf16.msra.mxu0 %v12181
        %12541 = vmatprep.subr.bf16.mxu0 0
        %12542 = vmatpush1.bf16.msra.mxu0 %v12182
        %12543 = vmatprep.subr.bf16.mxu0 0
        %12544 = vmatpush1.bf16.msra.mxu0 %v12183
        %12545 = vmatprep.subr.bf16.mxu0 0
        %12546 = vmatpush1.bf16.msra.mxu0 %v12184
        %12547 = vmatprep.subr.bf16.mxu0 0
        %12548 = vmatpush1.bf16.msra.mxu0 %v12185
        %12549 = vmatprep.subr.bf16.mxu0 0
        %12550 = vmatpush1.bf16.msra.mxu0 %v12186
        %12551 = vmatprep.subr.bf16.mxu0 0
        %12552 = vmatpush1.bf16.msra.mxu0 %v12187
        %12553 = vmatprep.subr.bf16.mxu0 0
        %12554 = vmatpush1.bf16.msra.mxu0 %v12188
        %12555 = vmatprep.subr.bf16.mxu0 0
        %12556 = vmatpush1.bf16.msra.mxu0 %v12189
        %12557 = vmatprep.subr.bf16.mxu0 0
        %12558 = vmatpush1.bf16.msra.mxu0 %v12190
        %12559 = vmatprep.mubr.bf16.mxu0 %v11314
        %12560 = vmatmul.mubr.bf16.gmra.mrb[0].mxu0 %v11313
        %v12561 = vpop.f32.mrb[0].mxu0
        %v12562 = vadd.f32 %v12522, %v12561
        %v12563 = vpop.f32.mrb[0].mxu0
        %v12564 = vpop.f32.mrb[0].mxu0
        %v12565 = vpop.f32.mrb[0].mxu0
        %12566 = vdwg.mxu0
        %12567 = vmatprep.subr.bf16.mxu0 0
        %12568 = vmatpush1.bf16.msra.mxu0 %v12191
        %12569 = vmatprep.subr.bf16.mxu0 0
        %12570 = vmatpush1.bf16.msra.mxu0 %v12192
        %12571 = vmatprep.subr.bf16.mxu0 0
        %12572 = vmatpush1.bf16.msra.mxu0 %v12193
        %12573 = vmatprep.subr.bf16.mxu0 0
        %12574 = vmatpush1.bf16.msra.mxu0 %v12194
        %12575 = vmatprep.subr.bf16.mxu0 0
        %12576 = vmatpush1.bf16.msra.mxu0 %v12195
        %12577 = vmatprep.subr.bf16.mxu0 0
        %12578 = vmatpush1.bf16.msra.mxu0 %v12196
        %12579 = vmatprep.subr.bf16.mxu0 0
        %12580 = vmatpush1.bf16.msra.mxu0 %v12197
        %12581 = vmatprep.subr.bf16.mxu0 0
        %12582 = vmatpush1.bf16.msra.mxu0 %v12198
        %12583 = vmatprep.subr.bf16.mxu0 0
        %12584 = vmatpush1.bf16.msra.mxu0 %v12199
        %12585 = vmatprep.subr.bf16.mxu0 0
        %12586 = vmatpush1.bf16.msra.mxu0 %v12200
        %12587 = vmatprep.subr.bf16.mxu0 0
        %12588 = vmatpush1.bf16.msra.mxu0 %v12201
        %12589 = vmatprep.subr.bf16.mxu0 0
        %12590 = vmatpush1.bf16.msra.mxu0 %v12202
        %12591 = vmatprep.subr.bf16.mxu0 0
        %12592 = vmatpush1.bf16.msra.mxu0 %v12203
        %12593 = vmatprep.subr.bf16.mxu0 0
        %12594 = vmatpush1.bf16.msra.mxu0 %v12204
        %12595 = vmatprep.subr.bf16.mxu0 0
        %12596 = vmatpush1.bf16.msra.mxu0 %v12205
        %12597 = vmatprep.subr.bf16.mxu0 0
        %12598 = vmatpush1.bf16.msra.mxu0 %v12206
        %12599 = vmatprep.mubr.bf16.mxu0 %v11316
        %12600 = vmatmul.mubr.bf16.gmra.mrb[0].mxu0 %v11315
        %v12601 = vpop.f32.mrb[0].mxu0
        %v12602 = vadd.f32 %v12562, %v12601
        %v12603 = vpop.f32.mrb[0].mxu0
        %v12604 = vpop.f32.mrb[0].mxu0
        %v12605 = vpop.f32.mrb[0].mxu0
        %12606 = vdwg.mxu0
        %12607 = vmatprep.subr.bf16.mxu0 0
        %12608 = vmatpush1.bf16.msra.mxu0 %v12207
        %12609 = vmatprep.subr.bf16.mxu0 0
        %12610 = vmatpush1.bf16.msra.mxu0 %v12208
        %12611 = vmatprep.subr.bf16.mxu0 0
        %12612 = vmatpush1.bf16.msra.mxu0 %v12209
        %12613 = vmatprep.subr.bf16.mxu0 0
        %12614 = vmatpush1.bf16.msra.mxu0 %v12210
        %12615 = vmatprep.subr.bf16.mxu0 0
        %12616 = vmatpush1.bf16.msra.mxu0 %v12211
        %12617 = vmatprep.subr.bf16.mxu0 0
        %12618 = vmatpush1.bf16.msra.mxu0 %v12212
        %12619 = vmatprep.subr.bf16.mxu0 0
        %12620 = vmatpush1.bf16.msra.mxu0 %v12213
        %12621 = vmatprep.subr.bf16.mxu0 0
        %12622 = vmatpush1.bf16.msra.mxu0 %v12214
        %12623 = vmatprep.subr.bf16.mxu0 0
        %12624 = vmatpush1.bf16.msra.mxu0 %v12215
        %12625 = vmatprep.subr.bf16.mxu0 0
        %12626 = vmatpush1.bf16.msra.mxu0 %v12216
        %12627 = vmatprep.subr.bf16.mxu0 0
        %12628 = vmatpush1.bf16.msra.mxu0 %v12217
        %12629 = vmatprep.subr.bf16.mxu0 0
        %12630 = vmatpush1.bf16.msra.mxu0 %v12218
        %12631 = vmatprep.subr.bf16.mxu0 0
        %12632 = vmatpush1.bf16.msra.mxu0 %v12219
        %12633 = vmatprep.subr.bf16.mxu0 0
        %12634 = vmatpush1.bf16.msra.mxu0 %v12220
        %12635 = vmatprep.subr.bf16.mxu0 0
        %12636 = vmatpush1.bf16.msra.mxu0 %v12221
        %12637 = vmatprep.subr.bf16.mxu0 0
        %12638 = vmatpush1.bf16.msra.mxu0 %v12222
        %12639 = vmatprep.mubr.bf16.mxu0 %v11326
        %12640 = vmatmul.mubr.bf16.gmra.mrb[0].mxu0 %v11323
        %v12641 = vpop.f32.mrb[0].mxu0
        %v12642 = vadd.f32 %v12602, %v12641
        %v12643 = vpop.f32.mrb[0].mxu0
        %v12644 = vpop.f32.mrb[0].mxu0
        %v12645 = vpop.f32.mrb[0].mxu0
        %12646 = vdwg.mxu0
        %12647 = vmatprep.subr.bf16.mxu0 0
        %12648 = vmatpush1.bf16.msra.mxu0 %v12223
        %12649 = vmatprep.subr.bf16.mxu0 0
        %12650 = vmatpush1.bf16.msra.mxu0 %v12224
        %12651 = vmatprep.subr.bf16.mxu0 0
        %12652 = vmatpush1.bf16.msra.mxu0 %v12225
        %12653 = vmatprep.subr.bf16.mxu0 0
        %12654 = vmatpush1.bf16.msra.mxu0 %v12226
        %12655 = vmatprep.subr.bf16.mxu0 0
        %12656 = vmatpush1.bf16.msra.mxu0 %v12227
        %12657 = vmatprep.subr.bf16.mxu0 0
        %12658 = vmatpush1.bf16.msra.mxu0 %v12228
        %12659 = vmatprep.subr.bf16.mxu0 0
        %12660 = vmatpush1.bf16.msra.mxu0 %v12229
        %12661 = vmatprep.subr.bf16.mxu0 0
        %12662 = vmatpush1.bf16.msra.mxu0 %v12230
        %12663 = vmatprep.subr.bf16.mxu0 0
        %12664 = vmatpush1.bf16.msra.mxu0 %v12231
        %12665 = vmatprep.subr.bf16.mxu0 0
        %12666 = vmatpush1.bf16.msra.mxu0 %v12232
        %12667 = vmatprep.subr.bf16.mxu0 0
        %12668 = vmatpush1.bf16.msra.mxu0 %v12233
        %12669 = vmatprep.subr.bf16.mxu0 0
        %12670 = vmatpush1.bf16.msra.mxu0 %v12234
        %12671 = vmatprep.subr.bf16.mxu0 0
        %12672 = vmatpush1.bf16.msra.mxu0 %v12235
        %12673 = vmatprep.subr.bf16.mxu0 0
        %12674 = vmatpush1.bf16.msra.mxu0 %v12236
        %12675 = vmatprep.subr.bf16.mxu0 0
        %12676 = vmatpush1.bf16.msra.mxu0 %v12237
        %12677 = vmatprep.subr.bf16.mxu0 0
        %12678 = vmatpush1.bf16.msra.mxu0 %v12238
        %12679 = vmatprep.mubr.bf16.mxu0 %v11332
        %12680 = vmatmul.mubr.bf16.gmra.mrb[0].mxu0 %v11329
        %v12681 = vpop.f32.mrb[0].mxu0
        %v12682 = vadd.f32 %v12642, %v12681
        %v12683 = vpop.f32.mrb[0].mxu0
        %v12684 = vpop.f32.mrb[0].mxu0
        %v12685 = vpop.f32.mrb[0].mxu0
        %12686 = vdwg.mxu0
        %12687 = vst [vmem:[%s480] sm:$0xf] %v12682
        %s12688 = sand.u32 %s252, 1
        %s12689 = scalar_lea.sflag [#allocation4], %s12688
        %s12690 = sand.u32 %s252, 1
        %s12691 = smul.addr %s12690, 4
        %s12692 = scalar_lea.vmem [#allocation17], %s12691
        // Predicated region
        $region97: #{tpu_custom_call.1} parent=59 // pred_check
          %p12693 = pneg %p262
        $region98: #{tpu_custom_call.1} parent=59 // pred_check_branch
          %12695 = sbr.rel (%p12693) target = $region100
        $region99: #{tpu_custom_call.1} parent=59 // pred_region
          %s12697 = ssub.s32 64, 64
          %12698 = vsyncadd %s12689, %s12697
          %s12699 = smul.addr %s29, 64
          %s12700 = scalar_lea.hbm %s10, %s12699
          %s12702 = sshll.u32 %s12692, 4
          %s12703 = int_to_ptr.vmem [resolvable:$true] %s12702
          %12705 = dma.vmem_to_hbm [thread:$0]  %s12703, 64, %s12700, %s12689
        $region100: #{tpu_custom_call.1} parent=59 // pred_fallthru
          _
      $region60: #{tpu_custom_call.1} parent=5 // pred_fallthru
        _
      %p12706 = scmp.le.s32.totalorder 2, %s24
      // Predicated region
      $region101: #{tpu_custom_call.1} parent=5 // pred_check
        %p12707 = pneg %p12706
      $region102: #{tpu_custom_call.1} parent=5 // pred_check_branch
        %12709 = sbr.rel (%p12707) target = $region104
      $region103: #{tpu_custom_call.1} parent=5 // pred_region
        %s12710 = ssub.s32 %s24, 2
        // Predicated region
        $region105: #{tpu_custom_call.1} parent=103 // pred_check
          %p12711 = pneg %p268
        $region106: #{tpu_custom_call.1} parent=103 // pred_check_branch
          %12713 = sbr.rel (%p12711) target = $region108
        $region107: #{tpu_custom_call.1} parent=103 // pred_region
          %s12714 = sand.u32 %s253, 1
          %s12715 = scalar_lea.sflag [#allocation4], %s12714
          %s12716 = sand.u32 %s253, 1
          %s12717 = smul.addr %s12716, 4
          %s12718 = scalar_lea.vmem [#allocation17], %s12717
          %12719 = dma.done %s12715, 64
        $region108: #{tpu_custom_call.1} parent=103 // pred_fallthru
          _
      $region104: #{tpu_custom_call.1} parent=5 // pred_fallthru
        _
    $region6: #{tpu_custom_call.1} parent=1 // loop_footer
      %s28 = sadd.s32 1, %s24
    $region7: #{tpu_custom_call.1} parent=1 // loop_footer_branch
      %23 = sbr.rel target = $region3
    $region8: #{tpu_custom_call.1} parent=1 // loop_exit
      _
    %12720 = vsyncpa [#allocation3], 1
    %s12721 = scalar_lea.sflag [#allocation3], 1
    %12722 = vsyncpa %s12721, 1
    %12723 = vsyncpa [#allocation6], 1
    %12724 = vsyncpa [#allocation9], 1
    %12725 = vsyncpa [#allocation12], 1
    %12726 = vsyncpa [#allocation15], 1
    %12727 = vsyncpa [#allocation4], 1
    %s12728 = scalar_lea.sflag [#allocation4], 1
    %12729 = vsyncpa %s12728, 1

</llo_original>
